<compile_context>
chip_gen: v7x
topology: tpu7x:2x2x1
jax: 0.10.0
libtpu: 0.0.40
codegen_flags: <defaults>
</compile_context>

<pallas_src>
import jax
import jax.numpy as jnp
from jax.experimental import pallas as pl
from jax.experimental.pallas import tpu as pltpu


# ---------------------------------------------------------------------------
# Fused kernel. Per grid step (one batch element):
#   x_ref   : (1, H, W, 4*Cin)     four head inputs concatenated on channels
#   w1_ref  : (4, 9*Cin, Cmid)     im2col-flattened conv1 weights (per head)
#   sb1_ref : (4, 2, Cmid)         folded BN1 (scale, bias)
#   w2_ref  : (4, 9*Cmid, Cmid)    im2col-flattened conv2 weights (per head)
#   sb2_ref : (4, 2, Cmid)         folded BN2 (scale, bias)
#   up_ref  : (OH*OW, H*W)         kron(Ah, Aw) bilinear matrix (shared)
#   o_ref   : (1, OH, OW, 4*Cmid)  lane-dense (128-wide) concatenated output
# Scratch:
#   xpad1   : (H+2, W+2, Cin)      zero-padded conv1 input
#   xpad2   : (H+2, W+2, Cmid)     zero-padded conv2 input
#   y_all   : (H*W, 4*Cmid)        conv outputs of all heads, channels on lanes
# ---------------------------------------------------------------------------
def _mla_fused_kernel(x_ref, w1_ref, sb1_ref, w2_ref, sb2_ref, up_ref, o_ref,
                      xpad1, xpad2, y_all):
    H, W = x_ref.shape[1], x_ref.shape[2]
    Cin = xpad1.shape[2]
    Cmid = w1_ref.shape[2]
    n_heads = w1_ref.shape[0]
    OH, OW, Ctot = o_ref.shape[1], o_ref.shape[2], o_ref.shape[3]

    # Zero the padded scratches; only the interior is overwritten per head,
    # so the 1-pixel zero border stays valid for every head.
    xpad1[...] = jnp.zeros_like(xpad1)
    xpad2[...] = jnp.zeros_like(xpad2)

    def im2col(xp_ref, c):
        # (H*W, 9*c) patch matrix; column order (dy, dx, cin) matches the
        # row-major reshape of HWIO conv weights done in the wrapper.
        return jnp.concatenate(
            [xp_ref[dy:dy + H, dx:dx + W, :].reshape(H * W, c)
             for dy in range(3) for dx in range(3)], axis=1)

    for h in range(n_heads):
        # ---- conv1 (Cin -> Cmid) + folded BN + ReLU
        xpad1[1:H + 1, 1:W + 1, :] = x_ref[0, :, :, h * Cin:(h + 1) * Cin]
        z = jnp.dot(im2col(xpad1, Cin), w1_ref[h],
                    preferred_element_type=jnp.float32)
        sb1 = sb1_ref[h]
        z = jnp.maximum(z * sb1[0:1, :] + sb1[1:2, :], 0.0)

        # ---- conv2 (Cmid -> Cmid) + folded BN + ReLU
        xpad2[1:H + 1, 1:W + 1, :] = z.reshape(H, W, Cmid)
        z2 = jnp.dot(im2col(xpad2, Cmid), w2_ref[h],
                     preferred_element_type=jnp.float32)
        sb2 = sb2_ref[h]
        z2 = jnp.maximum(z2 * sb2[0:1, :] + sb2[1:2, :], 0.0)

        # in-kernel channel concat: head h -> lanes [h*Cmid, (h+1)*Cmid)
        y_all[:, h * Cmid:(h + 1) * Cmid] = z2

    # Bilinear (align_corners=True) 4x upsample of all heads at once:
    #   out[(o,p), c] = sum_{h,w} Ah[o,h] * Aw[p,w] * y[(h,w), c]
    out = jnp.dot(up_ref[...], y_all[...], preferred_element_type=jnp.float32)
    o_ref[0] = out.reshape(OH, OW, Ctot).astype(o_ref.dtype)


# ---------------------------------------------------------------------------
# Wrapper / parameters
# ---------------------------------------------------------------------------
def _bilinear_matrix(out_size, in_size):
    """Row-interpolation matrix for bilinear interp with align_corners=True."""
    if in_size == 1:
        return jnp.ones((out_size, 1), jnp.float32)
    src = jnp.arange(out_size, dtype=jnp.float32) * (
        (in_size - 1) / max(out_size - 1, 1))
    lo = jnp.clip(jnp.floor(src).astype(jnp.int32), 0, in_size - 2)
    frac = src - lo.astype(jnp.float32)
    rows = jnp.arange(out_size)
    m = jnp.zeros((out_size, in_size), jnp.float32)
    m = m.at[rows, lo].add(1.0 - frac)
    m = m.at[rows, lo + 1].add(frac)
    return m


def mla_head_forward(params, mla_p2, mla_p3, mla_p4, mla_p5):
    """Inputs/outputs NCHW, matching the PyTorch module."""
    xs = [jnp.transpose(x, (0, 2, 3, 1))
          for x in (mla_p2, mla_p3, mla_p4, mla_p5)]
    x_all = jnp.concatenate(xs, axis=-1)                 # (N, H, W, 4*Cin)
    N, H, W, _ = x_all.shape
    cin = xs[0].shape[-1]
    n_heads, k1, cmid = params["w1"].shape
    assert k1 == 9 * cin
    # F.interpolate(..., 4 * x.shape[-1]): target = 4*W for BOTH spatial dims.
    OH = OW = 4 * W
    up = jnp.kron(_bilinear_matrix(OH, H), _bilinear_matrix(OW, W))

    out_nhwc = pl.pallas_call(
        _mla_fused_kernel,
        out_shape=jax.ShapeDtypeStruct((N, OH, OW, n_heads * cmid),
                                       jnp.float32),
        grid=(N,),
        in_specs=[
            pl.BlockSpec((1, H, W, n_heads * cin), lambda n: (n, 0, 0, 0)),
            pl.BlockSpec((n_heads, 9 * cin, cmid), lambda n: (0, 0, 0)),
            pl.BlockSpec((n_heads, 2, cmid), lambda n: (0, 0, 0)),
            pl.BlockSpec((n_heads, 9 * cmid, cmid), lambda n: (0, 0, 0)),
            pl.BlockSpec((n_heads, 2, cmid), lambda n: (0, 0, 0)),
            pl.BlockSpec((OH * OW, H * W), lambda n: (0, 0)),
        ],
        out_specs=pl.BlockSpec((1, OH, OW, n_heads * cmid),
                               lambda n: (n, 0, 0, 0)),
        scratch_shapes=[
            pltpu.VMEM((H + 2, W + 2, cin), jnp.float32),
            pltpu.VMEM((H + 2, W + 2, cmid), jnp.float32),
            pltpu.VMEM((H * W, n_heads * cmid), jnp.float32),
        ],
        compiler_params=pltpu.CompilerParams(
            dimension_semantics=("parallel",)),
    )(x_all, params["w1"], params["sb1"], params["w2"], params["sb2"], up)
    return jnp.transpose(out_nhwc, (0, 3, 1, 2))         # back to NCHW


def _fold_bn(gamma, beta, mean, var, eps=1e-5):
    scale = gamma / jnp.sqrt(var + eps)
    return scale, beta - mean * scale


def _init_single_head(key, cin, cmid):
    ks = jax.random.split(key, 10)
    w1 = jax.random.normal(ks[0], (3, 3, cin, cmid), jnp.float32) * 0.05
    w2 = jax.random.normal(ks[1], (3, 3, cmid, cmid), jnp.float32) * 0.05
    g1 = 1.0 + 0.1 * jax.random.normal(ks[2], (cmid,), jnp.float32)
    b1 = 0.1 * jax.random.normal(ks[3], (cmid,), jnp.float32)
    m1 = 0.1 * jax.random.normal(ks[4], (cmid,), jnp.float32)
    v1 = 1.0 + 0.1 * jnp.abs(jax.random.normal(ks[5], (cmid,), jnp.float32))
    g2 = 1.0 + 0.1 * jax.random.normal(ks[6], (cmid,), jnp.float32)
    b2 = 0.1 * jax.random.normal(ks[7], (cmid,), jnp.float32)
    m2 = 0.1 * jax.random.normal(ks[8], (cmid,), jnp.float32)
    v2 = 1.0 + 0.1 * jnp.abs(jax.random.normal(ks[9], (cmid,), jnp.float32))
    s1, bb1 = _fold_bn(g1, b1, m1, v1)
    s2, bb2 = _fold_bn(g2, b2, m2, v2)
    return dict(w1=w1, s1=s1, b1=bb1, w2=w2, s2=s2, b2=bb2)


def init_params(key, cin, cmid, n_heads=4):
    """Pack per-head params into head-stacked, im2col-flattened arrays."""
    keys = jax.random.split(key, n_heads)
    heads = [_init_single_head(k, cin, cmid) for k in keys]
    packed = dict(
        w1=jnp.stack([h["w1"].reshape(9 * cin, cmid) for h in heads]),
        sb1=jnp.stack([jnp.stack([h["s1"], h["b1"]]) for h in heads]),
        w2=jnp.stack([h["w2"].reshape(9 * cmid, cmid) for h in heads]),
        sb2=jnp.stack([jnp.stack([h["s2"], h["b2"]]) for h in heads]),
    )
    return packed, heads


# ---------------------------------------------------------------------------
# Pure-JAX reference (correctness sanity check)
# ---------------------------------------------------------------------------
def _ref_conv_bn_relu(x_nhwc, w, s, b):
    y = jax.lax.conv_general_dilated(
        x_nhwc, w, window_strides=(1, 1), padding="SAME",
        dimension_numbers=("NHWC", "HWIO", "NHWC"))
    return jnp.maximum(y * s + b, 0.0)


def _ref_head(x_nhwc, p):
    y = _ref_conv_bn_relu(x_nhwc, p["w1"], p["s1"], p["b1"])
    y = _ref_conv_bn_relu(y, p["w2"], p["s2"], p["b2"])
    out_hw = 4 * x_nhwc.shape[2]
    Ah = _bilinear_matrix(out_hw, y.shape[1])
    Aw = _bilinear_matrix(out_hw, y.shape[2])
    return jnp.einsum("oh,pw,nhwc->nopc", Ah, Aw, y)


def _ref_mla_head(heads, inputs_nchw):
    outs = [_ref_head(jnp.transpose(x, (0, 2, 3, 1)), p)
            for x, p in zip(inputs_nchw, heads)]
    return jnp.transpose(jnp.concatenate(outs, axis=-1), (0, 3, 1, 2))


if __name__ == "__main__":
    # Small shapes consistent with the module: mla_channels=16, mlahead=32.
    N, Cin, Cmid, H, W = 2, 16, 32, 8, 8
    key = jax.random.PRNGKey(0)
    k_in, k_p = jax.random.split(key)
    params, heads_raw = init_params(k_p, Cin, Cmid)
    kx = jax.random.split(k_in, 4)
    inputs = [jax.random.normal(kx[i], (N, Cin, H, W), jnp.float32)
              for i in range(4)]

    out = jax.block_until_ready(mla_head_forward(params, *inputs))
    assert out.shape == (N, 4 * Cmid, 4 * W, 4 * W), out.shape

    ref = _ref_mla_head(heads_raw, inputs)
    err = float(jnp.max(jnp.abs(out - ref)))
    assert jnp.allclose(out, ref, atol=2e-3, rtol=2e-3), err

    print("KERNEL_OK")
</pallas_src>

<mosaic_0001>
module attributes {stable_mosaic.version = 11 : i64} {
  func.func @_mla_fused_kernel(%arg0: i32, %arg1: memref<1x8x8x64xf32, #tpu.memory_space<vmem>>, %arg2: memref<4x144x32xf32, #tpu.memory_space<vmem>>, %arg3: memref<4x2x32xf32, #tpu.memory_space<vmem>>, %arg4: memref<4x288x32xf32, #tpu.memory_space<vmem>>, %arg5: memref<4x2x32xf32, #tpu.memory_space<vmem>>, %arg6: memref<1024x64xf32, #tpu.memory_space<vmem>>, %arg7: memref<1x32x32x128xf32, #tpu.memory_space<vmem>>, %arg8: memref<10x10x16xf32, #tpu.memory_space<vmem>>, %arg9: memref<10x10x32xf32, #tpu.memory_space<vmem>>, %arg10: memref<64x128xf32, #tpu.memory_space<vmem>>) attributes {dimension_semantics = [#tpu.dimension_semantics<parallel>], iteration_bounds = array<i64: 2>, scalar_prefetch = 0 : i64, scratch_operands = 3 : i64, tpu.core_type = #tpu.core_type<tc>, window_params = [{transform_indices = @transform_0, window_bounds = array<i64: 1, 8, 8, 64>}, {pipeline_mode = #tpu.pipeline_mode<synchronous>, transform_indices = @transform_1, window_bounds = array<i64: 4, 144, 32>}, {pipeline_mode = #tpu.pipeline_mode<synchronous>, transform_indices = @transform_2, window_bounds = array<i64: 4, 2, 32>}, {pipeline_mode = #tpu.pipeline_mode<synchronous>, transform_indices = @transform_3, window_bounds = array<i64: 4, 288, 32>}, {pipeline_mode = #tpu.pipeline_mode<synchronous>, transform_indices = @transform_4, window_bounds = array<i64: 4, 2, 32>}, {pipeline_mode = #tpu.pipeline_mode<synchronous>, transform_indices = @transform_5, window_bounds = array<i64: 1024, 64>}, {transform_indices = @transform_6, window_bounds = array<i64: 1, 32, 32, 128>}]} {
    %cst = arith.constant 0.000000e+00 : f32
    %0 = vector.broadcast %cst : f32 to vector<10x10x16xf32>
    %c0 = arith.constant 0 : index
    %c0_0 = arith.constant 0 : index
    %c0_1 = arith.constant 0 : index
    %1 = vector.load %arg8[%c0, %c0_0, %c0_1] : memref<10x10x16xf32, #tpu.memory_space<vmem>>, vector<10x10x16xf32>
    tpu.vector_store %arg8[%c0, %c0_0, %c0_1], %0 {strides = array<i32>} : memref<10x10x16xf32, #tpu.memory_space<vmem>>, vector<10x10x16xf32>,
    %cst_2 = arith.constant 0.000000e+00 : f32
    %2 = vector.broadcast %cst_2 : f32 to vector<10x10x32xf32>
    %c0_3 = arith.constant 0 : index
    %c0_4 = arith.constant 0 : index
    %c0_5 = arith.constant 0 : index
    %3 = vector.load %arg9[%c0_3, %c0_4, %c0_5] : memref<10x10x32xf32, #tpu.memory_space<vmem>>, vector<10x10x32xf32>
    tpu.vector_store %arg9[%c0_3, %c0_4, %c0_5], %2 {strides = array<i32>} : memref<10x10x32xf32, #tpu.memory_space<vmem>>, vector<10x10x32xf32>,
    %c0_6 = arith.constant 0 : index
    %c0_7 = arith.constant 0 : index
    %c0_8 = arith.constant 0 : index
    %c0_9 = arith.constant 0 : index
    %4 = vector.load %arg1[%c0_6, %c0_7, %c0_8, %c0_9] : memref<1x8x8x64xf32, #tpu.memory_space<vmem>>, vector<1x8x8x16xf32>
    %5 = vector.shape_cast %4 : vector<1x8x8x16xf32> to vector<8x8x16xf32>
    %c1 = arith.constant 1 : index
    %c1_10 = arith.constant 1 : index
    %c0_11 = arith.constant 0 : index
    %6 = vector.load %arg8[%c1, %c1_10, %c0_11] : memref<10x10x16xf32, #tpu.memory_space<vmem>>, vector<8x8x16xf32>
    tpu.vector_store %arg8[%c1, %c1_10, %c0_11], %5 {strides = array<i32>} : memref<10x10x16xf32, #tpu.memory_space<vmem>>, vector<8x8x16xf32>,
    %c0_12 = arith.constant 0 : index
    %c0_13 = arith.constant 0 : index
    %c0_14 = arith.constant 0 : index
    %7 = vector.load %arg8[%c0_12, %c0_13, %c0_14] : memref<10x10x16xf32, #tpu.memory_space<vmem>>, vector<8x8x16xf32>
    %8 = vector.shape_cast %7 : vector<8x8x16xf32> to vector<64x16xf32>
    %c0_15 = arith.constant 0 : index
    %c1_16 = arith.constant 1 : index
    %c0_17 = arith.constant 0 : index
    %9 = vector.load %arg8[%c0_15, %c1_16, %c0_17] : memref<10x10x16xf32, #tpu.memory_space<vmem>>, vector<8x8x16xf32>
    %10 = vector.shape_cast %9 : vector<8x8x16xf32> to vector<64x16xf32>
    %c0_18 = arith.constant 0 : index
    %c2 = arith.constant 2 : index
    %c0_19 = arith.constant 0 : index
    %11 = vector.load %arg8[%c0_18, %c2, %c0_19] : memref<10x10x16xf32, #tpu.memory_space<vmem>>, vector<8x8x16xf32>
    %12 = vector.shape_cast %11 : vector<8x8x16xf32> to vector<64x16xf32>
    %c1_20 = arith.constant 1 : index
    %c0_21 = arith.constant 0 : index
    %c0_22 = arith.constant 0 : index
    %13 = vector.load %arg8[%c1_20, %c0_21, %c0_22] : memref<10x10x16xf32, #tpu.memory_space<vmem>>, vector<8x8x16xf32>
    %14 = vector.shape_cast %13 : vector<8x8x16xf32> to vector<64x16xf32>
    %c1_23 = arith.constant 1 : index
    %c1_24 = arith.constant 1 : index
    %c0_25 = arith.constant 0 : index
    %15 = vector.load %arg8[%c1_23, %c1_24, %c0_25] : memref<10x10x16xf32, #tpu.memory_space<vmem>>, vector<8x8x16xf32>
    %16 = vector.shape_cast %15 : vector<8x8x16xf32> to vector<64x16xf32>
    %c1_26 = arith.constant 1 : index
    %c2_27 = arith.constant 2 : index
    %c0_28 = arith.constant 0 : index
    %17 = vector.load %arg8[%c1_26, %c2_27, %c0_28] : memref<10x10x16xf32, #tpu.memory_space<vmem>>, vector<8x8x16xf32>
    %18 = vector.shape_cast %17 : vector<8x8x16xf32> to vector<64x16xf32>
    %c2_29 = arith.constant 2 : index
    %c0_30 = arith.constant 0 : index
    %c0_31 = arith.constant 0 : index
    %19 = vector.load %arg8[%c2_29, %c0_30, %c0_31] : memref<10x10x16xf32, #tpu.memory_space<vmem>>, vector<8x8x16xf32>
    %20 = vector.shape_cast %19 : vector<8x8x16xf32> to vector<64x16xf32>
    %c2_32 = arith.constant 2 : index
    %c1_33 = arith.constant 1 : index
    %c0_34 = arith.constant 0 : index
    %21 = vector.load %arg8[%c2_32, %c1_33, %c0_34] : memref<10x10x16xf32, #tpu.memory_space<vmem>>, vector<8x8x16xf32>
    %22 = vector.shape_cast %21 : vector<8x8x16xf32> to vector<64x16xf32>
    %c2_35 = arith.constant 2 : index
    %c2_36 = arith.constant 2 : index
    %c0_37 = arith.constant 0 : index
    %23 = vector.load %arg8[%c2_35, %c2_36, %c0_37] : memref<10x10x16xf32, #tpu.memory_space<vmem>>, vector<8x8x16xf32>
    %24 = vector.shape_cast %23 : vector<8x8x16xf32> to vector<64x16xf32>
    %25 = tpu.concatenate %8, %10, %12, %14, %16, %18, %20, %22, %24 in 1 : vector<64x16xf32>, vector<64x16xf32>, vector<64x16xf32>, vector<64x16xf32>, vector<64x16xf32>, vector<64x16xf32>, vector<64x16xf32>, vector<64x16xf32>, vector<64x16xf32> -> vector<64x144xf32>
    %c0_38 = arith.constant 0 : index
    %c0_39 = arith.constant 0 : index
    %c0_40 = arith.constant 0 : index
    %26 = vector.load %arg2[%c0_38, %c0_39, %c0_40] : memref<4x144x32xf32, #tpu.memory_space<vmem>>, vector<1x144x32xf32>
    %27 = vector.shape_cast %26 : vector<1x144x32xf32> to vector<144x32xf32>
    %cst_41 = arith.constant dense<0.000000e+00> : vector<64x32xf32>
    %28 = tpu.matmul %25, %27, %cst_41 {dimension_numbers = #tpu.dot_dimension_numbers<[1], [0], [0], [1], [0, 0, 1, 1], [], []>} : vector<64x144xf32>, vector<144x32xf32>, vector<64x32xf32> -> vector<64x32xf32>
    %c0_42 = arith.constant 0 : index
    %c0_43 = arith.constant 0 : index
    %c0_44 = arith.constant 0 : index
    %29 = vector.load %arg3[%c0_42, %c0_43, %c0_44] : memref<4x2x32xf32, #tpu.memory_space<vmem>>, vector<1x2x32xf32>
    %30 = vector.shape_cast %29 : vector<1x2x32xf32> to vector<2x32xf32>
    %31 = vector.extract_strided_slice %30 {offsets = [0, 0], sizes = [1, 32], strides = [1, 1]} : vector<2x32xf32> to vector<1x32xf32>
    %32 = vector.broadcast %31 : vector<1x32xf32> to vector<64x32xf32>
    %33 = arith.mulf %28, %32 : vector<64x32xf32>
    %34 = vector.extract_strided_slice %30 {offsets = [1, 0], sizes = [1, 32], strides = [1, 1]} : vector<2x32xf32> to vector<1x32xf32>
    %35 = vector.broadcast %34 : vector<1x32xf32> to vector<64x32xf32>
    %36 = arith.addf %33, %35 : vector<64x32xf32>
    %cst_45 = arith.constant 0.000000e+00 : f32
    %37 = vector.broadcast %cst_45 : f32 to vector<64x32xf32>
    %38 = arith.maximumf %36, %37 : vector<64x32xf32>
    %39 = vector.shape_cast %38 : vector<64x32xf32> to vector<8x8x32xf32>
    %c1_46 = arith.constant 1 : index
    %c1_47 = arith.constant 1 : index
    %c0_48 = arith.constant 0 : index
    %40 = vector.load %arg9[%c1_46, %c1_47, %c0_48] : memref<10x10x32xf32, #tpu.memory_space<vmem>>, vector<8x8x32xf32>
    tpu.vector_store %arg9[%c1_46, %c1_47, %c0_48], %39 {strides = array<i32>} : memref<10x10x32xf32, #tpu.memory_space<vmem>>, vector<8x8x32xf32>,
    %c0_49 = arith.constant 0 : index
    %c0_50 = arith.constant 0 : index
    %c0_51 = arith.constant 0 : index
    %41 = vector.load %arg9[%c0_49, %c0_50, %c0_51] : memref<10x10x32xf32, #tpu.memory_space<vmem>>, vector<8x8x32xf32>
    %42 = vector.shape_cast %41 : vector<8x8x32xf32> to vector<64x32xf32>
    %c0_52 = arith.constant 0 : index
    %c1_53 = arith.constant 1 : index
    %c0_54 = arith.constant 0 : index
    %43 = vector.load %arg9[%c0_52, %c1_53, %c0_54] : memref<10x10x32xf32, #tpu.memory_space<vmem>>, vector<8x8x32xf32>
    %44 = vector.shape_cast %43 : vector<8x8x32xf32> to vector<64x32xf32>
    %c0_55 = arith.constant 0 : index
    %c2_56 = arith.constant 2 : index
    %c0_57 = arith.constant 0 : index
    %45 = vector.load %arg9[%c0_55, %c2_56, %c0_57] : memref<10x10x32xf32, #tpu.memory_space<vmem>>, vector<8x8x32xf32>
    %46 = vector.shape_cast %45 : vector<8x8x32xf32> to vector<64x32xf32>
    %c1_58 = arith.constant 1 : index
    %c0_59 = arith.constant 0 : index
    %c0_60 = arith.constant 0 : index
    %47 = vector.load %arg9[%c1_58, %c0_59, %c0_60] : memref<10x10x32xf32, #tpu.memory_space<vmem>>, vector<8x8x32xf32>
    %48 = vector.shape_cast %47 : vector<8x8x32xf32> to vector<64x32xf32>
    %c1_61 = arith.constant 1 : index
    %c1_62 = arith.constant 1 : index
    %c0_63 = arith.constant 0 : index
    %49 = vector.load %arg9[%c1_61, %c1_62, %c0_63] : memref<10x10x32xf32, #tpu.memory_space<vmem>>, vector<8x8x32xf32>
    %50 = vector.shape_cast %49 : vector<8x8x32xf32> to vector<64x32xf32>
    %c1_64 = arith.constant 1 : index
    %c2_65 = arith.constant 2 : index
    %c0_66 = arith.constant 0 : index
    %51 = vector.load %arg9[%c1_64, %c2_65, %c0_66] : memref<10x10x32xf32, #tpu.memory_space<vmem>>, vector<8x8x32xf32>
    %52 = vector.shape_cast %51 : vector<8x8x32xf32> to vector<64x32xf32>
    %c2_67 = arith.constant 2 : index
    %c0_68 = arith.constant 0 : index
    %c0_69 = arith.constant 0 : index
    %53 = vector.load %arg9[%c2_67, %c0_68, %c0_69] : memref<10x10x32xf32, #tpu.memory_space<vmem>>, vector<8x8x32xf32>
    %54 = vector.shape_cast %53 : vector<8x8x32xf32> to vector<64x32xf32>
    %c2_70 = arith.constant 2 : index
    %c1_71 = arith.constant 1 : index
    %c0_72 = arith.constant 0 : index
    %55 = vector.load %arg9[%c2_70, %c1_71, %c0_72] : memref<10x10x32xf32, #tpu.memory_space<vmem>>, vector<8x8x32xf32>
    %56 = vector.shape_cast %55 : vector<8x8x32xf32> to vector<64x32xf32>
    %c2_73 = arith.constant 2 : index
    %c2_74 = arith.constant 2 : index
    %c0_75 = arith.constant 0 : index
    %57 = vector.load %arg9[%c2_73, %c2_74, %c0_75] : memref<10x10x32xf32, #tpu.memory_space<vmem>>, vector<8x8x32xf32>
    %58 = vector.shape_cast %57 : vector<8x8x32xf32> to vector<64x32xf32>
    %59 = tpu.concatenate %42, %44, %46, %48, %50, %52, %54, %56, %58 in 1 : vector<64x32xf32>, vector<64x32xf32>, vector<64x32xf32>, vector<64x32xf32>, vector<64x32xf32>, vector<64x32xf32>, vector<64x32xf32>, vector<64x32xf32>, vector<64x32xf32> -> vector<64x288xf32>
    %c0_76 = arith.constant 0 : index
    %c0_77 = arith.constant 0 : index
    %c0_78 = arith.constant 0 : index
    %60 = vector.load %arg4[%c0_76, %c0_77, %c0_78] : memref<4x288x32xf32, #tpu.memory_space<vmem>>, vector<1x288x32xf32>
    %61 = vector.shape_cast %60 : vector<1x288x32xf32> to vector<288x32xf32>
    %cst_79 = arith.constant dense<0.000000e+00> : vector<64x32xf32>
    %62 = tpu.matmul %59, %61, %cst_79 {dimension_numbers = #tpu.dot_dimension_numbers<[1], [0], [0], [1], [0, 0, 1, 1], [], []>} : vector<64x288xf32>, vector<288x32xf32>, vector<64x32xf32> -> vector<64x32xf32>
    %c0_80 = arith.constant 0 : index
    %c0_81 = arith.constant 0 : index
    %c0_82 = arith.constant 0 : index
    %63 = vector.load %arg5[%c0_80, %c0_81, %c0_82] : memref<4x2x32xf32, #tpu.memory_space<vmem>>, vector<1x2x32xf32>
    %64 = vector.shape_cast %63 : vector<1x2x32xf32> to vector<2x32xf32>
    %65 = vector.extract_strided_slice %64 {offsets = [0, 0], sizes = [1, 32], strides = [1, 1]} : vector<2x32xf32> to vector<1x32xf32>
    %66 = vector.broadcast %65 : vector<1x32xf32> to vector<64x32xf32>
    %67 = arith.mulf %62, %66 : vector<64x32xf32>
    %68 = vector.extract_strided_slice %64 {offsets = [1, 0], sizes = [1, 32], strides = [1, 1]} : vector<2x32xf32> to vector<1x32xf32>
    %69 = vector.broadcast %68 : vector<1x32xf32> to vector<64x32xf32>
    %70 = arith.addf %67, %69 : vector<64x32xf32>
    %cst_83 = arith.constant 0.000000e+00 : f32
    %71 = vector.broadcast %cst_83 : f32 to vector<64x32xf32>
    %72 = arith.maximumf %70, %71 : vector<64x32xf32>
    %c0_84 = arith.constant 0 : index
    %c0_85 = arith.constant 0 : index
    %73 = vector.load %arg10[%c0_84, %c0_85] : memref<64x128xf32, #tpu.memory_space<vmem>>, vector<64x32xf32>
    tpu.vector_store %arg10[%c0_84, %c0_85], %72 {strides = array<i32>} : memref<64x128xf32, #tpu.memory_space<vmem>>, vector<64x32xf32>,
    %c0_86 = arith.constant 0 : index
    %c0_87 = arith.constant 0 : index
    %c0_88 = arith.constant 0 : index
    %c16 = arith.constant 16 : index
    %74 = vector.load %arg1[%c0_86, %c0_87, %c0_88, %c16] : memref<1x8x8x64xf32, #tpu.memory_space<vmem>>, vector<1x8x8x16xf32>
    %75 = vector.shape_cast %74 : vector<1x8x8x16xf32> to vector<8x8x16xf32>
    %c1_89 = arith.constant 1 : index
    %c1_90 = arith.constant 1 : index
    %c0_91 = arith.constant 0 : index
    %76 = vector.load %arg8[%c1_89, %c1_90, %c0_91] : memref<10x10x16xf32, #tpu.memory_space<vmem>>, vector<8x8x16xf32>
    tpu.vector_store %arg8[%c1_89, %c1_90, %c0_91], %75 {strides = array<i32>} : memref<10x10x16xf32, #tpu.memory_space<vmem>>, vector<8x8x16xf32>,
    %c0_92 = arith.constant 0 : index
    %c0_93 = arith.constant 0 : index
    %c0_94 = arith.constant 0 : index
    %77 = vector.load %arg8[%c0_92, %c0_93, %c0_94] : memref<10x10x16xf32, #tpu.memory_space<vmem>>, vector<8x8x16xf32>
    %78 = vector.shape_cast %77 : vector<8x8x16xf32> to vector<64x16xf32>
    %c0_95 = arith.constant 0 : index
    %c1_96 = arith.constant 1 : index
    %c0_97 = arith.constant 0 : index
    %79 = vector.load %arg8[%c0_95, %c1_96, %c0_97] : memref<10x10x16xf32, #tpu.memory_space<vmem>>, vector<8x8x16xf32>
    %80 = vector.shape_cast %79 : vector<8x8x16xf32> to vector<64x16xf32>
    %c0_98 = arith.constant 0 : index
    %c2_99 = arith.constant 2 : index
    %c0_100 = arith.constant 0 : index
    %81 = vector.load %arg8[%c0_98, %c2_99, %c0_100] : memref<10x10x16xf32, #tpu.memory_space<vmem>>, vector<8x8x16xf32>
    %82 = vector.shape_cast %81 : vector<8x8x16xf32> to vector<64x16xf32>
    %c1_101 = arith.constant 1 : index
    %c0_102 = arith.constant 0 : index
    %c0_103 = arith.constant 0 : index
    %83 = vector.load %arg8[%c1_101, %c0_102, %c0_103] : memref<10x10x16xf32, #tpu.memory_space<vmem>>, vector<8x8x16xf32>
    %84 = vector.shape_cast %83 : vector<8x8x16xf32> to vector<64x16xf32>
    %c1_104 = arith.constant 1 : index
    %c1_105 = arith.constant 1 : index
    %c0_106 = arith.constant 0 : index
    %85 = vector.load %arg8[%c1_104, %c1_105, %c0_106] : memref<10x10x16xf32, #tpu.memory_space<vmem>>, vector<8x8x16xf32>
    %86 = vector.shape_cast %85 : vector<8x8x16xf32> to vector<64x16xf32>
    %c1_107 = arith.constant 1 : index
    %c2_108 = arith.constant 2 : index
    %c0_109 = arith.constant 0 : index
    %87 = vector.load %arg8[%c1_107, %c2_108, %c0_109] : memref<10x10x16xf32, #tpu.memory_space<vmem>>, vector<8x8x16xf32>
    %88 = vector.shape_cast %87 : vector<8x8x16xf32> to vector<64x16xf32>
    %c2_110 = arith.constant 2 : index
    %c0_111 = arith.constant 0 : index
    %c0_112 = arith.constant 0 : index
    %89 = vector.load %arg8[%c2_110, %c0_111, %c0_112] : memref<10x10x16xf32, #tpu.memory_space<vmem>>, vector<8x8x16xf32>
    %90 = vector.shape_cast %89 : vector<8x8x16xf32> to vector<64x16xf32>
    %c2_113 = arith.constant 2 : index
    %c1_114 = arith.constant 1 : index
    %c0_115 = arith.constant 0 : index
    %91 = vector.load %arg8[%c2_113, %c1_114, %c0_115] : memref<10x10x16xf32, #tpu.memory_space<vmem>>, vector<8x8x16xf32>
    %92 = vector.shape_cast %91 : vector<8x8x16xf32> to vector<64x16xf32>
    %c2_116 = arith.constant 2 : index
    %c2_117 = arith.constant 2 : index
    %c0_118 = arith.constant 0 : index
    %93 = vector.load %arg8[%c2_116, %c2_117, %c0_118] : memref<10x10x16xf32, #tpu.memory_space<vmem>>, vector<8x8x16xf32>
    %94 = vector.shape_cast %93 : vector<8x8x16xf32> to vector<64x16xf32>
    %95 = tpu.concatenate %78, %80, %82, %84, %86, %88, %90, %92, %94 in 1 : vector<64x16xf32>, vector<64x16xf32>, vector<64x16xf32>, vector<64x16xf32>, vector<64x16xf32>, vector<64x16xf32>, vector<64x16xf32>, vector<64x16xf32>, vector<64x16xf32> -> vector<64x144xf32>
    %c1_119 = arith.constant 1 : index
    %c0_120 = arith.constant 0 : index
    %c0_121 = arith.constant 0 : index
    %96 = vector.load %arg2[%c1_119, %c0_120, %c0_121] : memref<4x144x32xf32, #tpu.memory_space<vmem>>, vector<1x144x32xf32>
    %97 = vector.shape_cast %96 : vector<1x144x32xf32> to vector<144x32xf32>
    %cst_122 = arith.constant dense<0.000000e+00> : vector<64x32xf32>
    %98 = tpu.matmul %95, %97, %cst_122 {dimension_numbers = #tpu.dot_dimension_numbers<[1], [0], [0], [1], [0, 0, 1, 1], [], []>} : vector<64x144xf32>, vector<144x32xf32>, vector<64x32xf32> -> vector<64x32xf32>
    %c1_123 = arith.constant 1 : index
    %c0_124 = arith.constant 0 : index
    %c0_125 = arith.constant 0 : index
    %99 = vector.load %arg3[%c1_123, %c0_124, %c0_125] : memref<4x2x32xf32, #tpu.memory_space<vmem>>, vector<1x2x32xf32>
    %100 = vector.shape_cast %99 : vector<1x2x32xf32> to vector<2x32xf32>
    %101 = vector.extract_strided_slice %100 {offsets = [0, 0], sizes = [1, 32], strides = [1, 1]} : vector<2x32xf32> to vector<1x32xf32>
    %102 = vector.broadcast %101 : vector<1x32xf32> to vector<64x32xf32>
    %103 = arith.mulf %98, %102 : vector<64x32xf32>
    %104 = vector.extract_strided_slice %100 {offsets = [1, 0], sizes = [1, 32], strides = [1, 1]} : vector<2x32xf32> to vector<1x32xf32>
    %105 = vector.broadcast %104 : vector<1x32xf32> to vector<64x32xf32>
    %106 = arith.addf %103, %105 : vector<64x32xf32>
    %cst_126 = arith.constant 0.000000e+00 : f32
    %107 = vector.broadcast %cst_126 : f32 to vector<64x32xf32>
    %108 = arith.maximumf %106, %107 : vector<64x32xf32>
    %109 = vector.shape_cast %108 : vector<64x32xf32> to vector<8x8x32xf32>
    %c1_127 = arith.constant 1 : index
    %c1_128 = arith.constant 1 : index
    %c0_129 = arith.constant 0 : index
    %110 = vector.load %arg9[%c1_127, %c1_128, %c0_129] : memref<10x10x32xf32, #tpu.memory_space<vmem>>, vector<8x8x32xf32>
    tpu.vector_store %arg9[%c1_127, %c1_128, %c0_129], %109 {strides = array<i32>} : memref<10x10x32xf32, #tpu.memory_space<vmem>>, vector<8x8x32xf32>,
    %c0_130 = arith.constant 0 : index
    %c0_131 = arith.constant 0 : index
    %c0_132 = arith.constant 0 : index
    %111 = vector.load %arg9[%c0_130, %c0_131, %c0_132] : memref<10x10x32xf32, #tpu.memory_space<vmem>>, vector<8x8x32xf32>
    %112 = vector.shape_cast %111 : vector<8x8x32xf32> to vector<64x32xf32>
    %c0_133 = arith.constant 0 : index
    %c1_134 = arith.constant 1 : index
    %c0_135 = arith.constant 0 : index
    %113 = vector.load %arg9[%c0_133, %c1_134, %c0_135] : memref<10x10x32xf32, #tpu.memory_space<vmem>>, vector<8x8x32xf32>
    %114 = vector.shape_cast %113 : vector<8x8x32xf32> to vector<64x32xf32>
    %c0_136 = arith.constant 0 : index
    %c2_137 = arith.constant 2 : index
    %c0_138 = arith.constant 0 : index
    %115 = vector.load %arg9[%c0_136, %c2_137, %c0_138] : memref<10x10x32xf32, #tpu.memory_space<vmem>>, vector<8x8x32xf32>
    %116 = vector.shape_cast %115 : vector<8x8x32xf32> to vector<64x32xf32>
    %c1_139 = arith.constant 1 : index
    %c0_140 = arith.constant 0 : index
    %c0_141 = arith.constant 0 : index
    %117 = vector.load %arg9[%c1_139, %c0_140, %c0_141] : memref<10x10x32xf32, #tpu.memory_space<vmem>>, vector<8x8x32xf32>
    %118 = vector.shape_cast %117 : vector<8x8x32xf32> to vector<64x32xf32>
    %c1_142 = arith.constant 1 : index
    %c1_143 = arith.constant 1 : index
    %c0_144 = arith.constant 0 : index
    %119 = vector.load %arg9[%c1_142, %c1_143, %c0_144] : memref<10x10x32xf32, #tpu.memory_space<vmem>>, vector<8x8x32xf32>
    %120 = vector.shape_cast %119 : vector<8x8x32xf32> to vector<64x32xf32>
    %c1_145 = arith.constant 1 : index
    %c2_146 = arith.constant 2 : index
    %c0_147 = arith.constant 0 : index
    %121 = vector.load %arg9[%c1_145, %c2_146, %c0_147] : memref<10x10x32xf32, #tpu.memory_space<vmem>>, vector<8x8x32xf32>
    %122 = vector.shape_cast %121 : vector<8x8x32xf32> to vector<64x32xf32>
    %c2_148 = arith.constant 2 : index
    %c0_149 = arith.constant 0 : index
    %c0_150 = arith.constant 0 : index
    %123 = vector.load %arg9[%c2_148, %c0_149, %c0_150] : memref<10x10x32xf32, #tpu.memory_space<vmem>>, vector<8x8x32xf32>
    %124 = vector.shape_cast %123 : vector<8x8x32xf32> to vector<64x32xf32>
    %c2_151 = arith.constant 2 : index
    %c1_152 = arith.constant 1 : index
    %c0_153 = arith.constant 0 : index
    %125 = vector.load %arg9[%c2_151, %c1_152, %c0_153] : memref<10x10x32xf32, #tpu.memory_space<vmem>>, vector<8x8x32xf32>
    %126 = vector.shape_cast %125 : vector<8x8x32xf32> to vector<64x32xf32>
    %c2_154 = arith.constant 2 : index
    %c2_155 = arith.constant 2 : index
    %c0_156 = arith.constant 0 : index
    %127 = vector.load %arg9[%c2_154, %c2_155, %c0_156] : memref<10x10x32xf32, #tpu.memory_space<vmem>>, vector<8x8x32xf32>
    %128 = vector.shape_cast %127 : vector<8x8x32xf32> to vector<64x32xf32>
    %129 = tpu.concatenate %112, %114, %116, %118, %120, %122, %124, %126, %128 in 1 : vector<64x32xf32>, vector<64x32xf32>, vector<64x32xf32>, vector<64x32xf32>, vector<64x32xf32>, vector<64x32xf32>, vector<64x32xf32>, vector<64x32xf32>, vector<64x32xf32> -> vector<64x288xf32>
    %c1_157 = arith.constant 1 : index
    %c0_158 = arith.constant 0 : index
    %c0_159 = arith.constant 0 : index
    %130 = vector.load %arg4[%c1_157, %c0_158, %c0_159] : memref<4x288x32xf32, #tpu.memory_space<vmem>>, vector<1x288x32xf32>
    %131 = vector.shape_cast %130 : vector<1x288x32xf32> to vector<288x32xf32>
    %cst_160 = arith.constant dense<0.000000e+00> : vector<64x32xf32>
    %132 = tpu.matmul %129, %131, %cst_160 {dimension_numbers = #tpu.dot_dimension_numbers<[1], [0], [0], [1], [0, 0, 1, 1], [], []>} : vector<64x288xf32>, vector<288x32xf32>, vector<64x32xf32> -> vector<64x32xf32>
    %c1_161 = arith.constant 1 : index
    %c0_162 = arith.constant 0 : index
    %c0_163 = arith.constant 0 : index
    %133 = vector.load %arg5[%c1_161, %c0_162, %c0_163] : memref<4x2x32xf32, #tpu.memory_space<vmem>>, vector<1x2x32xf32>
    %134 = vector.shape_cast %133 : vector<1x2x32xf32> to vector<2x32xf32>
    %135 = vector.extract_strided_slice %134 {offsets = [0, 0], sizes = [1, 32], strides = [1, 1]} : vector<2x32xf32> to vector<1x32xf32>
    %136 = vector.broadcast %135 : vector<1x32xf32> to vector<64x32xf32>
    %137 = arith.mulf %132, %136 : vector<64x32xf32>
    %138 = vector.extract_strided_slice %134 {offsets = [1, 0], sizes = [1, 32], strides = [1, 1]} : vector<2x32xf32> to vector<1x32xf32>
    %139 = vector.broadcast %138 : vector<1x32xf32> to vector<64x32xf32>
    %140 = arith.addf %137, %139 : vector<64x32xf32>
    %cst_164 = arith.constant 0.000000e+00 : f32
    %141 = vector.broadcast %cst_164 : f32 to vector<64x32xf32>
    %142 = arith.maximumf %140, %141 : vector<64x32xf32>
    %c0_165 = arith.constant 0 : index
    %c32 = arith.constant 32 : index
    %143 = vector.load %arg10[%c0_165, %c32] : memref<64x128xf32, #tpu.memory_space<vmem>>, vector<64x32xf32>
    tpu.vector_store %arg10[%c0_165, %c32], %142 {strides = array<i32>} : memref<64x128xf32, #tpu.memory_space<vmem>>, vector<64x32xf32>,
    %c0_166 = arith.constant 0 : index
    %c0_167 = arith.constant 0 : index
    %c0_168 = arith.constant 0 : index
    %c32_169 = arith.constant 32 : index
    %144 = vector.load %arg1[%c0_166, %c0_167, %c0_168, %c32_169] : memref<1x8x8x64xf32, #tpu.memory_space<vmem>>, vector<1x8x8x16xf32>
    %145 = vector.shape_cast %144 : vector<1x8x8x16xf32> to vector<8x8x16xf32>
    %c1_170 = arith.constant 1 : index
    %c1_171 = arith.constant 1 : index
    %c0_172 = arith.constant 0 : index
    %146 = vector.load %arg8[%c1_170, %c1_171, %c0_172] : memref<10x10x16xf32, #tpu.memory_space<vmem>>, vector<8x8x16xf32>
    tpu.vector_store %arg8[%c1_170, %c1_171, %c0_172], %145 {strides = array<i32>} : memref<10x10x16xf32, #tpu.memory_space<vmem>>, vector<8x8x16xf32>,
    %c0_173 = arith.constant 0 : index
    %c0_174 = arith.constant 0 : index
    %c0_175 = arith.constant 0 : index
    %147 = vector.load %arg8[%c0_173, %c0_174, %c0_175] : memref<10x10x16xf32, #tpu.memory_space<vmem>>, vector<8x8x16xf32>
    %148 = vector.shape_cast %147 : vector<8x8x16xf32> to vector<64x16xf32>
    %c0_176 = arith.constant 0 : index
    %c1_177 = arith.constant 1 : index
    %c0_178 = arith.constant 0 : index
    %149 = vector.load %arg8[%c0_176, %c1_177, %c0_178] : memref<10x10x16xf32, #tpu.memory_space<vmem>>, vector<8x8x16xf32>
    %150 = vector.shape_cast %149 : vector<8x8x16xf32> to vector<64x16xf32>
    %c0_179 = arith.constant 0 : index
    %c2_180 = arith.constant 2 : index
    %c0_181 = arith.constant 0 : index
    %151 = vector.load %arg8[%c0_179, %c2_180, %c0_181] : memref<10x10x16xf32, #tpu.memory_space<vmem>>, vector<8x8x16xf32>
    %152 = vector.shape_cast %151 : vector<8x8x16xf32> to vector<64x16xf32>
    %c1_182 = arith.constant 1 : index
    %c0_183 = arith.constant 0 : index
    %c0_184 = arith.constant 0 : index
    %153 = vector.load %arg8[%c1_182, %c0_183, %c0_184] : memref<10x10x16xf32, #tpu.memory_space<vmem>>, vector<8x8x16xf32>
    %154 = vector.shape_cast %153 : vector<8x8x16xf32> to vector<64x16xf32>
    %c1_185 = arith.constant 1 : index
    %c1_186 = arith.constant 1 : index
    %c0_187 = arith.constant 0 : index
    %155 = vector.load %arg8[%c1_185, %c1_186, %c0_187] : memref<10x10x16xf32, #tpu.memory_space<vmem>>, vector<8x8x16xf32>
    %156 = vector.shape_cast %155 : vector<8x8x16xf32> to vector<64x16xf32>
    %c1_188 = arith.constant 1 : index
    %c2_189 = arith.constant 2 : index
    %c0_190 = arith.constant 0 : index
    %157 = vector.load %arg8[%c1_188, %c2_189, %c0_190] : memref<10x10x16xf32, #tpu.memory_space<vmem>>, vector<8x8x16xf32>
    %158 = vector.shape_cast %157 : vector<8x8x16xf32> to vector<64x16xf32>
    %c2_191 = arith.constant 2 : index
    %c0_192 = arith.constant 0 : index
    %c0_193 = arith.constant 0 : index
    %159 = vector.load %arg8[%c2_191, %c0_192, %c0_193] : memref<10x10x16xf32, #tpu.memory_space<vmem>>, vector<8x8x16xf32>
    %160 = vector.shape_cast %159 : vector<8x8x16xf32> to vector<64x16xf32>
    %c2_194 = arith.constant 2 : index
    %c1_195 = arith.constant 1 : index
    %c0_196 = arith.constant 0 : index
    %161 = vector.load %arg8[%c2_194, %c1_195, %c0_196] : memref<10x10x16xf32, #tpu.memory_space<vmem>>, vector<8x8x16xf32>
    %162 = vector.shape_cast %161 : vector<8x8x16xf32> to vector<64x16xf32>
    %c2_197 = arith.constant 2 : index
    %c2_198 = arith.constant 2 : index
    %c0_199 = arith.constant 0 : index
    %163 = vector.load %arg8[%c2_197, %c2_198, %c0_199] : memref<10x10x16xf32, #tpu.memory_space<vmem>>, vector<8x8x16xf32>
    %164 = vector.shape_cast %163 : vector<8x8x16xf32> to vector<64x16xf32>
    %165 = tpu.concatenate %148, %150, %152, %154, %156, %158, %160, %162, %164 in 1 : vector<64x16xf32>, vector<64x16xf32>, vector<64x16xf32>, vector<64x16xf32>, vector<64x16xf32>, vector<64x16xf32>, vector<64x16xf32>, vector<64x16xf32>, vector<64x16xf32> -> vector<64x144xf32>
    %c2_200 = arith.constant 2 : index
    %c0_201 = arith.constant 0 : index
    %c0_202 = arith.constant 0 : index
    %166 = vector.load %arg2[%c2_200, %c0_201, %c0_202] : memref<4x144x32xf32, #tpu.memory_space<vmem>>, vector<1x144x32xf32>
    %167 = vector.shape_cast %166 : vector<1x144x32xf32> to vector<144x32xf32>
    %cst_203 = arith.constant dense<0.000000e+00> : vector<64x32xf32>
    %168 = tpu.matmul %165, %167, %cst_203 {dimension_numbers = #tpu.dot_dimension_numbers<[1], [0], [0], [1], [0, 0, 1, 1], [], []>} : vector<64x144xf32>, vector<144x32xf32>, vector<64x32xf32> -> vector<64x32xf32>
    %c2_204 = arith.constant 2 : index
    %c0_205 = arith.constant 0 : index
    %c0_206 = arith.constant 0 : index
    %169 = vector.load %arg3[%c2_204, %c0_205, %c0_206] : memref<4x2x32xf32, #tpu.memory_space<vmem>>, vector<1x2x32xf32>
    %170 = vector.shape_cast %169 : vector<1x2x32xf32> to vector<2x32xf32>
    %171 = vector.extract_strided_slice %170 {offsets = [0, 0], sizes = [1, 32], strides = [1, 1]} : vector<2x32xf32> to vector<1x32xf32>
    %172 = vector.broadcast %171 : vector<1x32xf32> to vector<64x32xf32>
    %173 = arith.mulf %168, %172 : vector<64x32xf32>
    %174 = vector.extract_strided_slice %170 {offsets = [1, 0], sizes = [1, 32], strides = [1, 1]} : vector<2x32xf32> to vector<1x32xf32>
    %175 = vector.broadcast %174 : vector<1x32xf32> to vector<64x32xf32>
    %176 = arith.addf %173, %175 : vector<64x32xf32>
    %cst_207 = arith.constant 0.000000e+00 : f32
    %177 = vector.broadcast %cst_207 : f32 to vector<64x32xf32>
    %178 = arith.maximumf %176, %177 : vector<64x32xf32>
    %179 = vector.shape_cast %178 : vector<64x32xf32> to vector<8x8x32xf32>
    %c1_208 = arith.constant 1 : index
    %c1_209 = arith.constant 1 : index
    %c0_210 = arith.constant 0 : index
    %180 = vector.load %arg9[%c1_208, %c1_209, %c0_210] : memref<10x10x32xf32, #tpu.memory_space<vmem>>, vector<8x8x32xf32>
    tpu.vector_store %arg9[%c1_208, %c1_209, %c0_210], %179 {strides = array<i32>} : memref<10x10x32xf32, #tpu.memory_space<vmem>>, vector<8x8x32xf32>,
    %c0_211 = arith.constant 0 : index
    %c0_212 = arith.constant 0 : index
    %c0_213 = arith.constant 0 : index
    %181 = vector.load %arg9[%c0_211, %c0_212, %c0_213] : memref<10x10x32xf32, #tpu.memory_space<vmem>>, vector<8x8x32xf32>
    %182 = vector.shape_cast %181 : vector<8x8x32xf32> to vector<64x32xf32>
    %c0_214 = arith.constant 0 : index
    %c1_215 = arith.constant 1 : index
    %c0_216 = arith.constant 0 : index
    %183 = vector.load %arg9[%c0_214, %c1_215, %c0_216] : memref<10x10x32xf32, #tpu.memory_space<vmem>>, vector<8x8x32xf32>
    %184 = vector.shape_cast %183 : vector<8x8x32xf32> to vector<64x32xf32>
    %c0_217 = arith.constant 0 : index
    %c2_218 = arith.constant 2 : index
    %c0_219 = arith.constant 0 : index
    %185 = vector.load %arg9[%c0_217, %c2_218, %c0_219] : memref<10x10x32xf32, #tpu.memory_space<vmem>>, vector<8x8x32xf32>
    %186 = vector.shape_cast %185 : vector<8x8x32xf32> to vector<64x32xf32>
    %c1_220 = arith.constant 1 : index
    %c0_221 = arith.constant 0 : index
    %c0_222 = arith.constant 0 : index
    %187 = vector.load %arg9[%c1_220, %c0_221, %c0_222] : memref<10x10x32xf32, #tpu.memory_space<vmem>>, vector<8x8x32xf32>
    %188 = vector.shape_cast %187 : vector<8x8x32xf32> to vector<64x32xf32>
    %c1_223 = arith.constant 1 : index
    %c1_224 = arith.constant 1 : index
    %c0_225 = arith.constant 0 : index
    %189 = vector.load %arg9[%c1_223, %c1_224, %c0_225] : memref<10x10x32xf32, #tpu.memory_space<vmem>>, vector<8x8x32xf32>
    %190 = vector.shape_cast %189 : vector<8x8x32xf32> to vector<64x32xf32>
    %c1_226 = arith.constant 1 : index
    %c2_227 = arith.constant 2 : index
    %c0_228 = arith.constant 0 : index
    %191 = vector.load %arg9[%c1_226, %c2_227, %c0_228] : memref<10x10x32xf32, #tpu.memory_space<vmem>>, vector<8x8x32xf32>
    %192 = vector.shape_cast %191 : vector<8x8x32xf32> to vector<64x32xf32>
    %c2_229 = arith.constant 2 : index
    %c0_230 = arith.constant 0 : index
    %c0_231 = arith.constant 0 : index
    %193 = vector.load %arg9[%c2_229, %c0_230, %c0_231] : memref<10x10x32xf32, #tpu.memory_space<vmem>>, vector<8x8x32xf32>
    %194 = vector.shape_cast %193 : vector<8x8x32xf32> to vector<64x32xf32>
    %c2_232 = arith.constant 2 : index
    %c1_233 = arith.constant 1 : index
    %c0_234 = arith.constant 0 : index
    %195 = vector.load %arg9[%c2_232, %c1_233, %c0_234] : memref<10x10x32xf32, #tpu.memory_space<vmem>>, vector<8x8x32xf32>
    %196 = vector.shape_cast %195 : vector<8x8x32xf32> to vector<64x32xf32>
    %c2_235 = arith.constant 2 : index
    %c2_236 = arith.constant 2 : index
    %c0_237 = arith.constant 0 : index
    %197 = vector.load %arg9[%c2_235, %c2_236, %c0_237] : memref<10x10x32xf32, #tpu.memory_space<vmem>>, vector<8x8x32xf32>
    %198 = vector.shape_cast %197 : vector<8x8x32xf32> to vector<64x32xf32>
    %199 = tpu.concatenate %182, %184, %186, %188, %190, %192, %194, %196, %198 in 1 : vector<64x32xf32>, vector<64x32xf32>, vector<64x32xf32>, vector<64x32xf32>, vector<64x32xf32>, vector<64x32xf32>, vector<64x32xf32>, vector<64x32xf32>, vector<64x32xf32> -> vector<64x288xf32>
    %c2_238 = arith.constant 2 : index
    %c0_239 = arith.constant 0 : index
    %c0_240 = arith.constant 0 : index
    %200 = vector.load %arg4[%c2_238, %c0_239, %c0_240] : memref<4x288x32xf32, #tpu.memory_space<vmem>>, vector<1x288x32xf32>
    %201 = vector.shape_cast %200 : vector<1x288x32xf32> to vector<288x32xf32>
    %cst_241 = arith.constant dense<0.000000e+00> : vector<64x32xf32>
    %202 = tpu.matmul %199, %201, %cst_241 {dimension_numbers = #tpu.dot_dimension_numbers<[1], [0], [0], [1], [0, 0, 1, 1], [], []>} : vector<64x288xf32>, vector<288x32xf32>, vector<64x32xf32> -> vector<64x32xf32>
    %c2_242 = arith.constant 2 : index
    %c0_243 = arith.constant 0 : index
    %c0_244 = arith.constant 0 : index
    %203 = vector.load %arg5[%c2_242, %c0_243, %c0_244] : memref<4x2x32xf32, #tpu.memory_space<vmem>>, vector<1x2x32xf32>
    %204 = vector.shape_cast %203 : vector<1x2x32xf32> to vector<2x32xf32>
    %205 = vector.extract_strided_slice %204 {offsets = [0, 0], sizes = [1, 32], strides = [1, 1]} : vector<2x32xf32> to vector<1x32xf32>
    %206 = vector.broadcast %205 : vector<1x32xf32> to vector<64x32xf32>
    %207 = arith.mulf %202, %206 : vector<64x32xf32>
    %208 = vector.extract_strided_slice %204 {offsets = [1, 0], sizes = [1, 32], strides = [1, 1]} : vector<2x32xf32> to vector<1x32xf32>
    %209 = vector.broadcast %208 : vector<1x32xf32> to vector<64x32xf32>
    %210 = arith.addf %207, %209 : vector<64x32xf32>
    %cst_245 = arith.constant 0.000000e+00 : f32
    %211 = vector.broadcast %cst_245 : f32 to vector<64x32xf32>
    %212 = arith.maximumf %210, %211 : vector<64x32xf32>
    %c0_246 = arith.constant 0 : index
    %c64 = arith.constant 64 : index
    %213 = vector.load %arg10[%c0_246, %c64] : memref<64x128xf32, #tpu.memory_space<vmem>>, vector<64x32xf32>
    tpu.vector_store %arg10[%c0_246, %c64], %212 {strides = array<i32>} : memref<64x128xf32, #tpu.memory_space<vmem>>, vector<64x32xf32>,
    %c0_247 = arith.constant 0 : index
    %c0_248 = arith.constant 0 : index
    %c0_249 = arith.constant 0 : index
    %c48 = arith.constant 48 : index
    %214 = vector.load %arg1[%c0_247, %c0_248, %c0_249, %c48] : memref<1x8x8x64xf32, #tpu.memory_space<vmem>>, vector<1x8x8x16xf32>
    %215 = vector.shape_cast %214 : vector<1x8x8x16xf32> to vector<8x8x16xf32>
    %c1_250 = arith.constant 1 : index
    %c1_251 = arith.constant 1 : index
    %c0_252 = arith.constant 0 : index
    %216 = vector.load %arg8[%c1_250, %c1_251, %c0_252] : memref<10x10x16xf32, #tpu.memory_space<vmem>>, vector<8x8x16xf32>
    tpu.vector_store %arg8[%c1_250, %c1_251, %c0_252], %215 {strides = array<i32>} : memref<10x10x16xf32, #tpu.memory_space<vmem>>, vector<8x8x16xf32>,
    %c0_253 = arith.constant 0 : index
    %c0_254 = arith.constant 0 : index
    %c0_255 = arith.constant 0 : index
    %217 = vector.load %arg8[%c0_253, %c0_254, %c0_255] : memref<10x10x16xf32, #tpu.memory_space<vmem>>, vector<8x8x16xf32>
    %218 = vector.shape_cast %217 : vector<8x8x16xf32> to vector<64x16xf32>
    %c0_256 = arith.constant 0 : index
    %c1_257 = arith.constant 1 : index
    %c0_258 = arith.constant 0 : index
    %219 = vector.load %arg8[%c0_256, %c1_257, %c0_258] : memref<10x10x16xf32, #tpu.memory_space<vmem>>, vector<8x8x16xf32>
    %220 = vector.shape_cast %219 : vector<8x8x16xf32> to vector<64x16xf32>
    %c0_259 = arith.constant 0 : index
    %c2_260 = arith.constant 2 : index
    %c0_261 = arith.constant 0 : index
    %221 = vector.load %arg8[%c0_259, %c2_260, %c0_261] : memref<10x10x16xf32, #tpu.memory_space<vmem>>, vector<8x8x16xf32>
    %222 = vector.shape_cast %221 : vector<8x8x16xf32> to vector<64x16xf32>
    %c1_262 = arith.constant 1 : index
    %c0_263 = arith.constant 0 : index
    %c0_264 = arith.constant 0 : index
    %223 = vector.load %arg8[%c1_262, %c0_263, %c0_264] : memref<10x10x16xf32, #tpu.memory_space<vmem>>, vector<8x8x16xf32>
    %224 = vector.shape_cast %223 : vector<8x8x16xf32> to vector<64x16xf32>
    %c1_265 = arith.constant 1 : index
    %c1_266 = arith.constant 1 : index
    %c0_267 = arith.constant 0 : index
    %225 = vector.load %arg8[%c1_265, %c1_266, %c0_267] : memref<10x10x16xf32, #tpu.memory_space<vmem>>, vector<8x8x16xf32>
    %226 = vector.shape_cast %225 : vector<8x8x16xf32> to vector<64x16xf32>
    %c1_268 = arith.constant 1 : index
    %c2_269 = arith.constant 2 : index
    %c0_270 = arith.constant 0 : index
    %227 = vector.load %arg8[%c1_268, %c2_269, %c0_270] : memref<10x10x16xf32, #tpu.memory_space<vmem>>, vector<8x8x16xf32>
    %228 = vector.shape_cast %227 : vector<8x8x16xf32> to vector<64x16xf32>
    %c2_271 = arith.constant 2 : index
    %c0_272 = arith.constant 0 : index
    %c0_273 = arith.constant 0 : index
    %229 = vector.load %arg8[%c2_271, %c0_272, %c0_273] : memref<10x10x16xf32, #tpu.memory_space<vmem>>, vector<8x8x16xf32>
    %230 = vector.shape_cast %229 : vector<8x8x16xf32> to vector<64x16xf32>
    %c2_274 = arith.constant 2 : index
    %c1_275 = arith.constant 1 : index
    %c0_276 = arith.constant 0 : index
    %231 = vector.load %arg8[%c2_274, %c1_275, %c0_276] : memref<10x10x16xf32, #tpu.memory_space<vmem>>, vector<8x8x16xf32>
    %232 = vector.shape_cast %231 : vector<8x8x16xf32> to vector<64x16xf32>
    %c2_277 = arith.constant 2 : index
    %c2_278 = arith.constant 2 : index
    %c0_279 = arith.constant 0 : index
    %233 = vector.load %arg8[%c2_277, %c2_278, %c0_279] : memref<10x10x16xf32, #tpu.memory_space<vmem>>, vector<8x8x16xf32>
    %234 = vector.shape_cast %233 : vector<8x8x16xf32> to vector<64x16xf32>
    %235 = tpu.concatenate %218, %220, %222, %224, %226, %228, %230, %232, %234 in 1 : vector<64x16xf32>, vector<64x16xf32>, vector<64x16xf32>, vector<64x16xf32>, vector<64x16xf32>, vector<64x16xf32>, vector<64x16xf32>, vector<64x16xf32>, vector<64x16xf32> -> vector<64x144xf32>
    %c3 = arith.constant 3 : index
    %c0_280 = arith.constant 0 : index
    %c0_281 = arith.constant 0 : index
    %236 = vector.load %arg2[%c3, %c0_280, %c0_281] : memref<4x144x32xf32, #tpu.memory_space<vmem>>, vector<1x144x32xf32>
    %237 = vector.shape_cast %236 : vector<1x144x32xf32> to vector<144x32xf32>
    %cst_282 = arith.constant dense<0.000000e+00> : vector<64x32xf32>
    %238 = tpu.matmul %235, %237, %cst_282 {dimension_numbers = #tpu.dot_dimension_numbers<[1], [0], [0], [1], [0, 0, 1, 1], [], []>} : vector<64x144xf32>, vector<144x32xf32>, vector<64x32xf32> -> vector<64x32xf32>
    %c3_283 = arith.constant 3 : index
    %c0_284 = arith.constant 0 : index
    %c0_285 = arith.constant 0 : index
    %239 = vector.load %arg3[%c3_283, %c0_284, %c0_285] : memref<4x2x32xf32, #tpu.memory_space<vmem>>, vector<1x2x32xf32>
    %240 = vector.shape_cast %239 : vector<1x2x32xf32> to vector<2x32xf32>
    %241 = vector.extract_strided_slice %240 {offsets = [0, 0], sizes = [1, 32], strides = [1, 1]} : vector<2x32xf32> to vector<1x32xf32>
    %242 = vector.broadcast %241 : vector<1x32xf32> to vector<64x32xf32>
    %243 = arith.mulf %238, %242 : vector<64x32xf32>
    %244 = vector.extract_strided_slice %240 {offsets = [1, 0], sizes = [1, 32], strides = [1, 1]} : vector<2x32xf32> to vector<1x32xf32>
    %245 = vector.broadcast %244 : vector<1x32xf32> to vector<64x32xf32>
    %246 = arith.addf %243, %245 : vector<64x32xf32>
    %cst_286 = arith.constant 0.000000e+00 : f32
    %247 = vector.broadcast %cst_286 : f32 to vector<64x32xf32>
    %248 = arith.maximumf %246, %247 : vector<64x32xf32>
    %249 = vector.shape_cast %248 : vector<64x32xf32> to vector<8x8x32xf32>
    %c1_287 = arith.constant 1 : index
    %c1_288 = arith.constant 1 : index
    %c0_289 = arith.constant 0 : index
    %250 = vector.load %arg9[%c1_287, %c1_288, %c0_289] : memref<10x10x32xf32, #tpu.memory_space<vmem>>, vector<8x8x32xf32>
    tpu.vector_store %arg9[%c1_287, %c1_288, %c0_289], %249 {strides = array<i32>} : memref<10x10x32xf32, #tpu.memory_space<vmem>>, vector<8x8x32xf32>,
    %c0_290 = arith.constant 0 : index
    %c0_291 = arith.constant 0 : index
    %c0_292 = arith.constant 0 : index
    %251 = vector.load %arg9[%c0_290, %c0_291, %c0_292] : memref<10x10x32xf32, #tpu.memory_space<vmem>>, vector<8x8x32xf32>
    %252 = vector.shape_cast %251 : vector<8x8x32xf32> to vector<64x32xf32>
    %c0_293 = arith.constant 0 : index
    %c1_294 = arith.constant 1 : index
    %c0_295 = arith.constant 0 : index
    %253 = vector.load %arg9[%c0_293, %c1_294, %c0_295] : memref<10x10x32xf32, #tpu.memory_space<vmem>>, vector<8x8x32xf32>
    %254 = vector.shape_cast %253 : vector<8x8x32xf32> to vector<64x32xf32>
    %c0_296 = arith.constant 0 : index
    %c2_297 = arith.constant 2 : index
    %c0_298 = arith.constant 0 : index
    %255 = vector.load %arg9[%c0_296, %c2_297, %c0_298] : memref<10x10x32xf32, #tpu.memory_space<vmem>>, vector<8x8x32xf32>
    %256 = vector.shape_cast %255 : vector<8x8x32xf32> to vector<64x32xf32>
    %c1_299 = arith.constant 1 : index
    %c0_300 = arith.constant 0 : index
    %c0_301 = arith.constant 0 : index
    %257 = vector.load %arg9[%c1_299, %c0_300, %c0_301] : memref<10x10x32xf32, #tpu.memory_space<vmem>>, vector<8x8x32xf32>
    %258 = vector.shape_cast %257 : vector<8x8x32xf32> to vector<64x32xf32>
    %c1_302 = arith.constant 1 : index
    %c1_303 = arith.constant 1 : index
    %c0_304 = arith.constant 0 : index
    %259 = vector.load %arg9[%c1_302, %c1_303, %c0_304] : memref<10x10x32xf32, #tpu.memory_space<vmem>>, vector<8x8x32xf32>
    %260 = vector.shape_cast %259 : vector<8x8x32xf32> to vector<64x32xf32>
    %c1_305 = arith.constant 1 : index
    %c2_306 = arith.constant 2 : index
    %c0_307 = arith.constant 0 : index
    %261 = vector.load %arg9[%c1_305, %c2_306, %c0_307] : memref<10x10x32xf32, #tpu.memory_space<vmem>>, vector<8x8x32xf32>
    %262 = vector.shape_cast %261 : vector<8x8x32xf32> to vector<64x32xf32>
    %c2_308 = arith.constant 2 : index
    %c0_309 = arith.constant 0 : index
    %c0_310 = arith.constant 0 : index
    %263 = vector.load %arg9[%c2_308, %c0_309, %c0_310] : memref<10x10x32xf32, #tpu.memory_space<vmem>>, vector<8x8x32xf32>
    %264 = vector.shape_cast %263 : vector<8x8x32xf32> to vector<64x32xf32>
    %c2_311 = arith.constant 2 : index
    %c1_312 = arith.constant 1 : index
    %c0_313 = arith.constant 0 : index
    %265 = vector.load %arg9[%c2_311, %c1_312, %c0_313] : memref<10x10x32xf32, #tpu.memory_space<vmem>>, vector<8x8x32xf32>
    %266 = vector.shape_cast %265 : vector<8x8x32xf32> to vector<64x32xf32>
    %c2_314 = arith.constant 2 : index
    %c2_315 = arith.constant 2 : index
    %c0_316 = arith.constant 0 : index
    %267 = vector.load %arg9[%c2_314, %c2_315, %c0_316] : memref<10x10x32xf32, #tpu.memory_space<vmem>>, vector<8x8x32xf32>
    %268 = vector.shape_cast %267 : vector<8x8x32xf32> to vector<64x32xf32>
    %269 = tpu.concatenate %252, %254, %256, %258, %260, %262, %264, %266, %268 in 1 : vector<64x32xf32>, vector<64x32xf32>, vector<64x32xf32>, vector<64x32xf32>, vector<64x32xf32>, vector<64x32xf32>, vector<64x32xf32>, vector<64x32xf32>, vector<64x32xf32> -> vector<64x288xf32>
    %c3_317 = arith.constant 3 : index
    %c0_318 = arith.constant 0 : index
    %c0_319 = arith.constant 0 : index
    %270 = vector.load %arg4[%c3_317, %c0_318, %c0_319] : memref<4x288x32xf32, #tpu.memory_space<vmem>>, vector<1x288x32xf32>
    %271 = vector.shape_cast %270 : vector<1x288x32xf32> to vector<288x32xf32>
    %cst_320 = arith.constant dense<0.000000e+00> : vector<64x32xf32>
    %272 = tpu.matmul %269, %271, %cst_320 {dimension_numbers = #tpu.dot_dimension_numbers<[1], [0], [0], [1], [0, 0, 1, 1], [], []>} : vector<64x288xf32>, vector<288x32xf32>, vector<64x32xf32> -> vector<64x32xf32>
    %c3_321 = arith.constant 3 : index
    %c0_322 = arith.constant 0 : index
    %c0_323 = arith.constant 0 : index
    %273 = vector.load %arg5[%c3_321, %c0_322, %c0_323] : memref<4x2x32xf32, #tpu.memory_space<vmem>>, vector<1x2x32xf32>
    %274 = vector.shape_cast %273 : vector<1x2x32xf32> to vector<2x32xf32>
    %275 = vector.extract_strided_slice %274 {offsets = [0, 0], sizes = [1, 32], strides = [1, 1]} : vector<2x32xf32> to vector<1x32xf32>
    %276 = vector.broadcast %275 : vector<1x32xf32> to vector<64x32xf32>
    %277 = arith.mulf %272, %276 : vector<64x32xf32>
    %278 = vector.extract_strided_slice %274 {offsets = [1, 0], sizes = [1, 32], strides = [1, 1]} : vector<2x32xf32> to vector<1x32xf32>
    %279 = vector.broadcast %278 : vector<1x32xf32> to vector<64x32xf32>
    %280 = arith.addf %277, %279 : vector<64x32xf32>
    %cst_324 = arith.constant 0.000000e+00 : f32
    %281 = vector.broadcast %cst_324 : f32 to vector<64x32xf32>
    %282 = arith.maximumf %280, %281 : vector<64x32xf32>
    %c0_325 = arith.constant 0 : index
    %c96 = arith.constant 96 : index
    %283 = vector.load %arg10[%c0_325, %c96] : memref<64x128xf32, #tpu.memory_space<vmem>>, vector<64x32xf32>
    tpu.vector_store %arg10[%c0_325, %c96], %282 {strides = array<i32>} : memref<64x128xf32, #tpu.memory_space<vmem>>, vector<64x32xf32>,
    %c0_326 = arith.constant 0 : index
    %c0_327 = arith.constant 0 : index
    %284 = vector.load %arg6[%c0_326, %c0_327] : memref<1024x64xf32, #tpu.memory_space<vmem>>, vector<1024x64xf32>
    %c0_328 = arith.constant 0 : index
    %c0_329 = arith.constant 0 : index
    %285 = vector.load %arg10[%c0_328, %c0_329] : memref<64x128xf32, #tpu.memory_space<vmem>>, vector<64x128xf32>
    %cst_330 = arith.constant dense<0.000000e+00> : vector<1024x128xf32>
    %286 = tpu.matmul %284, %285, %cst_330 {dimension_numbers = #tpu.dot_dimension_numbers<[1], [0], [0], [1], [0, 0, 1, 1], [], []>} : vector<1024x64xf32>, vector<64x128xf32>, vector<1024x128xf32> -> vector<1024x128xf32>
    %287 = vector.shape_cast %286 : vector<1024x128xf32> to vector<32x32x128xf32>
    %c0_331 = arith.constant 0 : index
    %c0_332 = arith.constant 0 : index
    %c0_333 = arith.constant 0 : index
    %c0_334 = arith.constant 0 : index
    %288 = vector.load %arg7[%c0_331, %c0_332, %c0_333, %c0_334] : memref<1x32x32x128xf32, #tpu.memory_space<vmem>>, vector<1x32x32x128xf32>
    %289 = vector.shape_cast %288 : vector<1x32x32x128xf32> to vector<32x32x128xf32>
    %290 = vector.shape_cast %287 : vector<32x32x128xf32> to vector<1x32x32x128xf32>
    tpu.vector_store %arg7[%c0_331, %c0_332, %c0_333, %c0_334], %290 {strides = array<i32>} : memref<1x32x32x128xf32, #tpu.memory_space<vmem>>, vector<1x32x32x128xf32>,
    return
  }
  func.func @transform_0(%arg0: i32) -> (i32, i32, i32, i32) {
    %c0_i32 = arith.constant 0 : i32
    %c0_i32_0 = arith.constant 0 : i32
    %c0_i32_1 = arith.constant 0 : i32
    %c0_i32_2 = arith.constant 0 : i32
    return %arg0, %c0_i32, %c0_i32_0, %c0_i32_1 : i32, i32, i32, i32
  }
  func.func @transform_1(%arg0: i32) -> (i32, i32, i32) {
    %c0_i32 = arith.constant 0 : i32
    %c0_i32_0 = arith.constant 0 : i32
    %c0_i32_1 = arith.constant 0 : i32
    %c0_i32_2 = arith.constant 0 : i32
    return %c0_i32, %c0_i32_0, %c0_i32_1 : i32, i32, i32
  }
  func.func @transform_2(%arg0: i32) -> (i32, i32, i32) {
    %c0_i32 = arith.constant 0 : i32
    %c0_i32_0 = arith.constant 0 : i32
    %c0_i32_1 = arith.constant 0 : i32
    %c0_i32_2 = arith.constant 0 : i32
    return %c0_i32, %c0_i32_0, %c0_i32_1 : i32, i32, i32
  }
  func.func @transform_3(%arg0: i32) -> (i32, i32, i32) {
    %c0_i32 = arith.constant 0 : i32
    %c0_i32_0 = arith.constant 0 : i32
    %c0_i32_1 = arith.constant 0 : i32
    %c0_i32_2 = arith.constant 0 : i32
    return %c0_i32, %c0_i32_0, %c0_i32_1 : i32, i32, i32
  }
  func.func @transform_4(%arg0: i32) -> (i32, i32, i32) {
    %c0_i32 = arith.constant 0 : i32
    %c0_i32_0 = arith.constant 0 : i32
    %c0_i32_1 = arith.constant 0 : i32
    %c0_i32_2 = arith.constant 0 : i32
    return %c0_i32, %c0_i32_0, %c0_i32_1 : i32, i32, i32
  }
  func.func @transform_5(%arg0: i32) -> (i32, i32) {
    %c0_i32 = arith.constant 0 : i32
    %c0_i32_0 = arith.constant 0 : i32
    %c0_i32_1 = arith.constant 0 : i32
    return %c0_i32, %c0_i32_0 : i32, i32
  }
  func.func @transform_6(%arg0: i32) -> (i32, i32, i32, i32) {
    %c0_i32 = arith.constant 0 : i32
    %c0_i32_0 = arith.constant 0 : i32
    %c0_i32_1 = arith.constant 0 : i32
    %c0_i32_2 = arith.constant 0 : i32
    return %arg0, %c0_i32, %c0_i32_0, %c0_i32_1 : i32, i32, i32, i32
  }
}

</mosaic_0001>

<llo_original>
// kernel: tpu_custom_call.1
$region0: #{tpu_custom_call.1}
  #allocation0 [shape = 'u32[]', space=smem, size = 0x4, offset = 0x4, fixed_abs, tag = 'smem constant byte address 0x4 - core index']
  #allocation1 [shape = 'u32[144,128]{1,0:T(1,128)}', space=vmem, size = 0x12000, scoped, tag = 'internal scratch']
  #allocation2 [shape = 'f32[10,10,16]{2,1,0:T(8,128)}', space=vmem, size = 0x14000, scoped, tag = 'scratch operand']
  #allocation3 [shape = 'f32[10,10,32]{2,1,0:T(8,128)}', space=vmem, size = 0x14000, scoped, tag = 'scratch operand']
  #allocation4 [shape = 'f32[64,128]{1,0:T(8,128)}', space=vmem, size = 0x8000, scoped, tag = 'scratch operand']
  %s0 = inlined_call_operand.vmem [shape: f32[2,8,8,64], index: 0, kind: input, shape index: {}]
  %s1 = inlined_call_operand.vmem [shape: f32[4,144,32], index: 1, kind: input, shape index: {}]
  %s2 = inlined_call_operand.vmem [shape: f32[4,2,32], index: 2, kind: input, shape index: {}]
  %s3 = inlined_call_operand.vmem [shape: f32[4,288,32], index: 3, kind: input, shape index: {}]
  %s4 = inlined_call_operand.vmem [shape: f32[4,2,32], index: 4, kind: input, shape index: {}]
  %s5 = inlined_call_operand.vmem [shape: f32[1024,64], index: 5, kind: input, shape index: {}]
  %s6 = inlined_call_operand.hbm [shape: f32[2,32,32,128], index: 6, kind: output, shape index: {}]
  %s7 = sld [smem:[#allocation0]]
  $region57: #{tpu_custom_call.1} parent=0
    _
  %s9 = ssub.s32 1, %s7
  %s10 = scalar_select 0, %s9, %s7
  $region1: #{tpu_custom_call.1} parent=0
    #allocation5 [shape = 'u8[1048576]{0}', space=vmem, size = 0x100000, scoped, tag = 'output window, operand 0']
    #allocation6 [shape = 's32[2]{0}', space=sflag, size = 0x8, scoped, tag = 'scoped memory for tpu_custom_call.1']
    %11 = vsyncpa [#allocation6], 0
    %s12 = scalar_lea.sflag [#allocation6], 1
    %13 = vsyncpa %s12, 0
    loop: start=0, step=1, limit=4
    $region2: #{tpu_custom_call.1} parent=1 // loop_pre_header
      _
    $region3: #{tpu_custom_call.1} parent=1 // loop_header
      %s15 = sphi 0, %s19
      %p16 = scmp.ge.s32.totalorder %s15, 4
      %s25 = sphi 0, %s27
      %s28 = sphi 0, %s25
      %s29 = sphi 0, %s28
      %s45 = sphi 0, %s29
      %s49 = sphi 0, %s49
      %s51 = sphi 0, %s49
      %s52 = sphi 0, %s51
      %s66 = sphi 0, %s52
      %s70 = sphi 0, %s70
      %s72 = sphi 0, %s70
      %s73 = sphi 0, %s72
      %s87 = sphi 0, %s73
      %s91 = sphi 0, %s91
      %s93 = sphi 0, %s91
      %s94 = sphi 0, %s93
      %s108 = sphi 0, %s94
      %s112 = sphi 0, %s112
      %s114 = sphi 0, %s112
      %s115 = sphi 0, %s114
      %s129 = sphi 0, %s115
      %s133 = sphi 0, %s133
      %s135 = sphi 0, %s133
      %s136 = sphi 0, %s135
      %s150 = sphi 0, %s136
      %s156 = sphi 0, %s158
      %s159 = sphi 0, %s156
      %s160 = sphi 0, %s159
      %s176 = sphi 0, %s160
    $region4: #{tpu_custom_call.1} parent=1 // loop_header_branch
      %18 = sbr.rel (%p16) target = $region8
    $region5: #{tpu_custom_call.1} parent=1 // loop_body
      %s20 = ssub.s32 %s15, 1
      %s21 = ssub.s32 %s15, 2
      %s22 = sadd.s32 %s15, 1
      %s23 = ssub.s32 %s15, %s22
      %p24 = scmp.eq.s32.totalorder %s23, 0
      %s26 = sadd.s32 %s25, 1
      %s27 = scalar_select %p24, %s25, %s26
      %p30 = pneg %p24
      %p31 = scmp.eq.s32.totalorder %s15, 1
      %p32 = por %p30, %p31
      %p33 = scmp.ne.s32.totalorder %s25, %s28
      %p34 = scmp.eq.s32.totalorder %s15, 0
      %p35 = por %p33, %p34
      %p36 = scmp.ne.s32.totalorder %s25, %s28
      %p37 = scmp.eq.s32.totalorder %s20, 1
      %p38 = por %p36, %p37
      %p39 = scmp.ne.s32.totalorder %s28, %s29
      %p40 = scmp.eq.s32.totalorder %s20, 0
      %p41 = por %p39, %p40
      %p42 = scmp.ne.s32.totalorder %s28, %s29
      %p43 = scmp.eq.s32.totalorder %s21, 1
      %p44 = por %p42, %p43
      %p46 = scmp.ne.s32.totalorder %s29, %s45
      %p47 = scmp.eq.s32.totalorder %s21, 0
      %p48 = por %p46, %p47
      %s50 = sadd.s32 %s49, 1
      %p53 = scmp.eq.s32.totalorder %s15, 1
      %p54 = scmp.ne.s32.totalorder %s49, %s51
      %p55 = scmp.eq.s32.totalorder %s15, 0
      %p56 = por %p54, %p55
      %p57 = scmp.ne.s32.totalorder %s49, %s51
      %p58 = scmp.eq.s32.totalorder %s20, 1
      %p59 = por %p57, %p58
      %p60 = scmp.ne.s32.totalorder %s51, %s52
      %p61 = scmp.eq.s32.totalorder %s20, 0
      %p62 = por %p60, %p61
      %p63 = scmp.ne.s32.totalorder %s51, %s52
      %p64 = scmp.eq.s32.totalorder %s21, 1
      %p65 = por %p63, %p64
      %p67 = scmp.ne.s32.totalorder %s52, %s66
      %p68 = scmp.eq.s32.totalorder %s21, 0
      %p69 = por %p67, %p68
      %s71 = sadd.s32 %s70, 1
      %p74 = scmp.eq.s32.totalorder %s15, 1
      %p75 = scmp.ne.s32.totalorder %s70, %s72
      %p76 = scmp.eq.s32.totalorder %s15, 0
      %p77 = por %p75, %p76
      %p78 = scmp.ne.s32.totalorder %s70, %s72
      %p79 = scmp.eq.s32.totalorder %s20, 1
      %p80 = por %p78, %p79
      %p81 = scmp.ne.s32.totalorder %s72, %s73
      %p82 = scmp.eq.s32.totalorder %s20, 0
      %p83 = por %p81, %p82
      %p84 = scmp.ne.s32.totalorder %s72, %s73
      %p85 = scmp.eq.s32.totalorder %s21, 1
      %p86 = por %p84, %p85
      %p88 = scmp.ne.s32.totalorder %s73, %s87
      %p89 = scmp.eq.s32.totalorder %s21, 0
      %p90 = por %p88, %p89
      %s92 = sadd.s32 %s91, 1
      %p95 = scmp.eq.s32.totalorder %s15, 1
      %p96 = scmp.ne.s32.totalorder %s91, %s93
      %p97 = scmp.eq.s32.totalorder %s15, 0
      %p98 = por %p96, %p97
      %p99 = scmp.ne.s32.totalorder %s91, %s93
      %p100 = scmp.eq.s32.totalorder %s20, 1
      %p101 = por %p99, %p100
      %p102 = scmp.ne.s32.totalorder %s93, %s94
      %p103 = scmp.eq.s32.totalorder %s20, 0
      %p104 = por %p102, %p103
      %p105 = scmp.ne.s32.totalorder %s93, %s94
      %p106 = scmp.eq.s32.totalorder %s21, 1
      %p107 = por %p105, %p106
      %p109 = scmp.ne.s32.totalorder %s94, %s108
      %p110 = scmp.eq.s32.totalorder %s21, 0
      %p111 = por %p109, %p110
      %s113 = sadd.s32 %s112, 1
      %p116 = scmp.eq.s32.totalorder %s15, 1
      %p117 = scmp.ne.s32.totalorder %s112, %s114
      %p118 = scmp.eq.s32.totalorder %s15, 0
      %p119 = por %p117, %p118
      %p120 = scmp.ne.s32.totalorder %s112, %s114
      %p121 = scmp.eq.s32.totalorder %s20, 1
      %p122 = por %p120, %p121
      %p123 = scmp.ne.s32.totalorder %s114, %s115
      %p124 = scmp.eq.s32.totalorder %s20, 0
      %p125 = por %p123, %p124
      %p126 = scmp.ne.s32.totalorder %s114, %s115
      %p127 = scmp.eq.s32.totalorder %s21, 1
      %p128 = por %p126, %p127
      %p130 = scmp.ne.s32.totalorder %s115, %s129
      %p131 = scmp.eq.s32.totalorder %s21, 0
      %p132 = por %p130, %p131
      %s134 = sadd.s32 %s133, 1
      %p137 = scmp.eq.s32.totalorder %s15, 1
      %p138 = scmp.ne.s32.totalorder %s133, %s135
      %p139 = scmp.eq.s32.totalorder %s15, 0
      %p140 = por %p138, %p139
      %p141 = scmp.ne.s32.totalorder %s133, %s135
      %p142 = scmp.eq.s32.totalorder %s20, 1
      %p143 = por %p141, %p142
      %p144 = scmp.ne.s32.totalorder %s135, %s136
      %p145 = scmp.eq.s32.totalorder %s20, 0
      %p146 = por %p144, %p145
      %p147 = scmp.ne.s32.totalorder %s135, %s136
      %p148 = scmp.eq.s32.totalorder %s21, 1
      %p149 = por %p147, %p148
      %p151 = scmp.ne.s32.totalorder %s136, %s150
      %p152 = scmp.eq.s32.totalorder %s21, 0
      %p153 = por %p151, %p152
      %s154 = ssub.s32 %s15, %s22
      %p155 = scmp.eq.s32.totalorder %s154, 0
      %s157 = sadd.s32 %s156, 1
      %s158 = scalar_select %p155, %s156, %s157
      %p161 = pneg %p155
      %p162 = scmp.eq.s32.totalorder %s15, 1
      %p163 = por %p161, %p162
      %p164 = scmp.ne.s32.totalorder %s156, %s159
      %p165 = scmp.eq.s32.totalorder %s15, 0
      %p166 = por %p164, %p165
      %p167 = scmp.ne.s32.totalorder %s156, %s159
      %p168 = scmp.eq.s32.totalorder %s20, 1
      %p169 = por %p167, %p168
      %p170 = scmp.ne.s32.totalorder %s159, %s160
      %p171 = scmp.eq.s32.totalorder %s20, 0
      %p172 = por %p170, %p171
      %p173 = scmp.ne.s32.totalorder %s159, %s160
      %p174 = scmp.eq.s32.totalorder %s21, 1
      %p175 = por %p173, %p174
      %p177 = scmp.ne.s32.totalorder %s160, %s176
      %p178 = scmp.eq.s32.totalorder %s21, 0
      %p179 = por %p177, %p178
      %p180 = scmp.le.s32.totalorder 1, %s15
      %p181 = scmp.lt.s32.totalorder %s15, 3
      %p182 = pnand %p180, %p181
      %p183 = pneg %p182
      // Predicated region
      $region9: #{tpu_custom_call.1} parent=5 // pred_check
        _
      $region10: #{tpu_custom_call.1} parent=5 // pred_check_branch
        %185 = sbr.rel (%p182) target = $region12
      $region11: #{tpu_custom_call.1} parent=5 // pred_region
        %s186 = ssub.s32 %s15, 1
        // Predicated region
        $region13: #{tpu_custom_call.1} parent=11 // pred_check
          %p187 = pneg %p62
        $region14: #{tpu_custom_call.1} parent=11 // pred_check_branch
          %189 = sbr.rel (%p187) target = $region16
        $region15: #{tpu_custom_call.1} parent=11 // pred_region
          _
        $region16: #{tpu_custom_call.1} parent=11 // pred_fallthru
          _
        // Predicated region
        $region17: #{tpu_custom_call.1} parent=11 // pred_check
          %p190 = pneg %p83
        $region18: #{tpu_custom_call.1} parent=11 // pred_check_branch
          %192 = sbr.rel (%p190) target = $region20
        $region19: #{tpu_custom_call.1} parent=11 // pred_region
          _
        $region20: #{tpu_custom_call.1} parent=11 // pred_fallthru
          _
        // Predicated region
        $region21: #{tpu_custom_call.1} parent=11 // pred_check
          %p193 = pneg %p104
        $region22: #{tpu_custom_call.1} parent=11 // pred_check_branch
          %195 = sbr.rel (%p193) target = $region24
        $region23: #{tpu_custom_call.1} parent=11 // pred_region
          _
        $region24: #{tpu_custom_call.1} parent=11 // pred_fallthru
          _
        // Predicated region
        $region25: #{tpu_custom_call.1} parent=11 // pred_check
          %p196 = pneg %p125
        $region26: #{tpu_custom_call.1} parent=11 // pred_check_branch
          %198 = sbr.rel (%p196) target = $region28
        $region27: #{tpu_custom_call.1} parent=11 // pred_region
          _
        $region28: #{tpu_custom_call.1} parent=11 // pred_fallthru
          _
        // Predicated region
        $region29: #{tpu_custom_call.1} parent=11 // pred_check
          %p199 = pneg %p146
        $region30: #{tpu_custom_call.1} parent=11 // pred_check_branch
          %201 = sbr.rel (%p199) target = $region32
        $region31: #{tpu_custom_call.1} parent=11 // pred_region
          _
        $region32: #{tpu_custom_call.1} parent=11 // pred_fallthru
          _
      $region12: #{tpu_custom_call.1} parent=5 // pred_fallthru
        _
      %p202 = scmp.lt.s32.totalorder %s15, 2
      // Predicated region
      $region33: #{tpu_custom_call.1} parent=5 // pred_check
        %p203 = pneg %p202
      $region34: #{tpu_custom_call.1} parent=5 // pred_check_branch
        %205 = sbr.rel (%p203) target = $region36
      $region35: #{tpu_custom_call.1} parent=5 // pred_region
        // Predicated region
        $region37: #{tpu_custom_call.1} parent=35 // pred_check
          %p206 = pneg %p35
        $region38: #{tpu_custom_call.1} parent=35 // pred_check_branch
          %208 = sbr.rel (%p206) target = $region40
        $region39: #{tpu_custom_call.1} parent=35 // pred_region
          %p209 = scmp.lt.s32.totalorder %s15, 1
          %s210 = scalar_select %p209, %s15, 1
          %s211 = smul.addr %s210, 8
          %s212 = smul.addr %s211, 8
          %s213 = scalar_lea.vmem %s0, %s212
        $region40: #{tpu_custom_call.1} parent=35 // pred_fallthru
          _
      $region36: #{tpu_custom_call.1} parent=5 // pred_fallthru
        _
      %p214 = scmp.le.s32.totalorder 1, %s15
      %p215 = scmp.lt.s32.totalorder %s15, 3
      %p216 = pnand %p214, %p215
      %p217 = pneg %p216
      // Predicated region
      $region41: #{tpu_custom_call.1} parent=5 // pred_check
        _
      $region42: #{tpu_custom_call.1} parent=5 // pred_check_branch
        %219 = sbr.rel (%p216) target = $region44
      $region43: #{tpu_custom_call.1} parent=5 // pred_region
        %s220 = ssub.s32 %s15, 1
        %p221 = scmp.lt.s32.totalorder %s20, 1
        %s222 = scalar_select %p221, %s20, 1
        %s223 = smul.addr %s222, 8
        %s224 = smul.addr %s223, 8
        %s225 = scalar_lea.vmem %s0, %s224
        %p226 = pneg %p41
        %p227 = pneg %p38
        %p228 = pneg %p62
        %p229 = pneg %p59
        %p230 = pneg %p83
        %p231 = pneg %p80
        %p232 = pneg %p104
        %p233 = pneg %p101
        %p234 = pneg %p125
        %p235 = pneg %p122
        %p236 = pneg %p146
        %p237 = pneg %p143
        %p238 = pneg %p172
        %p239 = pneg %p169
        %s240 = sand.u32 %s159, 1
        %s241 = scalar_lea.sflag [#allocation6], %s240
        %s242 = sand.u32 %s159, 1
        %s243 = smul.addr %s242, 1024
        %s244 = scalar_lea.vmem [#allocation5], %s243
        %p245 = scmp.lt.s32.totalorder %s20, 1
        %s246 = scalar_select %p245, %s20, 1
        %s247 = smul.addr %s246, 8
        %s248 = smul.addr %s247, 8
        %s249 = scalar_lea.vmem %s0, %s248
        %vm250 = vcmask 130048
        %251 = vst.msk [vmem:[#allocation2] sm:$0xff] %vm250, 0.0
        %vm252 = vcmask 123904
        %253 = vst.msk [vmem:[#allocation2 + $0x8] sm:$0x3] %vm252, 0.0
        %254 = vst.msk [vmem:[#allocation2 + $0x10] sm:$0xff] %vm250, 0.0
        %255 = vst.msk [vmem:[#allocation2 + $0x18] sm:$0x3] %vm252, 0.0
        %256 = vst.msk [vmem:[#allocation2 + $0x20] sm:$0xff] %vm250, 0.0
        %257 = vst.msk [vmem:[#allocation2 + $0x28] sm:$0x3] %vm252, 0.0
        %258 = vst.msk [vmem:[#allocation2 + $0x30] sm:$0xff] %vm250, 0.0
        %259 = vst.msk [vmem:[#allocation2 + $0x38] sm:$0x3] %vm252, 0.0
        %260 = vst.msk [vmem:[#allocation2 + $0x40] sm:$0xff] %vm250, 0.0
        %261 = vst.msk [vmem:[#allocation2 + $0x48] sm:$0x3] %vm252, 0.0
        %262 = vst.msk [vmem:[#allocation2 + $0x50] sm:$0xff] %vm250, 0.0
        %263 = vst.msk [vmem:[#allocation2 + $0x58] sm:$0x3] %vm252, 0.0
        %264 = vst.msk [vmem:[#allocation2 + $0x60] sm:$0xff] %vm250, 0.0
        %265 = vst.msk [vmem:[#allocation2 + $0x68] sm:$0x3] %vm252, 0.0
        %266 = vst.msk [vmem:[#allocation2 + $0x70] sm:$0xff] %vm250, 0.0
        %267 = vst.msk [vmem:[#allocation2 + $0x78] sm:$0x3] %vm252, 0.0
        %268 = vst.msk [vmem:[#allocation2 + $0x80] sm:$0xff] %vm250, 0.0
        %269 = vst.msk [vmem:[#allocation2 + $0x88] sm:$0x3] %vm252, 0.0
        %270 = vst.msk [vmem:[#allocation2 + $0x90] sm:$0xff] %vm250, 0.0
        %271 = vst.msk [vmem:[#allocation2 + $0x98] sm:$0x3] %vm252, 0.0
        %vm272 = vcmask 261120
        %273 = vst.msk [vmem:[#allocation3] sm:$0xff] %vm272, 0.0
        %vm274 = vcmask 254976
        %275 = vst.msk [vmem:[#allocation3 + $0x8] sm:$0x3] %vm274, 0.0
        %276 = vst.msk [vmem:[#allocation3 + $0x10] sm:$0xff] %vm272, 0.0
        %277 = vst.msk [vmem:[#allocation3 + $0x18] sm:$0x3] %vm274, 0.0
        %278 = vst.msk [vmem:[#allocation3 + $0x20] sm:$0xff] %vm272, 0.0
        %279 = vst.msk [vmem:[#allocation3 + $0x28] sm:$0x3] %vm274, 0.0
        %280 = vst.msk [vmem:[#allocation3 + $0x30] sm:$0xff] %vm272, 0.0
        %281 = vst.msk [vmem:[#allocation3 + $0x38] sm:$0x3] %vm274, 0.0
        %282 = vst.msk [vmem:[#allocation3 + $0x40] sm:$0xff] %vm272, 0.0
        %283 = vst.msk [vmem:[#allocation3 + $0x48] sm:$0x3] %vm274, 0.0
        %284 = vst.msk [vmem:[#allocation3 + $0x50] sm:$0xff] %vm272, 0.0
        %285 = vst.msk [vmem:[#allocation3 + $0x58] sm:$0x3] %vm274, 0.0
        %286 = vst.msk [vmem:[#allocation3 + $0x60] sm:$0xff] %vm272, 0.0
        %287 = vst.msk [vmem:[#allocation3 + $0x68] sm:$0x3] %vm274, 0.0
        %288 = vst.msk [vmem:[#allocation3 + $0x70] sm:$0xff] %vm272, 0.0
        %289 = vst.msk [vmem:[#allocation3 + $0x78] sm:$0x3] %vm274, 0.0
        %290 = vst.msk [vmem:[#allocation3 + $0x80] sm:$0xff] %vm272, 0.0
        %291 = vst.msk [vmem:[#allocation3 + $0x88] sm:$0x3] %vm274, 0.0
        %292 = vst.msk [vmem:[#allocation3 + $0x90] sm:$0xff] %vm272, 0.0
        %293 = vst.msk [vmem:[#allocation3 + $0x98] sm:$0x3] %vm274, 0.0
        %v294 = vld [vmem:[%s249] sm:$0xff]
        %v295 = vld [vmem:[%s249 + $0x8] sm:$0xff]
        %v296 = vld [vmem:[%s249 + $0x10] sm:$0xff]
        %v297 = vld [vmem:[%s249 + $0x18] sm:$0xff]
        %v298 = vld [vmem:[%s249 + $0x20] sm:$0xff]
        %v299 = vld [vmem:[%s249 + $0x28] sm:$0xff]
        %v300 = vld [vmem:[%s249 + $0x30] sm:$0xff]
        %v301 = vld [vmem:[%s249 + $0x38] sm:$0xff]
        %s302 = scalar_lea.vmem [#allocation2], 16
        %303 = vst.msk [vmem:[%s302 + $0x1] sm:$0xff] %vm250, %v294
        %304 = vst.msk [vmem:[%s302 + $0x11] sm:$0xff] %vm250, %v295
        %305 = vst.msk [vmem:[%s302 + $0x21] sm:$0xff] %vm250, %v296
        %306 = vst.msk [vmem:[%s302 + $0x31] sm:$0xff] %vm250, %v297
        %307 = vst.msk [vmem:[%s302 + $0x41] sm:$0xff] %vm250, %v298
        %308 = vst.msk [vmem:[%s302 + $0x51] sm:$0xff] %vm250, %v299
        %309 = vst.msk [vmem:[%s302 + $0x61] sm:$0xff] %vm250, %v300
        %310 = vst.msk [vmem:[%s302 + $0x71] sm:$0xff] %vm250, %v301
        %v311 = vld [vmem:[#allocation2] sm:$0xff]
        %v312 = vld [vmem:[#allocation2 + $0x10] sm:$0xff]
        %v313 = vld [vmem:[#allocation2 + $0x20] sm:$0xff]
        %v314 = vld [vmem:[#allocation2 + $0x30] sm:$0xff]
        %v315 = vld [vmem:[#allocation2 + $0x40] sm:$0xff]
        %v316 = vld [vmem:[#allocation2 + $0x50] sm:$0xff]
        %v317 = vld [vmem:[#allocation2 + $0x60] sm:$0xff]
        %v318 = vld [vmem:[#allocation2 + $0x70] sm:$0xff]
        %v319 = vld [vmem:[#allocation2 + $0x1] sm:$0xff]
        %v320 = vld [vmem:[#allocation2 + $0x11] sm:$0xff]
        %v321 = vld [vmem:[#allocation2 + $0x21] sm:$0xff]
        %v322 = vld [vmem:[#allocation2 + $0x31] sm:$0xff]
        %v323 = vld [vmem:[#allocation2 + $0x41] sm:$0xff]
        %v324 = vld [vmem:[#allocation2 + $0x51] sm:$0xff]
        %v325 = vld [vmem:[#allocation2 + $0x61] sm:$0xff]
        %v326 = vld [vmem:[#allocation2 + $0x71] sm:$0xff]
        %v327 = vld [vmem:[#allocation2 + $0x2] sm:$0xff]
        %v328 = vld [vmem:[#allocation2 + $0x12] sm:$0xff]
        %v329 = vld [vmem:[#allocation2 + $0x22] sm:$0xff]
        %v330 = vld [vmem:[#allocation2 + $0x32] sm:$0xff]
        %v331 = vld [vmem:[#allocation2 + $0x42] sm:$0xff]
        %v332 = vld [vmem:[#allocation2 + $0x52] sm:$0xff]
        %v333 = vld [vmem:[#allocation2 + $0x62] sm:$0xff]
        %v334 = vld [vmem:[#allocation2 + $0x72] sm:$0xff]
        %v335 = vld [vmem:[%s302] sm:$0xff]
        %v336 = vld [vmem:[%s302 + $0x10] sm:$0xff]
        %v337 = vld [vmem:[%s302 + $0x20] sm:$0xff]
        %v338 = vld [vmem:[%s302 + $0x30] sm:$0xff]
        %v339 = vld [vmem:[%s302 + $0x40] sm:$0xff]
        %v340 = vld [vmem:[%s302 + $0x50] sm:$0xff]
        %v341 = vld [vmem:[%s302 + $0x60] sm:$0xff]
        %v342 = vld [vmem:[%s302 + $0x70] sm:$0xff]
        %v343 = vld [vmem:[%s302 + $0x1] sm:$0xff]
        %v344 = vld [vmem:[%s302 + $0x11] sm:$0xff]
        %v345 = vld [vmem:[%s302 + $0x21] sm:$0xff]
        %v346 = vld [vmem:[%s302 + $0x31] sm:$0xff]
        %v347 = vld [vmem:[%s302 + $0x41] sm:$0xff]
        %v348 = vld [vmem:[%s302 + $0x51] sm:$0xff]
        %v349 = vld [vmem:[%s302 + $0x61] sm:$0xff]
        %v350 = vld [vmem:[%s302 + $0x71] sm:$0xff]
        %v351 = vld [vmem:[%s302 + $0x2] sm:$0xff]
        %v352 = vld [vmem:[%s302 + $0x12] sm:$0xff]
        %v353 = vld [vmem:[%s302 + $0x22] sm:$0xff]
        %v354 = vld [vmem:[%s302 + $0x32] sm:$0xff]
        %v355 = vld [vmem:[%s302 + $0x42] sm:$0xff]
        %v356 = vld [vmem:[%s302 + $0x52] sm:$0xff]
        %v357 = vld [vmem:[%s302 + $0x62] sm:$0xff]
        %v358 = vld [vmem:[%s302 + $0x72] sm:$0xff]
        %s359 = scalar_lea.vmem [#allocation2], 32
        %v360 = vld [vmem:[%s359] sm:$0xff]
        %v361 = vld [vmem:[%s359 + $0x10] sm:$0xff]
        %v362 = vld [vmem:[%s359 + $0x20] sm:$0xff]
        %v363 = vld [vmem:[%s359 + $0x30] sm:$0xff]
        %v364 = vld [vmem:[%s359 + $0x40] sm:$0xff]
        %v365 = vld [vmem:[%s359 + $0x50] sm:$0xff]
        %v366 = vld [vmem:[%s359 + $0x60] sm:$0xff]
        %v367 = vld [vmem:[%s359 + $0x70] sm:$0xff]
        %v368 = vld [vmem:[%s359 + $0x1] sm:$0xff]
        %v369 = vld [vmem:[%s359 + $0x11] sm:$0xff]
        %v370 = vld [vmem:[%s359 + $0x21] sm:$0xff]
        %v371 = vld [vmem:[%s359 + $0x31] sm:$0xff]
        %v372 = vld [vmem:[%s359 + $0x41] sm:$0xff]
        %v373 = vld [vmem:[%s359 + $0x51] sm:$0xff]
        %v374 = vld [vmem:[%s359 + $0x61] sm:$0xff]
        %v375 = vld [vmem:[%s359 + $0x71] sm:$0xff]
        %v376 = vld [vmem:[%s359 + $0x2] sm:$0xff]
        %v377 = vld [vmem:[%s359 + $0x12] sm:$0xff]
        %v378 = vld [vmem:[%s359 + $0x22] sm:$0xff]
        %v379 = vld [vmem:[%s359 + $0x32] sm:$0xff]
        %v380 = vld [vmem:[%s359 + $0x42] sm:$0xff]
        %v381 = vld [vmem:[%s359 + $0x52] sm:$0xff]
        %v382 = vld [vmem:[%s359 + $0x62] sm:$0xff]
        %v383 = vld [vmem:[%s359 + $0x72] sm:$0xff]
        %392 = vrot.lane.b32.xlu0 %v319, 16
        %v393 = vpop.permute.xlu0 %392
        %394 = vrot.lane.b32.xlu0 %v320, 16
        %v395 = vpop.permute.xlu0 %394
        %396 = vrot.lane.b32.xlu0 %v321, 16
        %v397 = vpop.permute.xlu0 %396
        %398 = vrot.lane.b32.xlu0 %v322, 16
        %v399 = vpop.permute.xlu0 %398
        %400 = vrot.lane.b32.xlu0 %v323, 16
        %v401 = vpop.permute.xlu0 %400
        %402 = vrot.lane.b32.xlu0 %v324, 16
        %v403 = vpop.permute.xlu0 %402
        %404 = vrot.lane.b32.xlu0 %v325, 16
        %v405 = vpop.permute.xlu0 %404
        %406 = vrot.lane.b32.xlu0 %v326, 16
        %v407 = vpop.permute.xlu0 %406
        %424 = vrot.lane.b32.xlu0 %v327, 32
        %v425 = vpop.permute.xlu0 %424
        %426 = vrot.lane.b32.xlu0 %v328, 32
        %v427 = vpop.permute.xlu0 %426
        %428 = vrot.lane.b32.xlu0 %v329, 32
        %v429 = vpop.permute.xlu0 %428
        %430 = vrot.lane.b32.xlu0 %v330, 32
        %v431 = vpop.permute.xlu0 %430
        %432 = vrot.lane.b32.xlu0 %v331, 32
        %v433 = vpop.permute.xlu0 %432
        %434 = vrot.lane.b32.xlu0 %v332, 32
        %v435 = vpop.permute.xlu0 %434
        %436 = vrot.lane.b32.xlu0 %v333, 32
        %v437 = vpop.permute.xlu0 %436
        %438 = vrot.lane.b32.xlu0 %v334, 32
        %v439 = vpop.permute.xlu0 %438
        %456 = vrot.lane.b32.xlu0 %v335, 48
        %v457 = vpop.permute.xlu0 %456
        %458 = vrot.lane.b32.xlu0 %v336, 48
        %v459 = vpop.permute.xlu0 %458
        %460 = vrot.lane.b32.xlu0 %v337, 48
        %v461 = vpop.permute.xlu0 %460
        %462 = vrot.lane.b32.xlu0 %v338, 48
        %v463 = vpop.permute.xlu0 %462
        %464 = vrot.lane.b32.xlu0 %v339, 48
        %v465 = vpop.permute.xlu0 %464
        %466 = vrot.lane.b32.xlu0 %v340, 48
        %v467 = vpop.permute.xlu0 %466
        %468 = vrot.lane.b32.xlu0 %v341, 48
        %v469 = vpop.permute.xlu0 %468
        %470 = vrot.lane.b32.xlu0 %v342, 48
        %v471 = vpop.permute.xlu0 %470
        %488 = vrot.lane.b32.xlu0 %v343, 64
        %v489 = vpop.permute.xlu0 %488
        %490 = vrot.lane.b32.xlu0 %v344, 64
        %v491 = vpop.permute.xlu0 %490
        %492 = vrot.lane.b32.xlu0 %v345, 64
        %v493 = vpop.permute.xlu0 %492
        %494 = vrot.lane.b32.xlu0 %v346, 64
        %v495 = vpop.permute.xlu0 %494
        %496 = vrot.lane.b32.xlu0 %v347, 64
        %v497 = vpop.permute.xlu0 %496
        %498 = vrot.lane.b32.xlu0 %v348, 64
        %v499 = vpop.permute.xlu0 %498
        %500 = vrot.lane.b32.xlu0 %v349, 64
        %v501 = vpop.permute.xlu0 %500
        %502 = vrot.lane.b32.xlu0 %v350, 64
        %v503 = vpop.permute.xlu0 %502
        %520 = vrot.lane.b32.xlu0 %v351, 80
        %v521 = vpop.permute.xlu0 %520
        %522 = vrot.lane.b32.xlu0 %v352, 80
        %v523 = vpop.permute.xlu0 %522
        %524 = vrot.lane.b32.xlu0 %v353, 80
        %v525 = vpop.permute.xlu0 %524
        %526 = vrot.lane.b32.xlu0 %v354, 80
        %v527 = vpop.permute.xlu0 %526
        %528 = vrot.lane.b32.xlu0 %v355, 80
        %v529 = vpop.permute.xlu0 %528
        %530 = vrot.lane.b32.xlu0 %v356, 80
        %v531 = vpop.permute.xlu0 %530
        %532 = vrot.lane.b32.xlu0 %v357, 80
        %v533 = vpop.permute.xlu0 %532
        %534 = vrot.lane.b32.xlu0 %v358, 80
        %v535 = vpop.permute.xlu0 %534
        %552 = vrot.lane.b32.xlu0 %v360, 96
        %v553 = vpop.permute.xlu0 %552
        %554 = vrot.lane.b32.xlu0 %v361, 96
        %v555 = vpop.permute.xlu0 %554
        %556 = vrot.lane.b32.xlu0 %v362, 96
        %v557 = vpop.permute.xlu0 %556
        %558 = vrot.lane.b32.xlu0 %v363, 96
        %v559 = vpop.permute.xlu0 %558
        %560 = vrot.lane.b32.xlu0 %v364, 96
        %v561 = vpop.permute.xlu0 %560
        %562 = vrot.lane.b32.xlu0 %v365, 96
        %v563 = vpop.permute.xlu0 %562
        %564 = vrot.lane.b32.xlu0 %v366, 96
        %v565 = vpop.permute.xlu0 %564
        %566 = vrot.lane.b32.xlu0 %v367, 96
        %v567 = vpop.permute.xlu0 %566
        %584 = vrot.lane.b32.xlu0 %v368, 112
        %v585 = vpop.permute.xlu0 %584
        %586 = vrot.lane.b32.xlu0 %v369, 112
        %v587 = vpop.permute.xlu0 %586
        %588 = vrot.lane.b32.xlu0 %v370, 112
        %v589 = vpop.permute.xlu0 %588
        %590 = vrot.lane.b32.xlu0 %v371, 112
        %v591 = vpop.permute.xlu0 %590
        %592 = vrot.lane.b32.xlu0 %v372, 112
        %v593 = vpop.permute.xlu0 %592
        %594 = vrot.lane.b32.xlu0 %v373, 112
        %v595 = vpop.permute.xlu0 %594
        %596 = vrot.lane.b32.xlu0 %v374, 112
        %v597 = vpop.permute.xlu0 %596
        %598 = vrot.lane.b32.xlu0 %v375, 112
        %v599 = vpop.permute.xlu0 %598
        %v608 = vsel %vm250, %v311, %v393
        %v609 = vsel %vm250, %v312, %v395
        %v610 = vsel %vm250, %v313, %v397
        %v611 = vsel %vm250, %v314, %v399
        %v612 = vsel %vm250, %v315, %v401
        %v613 = vsel %vm250, %v316, %v403
        %v614 = vsel %vm250, %v317, %v405
        %v615 = vsel %vm250, %v318, %v407
        %v616 = vsel %vm272, %v608, %v425
        %v617 = vsel %vm272, %v609, %v427
        %v618 = vsel %vm272, %v610, %v429
        %v619 = vsel %vm272, %v611, %v431
        %v620 = vsel %vm272, %v612, %v433
        %v621 = vsel %vm272, %v613, %v435
        %v622 = vsel %vm272, %v614, %v437
        %v623 = vsel %vm272, %v615, %v439
        %vm624 = vcmask 392192
        %v625 = vsel %vm624, %v616, %v457
        %v626 = vsel %vm624, %v617, %v459
        %v627 = vsel %vm624, %v618, %v461
        %v628 = vsel %vm624, %v619, %v463
        %v629 = vsel %vm624, %v620, %v465
        %v630 = vsel %vm624, %v621, %v467
        %v631 = vsel %vm624, %v622, %v469
        %v632 = vsel %vm624, %v623, %v471
        %vm633 = vcmask 523264
        %v634 = vsel %vm633, %v625, %v489
        %v635 = vsel %vm633, %v626, %v491
        %v636 = vsel %vm633, %v627, %v493
        %v637 = vsel %vm633, %v628, %v495
        %v638 = vsel %vm633, %v629, %v497
        %v639 = vsel %vm633, %v630, %v499
        %v640 = vsel %vm633, %v631, %v501
        %v641 = vsel %vm633, %v632, %v503
        %vm642 = vcmask 654336
        %v643 = vsel %vm642, %v634, %v521
        %v644 = vsel %vm642, %v635, %v523
        %v645 = vsel %vm642, %v636, %v525
        %v646 = vsel %vm642, %v637, %v527
        %v647 = vsel %vm642, %v638, %v529
        %v648 = vsel %vm642, %v639, %v531
        %v649 = vsel %vm642, %v640, %v533
        %v650 = vsel %vm642, %v641, %v535
        %vm651 = vcmask 785408
        %v652 = vsel %vm651, %v643, %v553
        %v653 = vsel %vm651, %v644, %v555
        %v654 = vsel %vm651, %v645, %v557
        %v655 = vsel %vm651, %v646, %v559
        %v656 = vsel %vm651, %v647, %v561
        %v657 = vsel %vm651, %v648, %v563
        %v658 = vsel %vm651, %v649, %v565
        %v659 = vsel %vm651, %v650, %v567
        %vm660 = vcmask 916480
        %v661 = vsel %vm660, %v652, %v585
        %v662 = vsel %vm660, %v653, %v587
        %v663 = vsel %vm660, %v654, %v589
        %v664 = vsel %vm660, %v655, %v591
        %v665 = vsel %vm660, %v656, %v593
        %v666 = vsel %vm660, %v657, %v595
        %v667 = vsel %vm660, %v658, %v597
        %v668 = vsel %vm660, %v659, %v599
        %v669 = vld [vmem:[%s1] sm:$0xff]
        %v670 = vld [vmem:[%s1 + $0x8] sm:$0xff]
        %v671 = vld [vmem:[%s1 + $0x10] sm:$0xff]
        %v672 = vld [vmem:[%s1 + $0x18] sm:$0xff]
        %v673 = vld [vmem:[%s1 + $0x20] sm:$0xff]
        %v674 = vld [vmem:[%s1 + $0x28] sm:$0xff]
        %v675 = vld [vmem:[%s1 + $0x30] sm:$0xff]
        %v676 = vld [vmem:[%s1 + $0x38] sm:$0xff]
        %v677 = vld [vmem:[%s1 + $0x40] sm:$0xff]
        %v678 = vld [vmem:[%s1 + $0x48] sm:$0xff]
        %v679 = vld [vmem:[%s1 + $0x50] sm:$0xff]
        %v680 = vld [vmem:[%s1 + $0x58] sm:$0xff]
        %v681 = vld [vmem:[%s1 + $0x60] sm:$0xff]
        %v682 = vld [vmem:[%s1 + $0x68] sm:$0xff]
        %v683 = vld [vmem:[%s1 + $0x70] sm:$0xff]
        %v684 = vld [vmem:[%s1 + $0x78] sm:$0xff]
        %v685 = vld [vmem:[%s1 + $0x80] sm:$0xff]
        %v686 = vld [vmem:[%s1 + $0x88] sm:$0xff]
        %v688 = vsel %vm250, %v376, 0
        %v691 = vsel %vm250, %v377, 0
        %v694 = vsel %vm250, %v378, 0
        %v697 = vsel %vm250, %v379, 0
        %v700 = vsel %vm250, %v380, 0
        %v703 = vsel %vm250, %v381, 0
        %v706 = vsel %vm250, %v382, 0
        %v709 = vsel %vm250, %v383, 0
        %711 = vmatprep.subr.mxu0 0.0
        %712 = vmatpush1.msra.mxu0 %v669
        %713 = vmatprep.subr.mxu0 0.0
        %714 = vmatpush1.msra.mxu0 %v670
        %715 = vmatprep.subr.mxu0 0.0
        %716 = vmatpush1.msra.mxu0 %v671
        %717 = vmatprep.subr.mxu0 0.0
        %718 = vmatpush1.msra.mxu0 %v672
        %719 = vmatprep.subr.mxu0 0.0
        %720 = vmatpush1.msra.mxu0 %v673
        %721 = vmatprep.subr.mxu0 0.0
        %722 = vmatpush1.msra.mxu0 %v674
        %723 = vmatprep.subr.mxu0 0.0
        %724 = vmatpush1.msra.mxu0 %v675
        %725 = vmatprep.subr.mxu0 0.0
        %726 = vmatpush1.msra.mxu0 %v676
        %727 = vmatprep.subr.mxu0 0.0
        %728 = vmatpush1.msra.mxu0 %v677
        %729 = vmatprep.subr.mxu0 0.0
        %730 = vmatpush1.msra.mxu0 %v678
        %731 = vmatprep.subr.mxu0 0.0
        %732 = vmatpush1.msra.mxu0 %v679
        %733 = vmatprep.subr.mxu0 0.0
        %734 = vmatpush1.msra.mxu0 %v680
        %735 = vmatprep.subr.mxu0 0.0
        %736 = vmatpush1.msra.mxu0 %v681
        %737 = vmatprep.subr.mxu0 0.0
        %738 = vmatpush1.msra.mxu0 %v682
        %739 = vmatprep.subr.mxu0 0.0
        %740 = vmatpush1.msra.mxu0 %v683
        %741 = vmatprep.subr.mxu0 0.0
        %742 = vmatpush1.msra.mxu0 %v684
        %743 = vmatprep.subr.mxu0 0.0
        %744 = vmatpush1.msra.mxu0 %v685
        %745 = vmatprep.subr.mxu0 0.0
        %746 = vmatpush1.msra.mxu0 %v686
        %747 = vmatprep.subr.mxu0 0.0
        %748 = vmatpush1.msra.mxu0 0.0
        %749 = vmatprep.subr.mxu0 0.0
        %750 = vmatpush1.msra.mxu0 0.0
        %751 = vmatprep.subr.mxu0 0.0
        %752 = vmatpush1.msra.mxu0 0.0
        %753 = vmatprep.subr.mxu0 0.0
        %754 = vmatpush1.msra.mxu0 0.0
        %755 = vmatprep.subr.mxu0 0.0
        %756 = vmatpush1.msra.mxu0 0.0
        %757 = vmatprep.subr.mxu0 0.0
        %758 = vmatpush1.msra.mxu0 0.0
        %759 = vmatprep.subr.mxu0 0.0
        %760 = vmatpush1.msra.mxu0 0.0
        %761 = vmatprep.subr.mxu0 0.0
        %762 = vmatpush1.msra.mxu0 0.0
        %763 = vmatprep.subr.mxu0 0.0
        %764 = vmatpush1.msra.mxu0 0.0
        %765 = vmatprep.subr.mxu0 0.0
        %766 = vmatpush1.msra.mxu0 0.0
        %767 = vmatprep.subr.mxu0 0.0
        %768 = vmatpush1.msra.mxu0 0.0
        %769 = vmatprep.subr.mxu0 0.0
        %770 = vmatpush1.msra.mxu0 0.0
        %771 = vmatprep.subr.mxu0 0.0
        %772 = vmatpush1.msra.mxu0 0.0
        %773 = vmatprep.subr.mxu0 0.0
        %774 = vmatpush1.msra.mxu0 0.0
        %775 = vmatprep.mubr.f32.mxu0 %v688
        %776 = vmatmul.mubr.f32.gmra.mrb[0].mxu0 %v661
        %v777 = vpop.f32.mrb[0].mxu0
        %v778 = vadd.f32 0.0, %v777
        %v779 = vpop.f32.mrb[0].mxu0
        %780 = vmatprep.mubr.f32.mxu0 %v691
        %781 = vmatmul.mubr.f32.gmra.mrb[0].mxu0 %v662
        %v782 = vpop.f32.mrb[0].mxu0
        %v783 = vadd.f32 0.0, %v782
        %v784 = vpop.f32.mrb[0].mxu0
        %785 = vmatprep.mubr.f32.mxu0 %v694
        %786 = vmatmul.mubr.f32.gmra.mrb[0].mxu0 %v663
        %v787 = vpop.f32.mrb[0].mxu0
        %v788 = vadd.f32 0.0, %v787
        %v789 = vpop.f32.mrb[0].mxu0
        %790 = vmatprep.mubr.f32.mxu0 %v697
        %791 = vmatmul.mubr.f32.gmra.mrb[0].mxu0 %v664
        %v792 = vpop.f32.mrb[0].mxu0
        %v793 = vadd.f32 0.0, %v792
        %v794 = vpop.f32.mrb[0].mxu0
        %795 = vmatprep.mubr.f32.mxu0 %v700
        %796 = vmatmul.mubr.f32.gmra.mrb[0].mxu0 %v665
        %v797 = vpop.f32.mrb[0].mxu0
        %v798 = vadd.f32 0.0, %v797
        %v799 = vpop.f32.mrb[0].mxu0
        %800 = vmatprep.mubr.f32.mxu0 %v703
        %801 = vmatmul.mubr.f32.gmra.mrb[0].mxu0 %v666
        %v802 = vpop.f32.mrb[0].mxu0
        %v803 = vadd.f32 0.0, %v802
        %v804 = vpop.f32.mrb[0].mxu0
        %805 = vmatprep.mubr.f32.mxu0 %v706
        %806 = vmatmul.mubr.f32.gmra.mrb[0].mxu0 %v667
        %v807 = vpop.f32.mrb[0].mxu0
        %v808 = vadd.f32 0.0, %v807
        %v809 = vpop.f32.mrb[0].mxu0
        %810 = vmatprep.mubr.f32.mxu0 %v709
        %811 = vmatmul.mubr.f32.gmra.mrb[0].mxu0 %v668
        %v812 = vpop.f32.mrb[0].mxu0
        %v813 = vadd.f32 0.0, %v812
        %v814 = vpop.f32.mrb[0].mxu0
        %815 = vdwg.mxu0
        %v816 = vld [vmem:[%s2] sm:$0x3]
        %v817 = vlaneseq
        %v818 = vshrl.u32 %v817, 7
        %v819 = vsub.s32 0, %v818
        %v820 = vrot.slane %v816, %v819
        %v821 = vmul.f32 %v778, %v820
        %v822 = vmul.f32 %v783, %v820
        %v823 = vmul.f32 %v788, %v820
        %v824 = vmul.f32 %v793, %v820
        %v825 = vmul.f32 %v798, %v820
        %v826 = vmul.f32 %v803, %v820
        %v827 = vmul.f32 %v808, %v820
        %v828 = vmul.f32 %v813, %v820
        %v829 = vlaneseq
        %v830 = vshrl.u32 %v829, 7
        %v831 = vsub.s32 1, %v830
        %v832 = vrot.slane %v816, %v831
        %v833 = vadd.f32 %v821, %v832
        %v834 = vadd.f32 %v822, %v832
        %v835 = vadd.f32 %v823, %v832
        %v836 = vadd.f32 %v824, %v832
        %v837 = vadd.f32 %v825, %v832
        %v838 = vadd.f32 %v826, %v832
        %v839 = vadd.f32 %v827, %v832
        %v840 = vadd.f32 %v828, %v832
        %v841 = vmax.f32 %v833, 0.0
        %v842 = vmax.f32 %v834, 0.0
        %v843 = vmax.f32 %v835, 0.0
        %v844 = vmax.f32 %v836, 0.0
        %v845 = vmax.f32 %v837, 0.0
        %v846 = vmax.f32 %v838, 0.0
        %v847 = vmax.f32 %v839, 0.0
        %v848 = vmax.f32 %v840, 0.0
        %s849 = scalar_lea.vmem [#allocation3], 16
        %850 = vst.msk [vmem:[%s849 + $0x1] sm:$0xff] %vm272, %v841
        %851 = vst.msk [vmem:[%s849 + $0x11] sm:$0xff] %vm272, %v842
        %852 = vst.msk [vmem:[%s849 + $0x21] sm:$0xff] %vm272, %v843
        %853 = vst.msk [vmem:[%s849 + $0x31] sm:$0xff] %vm272, %v844
        %854 = vst.msk [vmem:[%s849 + $0x41] sm:$0xff] %vm272, %v845
        %855 = vst.msk [vmem:[%s849 + $0x51] sm:$0xff] %vm272, %v846
        %856 = vst.msk [vmem:[%s849 + $0x61] sm:$0xff] %vm272, %v847
        %857 = vst.msk [vmem:[%s849 + $0x71] sm:$0xff] %vm272, %v848
        %v858 = vld [vmem:[#allocation3] sm:$0xff]
        %v859 = vld [vmem:[#allocation3 + $0x10] sm:$0xff]
        %v860 = vld [vmem:[#allocation3 + $0x20] sm:$0xff]
        %v861 = vld [vmem:[#allocation3 + $0x30] sm:$0xff]
        %v862 = vld [vmem:[#allocation3 + $0x40] sm:$0xff]
        %v863 = vld [vmem:[#allocation3 + $0x50] sm:$0xff]
        %v864 = vld [vmem:[#allocation3 + $0x60] sm:$0xff]
        %v865 = vld [vmem:[#allocation3 + $0x70] sm:$0xff]
        %v866 = vld [vmem:[#allocation3 + $0x1] sm:$0xff]
        %v867 = vld [vmem:[#allocation3 + $0x11] sm:$0xff]
        %v868 = vld [vmem:[#allocation3 + $0x21] sm:$0xff]
        %v869 = vld [vmem:[#allocation3 + $0x31] sm:$0xff]
        %v870 = vld [vmem:[#allocation3 + $0x41] sm:$0xff]
        %v871 = vld [vmem:[#allocation3 + $0x51] sm:$0xff]
        %v872 = vld [vmem:[#allocation3 + $0x61] sm:$0xff]
        %v873 = vld [vmem:[#allocation3 + $0x71] sm:$0xff]
        %v874 = vld [vmem:[#allocation3 + $0x2] sm:$0xff]
        %v875 = vld [vmem:[#allocation3 + $0x12] sm:$0xff]
        %v876 = vld [vmem:[#allocation3 + $0x22] sm:$0xff]
        %v877 = vld [vmem:[#allocation3 + $0x32] sm:$0xff]
        %v878 = vld [vmem:[#allocation3 + $0x42] sm:$0xff]
        %v879 = vld [vmem:[#allocation3 + $0x52] sm:$0xff]
        %v880 = vld [vmem:[#allocation3 + $0x62] sm:$0xff]
        %v881 = vld [vmem:[#allocation3 + $0x72] sm:$0xff]
        %v882 = vld [vmem:[%s849] sm:$0xff]
        %v883 = vld [vmem:[%s849 + $0x10] sm:$0xff]
        %v884 = vld [vmem:[%s849 + $0x20] sm:$0xff]
        %v885 = vld [vmem:[%s849 + $0x30] sm:$0xff]
        %v886 = vld [vmem:[%s849 + $0x40] sm:$0xff]
        %v887 = vld [vmem:[%s849 + $0x50] sm:$0xff]
        %v888 = vld [vmem:[%s849 + $0x60] sm:$0xff]
        %v889 = vld [vmem:[%s849 + $0x70] sm:$0xff]
        %v890 = vld [vmem:[%s849 + $0x1] sm:$0xff]
        %v891 = vld [vmem:[%s849 + $0x11] sm:$0xff]
        %v892 = vld [vmem:[%s849 + $0x21] sm:$0xff]
        %v893 = vld [vmem:[%s849 + $0x31] sm:$0xff]
        %v894 = vld [vmem:[%s849 + $0x41] sm:$0xff]
        %v895 = vld [vmem:[%s849 + $0x51] sm:$0xff]
        %v896 = vld [vmem:[%s849 + $0x61] sm:$0xff]
        %v897 = vld [vmem:[%s849 + $0x71] sm:$0xff]
        %v898 = vld [vmem:[%s849 + $0x2] sm:$0xff]
        %v899 = vld [vmem:[%s849 + $0x12] sm:$0xff]
        %v900 = vld [vmem:[%s849 + $0x22] sm:$0xff]
        %v901 = vld [vmem:[%s849 + $0x32] sm:$0xff]
        %v902 = vld [vmem:[%s849 + $0x42] sm:$0xff]
        %v903 = vld [vmem:[%s849 + $0x52] sm:$0xff]
        %v904 = vld [vmem:[%s849 + $0x62] sm:$0xff]
        %v905 = vld [vmem:[%s849 + $0x72] sm:$0xff]
        %s906 = scalar_lea.vmem [#allocation3], 32
        %v907 = vld [vmem:[%s906] sm:$0xff]
        %v908 = vld [vmem:[%s906 + $0x10] sm:$0xff]
        %v909 = vld [vmem:[%s906 + $0x20] sm:$0xff]
        %v910 = vld [vmem:[%s906 + $0x30] sm:$0xff]
        %v911 = vld [vmem:[%s906 + $0x40] sm:$0xff]
        %v912 = vld [vmem:[%s906 + $0x50] sm:$0xff]
        %v913 = vld [vmem:[%s906 + $0x60] sm:$0xff]
        %v914 = vld [vmem:[%s906 + $0x70] sm:$0xff]
        %v915 = vld [vmem:[%s906 + $0x1] sm:$0xff]
        %v916 = vld [vmem:[%s906 + $0x11] sm:$0xff]
        %v917 = vld [vmem:[%s906 + $0x21] sm:$0xff]
        %v918 = vld [vmem:[%s906 + $0x31] sm:$0xff]
        %v919 = vld [vmem:[%s906 + $0x41] sm:$0xff]
        %v920 = vld [vmem:[%s906 + $0x51] sm:$0xff]
        %v921 = vld [vmem:[%s906 + $0x61] sm:$0xff]
        %v922 = vld [vmem:[%s906 + $0x71] sm:$0xff]
        %v923 = vld [vmem:[%s906 + $0x2] sm:$0xff]
        %v924 = vld [vmem:[%s906 + $0x12] sm:$0xff]
        %v925 = vld [vmem:[%s906 + $0x22] sm:$0xff]
        %v926 = vld [vmem:[%s906 + $0x32] sm:$0xff]
        %v927 = vld [vmem:[%s906 + $0x42] sm:$0xff]
        %v928 = vld [vmem:[%s906 + $0x52] sm:$0xff]
        %v929 = vld [vmem:[%s906 + $0x62] sm:$0xff]
        %v930 = vld [vmem:[%s906 + $0x72] sm:$0xff]
        %939 = vrot.lane.b32.xlu0 %v866, 32
        %v940 = vpop.permute.xlu0 %939
        %941 = vrot.lane.b32.xlu0 %v867, 32
        %v942 = vpop.permute.xlu0 %941
        %943 = vrot.lane.b32.xlu0 %v868, 32
        %v944 = vpop.permute.xlu0 %943
        %945 = vrot.lane.b32.xlu0 %v869, 32
        %v946 = vpop.permute.xlu0 %945
        %947 = vrot.lane.b32.xlu0 %v870, 32
        %v948 = vpop.permute.xlu0 %947
        %949 = vrot.lane.b32.xlu0 %v871, 32
        %v950 = vpop.permute.xlu0 %949
        %951 = vrot.lane.b32.xlu0 %v872, 32
        %v952 = vpop.permute.xlu0 %951
        %953 = vrot.lane.b32.xlu0 %v873, 32
        %v954 = vpop.permute.xlu0 %953
        %971 = vrot.lane.b32.xlu0 %v874, 64
        %v972 = vpop.permute.xlu0 %971
        %973 = vrot.lane.b32.xlu0 %v875, 64
        %v974 = vpop.permute.xlu0 %973
        %975 = vrot.lane.b32.xlu0 %v876, 64
        %v976 = vpop.permute.xlu0 %975
        %977 = vrot.lane.b32.xlu0 %v877, 64
        %v978 = vpop.permute.xlu0 %977
        %979 = vrot.lane.b32.xlu0 %v878, 64
        %v980 = vpop.permute.xlu0 %979
        %981 = vrot.lane.b32.xlu0 %v879, 64
        %v982 = vpop.permute.xlu0 %981
        %983 = vrot.lane.b32.xlu0 %v880, 64
        %v984 = vpop.permute.xlu0 %983
        %985 = vrot.lane.b32.xlu0 %v881, 64
        %v986 = vpop.permute.xlu0 %985
        %1003 = vrot.lane.b32.xlu0 %v882, 96
        %v1004 = vpop.permute.xlu0 %1003
        %1005 = vrot.lane.b32.xlu0 %v883, 96
        %v1006 = vpop.permute.xlu0 %1005
        %1007 = vrot.lane.b32.xlu0 %v884, 96
        %v1008 = vpop.permute.xlu0 %1007
        %1009 = vrot.lane.b32.xlu0 %v885, 96
        %v1010 = vpop.permute.xlu0 %1009
        %1011 = vrot.lane.b32.xlu0 %v886, 96
        %v1012 = vpop.permute.xlu0 %1011
        %1013 = vrot.lane.b32.xlu0 %v887, 96
        %v1014 = vpop.permute.xlu0 %1013
        %1015 = vrot.lane.b32.xlu0 %v888, 96
        %v1016 = vpop.permute.xlu0 %1015
        %1017 = vrot.lane.b32.xlu0 %v889, 96
        %v1018 = vpop.permute.xlu0 %1017
        %1035 = vrot.lane.b32.xlu0 %v898, 32
        %v1036 = vpop.permute.xlu0 %1035
        %1037 = vrot.lane.b32.xlu0 %v899, 32
        %v1038 = vpop.permute.xlu0 %1037
        %1039 = vrot.lane.b32.xlu0 %v900, 32
        %v1040 = vpop.permute.xlu0 %1039
        %1041 = vrot.lane.b32.xlu0 %v901, 32
        %v1042 = vpop.permute.xlu0 %1041
        %1043 = vrot.lane.b32.xlu0 %v902, 32
        %v1044 = vpop.permute.xlu0 %1043
        %1045 = vrot.lane.b32.xlu0 %v903, 32
        %v1046 = vpop.permute.xlu0 %1045
        %1047 = vrot.lane.b32.xlu0 %v904, 32
        %v1048 = vpop.permute.xlu0 %1047
        %1049 = vrot.lane.b32.xlu0 %v905, 32
        %v1050 = vpop.permute.xlu0 %1049
        %1067 = vrot.lane.b32.xlu0 %v907, 64
        %v1068 = vpop.permute.xlu0 %1067
        %1069 = vrot.lane.b32.xlu0 %v908, 64
        %v1070 = vpop.permute.xlu0 %1069
        %1071 = vrot.lane.b32.xlu0 %v909, 64
        %v1072 = vpop.permute.xlu0 %1071
        %1073 = vrot.lane.b32.xlu0 %v910, 64
        %v1074 = vpop.permute.xlu0 %1073
        %1075 = vrot.lane.b32.xlu0 %v911, 64
        %v1076 = vpop.permute.xlu0 %1075
        %1077 = vrot.lane.b32.xlu0 %v912, 64
        %v1078 = vpop.permute.xlu0 %1077
        %1079 = vrot.lane.b32.xlu0 %v913, 64
        %v1080 = vpop.permute.xlu0 %1079
        %1081 = vrot.lane.b32.xlu0 %v914, 64
        %v1082 = vpop.permute.xlu0 %1081
        %1099 = vrot.lane.b32.xlu0 %v915, 96
        %v1100 = vpop.permute.xlu0 %1099
        %1101 = vrot.lane.b32.xlu0 %v916, 96
        %v1102 = vpop.permute.xlu0 %1101
        %1103 = vrot.lane.b32.xlu0 %v917, 96
        %v1104 = vpop.permute.xlu0 %1103
        %1105 = vrot.lane.b32.xlu0 %v918, 96
        %v1106 = vpop.permute.xlu0 %1105
        %1107 = vrot.lane.b32.xlu0 %v919, 96
        %v1108 = vpop.permute.xlu0 %1107
        %1109 = vrot.lane.b32.xlu0 %v920, 96
        %v1110 = vpop.permute.xlu0 %1109
        %1111 = vrot.lane.b32.xlu0 %v921, 96
        %v1112 = vpop.permute.xlu0 %1111
        %1113 = vrot.lane.b32.xlu0 %v922, 96
        %v1114 = vpop.permute.xlu0 %1113
        %v1123 = vsel %vm272, %v858, %v940
        %v1124 = vsel %vm272, %v859, %v942
        %v1125 = vsel %vm272, %v860, %v944
        %v1126 = vsel %vm272, %v861, %v946
        %v1127 = vsel %vm272, %v862, %v948
        %v1128 = vsel %vm272, %v863, %v950
        %v1129 = vsel %vm272, %v864, %v952
        %v1130 = vsel %vm272, %v865, %v954
        %v1131 = vsel %vm633, %v1123, %v972
        %v1132 = vsel %vm633, %v1124, %v974
        %v1133 = vsel %vm633, %v1125, %v976
        %v1134 = vsel %vm633, %v1126, %v978
        %v1135 = vsel %vm633, %v1127, %v980
        %v1136 = vsel %vm633, %v1128, %v982
        %v1137 = vsel %vm633, %v1129, %v984
        %v1138 = vsel %vm633, %v1130, %v986
        %v1139 = vsel %vm651, %v1131, %v1004
        %v1140 = vsel %vm651, %v1132, %v1006
        %v1141 = vsel %vm651, %v1133, %v1008
        %v1142 = vsel %vm651, %v1134, %v1010
        %v1143 = vsel %vm651, %v1135, %v1012
        %v1144 = vsel %vm651, %v1136, %v1014
        %v1145 = vsel %vm651, %v1137, %v1016
        %v1146 = vsel %vm651, %v1138, %v1018
        %v1147 = vsel %vm272, %v890, %v1036
        %v1148 = vsel %vm272, %v891, %v1038
        %v1149 = vsel %vm272, %v892, %v1040
        %v1150 = vsel %vm272, %v893, %v1042
        %v1151 = vsel %vm272, %v894, %v1044
        %v1152 = vsel %vm272, %v895, %v1046
        %v1153 = vsel %vm272, %v896, %v1048
        %v1154 = vsel %vm272, %v897, %v1050
        %v1155 = vsel %vm633, %v1147, %v1068
        %v1156 = vsel %vm633, %v1148, %v1070
        %v1157 = vsel %vm633, %v1149, %v1072
        %v1158 = vsel %vm633, %v1150, %v1074
        %v1159 = vsel %vm633, %v1151, %v1076
        %v1160 = vsel %vm633, %v1152, %v1078
        %v1161 = vsel %vm633, %v1153, %v1080
        %v1162 = vsel %vm633, %v1154, %v1082
        %v1163 = vsel %vm651, %v1155, %v1100
        %v1164 = vsel %vm651, %v1156, %v1102
        %v1165 = vsel %vm651, %v1157, %v1104
        %v1166 = vsel %vm651, %v1158, %v1106
        %v1167 = vsel %vm651, %v1159, %v1108
        %v1168 = vsel %vm651, %v1160, %v1110
        %v1169 = vsel %vm651, %v1161, %v1112
        %v1170 = vsel %vm651, %v1162, %v1114
        %v1171 = vld [vmem:[%s3] sm:$0xff]
        %v1172 = vld [vmem:[%s3 + $0x8] sm:$0xff]
        %v1173 = vld [vmem:[%s3 + $0x10] sm:$0xff]
        %v1174 = vld [vmem:[%s3 + $0x18] sm:$0xff]
        %v1175 = vld [vmem:[%s3 + $0x20] sm:$0xff]
        %v1176 = vld [vmem:[%s3 + $0x28] sm:$0xff]
        %v1177 = vld [vmem:[%s3 + $0x30] sm:$0xff]
        %v1178 = vld [vmem:[%s3 + $0x38] sm:$0xff]
        %v1179 = vld [vmem:[%s3 + $0x40] sm:$0xff]
        %v1180 = vld [vmem:[%s3 + $0x48] sm:$0xff]
        %v1181 = vld [vmem:[%s3 + $0x50] sm:$0xff]
        %v1182 = vld [vmem:[%s3 + $0x58] sm:$0xff]
        %v1183 = vld [vmem:[%s3 + $0x60] sm:$0xff]
        %v1184 = vld [vmem:[%s3 + $0x68] sm:$0xff]
        %v1185 = vld [vmem:[%s3 + $0x70] sm:$0xff]
        %v1186 = vld [vmem:[%s3 + $0x78] sm:$0xff]
        %v1187 = vld [vmem:[%s3 + $0x80] sm:$0xff]
        %v1188 = vld [vmem:[%s3 + $0x88] sm:$0xff]
        %v1189 = vld [vmem:[%s3 + $0x90] sm:$0xff]
        %v1190 = vld [vmem:[%s3 + $0x98] sm:$0xff]
        %v1191 = vld [vmem:[%s3 + $0xa0] sm:$0xff]
        %v1192 = vld [vmem:[%s3 + $0xa8] sm:$0xff]
        %v1193 = vld [vmem:[%s3 + $0xb0] sm:$0xff]
        %v1194 = vld [vmem:[%s3 + $0xb8] sm:$0xff]
        %v1195 = vld [vmem:[%s3 + $0xc0] sm:$0xff]
        %v1196 = vld [vmem:[%s3 + $0xc8] sm:$0xff]
        %v1197 = vld [vmem:[%s3 + $0xd0] sm:$0xff]
        %v1198 = vld [vmem:[%s3 + $0xd8] sm:$0xff]
        %v1199 = vld [vmem:[%s3 + $0xe0] sm:$0xff]
        %v1200 = vld [vmem:[%s3 + $0xe8] sm:$0xff]
        %v1201 = vld [vmem:[%s3 + $0xf0] sm:$0xff]
        %v1202 = vld [vmem:[%s3 + $0xf8] sm:$0xff]
        %v1203 = vld [vmem:[%s3 + $0x100] sm:$0xff]
        %v1204 = vld [vmem:[%s3 + $0x108] sm:$0xff]
        %v1205 = vld [vmem:[%s3 + $0x110] sm:$0xff]
        %v1206 = vld [vmem:[%s3 + $0x118] sm:$0xff]
        %v1208 = vsel %vm272, %v923, 0
        %v1211 = vsel %vm272, %v924, 0
        %v1214 = vsel %vm272, %v925, 0
        %v1217 = vsel %vm272, %v926, 0
        %v1220 = vsel %vm272, %v927, 0
        %v1223 = vsel %vm272, %v928, 0
        %v1226 = vsel %vm272, %v929, 0
        %v1229 = vsel %vm272, %v930, 0
        %1231 = vmatprep.subr.mxu0 0.0
        %1232 = vmatpush1.msra.mxu0 %v1171
        %1233 = vmatprep.subr.mxu0 0.0
        %1234 = vmatpush1.msra.mxu0 %v1172
        %1235 = vmatprep.subr.mxu0 0.0
        %1236 = vmatpush1.msra.mxu0 %v1173
        %1237 = vmatprep.subr.mxu0 0.0
        %1238 = vmatpush1.msra.mxu0 %v1174
        %1239 = vmatprep.subr.mxu0 0.0
        %1240 = vmatpush1.msra.mxu0 %v1175
        %1241 = vmatprep.subr.mxu0 0.0
        %1242 = vmatpush1.msra.mxu0 %v1176
        %1243 = vmatprep.subr.mxu0 0.0
        %1244 = vmatpush1.msra.mxu0 %v1177
        %1245 = vmatprep.subr.mxu0 0.0
        %1246 = vmatpush1.msra.mxu0 %v1178
        %1247 = vmatprep.subr.mxu0 0.0
        %1248 = vmatpush1.msra.mxu0 %v1179
        %1249 = vmatprep.subr.mxu0 0.0
        %1250 = vmatpush1.msra.mxu0 %v1180
        %1251 = vmatprep.subr.mxu0 0.0
        %1252 = vmatpush1.msra.mxu0 %v1181
        %1253 = vmatprep.subr.mxu0 0.0
        %1254 = vmatpush1.msra.mxu0 %v1182
        %1255 = vmatprep.subr.mxu0 0.0
        %1256 = vmatpush1.msra.mxu0 %v1183
        %1257 = vmatprep.subr.mxu0 0.0
        %1258 = vmatpush1.msra.mxu0 %v1184
        %1259 = vmatprep.subr.mxu0 0.0
        %1260 = vmatpush1.msra.mxu0 %v1185
        %1261 = vmatprep.subr.mxu0 0.0
        %1262 = vmatpush1.msra.mxu0 %v1186
        %1263 = vmatprep.subr.mxu0 0.0
        %1264 = vmatpush1.msra.mxu0 %v1187
        %1265 = vmatprep.subr.mxu0 0.0
        %1266 = vmatpush1.msra.mxu0 %v1188
        %1267 = vmatprep.subr.mxu0 0.0
        %1268 = vmatpush1.msra.mxu0 %v1189
        %1269 = vmatprep.subr.mxu0 0.0
        %1270 = vmatpush1.msra.mxu0 %v1190
        %1271 = vmatprep.subr.mxu0 0.0
        %1272 = vmatpush1.msra.mxu0 %v1191
        %1273 = vmatprep.subr.mxu0 0.0
        %1274 = vmatpush1.msra.mxu0 %v1192
        %1275 = vmatprep.subr.mxu0 0.0
        %1276 = vmatpush1.msra.mxu0 %v1193
        %1277 = vmatprep.subr.mxu0 0.0
        %1278 = vmatpush1.msra.mxu0 %v1194
        %1279 = vmatprep.subr.mxu0 0.0
        %1280 = vmatpush1.msra.mxu0 %v1195
        %1281 = vmatprep.subr.mxu0 0.0
        %1282 = vmatpush1.msra.mxu0 %v1196
        %1283 = vmatprep.subr.mxu0 0.0
        %1284 = vmatpush1.msra.mxu0 %v1197
        %1285 = vmatprep.subr.mxu0 0.0
        %1286 = vmatpush1.msra.mxu0 %v1198
        %1287 = vmatprep.subr.mxu0 0.0
        %1288 = vmatpush1.msra.mxu0 %v1199
        %1289 = vmatprep.subr.mxu0 0.0
        %1290 = vmatpush1.msra.mxu0 %v1200
        %1291 = vmatprep.subr.mxu0 0.0
        %1292 = vmatpush1.msra.mxu0 %v1201
        %1293 = vmatprep.subr.mxu0 0.0
        %1294 = vmatpush1.msra.mxu0 %v1202
        %1295 = vmatprep.mubr.f32.mxu0 %v1163
        %1296 = vmatmul.mubr.f32.gmra.mrb[0].mxu0 %v1139
        %v1297 = vpop.f32.mrb[0].mxu0
        %v1298 = vadd.f32 0.0, %v1297
        %v1299 = vpop.f32.mrb[0].mxu0
        %1300 = vmatprep.mubr.f32.mxu0 %v1164
        %1301 = vmatmul.mubr.f32.gmra.mrb[0].mxu0 %v1140
        %v1302 = vpop.f32.mrb[0].mxu0
        %v1303 = vadd.f32 0.0, %v1302
        %v1304 = vpop.f32.mrb[0].mxu0
        %1305 = vmatprep.mubr.f32.mxu0 %v1165
        %1306 = vmatmul.mubr.f32.gmra.mrb[0].mxu0 %v1141
        %v1307 = vpop.f32.mrb[0].mxu0
        %v1308 = vadd.f32 0.0, %v1307
        %v1309 = vpop.f32.mrb[0].mxu0
        %1310 = vmatprep.mubr.f32.mxu0 %v1166
        %1311 = vmatmul.mubr.f32.gmra.mrb[0].mxu0 %v1142
        %v1312 = vpop.f32.mrb[0].mxu0
        %v1313 = vadd.f32 0.0, %v1312
        %v1314 = vpop.f32.mrb[0].mxu0
        %1315 = vmatprep.mubr.f32.mxu0 %v1167
        %1316 = vmatmul.mubr.f32.gmra.mrb[0].mxu0 %v1143
        %v1317 = vpop.f32.mrb[0].mxu0
        %v1318 = vadd.f32 0.0, %v1317
        %v1319 = vpop.f32.mrb[0].mxu0
        %1320 = vmatprep.mubr.f32.mxu0 %v1168
        %1321 = vmatmul.mubr.f32.gmra.mrb[0].mxu0 %v1144
        %v1322 = vpop.f32.mrb[0].mxu0
        %v1323 = vadd.f32 0.0, %v1322
        %v1324 = vpop.f32.mrb[0].mxu0
        %1325 = vmatprep.mubr.f32.mxu0 %v1169
        %1326 = vmatmul.mubr.f32.gmra.mrb[0].mxu0 %v1145
        %v1327 = vpop.f32.mrb[0].mxu0
        %v1328 = vadd.f32 0.0, %v1327
        %v1329 = vpop.f32.mrb[0].mxu0
        %1330 = vmatprep.mubr.f32.mxu0 %v1170
        %1331 = vmatmul.mubr.f32.gmra.mrb[0].mxu0 %v1146
        %v1332 = vpop.f32.mrb[0].mxu0
        %v1333 = vadd.f32 0.0, %v1332
        %v1334 = vpop.f32.mrb[0].mxu0
        %1335 = vdwg.mxu0
        %1336 = vmatprep.subr.mxu0 0.0
        %1337 = vmatpush1.msra.mxu0 %v1203
        %1338 = vmatprep.subr.mxu0 0.0
        %1339 = vmatpush1.msra.mxu0 %v1204
        %1340 = vmatprep.subr.mxu0 0.0
        %1341 = vmatpush1.msra.mxu0 %v1205
        %1342 = vmatprep.subr.mxu0 0.0
        %1343 = vmatpush1.msra.mxu0 %v1206
        %1344 = vmatprep.subr.mxu0 0.0
        %1345 = vmatpush1.msra.mxu0 0.0
        %1346 = vmatprep.subr.mxu0 0.0
        %1347 = vmatpush1.msra.mxu0 0.0
        %1348 = vmatprep.subr.mxu0 0.0
        %1349 = vmatpush1.msra.mxu0 0.0
        %1350 = vmatprep.subr.mxu0 0.0
        %1351 = vmatpush1.msra.mxu0 0.0
        %1352 = vmatprep.subr.mxu0 0.0
        %1353 = vmatpush1.msra.mxu0 0.0
        %1354 = vmatprep.subr.mxu0 0.0
        %1355 = vmatpush1.msra.mxu0 0.0
        %1356 = vmatprep.subr.mxu0 0.0
        %1357 = vmatpush1.msra.mxu0 0.0
        %1358 = vmatprep.subr.mxu0 0.0
        %1359 = vmatpush1.msra.mxu0 0.0
        %1360 = vmatprep.subr.mxu0 0.0
        %1361 = vmatpush1.msra.mxu0 0.0
        %1362 = vmatprep.subr.mxu0 0.0
        %1363 = vmatpush1.msra.mxu0 0.0
        %1364 = vmatprep.subr.mxu0 0.0
        %1365 = vmatpush1.msra.mxu0 0.0
        %1366 = vmatprep.subr.mxu0 0.0
        %1367 = vmatpush1.msra.mxu0 0.0
        %1368 = vmatprep.subr.mxu0 0.0
        %1369 = vmatpush1.msra.mxu0 0.0
        %1370 = vmatprep.subr.mxu0 0.0
        %1371 = vmatpush1.msra.mxu0 0.0
        %1372 = vmatprep.subr.mxu0 0.0
        %1373 = vmatpush1.msra.mxu0 0.0
        %1374 = vmatprep.subr.mxu0 0.0
        %1375 = vmatpush1.msra.mxu0 0.0
        %1376 = vmatprep.subr.mxu0 0.0
        %1377 = vmatpush1.msra.mxu0 0.0
        %1378 = vmatprep.subr.mxu0 0.0
        %1379 = vmatpush1.msra.mxu0 0.0
        %1380 = vmatprep.subr.mxu0 0.0
        %1381 = vmatpush1.msra.mxu0 0.0
        %1382 = vmatprep.subr.mxu0 0.0
        %1383 = vmatpush1.msra.mxu0 0.0
        %1384 = vmatprep.subr.mxu0 0.0
        %1385 = vmatpush1.msra.mxu0 0.0
        %1386 = vmatprep.subr.mxu0 0.0
        %1387 = vmatpush1.msra.mxu0 0.0
        %1388 = vmatprep.subr.mxu0 0.0
        %1389 = vmatpush1.msra.mxu0 0.0
        %1390 = vmatprep.subr.mxu0 0.0
        %1391 = vmatpush1.msra.mxu0 0.0
        %1392 = vmatprep.subr.mxu0 0.0
        %1393 = vmatpush1.msra.mxu0 0.0
        %1394 = vmatprep.subr.mxu0 0.0
        %1395 = vmatpush1.msra.mxu0 0.0
        %1396 = vmatprep.subr.mxu0 0.0
        %1397 = vmatpush1.msra.mxu0 0.0
        %1398 = vmatprep.subr.mxu0 0.0
        %1399 = vmatpush1.msra.mxu0 0.0
        %1400 = vmatprep.mubr.f32.mxu0 0.0
        %1401 = vmatmul.mubr.f32.gmra.mrb[0].mxu0 %v1208
        %v1402 = vpop.f32.mrb[0].mxu0
        %v1403 = vadd.f32 %v1298, %v1402
        %v1404 = vpop.f32.mrb[0].mxu0
        %1405 = vmatprep.mubr.f32.mxu0 0.0
        %1406 = vmatmul.mubr.f32.gmra.mrb[0].mxu0 %v1211
        %v1407 = vpop.f32.mrb[0].mxu0
        %v1408 = vadd.f32 %v1303, %v1407
        %v1409 = vpop.f32.mrb[0].mxu0
        %1410 = vmatprep.mubr.f32.mxu0 0.0
        %1411 = vmatmul.mubr.f32.gmra.mrb[0].mxu0 %v1214
        %v1412 = vpop.f32.mrb[0].mxu0
        %v1413 = vadd.f32 %v1308, %v1412
        %v1414 = vpop.f32.mrb[0].mxu0
        %1415 = vmatprep.mubr.f32.mxu0 0.0
        %1416 = vmatmul.mubr.f32.gmra.mrb[0].mxu0 %v1217
        %v1417 = vpop.f32.mrb[0].mxu0
        %v1418 = vadd.f32 %v1313, %v1417
        %v1419 = vpop.f32.mrb[0].mxu0
        %1420 = vmatprep.mubr.f32.mxu0 0.0
        %1421 = vmatmul.mubr.f32.gmra.mrb[0].mxu0 %v1220
        %v1422 = vpop.f32.mrb[0].mxu0
        %v1423 = vadd.f32 %v1318, %v1422
        %v1424 = vpop.f32.mrb[0].mxu0
        %1425 = vmatprep.mubr.f32.mxu0 0.0
        %1426 = vmatmul.mubr.f32.gmra.mrb[0].mxu0 %v1223
        %v1427 = vpop.f32.mrb[0].mxu0
        %v1428 = vadd.f32 %v1323, %v1427
        %v1429 = vpop.f32.mrb[0].mxu0
        %1430 = vmatprep.mubr.f32.mxu0 0.0
        %1431 = vmatmul.mubr.f32.gmra.mrb[0].mxu0 %v1226
        %v1432 = vpop.f32.mrb[0].mxu0
        %v1433 = vadd.f32 %v1328, %v1432
        %v1434 = vpop.f32.mrb[0].mxu0
        %1435 = vmatprep.mubr.f32.mxu0 0.0
        %1436 = vmatmul.mubr.f32.gmra.mrb[0].mxu0 %v1229
        %v1437 = vpop.f32.mrb[0].mxu0
        %v1438 = vadd.f32 %v1333, %v1437
        %v1439 = vpop.f32.mrb[0].mxu0
        %1440 = vdwg.mxu0
        %v1441 = vld [vmem:[%s4] sm:$0x3]
        %v1442 = vlaneseq
        %v1443 = vshrl.u32 %v1442, 7
        %v1444 = vsub.s32 0, %v1443
        %v1445 = vrot.slane %v1441, %v1444
        %v1446 = vmul.f32 %v1403, %v1445
        %v1447 = vmul.f32 %v1408, %v1445
        %v1448 = vmul.f32 %v1413, %v1445
        %v1449 = vmul.f32 %v1418, %v1445
        %v1450 = vmul.f32 %v1423, %v1445
        %v1451 = vmul.f32 %v1428, %v1445
        %v1452 = vmul.f32 %v1433, %v1445
        %v1453 = vmul.f32 %v1438, %v1445
        %v1454 = vlaneseq
        %v1455 = vshrl.u32 %v1454, 7
        %v1456 = vsub.s32 1, %v1455
        %v1457 = vrot.slane %v1441, %v1456
        %v1458 = vadd.f32 %v1446, %v1457
        %v1459 = vadd.f32 %v1447, %v1457
        %v1460 = vadd.f32 %v1448, %v1457
        %v1461 = vadd.f32 %v1449, %v1457
        %v1462 = vadd.f32 %v1450, %v1457
        %v1463 = vadd.f32 %v1451, %v1457
        %v1464 = vadd.f32 %v1452, %v1457
        %v1465 = vadd.f32 %v1453, %v1457
        %v1466 = vmax.f32 %v1458, 0.0
        %v1467 = vmax.f32 %v1459, 0.0
        %v1468 = vmax.f32 %v1460, 0.0
        %v1469 = vmax.f32 %v1461, 0.0
        %v1470 = vmax.f32 %v1462, 0.0
        %v1471 = vmax.f32 %v1463, 0.0
        %v1472 = vmax.f32 %v1464, 0.0
        %v1473 = vmax.f32 %v1465, 0.0
        %1474 = vst.msk [vmem:[#allocation4] sm:$0xff] %vm272, %v1466
        %1475 = vst.msk [vmem:[#allocation4 + $0x8] sm:$0xff] %vm272, %v1467
        %1476 = vst.msk [vmem:[#allocation4 + $0x10] sm:$0xff] %vm272, %v1468
        %1477 = vst.msk [vmem:[#allocation4 + $0x18] sm:$0xff] %vm272, %v1469
        %1478 = vst.msk [vmem:[#allocation4 + $0x20] sm:$0xff] %vm272, %v1470
        %1479 = vst.msk [vmem:[#allocation4 + $0x28] sm:$0xff] %vm272, %v1471
        %1480 = vst.msk [vmem:[#allocation4 + $0x30] sm:$0xff] %vm272, %v1472
        %1481 = vst.msk [vmem:[#allocation4 + $0x38] sm:$0xff] %vm272, %v1473
        %v1482 = vld [vmem:[%s249] sm:$0xff]
        %v1483 = vld [vmem:[%s249 + $0x8] sm:$0xff]
        %v1484 = vld [vmem:[%s249 + $0x10] sm:$0xff]
        %v1485 = vld [vmem:[%s249 + $0x18] sm:$0xff]
        %v1486 = vld [vmem:[%s249 + $0x20] sm:$0xff]
        %v1487 = vld [vmem:[%s249 + $0x28] sm:$0xff]
        %v1488 = vld [vmem:[%s249 + $0x30] sm:$0xff]
        %v1489 = vld [vmem:[%s249 + $0x38] sm:$0xff]
        %1498 = vrot.lane.b32.xlu0 %v1482, 112
        %v1499 = vpop.permute.xlu0 %1498
        %1500 = vrot.lane.b32.xlu0 %v1483, 112
        %v1501 = vpop.permute.xlu0 %1500
        %1502 = vrot.lane.b32.xlu0 %v1484, 112
        %v1503 = vpop.permute.xlu0 %1502
        %1504 = vrot.lane.b32.xlu0 %v1485, 112
        %v1505 = vpop.permute.xlu0 %1504
        %1506 = vrot.lane.b32.xlu0 %v1486, 112
        %v1507 = vpop.permute.xlu0 %1506
        %1508 = vrot.lane.b32.xlu0 %v1487, 112
        %v1509 = vpop.permute.xlu0 %1508
        %1510 = vrot.lane.b32.xlu0 %v1488, 112
        %v1511 = vpop.permute.xlu0 %1510
        %1512 = vrot.lane.b32.xlu0 %v1489, 112
        %v1513 = vpop.permute.xlu0 %1512
        %1522 = vst.msk [vmem:[%s302 + $0x1] sm:$0xff] %vm250, %v1499
        %1523 = vst.msk [vmem:[%s302 + $0x11] sm:$0xff] %vm250, %v1501
        %1524 = vst.msk [vmem:[%s302 + $0x21] sm:$0xff] %vm250, %v1503
        %1525 = vst.msk [vmem:[%s302 + $0x31] sm:$0xff] %vm250, %v1505
        %1526 = vst.msk [vmem:[%s302 + $0x41] sm:$0xff] %vm250, %v1507
        %1527 = vst.msk [vmem:[%s302 + $0x51] sm:$0xff] %vm250, %v1509
        %1528 = vst.msk [vmem:[%s302 + $0x61] sm:$0xff] %vm250, %v1511
        %1529 = vst.msk [vmem:[%s302 + $0x71] sm:$0xff] %vm250, %v1513
        %v1530 = vld [vmem:[#allocation2] sm:$0xff]
        %v1531 = vld [vmem:[#allocation2 + $0x10] sm:$0xff]
        %v1532 = vld [vmem:[#allocation2 + $0x20] sm:$0xff]
        %v1533 = vld [vmem:[#allocation2 + $0x30] sm:$0xff]
        %v1534 = vld [vmem:[#allocation2 + $0x40] sm:$0xff]
        %v1535 = vld [vmem:[#allocation2 + $0x50] sm:$0xff]
        %v1536 = vld [vmem:[#allocation2 + $0x60] sm:$0xff]
        %v1537 = vld [vmem:[#allocation2 + $0x70] sm:$0xff]
        %v1538 = vld [vmem:[#allocation2 + $0x1] sm:$0xff]
        %v1539 = vld [vmem:[#allocation2 + $0x11] sm:$0xff]
        %v1540 = vld [vmem:[#allocation2 + $0x21] sm:$0xff]
        %v1541 = vld [vmem:[#allocation2 + $0x31] sm:$0xff]
        %v1542 = vld [vmem:[#allocation2 + $0x41] sm:$0xff]
        %v1543 = vld [vmem:[#allocation2 + $0x51] sm:$0xff]
        %v1544 = vld [vmem:[#allocation2 + $0x61] sm:$0xff]
        %v1545 = vld [vmem:[#allocation2 + $0x71] sm:$0xff]
        %v1546 = vld [vmem:[#allocation2 + $0x2] sm:$0xff]
        %v1547 = vld [vmem:[#allocation2 + $0x12] sm:$0xff]
        %v1548 = vld [vmem:[#allocation2 + $0x22] sm:$0xff]
        %v1549 = vld [vmem:[#allocation2 + $0x32] sm:$0xff]
        %v1550 = vld [vmem:[#allocation2 + $0x42] sm:$0xff]
        %v1551 = vld [vmem:[#allocation2 + $0x52] sm:$0xff]
        %v1552 = vld [vmem:[#allocation2 + $0x62] sm:$0xff]
        %v1553 = vld [vmem:[#allocation2 + $0x72] sm:$0xff]
        %v1554 = vld [vmem:[%s302] sm:$0xff]
        %v1555 = vld [vmem:[%s302 + $0x10] sm:$0xff]
        %v1556 = vld [vmem:[%s302 + $0x20] sm:$0xff]
        %v1557 = vld [vmem:[%s302 + $0x30] sm:$0xff]
        %v1558 = vld [vmem:[%s302 + $0x40] sm:$0xff]
        %v1559 = vld [vmem:[%s302 + $0x50] sm:$0xff]
        %v1560 = vld [vmem:[%s302 + $0x60] sm:$0xff]
        %v1561 = vld [vmem:[%s302 + $0x70] sm:$0xff]
        %v1562 = vld [vmem:[%s302 + $0x1] sm:$0xff]
        %v1563 = vld [vmem:[%s302 + $0x11] sm:$0xff]
        %v1564 = vld [vmem:[%s302 + $0x21] sm:$0xff]
        %v1565 = vld [vmem:[%s302 + $0x31] sm:$0xff]
        %v1566 = vld [vmem:[%s302 + $0x41] sm:$0xff]
        %v1567 = vld [vmem:[%s302 + $0x51] sm:$0xff]
        %v1568 = vld [vmem:[%s302 + $0x61] sm:$0xff]
        %v1569 = vld [vmem:[%s302 + $0x71] sm:$0xff]
        %v1570 = vld [vmem:[%s302 + $0x2] sm:$0xff]
        %v1571 = vld [vmem:[%s302 + $0x12] sm:$0xff]
        %v1572 = vld [vmem:[%s302 + $0x22] sm:$0xff]
        %v1573 = vld [vmem:[%s302 + $0x32] sm:$0xff]
        %v1574 = vld [vmem:[%s302 + $0x42] sm:$0xff]
        %v1575 = vld [vmem:[%s302 + $0x52] sm:$0xff]
        %v1576 = vld [vmem:[%s302 + $0x62] sm:$0xff]
        %v1577 = vld [vmem:[%s302 + $0x72] sm:$0xff]
        %v1578 = vld [vmem:[%s359] sm:$0xff]
        %v1579 = vld [vmem:[%s359 + $0x10] sm:$0xff]
        %v1580 = vld [vmem:[%s359 + $0x20] sm:$0xff]
        %v1581 = vld [vmem:[%s359 + $0x30] sm:$0xff]
        %v1582 = vld [vmem:[%s359 + $0x40] sm:$0xff]
        %v1583 = vld [vmem:[%s359 + $0x50] sm:$0xff]
        %v1584 = vld [vmem:[%s359 + $0x60] sm:$0xff]
        %v1585 = vld [vmem:[%s359 + $0x70] sm:$0xff]
        %v1586 = vld [vmem:[%s359 + $0x1] sm:$0xff]
        %v1587 = vld [vmem:[%s359 + $0x11] sm:$0xff]
        %v1588 = vld [vmem:[%s359 + $0x21] sm:$0xff]
        %v1589 = vld [vmem:[%s359 + $0x31] sm:$0xff]
        %v1590 = vld [vmem:[%s359 + $0x41] sm:$0xff]
        %v1591 = vld [vmem:[%s359 + $0x51] sm:$0xff]
        %v1592 = vld [vmem:[%s359 + $0x61] sm:$0xff]
        %v1593 = vld [vmem:[%s359 + $0x71] sm:$0xff]
        %v1594 = vld [vmem:[%s359 + $0x2] sm:$0xff]
        %v1595 = vld [vmem:[%s359 + $0x12] sm:$0xff]
        %v1596 = vld [vmem:[%s359 + $0x22] sm:$0xff]
        %v1597 = vld [vmem:[%s359 + $0x32] sm:$0xff]
        %v1598 = vld [vmem:[%s359 + $0x42] sm:$0xff]
        %v1599 = vld [vmem:[%s359 + $0x52] sm:$0xff]
        %v1600 = vld [vmem:[%s359 + $0x62] sm:$0xff]
        %v1601 = vld [vmem:[%s359 + $0x72] sm:$0xff]
        %1610 = vrot.lane.b32.xlu0 %v1538, 16
        %v1611 = vpop.permute.xlu0 %1610
        %1612 = vrot.lane.b32.xlu0 %v1539, 16
        %v1613 = vpop.permute.xlu0 %1612
        %1614 = vrot.lane.b32.xlu0 %v1540, 16
        %v1615 = vpop.permute.xlu0 %1614
        %1616 = vrot.lane.b32.xlu0 %v1541, 16
        %v1617 = vpop.permute.xlu0 %1616
        %1618 = vrot.lane.b32.xlu0 %v1542, 16
        %v1619 = vpop.permute.xlu0 %1618
        %1620 = vrot.lane.b32.xlu0 %v1543, 16
        %v1621 = vpop.permute.xlu0 %1620
        %1622 = vrot.lane.b32.xlu0 %v1544, 16
        %v1623 = vpop.permute.xlu0 %1622
        %1624 = vrot.lane.b32.xlu0 %v1545, 16
        %v1625 = vpop.permute.xlu0 %1624
        %1642 = vrot.lane.b32.xlu0 %v1546, 32
        %v1643 = vpop.permute.xlu0 %1642
        %1644 = vrot.lane.b32.xlu0 %v1547, 32
        %v1645 = vpop.permute.xlu0 %1644
        %1646 = vrot.lane.b32.xlu0 %v1548, 32
        %v1647 = vpop.permute.xlu0 %1646
        %1648 = vrot.lane.b32.xlu0 %v1549, 32
        %v1649 = vpop.permute.xlu0 %1648
        %1650 = vrot.lane.b32.xlu0 %v1550, 32
        %v1651 = vpop.permute.xlu0 %1650
        %1652 = vrot.lane.b32.xlu0 %v1551, 32
        %v1653 = vpop.permute.xlu0 %1652
        %1654 = vrot.lane.b32.xlu0 %v1552, 32
        %v1655 = vpop.permute.xlu0 %1654
        %1656 = vrot.lane.b32.xlu0 %v1553, 32
        %v1657 = vpop.permute.xlu0 %1656
        %1674 = vrot.lane.b32.xlu0 %v1554, 48
        %v1675 = vpop.permute.xlu0 %1674
        %1676 = vrot.lane.b32.xlu0 %v1555, 48
        %v1677 = vpop.permute.xlu0 %1676
        %1678 = vrot.lane.b32.xlu0 %v1556, 48
        %v1679 = vpop.permute.xlu0 %1678
        %1680 = vrot.lane.b32.xlu0 %v1557, 48
        %v1681 = vpop.permute.xlu0 %1680
        %1682 = vrot.lane.b32.xlu0 %v1558, 48
        %v1683 = vpop.permute.xlu0 %1682
        %1684 = vrot.lane.b32.xlu0 %v1559, 48
        %v1685 = vpop.permute.xlu0 %1684
        %1686 = vrot.lane.b32.xlu0 %v1560, 48
        %v1687 = vpop.permute.xlu0 %1686
        %1688 = vrot.lane.b32.xlu0 %v1561, 48
        %v1689 = vpop.permute.xlu0 %1688
        %1706 = vrot.lane.b32.xlu0 %v1562, 64
        %v1707 = vpop.permute.xlu0 %1706
        %1708 = vrot.lane.b32.xlu0 %v1563, 64
        %v1709 = vpop.permute.xlu0 %1708
        %1710 = vrot.lane.b32.xlu0 %v1564, 64
        %v1711 = vpop.permute.xlu0 %1710
        %1712 = vrot.lane.b32.xlu0 %v1565, 64
        %v1713 = vpop.permute.xlu0 %1712
        %1714 = vrot.lane.b32.xlu0 %v1566, 64
        %v1715 = vpop.permute.xlu0 %1714
        %1716 = vrot.lane.b32.xlu0 %v1567, 64
        %v1717 = vpop.permute.xlu0 %1716
        %1718 = vrot.lane.b32.xlu0 %v1568, 64
        %v1719 = vpop.permute.xlu0 %1718
        %1720 = vrot.lane.b32.xlu0 %v1569, 64
        %v1721 = vpop.permute.xlu0 %1720
        %1738 = vrot.lane.b32.xlu0 %v1570, 80
        %v1739 = vpop.permute.xlu0 %1738
        %1740 = vrot.lane.b32.xlu0 %v1571, 80
        %v1741 = vpop.permute.xlu0 %1740
        %1742 = vrot.lane.b32.xlu0 %v1572, 80
        %v1743 = vpop.permute.xlu0 %1742
        %1744 = vrot.lane.b32.xlu0 %v1573, 80
        %v1745 = vpop.permute.xlu0 %1744
        %1746 = vrot.lane.b32.xlu0 %v1574, 80
        %v1747 = vpop.permute.xlu0 %1746
        %1748 = vrot.lane.b32.xlu0 %v1575, 80
        %v1749 = vpop.permute.xlu0 %1748
        %1750 = vrot.lane.b32.xlu0 %v1576, 80
        %v1751 = vpop.permute.xlu0 %1750
        %1752 = vrot.lane.b32.xlu0 %v1577, 80
        %v1753 = vpop.permute.xlu0 %1752
        %1770 = vrot.lane.b32.xlu0 %v1578, 96
        %v1771 = vpop.permute.xlu0 %1770
        %1772 = vrot.lane.b32.xlu0 %v1579, 96
        %v1773 = vpop.permute.xlu0 %1772
        %1774 = vrot.lane.b32.xlu0 %v1580, 96
        %v1775 = vpop.permute.xlu0 %1774
        %1776 = vrot.lane.b32.xlu0 %v1581, 96
        %v1777 = vpop.permute.xlu0 %1776
        %1778 = vrot.lane.b32.xlu0 %v1582, 96
        %v1779 = vpop.permute.xlu0 %1778
        %1780 = vrot.lane.b32.xlu0 %v1583, 96
        %v1781 = vpop.permute.xlu0 %1780
        %1782 = vrot.lane.b32.xlu0 %v1584, 96
        %v1783 = vpop.permute.xlu0 %1782
        %1784 = vrot.lane.b32.xlu0 %v1585, 96
        %v1785 = vpop.permute.xlu0 %1784
        %1802 = vrot.lane.b32.xlu0 %v1586, 112
        %v1803 = vpop.permute.xlu0 %1802
        %1804 = vrot.lane.b32.xlu0 %v1587, 112
        %v1805 = vpop.permute.xlu0 %1804
        %1806 = vrot.lane.b32.xlu0 %v1588, 112
        %v1807 = vpop.permute.xlu0 %1806
        %1808 = vrot.lane.b32.xlu0 %v1589, 112
        %v1809 = vpop.permute.xlu0 %1808
        %1810 = vrot.lane.b32.xlu0 %v1590, 112
        %v1811 = vpop.permute.xlu0 %1810
        %1812 = vrot.lane.b32.xlu0 %v1591, 112
        %v1813 = vpop.permute.xlu0 %1812
        %1814 = vrot.lane.b32.xlu0 %v1592, 112
        %v1815 = vpop.permute.xlu0 %1814
        %1816 = vrot.lane.b32.xlu0 %v1593, 112
        %v1817 = vpop.permute.xlu0 %1816
        %v1826 = vsel %vm250, %v1530, %v1611
        %v1827 = vsel %vm250, %v1531, %v1613
        %v1828 = vsel %vm250, %v1532, %v1615
        %v1829 = vsel %vm250, %v1533, %v1617
        %v1830 = vsel %vm250, %v1534, %v1619
        %v1831 = vsel %vm250, %v1535, %v1621
        %v1832 = vsel %vm250, %v1536, %v1623
        %v1833 = vsel %vm250, %v1537, %v1625
        %v1834 = vsel %vm272, %v1826, %v1643
        %v1835 = vsel %vm272, %v1827, %v1645
        %v1836 = vsel %vm272, %v1828, %v1647
        %v1837 = vsel %vm272, %v1829, %v1649
        %v1838 = vsel %vm272, %v1830, %v1651
        %v1839 = vsel %vm272, %v1831, %v1653
        %v1840 = vsel %vm272, %v1832, %v1655
        %v1841 = vsel %vm272, %v1833, %v1657
        %v1842 = vsel %vm624, %v1834, %v1675
        %v1843 = vsel %vm624, %v1835, %v1677
        %v1844 = vsel %vm624, %v1836, %v1679
        %v1845 = vsel %vm624, %v1837, %v1681
        %v1846 = vsel %vm624, %v1838, %v1683
        %v1847 = vsel %vm624, %v1839, %v1685
        %v1848 = vsel %vm624, %v1840, %v1687
        %v1849 = vsel %vm624, %v1841, %v1689
        %v1850 = vsel %vm633, %v1842, %v1707
        %v1851 = vsel %vm633, %v1843, %v1709
        %v1852 = vsel %vm633, %v1844, %v1711
        %v1853 = vsel %vm633, %v1845, %v1713
        %v1854 = vsel %vm633, %v1846, %v1715
        %v1855 = vsel %vm633, %v1847, %v1717
        %v1856 = vsel %vm633, %v1848, %v1719
        %v1857 = vsel %vm633, %v1849, %v1721
        %v1858 = vsel %vm642, %v1850, %v1739
        %v1859 = vsel %vm642, %v1851, %v1741
        %v1860 = vsel %vm642, %v1852, %v1743
        %v1861 = vsel %vm642, %v1853, %v1745
        %v1862 = vsel %vm642, %v1854, %v1747
        %v1863 = vsel %vm642, %v1855, %v1749
        %v1864 = vsel %vm642, %v1856, %v1751
        %v1865 = vsel %vm642, %v1857, %v1753
        %v1866 = vsel %vm651, %v1858, %v1771
        %v1867 = vsel %vm651, %v1859, %v1773
        %v1868 = vsel %vm651, %v1860, %v1775
        %v1869 = vsel %vm651, %v1861, %v1777
        %v1870 = vsel %vm651, %v1862, %v1779
        %v1871 = vsel %vm651, %v1863, %v1781
        %v1872 = vsel %vm651, %v1864, %v1783
        %v1873 = vsel %vm651, %v1865, %v1785
        %v1874 = vsel %vm660, %v1866, %v1803
        %v1875 = vsel %vm660, %v1867, %v1805
        %v1876 = vsel %vm660, %v1868, %v1807
        %v1877 = vsel %vm660, %v1869, %v1809
        %v1878 = vsel %vm660, %v1870, %v1811
        %v1879 = vsel %vm660, %v1871, %v1813
        %v1880 = vsel %vm660, %v1872, %v1815
        %v1881 = vsel %vm660, %v1873, %v1817
        %s1882 = scalar_lea.vmem %s1, 144
        %v1883 = vld [vmem:[%s1882] sm:$0xff]
        %v1884 = vld [vmem:[%s1882 + $0x8] sm:$0xff]
        %v1885 = vld [vmem:[%s1882 + $0x10] sm:$0xff]
        %v1886 = vld [vmem:[%s1882 + $0x18] sm:$0xff]
        %v1887 = vld [vmem:[%s1882 + $0x20] sm:$0xff]
        %v1888 = vld [vmem:[%s1882 + $0x28] sm:$0xff]
        %v1889 = vld [vmem:[%s1882 + $0x30] sm:$0xff]
        %v1890 = vld [vmem:[%s1882 + $0x38] sm:$0xff]
        %v1891 = vld [vmem:[%s1882 + $0x40] sm:$0xff]
        %v1892 = vld [vmem:[%s1882 + $0x48] sm:$0xff]
        %v1893 = vld [vmem:[%s1882 + $0x50] sm:$0xff]
        %v1894 = vld [vmem:[%s1882 + $0x58] sm:$0xff]
        %v1895 = vld [vmem:[%s1882 + $0x60] sm:$0xff]
        %v1896 = vld [vmem:[%s1882 + $0x68] sm:$0xff]
        %v1897 = vld [vmem:[%s1882 + $0x70] sm:$0xff]
        %v1898 = vld [vmem:[%s1882 + $0x78] sm:$0xff]
        %v1899 = vld [vmem:[%s1882 + $0x80] sm:$0xff]
        %v1900 = vld [vmem:[%s1882 + $0x88] sm:$0xff]
        %v1902 = vsel %vm250, %v1594, 0
        %v1905 = vsel %vm250, %v1595, 0
        %v1908 = vsel %vm250, %v1596, 0
        %v1911 = vsel %vm250, %v1597, 0
        %v1914 = vsel %vm250, %v1598, 0
        %v1917 = vsel %vm250, %v1599, 0
        %v1920 = vsel %vm250, %v1600, 0
        %v1923 = vsel %vm250, %v1601, 0
        %1925 = vmatprep.subr.mxu0 0.0
        %1926 = vmatpush1.msra.mxu0 %v1883
        %1927 = vmatprep.subr.mxu0 0.0
        %1928 = vmatpush1.msra.mxu0 %v1884
        %1929 = vmatprep.subr.mxu0 0.0
        %1930 = vmatpush1.msra.mxu0 %v1885
        %1931 = vmatprep.subr.mxu0 0.0
        %1932 = vmatpush1.msra.mxu0 %v1886
        %1933 = vmatprep.subr.mxu0 0.0
        %1934 = vmatpush1.msra.mxu0 %v1887
        %1935 = vmatprep.subr.mxu0 0.0
        %1936 = vmatpush1.msra.mxu0 %v1888
        %1937 = vmatprep.subr.mxu0 0.0
        %1938 = vmatpush1.msra.mxu0 %v1889
        %1939 = vmatprep.subr.mxu0 0.0
        %1940 = vmatpush1.msra.mxu0 %v1890
        %1941 = vmatprep.subr.mxu0 0.0
        %1942 = vmatpush1.msra.mxu0 %v1891
        %1943 = vmatprep.subr.mxu0 0.0
        %1944 = vmatpush1.msra.mxu0 %v1892
        %1945 = vmatprep.subr.mxu0 0.0
        %1946 = vmatpush1.msra.mxu0 %v1893
        %1947 = vmatprep.subr.mxu0 0.0
        %1948 = vmatpush1.msra.mxu0 %v1894
        %1949 = vmatprep.subr.mxu0 0.0
        %1950 = vmatpush1.msra.mxu0 %v1895
        %1951 = vmatprep.subr.mxu0 0.0
        %1952 = vmatpush1.msra.mxu0 %v1896
        %1953 = vmatprep.subr.mxu0 0.0
        %1954 = vmatpush1.msra.mxu0 %v1897
        %1955 = vmatprep.subr.mxu0 0.0
        %1956 = vmatpush1.msra.mxu0 %v1898
        %1957 = vmatprep.subr.mxu0 0.0
        %1958 = vmatpush1.msra.mxu0 %v1899
        %1959 = vmatprep.subr.mxu0 0.0
        %1960 = vmatpush1.msra.mxu0 %v1900
        %1961 = vmatprep.subr.mxu0 0.0
        %1962 = vmatpush1.msra.mxu0 0.0
        %1963 = vmatprep.subr.mxu0 0.0
        %1964 = vmatpush1.msra.mxu0 0.0
        %1965 = vmatprep.subr.mxu0 0.0
        %1966 = vmatpush1.msra.mxu0 0.0
        %1967 = vmatprep.subr.mxu0 0.0
        %1968 = vmatpush1.msra.mxu0 0.0
        %1969 = vmatprep.subr.mxu0 0.0
        %1970 = vmatpush1.msra.mxu0 0.0
        %1971 = vmatprep.subr.mxu0 0.0
        %1972 = vmatpush1.msra.mxu0 0.0
        %1973 = vmatprep.subr.mxu0 0.0
        %1974 = vmatpush1.msra.mxu0 0.0
        %1975 = vmatprep.subr.mxu0 0.0
        %1976 = vmatpush1.msra.mxu0 0.0
        %1977 = vmatprep.subr.mxu0 0.0
        %1978 = vmatpush1.msra.mxu0 0.0
        %1979 = vmatprep.subr.mxu0 0.0
        %1980 = vmatpush1.msra.mxu0 0.0
        %1981 = vmatprep.subr.mxu0 0.0
        %1982 = vmatpush1.msra.mxu0 0.0
        %1983 = vmatprep.subr.mxu0 0.0
        %1984 = vmatpush1.msra.mxu0 0.0
        %1985 = vmatprep.subr.mxu0 0.0
        %1986 = vmatpush1.msra.mxu0 0.0
        %1987 = vmatprep.subr.mxu0 0.0
        %1988 = vmatpush1.msra.mxu0 0.0
        %1989 = vmatprep.mubr.f32.mxu0 %v1902
        %1990 = vmatmul.mubr.f32.gmra.mrb[0].mxu0 %v1874
        %v1991 = vpop.f32.mrb[0].mxu0
        %v1992 = vadd.f32 0.0, %v1991
        %v1993 = vpop.f32.mrb[0].mxu0
        %1994 = vmatprep.mubr.f32.mxu0 %v1905
        %1995 = vmatmul.mubr.f32.gmra.mrb[0].mxu0 %v1875
        %v1996 = vpop.f32.mrb[0].mxu0
        %v1997 = vadd.f32 0.0, %v1996
        %v1998 = vpop.f32.mrb[0].mxu0
        %1999 = vmatprep.mubr.f32.mxu0 %v1908
        %2000 = vmatmul.mubr.f32.gmra.mrb[0].mxu0 %v1876
        %v2001 = vpop.f32.mrb[0].mxu0
        %v2002 = vadd.f32 0.0, %v2001
        %v2003 = vpop.f32.mrb[0].mxu0
        %2004 = vmatprep.mubr.f32.mxu0 %v1911
        %2005 = vmatmul.mubr.f32.gmra.mrb[0].mxu0 %v1877
        %v2006 = vpop.f32.mrb[0].mxu0
        %v2007 = vadd.f32 0.0, %v2006
        %v2008 = vpop.f32.mrb[0].mxu0
        %2009 = vmatprep.mubr.f32.mxu0 %v1914
        %2010 = vmatmul.mubr.f32.gmra.mrb[0].mxu0 %v1878
        %v2011 = vpop.f32.mrb[0].mxu0
        %v2012 = vadd.f32 0.0, %v2011
        %v2013 = vpop.f32.mrb[0].mxu0
        %2014 = vmatprep.mubr.f32.mxu0 %v1917
        %2015 = vmatmul.mubr.f32.gmra.mrb[0].mxu0 %v1879
        %v2016 = vpop.f32.mrb[0].mxu0
        %v2017 = vadd.f32 0.0, %v2016
        %v2018 = vpop.f32.mrb[0].mxu0
        %2019 = vmatprep.mubr.f32.mxu0 %v1920
        %2020 = vmatmul.mubr.f32.gmra.mrb[0].mxu0 %v1880
        %v2021 = vpop.f32.mrb[0].mxu0
        %v2022 = vadd.f32 0.0, %v2021
        %v2023 = vpop.f32.mrb[0].mxu0
        %2024 = vmatprep.mubr.f32.mxu0 %v1923
        %2025 = vmatmul.mubr.f32.gmra.mrb[0].mxu0 %v1881
        %v2026 = vpop.f32.mrb[0].mxu0
        %v2027 = vadd.f32 0.0, %v2026
        %v2028 = vpop.f32.mrb[0].mxu0
        %2029 = vdwg.mxu0
        %s2030 = scalar_lea.vmem %s2, 2
        %v2031 = vld [vmem:[%s2030] sm:$0x3]
        %v2032 = vlaneseq
        %v2033 = vshrl.u32 %v2032, 7
        %v2034 = vsub.s32 0, %v2033
        %v2035 = vrot.slane %v2031, %v2034
        %v2036 = vmul.f32 %v1992, %v2035
        %v2037 = vmul.f32 %v1997, %v2035
        %v2038 = vmul.f32 %v2002, %v2035
        %v2039 = vmul.f32 %v2007, %v2035
        %v2040 = vmul.f32 %v2012, %v2035
        %v2041 = vmul.f32 %v2017, %v2035
        %v2042 = vmul.f32 %v2022, %v2035
        %v2043 = vmul.f32 %v2027, %v2035
        %v2044 = vlaneseq
        %v2045 = vshrl.u32 %v2044, 7
        %v2046 = vsub.s32 1, %v2045
        %v2047 = vrot.slane %v2031, %v2046
        %v2048 = vadd.f32 %v2036, %v2047
        %v2049 = vadd.f32 %v2037, %v2047
        %v2050 = vadd.f32 %v2038, %v2047
        %v2051 = vadd.f32 %v2039, %v2047
        %v2052 = vadd.f32 %v2040, %v2047
        %v2053 = vadd.f32 %v2041, %v2047
        %v2054 = vadd.f32 %v2042, %v2047
        %v2055 = vadd.f32 %v2043, %v2047
        %v2056 = vmax.f32 %v2048, 0.0
        %v2057 = vmax.f32 %v2049, 0.0
        %v2058 = vmax.f32 %v2050, 0.0
        %v2059 = vmax.f32 %v2051, 0.0
        %v2060 = vmax.f32 %v2052, 0.0
        %v2061 = vmax.f32 %v2053, 0.0
        %v2062 = vmax.f32 %v2054, 0.0
        %v2063 = vmax.f32 %v2055, 0.0
        %2064 = vst.msk [vmem:[%s849 + $0x1] sm:$0xff] %vm272, %v2056
        %2065 = vst.msk [vmem:[%s849 + $0x11] sm:$0xff] %vm272, %v2057
        %2066 = vst.msk [vmem:[%s849 + $0x21] sm:$0xff] %vm272, %v2058
        %2067 = vst.msk [vmem:[%s849 + $0x31] sm:$0xff] %vm272, %v2059
        %2068 = vst.msk [vmem:[%s849 + $0x41] sm:$0xff] %vm272, %v2060
        %2069 = vst.msk [vmem:[%s849 + $0x51] sm:$0xff] %vm272, %v2061
        %2070 = vst.msk [vmem:[%s849 + $0x61] sm:$0xff] %vm272, %v2062
        %2071 = vst.msk [vmem:[%s849 + $0x71] sm:$0xff] %vm272, %v2063
        %v2072 = vld [vmem:[#allocation3] sm:$0xff]
        %v2073 = vld [vmem:[#allocation3 + $0x10] sm:$0xff]
        %v2074 = vld [vmem:[#allocation3 + $0x20] sm:$0xff]
        %v2075 = vld [vmem:[#allocation3 + $0x30] sm:$0xff]
        %v2076 = vld [vmem:[#allocation3 + $0x40] sm:$0xff]
        %v2077 = vld [vmem:[#allocation3 + $0x50] sm:$0xff]
        %v2078 = vld [vmem:[#allocation3 + $0x60] sm:$0xff]
        %v2079 = vld [vmem:[#allocation3 + $0x70] sm:$0xff]
        %v2080 = vld [vmem:[#allocation3 + $0x1] sm:$0xff]
        %v2081 = vld [vmem:[#allocation3 + $0x11] sm:$0xff]
        %v2082 = vld [vmem:[#allocation3 + $0x21] sm:$0xff]
        %v2083 = vld [vmem:[#allocation3 + $0x31] sm:$0xff]
        %v2084 = vld [vmem:[#allocation3 + $0x41] sm:$0xff]
        %v2085 = vld [vmem:[#allocation3 + $0x51] sm:$0xff]
        %v2086 = vld [vmem:[#allocation3 + $0x61] sm:$0xff]
        %v2087 = vld [vmem:[#allocation3 + $0x71] sm:$0xff]
        %v2088 = vld [vmem:[#allocation3 + $0x2] sm:$0xff]
        %v2089 = vld [vmem:[#allocation3 + $0x12] sm:$0xff]
        %v2090 = vld [vmem:[#allocation3 + $0x22] sm:$0xff]
        %v2091 = vld [vmem:[#allocation3 + $0x32] sm:$0xff]
        %v2092 = vld [vmem:[#allocation3 + $0x42] sm:$0xff]
        %v2093 = vld [vmem:[#allocation3 + $0x52] sm:$0xff]
        %v2094 = vld [vmem:[#allocation3 + $0x62] sm:$0xff]
        %v2095 = vld [vmem:[#allocation3 + $0x72] sm:$0xff]
        %v2096 = vld [vmem:[%s849] sm:$0xff]
        %v2097 = vld [vmem:[%s849 + $0x10] sm:$0xff]
        %v2098 = vld [vmem:[%s849 + $0x20] sm:$0xff]
        %v2099 = vld [vmem:[%s849 + $0x30] sm:$0xff]
        %v2100 = vld [vmem:[%s849 + $0x40] sm:$0xff]
        %v2101 = vld [vmem:[%s849 + $0x50] sm:$0xff]
        %v2102 = vld [vmem:[%s849 + $0x60] sm:$0xff]
        %v2103 = vld [vmem:[%s849 + $0x70] sm:$0xff]
        %v2104 = vld [vmem:[%s849 + $0x1] sm:$0xff]
        %v2105 = vld [vmem:[%s849 + $0x11] sm:$0xff]
        %v2106 = vld [vmem:[%s849 + $0x21] sm:$0xff]
        %v2107 = vld [vmem:[%s849 + $0x31] sm:$0xff]
        %v2108 = vld [vmem:[%s849 + $0x41] sm:$0xff]
        %v2109 = vld [vmem:[%s849 + $0x51] sm:$0xff]
        %v2110 = vld [vmem:[%s849 + $0x61] sm:$0xff]
        %v2111 = vld [vmem:[%s849 + $0x71] sm:$0xff]
        %v2112 = vld [vmem:[%s849 + $0x2] sm:$0xff]
        %v2113 = vld [vmem:[%s849 + $0x12] sm:$0xff]
        %v2114 = vld [vmem:[%s849 + $0x22] sm:$0xff]
        %v2115 = vld [vmem:[%s849 + $0x32] sm:$0xff]
        %v2116 = vld [vmem:[%s849 + $0x42] sm:$0xff]
        %v2117 = vld [vmem:[%s849 + $0x52] sm:$0xff]
        %v2118 = vld [vmem:[%s849 + $0x62] sm:$0xff]
        %v2119 = vld [vmem:[%s849 + $0x72] sm:$0xff]
        %v2120 = vld [vmem:[%s906] sm:$0xff]
        %v2121 = vld [vmem:[%s906 + $0x10] sm:$0xff]
        %v2122 = vld [vmem:[%s906 + $0x20] sm:$0xff]
        %v2123 = vld [vmem:[%s906 + $0x30] sm:$0xff]
        %v2124 = vld [vmem:[%s906 + $0x40] sm:$0xff]
        %v2125 = vld [vmem:[%s906 + $0x50] sm:$0xff]
        %v2126 = vld [vmem:[%s906 + $0x60] sm:$0xff]
        %v2127 = vld [vmem:[%s906 + $0x70] sm:$0xff]
        %v2128 = vld [vmem:[%s906 + $0x1] sm:$0xff]
        %v2129 = vld [vmem:[%s906 + $0x11] sm:$0xff]
        %v2130 = vld [vmem:[%s906 + $0x21] sm:$0xff]
        %v2131 = vld [vmem:[%s906 + $0x31] sm:$0xff]
        %v2132 = vld [vmem:[%s906 + $0x41] sm:$0xff]
        %v2133 = vld [vmem:[%s906 + $0x51] sm:$0xff]
        %v2134 = vld [vmem:[%s906 + $0x61] sm:$0xff]
        %v2135 = vld [vmem:[%s906 + $0x71] sm:$0xff]
        %v2136 = vld [vmem:[%s906 + $0x2] sm:$0xff]
        %v2137 = vld [vmem:[%s906 + $0x12] sm:$0xff]
        %v2138 = vld [vmem:[%s906 + $0x22] sm:$0xff]
        %v2139 = vld [vmem:[%s906 + $0x32] sm:$0xff]
        %v2140 = vld [vmem:[%s906 + $0x42] sm:$0xff]
        %v2141 = vld [vmem:[%s906 + $0x52] sm:$0xff]
        %v2142 = vld [vmem:[%s906 + $0x62] sm:$0xff]
        %v2143 = vld [vmem:[%s906 + $0x72] sm:$0xff]
        %2152 = vrot.lane.b32.xlu0 %v2080, 32
        %v2153 = vpop.permute.xlu0 %2152
        %2154 = vrot.lane.b32.xlu0 %v2081, 32
        %v2155 = vpop.permute.xlu0 %2154
        %2156 = vrot.lane.b32.xlu0 %v2082, 32
        %v2157 = vpop.permute.xlu0 %2156
        %2158 = vrot.lane.b32.xlu0 %v2083, 32
        %v2159 = vpop.permute.xlu0 %2158
        %2160 = vrot.lane.b32.xlu0 %v2084, 32
        %v2161 = vpop.permute.xlu0 %2160
        %2162 = vrot.lane.b32.xlu0 %v2085, 32
        %v2163 = vpop.permute.xlu0 %2162
        %2164 = vrot.lane.b32.xlu0 %v2086, 32
        %v2165 = vpop.permute.xlu0 %2164
        %2166 = vrot.lane.b32.xlu0 %v2087, 32
        %v2167 = vpop.permute.xlu0 %2166
        %2184 = vrot.lane.b32.xlu0 %v2088, 64
        %v2185 = vpop.permute.xlu0 %2184
        %2186 = vrot.lane.b32.xlu0 %v2089, 64
        %v2187 = vpop.permute.xlu0 %2186
        %2188 = vrot.lane.b32.xlu0 %v2090, 64
        %v2189 = vpop.permute.xlu0 %2188
        %2190 = vrot.lane.b32.xlu0 %v2091, 64
        %v2191 = vpop.permute.xlu0 %2190
        %2192 = vrot.lane.b32.xlu0 %v2092, 64
        %v2193 = vpop.permute.xlu0 %2192
        %2194 = vrot.lane.b32.xlu0 %v2093, 64
        %v2195 = vpop.permute.xlu0 %2194
        %2196 = vrot.lane.b32.xlu0 %v2094, 64
        %v2197 = vpop.permute.xlu0 %2196
        %2198 = vrot.lane.b32.xlu0 %v2095, 64
        %v2199 = vpop.permute.xlu0 %2198
        %2216 = vrot.lane.b32.xlu0 %v2096, 96
        %v2217 = vpop.permute.xlu0 %2216
        %2218 = vrot.lane.b32.xlu0 %v2097, 96
        %v2219 = vpop.permute.xlu0 %2218
        %2220 = vrot.lane.b32.xlu0 %v2098, 96
        %v2221 = vpop.permute.xlu0 %2220
        %2222 = vrot.lane.b32.xlu0 %v2099, 96
        %v2223 = vpop.permute.xlu0 %2222
        %2224 = vrot.lane.b32.xlu0 %v2100, 96
        %v2225 = vpop.permute.xlu0 %2224
        %2226 = vrot.lane.b32.xlu0 %v2101, 96
        %v2227 = vpop.permute.xlu0 %2226
        %2228 = vrot.lane.b32.xlu0 %v2102, 96
        %v2229 = vpop.permute.xlu0 %2228
        %2230 = vrot.lane.b32.xlu0 %v2103, 96
        %v2231 = vpop.permute.xlu0 %2230
        %2248 = vrot.lane.b32.xlu0 %v2112, 32
        %v2249 = vpop.permute.xlu0 %2248
        %2250 = vrot.lane.b32.xlu0 %v2113, 32
        %v2251 = vpop.permute.xlu0 %2250
        %2252 = vrot.lane.b32.xlu0 %v2114, 32
        %v2253 = vpop.permute.xlu0 %2252
        %2254 = vrot.lane.b32.xlu0 %v2115, 32
        %v2255 = vpop.permute.xlu0 %2254
        %2256 = vrot.lane.b32.xlu0 %v2116, 32
        %v2257 = vpop.permute.xlu0 %2256
        %2258 = vrot.lane.b32.xlu0 %v2117, 32
        %v2259 = vpop.permute.xlu0 %2258
        %2260 = vrot.lane.b32.xlu0 %v2118, 32
        %v2261 = vpop.permute.xlu0 %2260
        %2262 = vrot.lane.b32.xlu0 %v2119, 32
        %v2263 = vpop.permute.xlu0 %2262
        %2280 = vrot.lane.b32.xlu0 %v2120, 64
        %v2281 = vpop.permute.xlu0 %2280
        %2282 = vrot.lane.b32.xlu0 %v2121, 64
        %v2283 = vpop.permute.xlu0 %2282
        %2284 = vrot.lane.b32.xlu0 %v2122, 64
        %v2285 = vpop.permute.xlu0 %2284
        %2286 = vrot.lane.b32.xlu0 %v2123, 64
        %v2287 = vpop.permute.xlu0 %2286
        %2288 = vrot.lane.b32.xlu0 %v2124, 64
        %v2289 = vpop.permute.xlu0 %2288
        %2290 = vrot.lane.b32.xlu0 %v2125, 64
        %v2291 = vpop.permute.xlu0 %2290
        %2292 = vrot.lane.b32.xlu0 %v2126, 64
        %v2293 = vpop.permute.xlu0 %2292
        %2294 = vrot.lane.b32.xlu0 %v2127, 64
        %v2295 = vpop.permute.xlu0 %2294
        %2312 = vrot.lane.b32.xlu0 %v2128, 96
        %v2313 = vpop.permute.xlu0 %2312
        %2314 = vrot.lane.b32.xlu0 %v2129, 96
        %v2315 = vpop.permute.xlu0 %2314
        %2316 = vrot.lane.b32.xlu0 %v2130, 96
        %v2317 = vpop.permute.xlu0 %2316
        %2318 = vrot.lane.b32.xlu0 %v2131, 96
        %v2319 = vpop.permute.xlu0 %2318
        %2320 = vrot.lane.b32.xlu0 %v2132, 96
        %v2321 = vpop.permute.xlu0 %2320
        %2322 = vrot.lane.b32.xlu0 %v2133, 96
        %v2323 = vpop.permute.xlu0 %2322
        %2324 = vrot.lane.b32.xlu0 %v2134, 96
        %v2325 = vpop.permute.xlu0 %2324
        %2326 = vrot.lane.b32.xlu0 %v2135, 96
        %v2327 = vpop.permute.xlu0 %2326
        %v2336 = vsel %vm272, %v2072, %v2153
        %v2337 = vsel %vm272, %v2073, %v2155
        %v2338 = vsel %vm272, %v2074, %v2157
        %v2339 = vsel %vm272, %v2075, %v2159
        %v2340 = vsel %vm272, %v2076, %v2161
        %v2341 = vsel %vm272, %v2077, %v2163
        %v2342 = vsel %vm272, %v2078, %v2165
        %v2343 = vsel %vm272, %v2079, %v2167
        %v2344 = vsel %vm633, %v2336, %v2185
        %v2345 = vsel %vm633, %v2337, %v2187
        %v2346 = vsel %vm633, %v2338, %v2189
        %v2347 = vsel %vm633, %v2339, %v2191
        %v2348 = vsel %vm633, %v2340, %v2193
        %v2349 = vsel %vm633, %v2341, %v2195
        %v2350 = vsel %vm633, %v2342, %v2197
        %v2351 = vsel %vm633, %v2343, %v2199
        %v2352 = vsel %vm651, %v2344, %v2217
        %v2353 = vsel %vm651, %v2345, %v2219
        %v2354 = vsel %vm651, %v2346, %v2221
        %v2355 = vsel %vm651, %v2347, %v2223
        %v2356 = vsel %vm651, %v2348, %v2225
        %v2357 = vsel %vm651, %v2349, %v2227
        %v2358 = vsel %vm651, %v2350, %v2229
        %v2359 = vsel %vm651, %v2351, %v2231
        %v2360 = vsel %vm272, %v2104, %v2249
        %v2361 = vsel %vm272, %v2105, %v2251
        %v2362 = vsel %vm272, %v2106, %v2253
        %v2363 = vsel %vm272, %v2107, %v2255
        %v2364 = vsel %vm272, %v2108, %v2257
        %v2365 = vsel %vm272, %v2109, %v2259
        %v2366 = vsel %vm272, %v2110, %v2261
        %v2367 = vsel %vm272, %v2111, %v2263
        %v2368 = vsel %vm633, %v2360, %v2281
        %v2369 = vsel %vm633, %v2361, %v2283
        %v2370 = vsel %vm633, %v2362, %v2285
        %v2371 = vsel %vm633, %v2363, %v2287
        %v2372 = vsel %vm633, %v2364, %v2289
        %v2373 = vsel %vm633, %v2365, %v2291
        %v2374 = vsel %vm633, %v2366, %v2293
        %v2375 = vsel %vm633, %v2367, %v2295
        %v2376 = vsel %vm651, %v2368, %v2313
        %v2377 = vsel %vm651, %v2369, %v2315
        %v2378 = vsel %vm651, %v2370, %v2317
        %v2379 = vsel %vm651, %v2371, %v2319
        %v2380 = vsel %vm651, %v2372, %v2321
        %v2381 = vsel %vm651, %v2373, %v2323
        %v2382 = vsel %vm651, %v2374, %v2325
        %v2383 = vsel %vm651, %v2375, %v2327
        %s2384 = scalar_lea.vmem %s3, 288
        %v2385 = vld [vmem:[%s2384] sm:$0xff]
        %v2386 = vld [vmem:[%s2384 + $0x8] sm:$0xff]
        %v2387 = vld [vmem:[%s2384 + $0x10] sm:$0xff]
        %v2388 = vld [vmem:[%s2384 + $0x18] sm:$0xff]
        %v2389 = vld [vmem:[%s2384 + $0x20] sm:$0xff]
        %v2390 = vld [vmem:[%s2384 + $0x28] sm:$0xff]
        %v2391 = vld [vmem:[%s2384 + $0x30] sm:$0xff]
        %v2392 = vld [vmem:[%s2384 + $0x38] sm:$0xff]
        %v2393 = vld [vmem:[%s2384 + $0x40] sm:$0xff]
        %v2394 = vld [vmem:[%s2384 + $0x48] sm:$0xff]
        %v2395 = vld [vmem:[%s2384 + $0x50] sm:$0xff]
        %v2396 = vld [vmem:[%s2384 + $0x58] sm:$0xff]
        %v2397 = vld [vmem:[%s2384 + $0x60] sm:$0xff]
        %v2398 = vld [vmem:[%s2384 + $0x68] sm:$0xff]
        %v2399 = vld [vmem:[%s2384 + $0x70] sm:$0xff]
        %v2400 = vld [vmem:[%s2384 + $0x78] sm:$0xff]
        %v2401 = vld [vmem:[%s2384 + $0x80] sm:$0xff]
        %v2402 = vld [vmem:[%s2384 + $0x88] sm:$0xff]
        %v2403 = vld [vmem:[%s2384 + $0x90] sm:$0xff]
        %v2404 = vld [vmem:[%s2384 + $0x98] sm:$0xff]
        %v2405 = vld [vmem:[%s2384 + $0xa0] sm:$0xff]
        %v2406 = vld [vmem:[%s2384 + $0xa8] sm:$0xff]
        %v2407 = vld [vmem:[%s2384 + $0xb0] sm:$0xff]
        %v2408 = vld [vmem:[%s2384 + $0xb8] sm:$0xff]
        %v2409 = vld [vmem:[%s2384 + $0xc0] sm:$0xff]
        %v2410 = vld [vmem:[%s2384 + $0xc8] sm:$0xff]
        %v2411 = vld [vmem:[%s2384 + $0xd0] sm:$0xff]
        %v2412 = vld [vmem:[%s2384 + $0xd8] sm:$0xff]
        %v2413 = vld [vmem:[%s2384 + $0xe0] sm:$0xff]
        %v2414 = vld [vmem:[%s2384 + $0xe8] sm:$0xff]
        %v2415 = vld [vmem:[%s2384 + $0xf0] sm:$0xff]
        %v2416 = vld [vmem:[%s2384 + $0xf8] sm:$0xff]
        %v2417 = vld [vmem:[%s2384 + $0x100] sm:$0xff]
        %v2418 = vld [vmem:[%s2384 + $0x108] sm:$0xff]
        %v2419 = vld [vmem:[%s2384 + $0x110] sm:$0xff]
        %v2420 = vld [vmem:[%s2384 + $0x118] sm:$0xff]
        %v2422 = vsel %vm272, %v2136, 0
        %v2425 = vsel %vm272, %v2137, 0
        %v2428 = vsel %vm272, %v2138, 0
        %v2431 = vsel %vm272, %v2139, 0
        %v2434 = vsel %vm272, %v2140, 0
        %v2437 = vsel %vm272, %v2141, 0
        %v2440 = vsel %vm272, %v2142, 0
        %v2443 = vsel %vm272, %v2143, 0
        %2445 = vmatprep.subr.mxu0 0.0
        %2446 = vmatpush1.msra.mxu0 %v2385
        %2447 = vmatprep.subr.mxu0 0.0
        %2448 = vmatpush1.msra.mxu0 %v2386
        %2449 = vmatprep.subr.mxu0 0.0
        %2450 = vmatpush1.msra.mxu0 %v2387
        %2451 = vmatprep.subr.mxu0 0.0
        %2452 = vmatpush1.msra.mxu0 %v2388
        %2453 = vmatprep.subr.mxu0 0.0
        %2454 = vmatpush1.msra.mxu0 %v2389
        %2455 = vmatprep.subr.mxu0 0.0
        %2456 = vmatpush1.msra.mxu0 %v2390
        %2457 = vmatprep.subr.mxu0 0.0
        %2458 = vmatpush1.msra.mxu0 %v2391
        %2459 = vmatprep.subr.mxu0 0.0
        %2460 = vmatpush1.msra.mxu0 %v2392
        %2461 = vmatprep.subr.mxu0 0.0
        %2462 = vmatpush1.msra.mxu0 %v2393
        %2463 = vmatprep.subr.mxu0 0.0
        %2464 = vmatpush1.msra.mxu0 %v2394
        %2465 = vmatprep.subr.mxu0 0.0
        %2466 = vmatpush1.msra.mxu0 %v2395
        %2467 = vmatprep.subr.mxu0 0.0
        %2468 = vmatpush1.msra.mxu0 %v2396
        %2469 = vmatprep.subr.mxu0 0.0
        %2470 = vmatpush1.msra.mxu0 %v2397
        %2471 = vmatprep.subr.mxu0 0.0
        %2472 = vmatpush1.msra.mxu0 %v2398
        %2473 = vmatprep.subr.mxu0 0.0
        %2474 = vmatpush1.msra.mxu0 %v2399
        %2475 = vmatprep.subr.mxu0 0.0
        %2476 = vmatpush1.msra.mxu0 %v2400
        %2477 = vmatprep.subr.mxu0 0.0
        %2478 = vmatpush1.msra.mxu0 %v2401
        %2479 = vmatprep.subr.mxu0 0.0
        %2480 = vmatpush1.msra.mxu0 %v2402
        %2481 = vmatprep.subr.mxu0 0.0
        %2482 = vmatpush1.msra.mxu0 %v2403
        %2483 = vmatprep.subr.mxu0 0.0
        %2484 = vmatpush1.msra.mxu0 %v2404
        %2485 = vmatprep.subr.mxu0 0.0
        %2486 = vmatpush1.msra.mxu0 %v2405
        %2487 = vmatprep.subr.mxu0 0.0
        %2488 = vmatpush1.msra.mxu0 %v2406
        %2489 = vmatprep.subr.mxu0 0.0
        %2490 = vmatpush1.msra.mxu0 %v2407
        %2491 = vmatprep.subr.mxu0 0.0
        %2492 = vmatpush1.msra.mxu0 %v2408
        %2493 = vmatprep.subr.mxu0 0.0
        %2494 = vmatpush1.msra.mxu0 %v2409
        %2495 = vmatprep.subr.mxu0 0.0
        %2496 = vmatpush1.msra.mxu0 %v2410
        %2497 = vmatprep.subr.mxu0 0.0
        %2498 = vmatpush1.msra.mxu0 %v2411
        %2499 = vmatprep.subr.mxu0 0.0
        %2500 = vmatpush1.msra.mxu0 %v2412
        %2501 = vmatprep.subr.mxu0 0.0
        %2502 = vmatpush1.msra.mxu0 %v2413
        %2503 = vmatprep.subr.mxu0 0.0
        %2504 = vmatpush1.msra.mxu0 %v2414
        %2505 = vmatprep.subr.mxu0 0.0
        %2506 = vmatpush1.msra.mxu0 %v2415
        %2507 = vmatprep.subr.mxu0 0.0
        %2508 = vmatpush1.msra.mxu0 %v2416
        %2509 = vmatprep.mubr.f32.mxu0 %v2376
        %2510 = vmatmul.mubr.f32.gmra.mrb[0].mxu0 %v2352
        %v2511 = vpop.f32.mrb[0].mxu0
        %v2512 = vadd.f32 0.0, %v2511
        %v2513 = vpop.f32.mrb[0].mxu0
        %2514 = vmatprep.mubr.f32.mxu0 %v2377
        %2515 = vmatmul.mubr.f32.gmra.mrb[0].mxu0 %v2353
        %v2516 = vpop.f32.mrb[0].mxu0
        %v2517 = vadd.f32 0.0, %v2516
        %v2518 = vpop.f32.mrb[0].mxu0
        %2519 = vmatprep.mubr.f32.mxu0 %v2378
        %2520 = vmatmul.mubr.f32.gmra.mrb[0].mxu0 %v2354
        %v2521 = vpop.f32.mrb[0].mxu0
        %v2522 = vadd.f32 0.0, %v2521
        %v2523 = vpop.f32.mrb[0].mxu0
        %2524 = vmatprep.mubr.f32.mxu0 %v2379
        %2525 = vmatmul.mubr.f32.gmra.mrb[0].mxu0 %v2355
        %v2526 = vpop.f32.mrb[0].mxu0
        %v2527 = vadd.f32 0.0, %v2526
        %v2528 = vpop.f32.mrb[0].mxu0
        %2529 = vmatprep.mubr.f32.mxu0 %v2380
        %2530 = vmatmul.mubr.f32.gmra.mrb[0].mxu0 %v2356
        %v2531 = vpop.f32.mrb[0].mxu0
        %v2532 = vadd.f32 0.0, %v2531
        %v2533 = vpop.f32.mrb[0].mxu0
        %2534 = vmatprep.mubr.f32.mxu0 %v2381
        %2535 = vmatmul.mubr.f32.gmra.mrb[0].mxu0 %v2357
        %v2536 = vpop.f32.mrb[0].mxu0
        %v2537 = vadd.f32 0.0, %v2536
        %v2538 = vpop.f32.mrb[0].mxu0
        %2539 = vmatprep.mubr.f32.mxu0 %v2382
        %2540 = vmatmul.mubr.f32.gmra.mrb[0].mxu0 %v2358
        %v2541 = vpop.f32.mrb[0].mxu0
        %v2542 = vadd.f32 0.0, %v2541
        %v2543 = vpop.f32.mrb[0].mxu0
        %2544 = vmatprep.mubr.f32.mxu0 %v2383
        %2545 = vmatmul.mubr.f32.gmra.mrb[0].mxu0 %v2359
        %v2546 = vpop.f32.mrb[0].mxu0
        %v2547 = vadd.f32 0.0, %v2546
        %v2548 = vpop.f32.mrb[0].mxu0
        %2549 = vdwg.mxu0
        %2550 = vmatprep.subr.mxu0 0.0
        %2551 = vmatpush1.msra.mxu0 %v2417
        %2552 = vmatprep.subr.mxu0 0.0
        %2553 = vmatpush1.msra.mxu0 %v2418
        %2554 = vmatprep.subr.mxu0 0.0
        %2555 = vmatpush1.msra.mxu0 %v2419
        %2556 = vmatprep.subr.mxu0 0.0
        %2557 = vmatpush1.msra.mxu0 %v2420
        %2558 = vmatprep.subr.mxu0 0.0
        %2559 = vmatpush1.msra.mxu0 0.0
        %2560 = vmatprep.subr.mxu0 0.0
        %2561 = vmatpush1.msra.mxu0 0.0
        %2562 = vmatprep.subr.mxu0 0.0
        %2563 = vmatpush1.msra.mxu0 0.0
        %2564 = vmatprep.subr.mxu0 0.0
        %2565 = vmatpush1.msra.mxu0 0.0
        %2566 = vmatprep.subr.mxu0 0.0
        %2567 = vmatpush1.msra.mxu0 0.0
        %2568 = vmatprep.subr.mxu0 0.0
        %2569 = vmatpush1.msra.mxu0 0.0
        %2570 = vmatprep.subr.mxu0 0.0
        %2571 = vmatpush1.msra.mxu0 0.0
        %2572 = vmatprep.subr.mxu0 0.0
        %2573 = vmatpush1.msra.mxu0 0.0
        %2574 = vmatprep.subr.mxu0 0.0
        %2575 = vmatpush1.msra.mxu0 0.0
        %2576 = vmatprep.subr.mxu0 0.0
        %2577 = vmatpush1.msra.mxu0 0.0
        %2578 = vmatprep.subr.mxu0 0.0
        %2579 = vmatpush1.msra.mxu0 0.0
        %2580 = vmatprep.subr.mxu0 0.0
        %2581 = vmatpush1.msra.mxu0 0.0
        %2582 = vmatprep.subr.mxu0 0.0
        %2583 = vmatpush1.msra.mxu0 0.0
        %2584 = vmatprep.subr.mxu0 0.0
        %2585 = vmatpush1.msra.mxu0 0.0
        %2586 = vmatprep.subr.mxu0 0.0
        %2587 = vmatpush1.msra.mxu0 0.0
        %2588 = vmatprep.subr.mxu0 0.0
        %2589 = vmatpush1.msra.mxu0 0.0
        %2590 = vmatprep.subr.mxu0 0.0
        %2591 = vmatpush1.msra.mxu0 0.0
        %2592 = vmatprep.subr.mxu0 0.0
        %2593 = vmatpush1.msra.mxu0 0.0
        %2594 = vmatprep.subr.mxu0 0.0
        %2595 = vmatpush1.msra.mxu0 0.0
        %2596 = vmatprep.subr.mxu0 0.0
        %2597 = vmatpush1.msra.mxu0 0.0
        %2598 = vmatprep.subr.mxu0 0.0
        %2599 = vmatpush1.msra.mxu0 0.0
        %2600 = vmatprep.subr.mxu0 0.0
        %2601 = vmatpush1.msra.mxu0 0.0
        %2602 = vmatprep.subr.mxu0 0.0
        %2603 = vmatpush1.msra.mxu0 0.0
        %2604 = vmatprep.subr.mxu0 0.0
        %2605 = vmatpush1.msra.mxu0 0.0
        %2606 = vmatprep.subr.mxu0 0.0
        %2607 = vmatpush1.msra.mxu0 0.0
        %2608 = vmatprep.subr.mxu0 0.0
        %2609 = vmatpush1.msra.mxu0 0.0
        %2610 = vmatprep.subr.mxu0 0.0
        %2611 = vmatpush1.msra.mxu0 0.0
        %2612 = vmatprep.subr.mxu0 0.0
        %2613 = vmatpush1.msra.mxu0 0.0
        %2614 = vmatprep.mubr.f32.mxu0 0.0
        %2615 = vmatmul.mubr.f32.gmra.mrb[0].mxu0 %v2422
        %v2616 = vpop.f32.mrb[0].mxu0
        %v2617 = vadd.f32 %v2512, %v2616
        %v2618 = vpop.f32.mrb[0].mxu0
        %2619 = vmatprep.mubr.f32.mxu0 0.0
        %2620 = vmatmul.mubr.f32.gmra.mrb[0].mxu0 %v2425
        %v2621 = vpop.f32.mrb[0].mxu0
        %v2622 = vadd.f32 %v2517, %v2621
        %v2623 = vpop.f32.mrb[0].mxu0
        %2624 = vmatprep.mubr.f32.mxu0 0.0
        %2625 = vmatmul.mubr.f32.gmra.mrb[0].mxu0 %v2428
        %v2626 = vpop.f32.mrb[0].mxu0
        %v2627 = vadd.f32 %v2522, %v2626
        %v2628 = vpop.f32.mrb[0].mxu0
        %2629 = vmatprep.mubr.f32.mxu0 0.0
        %2630 = vmatmul.mubr.f32.gmra.mrb[0].mxu0 %v2431
        %v2631 = vpop.f32.mrb[0].mxu0
        %v2632 = vadd.f32 %v2527, %v2631
        %v2633 = vpop.f32.mrb[0].mxu0
        %2634 = vmatprep.mubr.f32.mxu0 0.0
        %2635 = vmatmul.mubr.f32.gmra.mrb[0].mxu0 %v2434
        %v2636 = vpop.f32.mrb[0].mxu0
        %v2637 = vadd.f32 %v2532, %v2636
        %v2638 = vpop.f32.mrb[0].mxu0
        %2639 = vmatprep.mubr.f32.mxu0 0.0
        %2640 = vmatmul.mubr.f32.gmra.mrb[0].mxu0 %v2437
        %v2641 = vpop.f32.mrb[0].mxu0
        %v2642 = vadd.f32 %v2537, %v2641
        %v2643 = vpop.f32.mrb[0].mxu0
        %2644 = vmatprep.mubr.f32.mxu0 0.0
        %2645 = vmatmul.mubr.f32.gmra.mrb[0].mxu0 %v2440
        %v2646 = vpop.f32.mrb[0].mxu0
        %v2647 = vadd.f32 %v2542, %v2646
        %v2648 = vpop.f32.mrb[0].mxu0
        %2649 = vmatprep.mubr.f32.mxu0 0.0
        %2650 = vmatmul.mubr.f32.gmra.mrb[0].mxu0 %v2443
        %v2651 = vpop.f32.mrb[0].mxu0
        %v2652 = vadd.f32 %v2547, %v2651
        %v2653 = vpop.f32.mrb[0].mxu0
        %2654 = vdwg.mxu0
        %s2655 = scalar_lea.vmem %s4, 2
        %v2656 = vld [vmem:[%s2655] sm:$0x3]
        %v2657 = vlaneseq
        %v2658 = vshrl.u32 %v2657, 7
        %v2659 = vsub.s32 0, %v2658
        %v2660 = vrot.slane %v2656, %v2659
        %v2661 = vmul.f32 %v2617, %v2660
        %v2662 = vmul.f32 %v2622, %v2660
        %v2663 = vmul.f32 %v2627, %v2660
        %v2664 = vmul.f32 %v2632, %v2660
        %v2665 = vmul.f32 %v2637, %v2660
        %v2666 = vmul.f32 %v2642, %v2660
        %v2667 = vmul.f32 %v2647, %v2660
        %v2668 = vmul.f32 %v2652, %v2660
        %v2669 = vlaneseq
        %v2670 = vshrl.u32 %v2669, 7
        %v2671 = vsub.s32 1, %v2670
        %v2672 = vrot.slane %v2656, %v2671
        %v2673 = vadd.f32 %v2661, %v2672
        %v2674 = vadd.f32 %v2662, %v2672
        %v2675 = vadd.f32 %v2663, %v2672
        %v2676 = vadd.f32 %v2664, %v2672
        %v2677 = vadd.f32 %v2665, %v2672
        %v2678 = vadd.f32 %v2666, %v2672
        %v2679 = vadd.f32 %v2667, %v2672
        %v2680 = vadd.f32 %v2668, %v2672
        %v2681 = vmax.f32 %v2673, 0.0
        %v2682 = vmax.f32 %v2674, 0.0
        %v2683 = vmax.f32 %v2675, 0.0
        %v2684 = vmax.f32 %v2676, 0.0
        %v2685 = vmax.f32 %v2677, 0.0
        %v2686 = vmax.f32 %v2678, 0.0
        %v2687 = vmax.f32 %v2679, 0.0
        %v2688 = vmax.f32 %v2680, 0.0
        %2697 = vrot.lane.b32.xlu0 %v2681, 32
        %v2698 = vpop.permute.xlu0 %2697
        %2699 = vrot.lane.b32.xlu0 %v2682, 32
        %v2700 = vpop.permute.xlu0 %2699
        %2701 = vrot.lane.b32.xlu0 %v2683, 32
        %v2702 = vpop.permute.xlu0 %2701
        %2703 = vrot.lane.b32.xlu0 %v2684, 32
        %v2704 = vpop.permute.xlu0 %2703
        %2705 = vrot.lane.b32.xlu0 %v2685, 32
        %v2706 = vpop.permute.xlu0 %2705
        %2707 = vrot.lane.b32.xlu0 %v2686, 32
        %v2708 = vpop.permute.xlu0 %2707
        %2709 = vrot.lane.b32.xlu0 %v2687, 32
        %v2710 = vpop.permute.xlu0 %2709
        %2711 = vrot.lane.b32.xlu0 %v2688, 32
        %v2712 = vpop.permute.xlu0 %2711
        %vm2721 = vcmask 523520
        %2722 = vst.msk [vmem:[#allocation4] sm:$0xff] %vm2721, %v2698
        %2723 = vst.msk [vmem:[#allocation4 + $0x8] sm:$0xff] %vm2721, %v2700
        %2724 = vst.msk [vmem:[#allocation4 + $0x10] sm:$0xff] %vm2721, %v2702
        %2725 = vst.msk [vmem:[#allocation4 + $0x18] sm:$0xff] %vm2721, %v2704
        %2726 = vst.msk [vmem:[#allocation4 + $0x20] sm:$0xff] %vm2721, %v2706
        %2727 = vst.msk [vmem:[#allocation4 + $0x28] sm:$0xff] %vm2721, %v2708
        %2728 = vst.msk [vmem:[#allocation4 + $0x30] sm:$0xff] %vm2721, %v2710
        %2729 = vst.msk [vmem:[#allocation4 + $0x38] sm:$0xff] %vm2721, %v2712
        %v2730 = vld [vmem:[%s249] sm:$0xff]
        %v2731 = vld [vmem:[%s249 + $0x8] sm:$0xff]
        %v2732 = vld [vmem:[%s249 + $0x10] sm:$0xff]
        %v2733 = vld [vmem:[%s249 + $0x18] sm:$0xff]
        %v2734 = vld [vmem:[%s249 + $0x20] sm:$0xff]
        %v2735 = vld [vmem:[%s249 + $0x28] sm:$0xff]
        %v2736 = vld [vmem:[%s249 + $0x30] sm:$0xff]
        %v2737 = vld [vmem:[%s249 + $0x38] sm:$0xff]
        %2746 = vrot.lane.b32.xlu0 %v2730, 96
        %v2747 = vpop.permute.xlu0 %2746
        %2748 = vrot.lane.b32.xlu0 %v2731, 96
        %v2749 = vpop.permute.xlu0 %2748
        %2750 = vrot.lane.b32.xlu0 %v2732, 96
        %v2751 = vpop.permute.xlu0 %2750
        %2752 = vrot.lane.b32.xlu0 %v2733, 96
        %v2753 = vpop.permute.xlu0 %2752
        %2754 = vrot.lane.b32.xlu0 %v2734, 96
        %v2755 = vpop.permute.xlu0 %2754
        %2756 = vrot.lane.b32.xlu0 %v2735, 96
        %v2757 = vpop.permute.xlu0 %2756
        %2758 = vrot.lane.b32.xlu0 %v2736, 96
        %v2759 = vpop.permute.xlu0 %2758
        %2760 = vrot.lane.b32.xlu0 %v2737, 96
        %v2761 = vpop.permute.xlu0 %2760
        %2770 = vst.msk [vmem:[%s302 + $0x1] sm:$0xff] %vm250, %v2747
        %2771 = vst.msk [vmem:[%s302 + $0x11] sm:$0xff] %vm250, %v2749
        %2772 = vst.msk [vmem:[%s302 + $0x21] sm:$0xff] %vm250, %v2751
        %2773 = vst.msk [vmem:[%s302 + $0x31] sm:$0xff] %vm250, %v2753
        %2774 = vst.msk [vmem:[%s302 + $0x41] sm:$0xff] %vm250, %v2755
        %2775 = vst.msk [vmem:[%s302 + $0x51] sm:$0xff] %vm250, %v2757
        %2776 = vst.msk [vmem:[%s302 + $0x61] sm:$0xff] %vm250, %v2759
        %2777 = vst.msk [vmem:[%s302 + $0x71] sm:$0xff] %vm250, %v2761
        %v2778 = vld [vmem:[#allocation2] sm:$0xff]
        %v2779 = vld [vmem:[#allocation2 + $0x10] sm:$0xff]
        %v2780 = vld [vmem:[#allocation2 + $0x20] sm:$0xff]
        %v2781 = vld [vmem:[#allocation2 + $0x30] sm:$0xff]
        %v2782 = vld [vmem:[#allocation2 + $0x40] sm:$0xff]
        %v2783 = vld [vmem:[#allocation2 + $0x50] sm:$0xff]
        %v2784 = vld [vmem:[#allocation2 + $0x60] sm:$0xff]
        %v2785 = vld [vmem:[#allocation2 + $0x70] sm:$0xff]
        %v2786 = vld [vmem:[#allocation2 + $0x1] sm:$0xff]
        %v2787 = vld [vmem:[#allocation2 + $0x11] sm:$0xff]
        %v2788 = vld [vmem:[#allocation2 + $0x21] sm:$0xff]
        %v2789 = vld [vmem:[#allocation2 + $0x31] sm:$0xff]
        %v2790 = vld [vmem:[#allocation2 + $0x41] sm:$0xff]
        %v2791 = vld [vmem:[#allocation2 + $0x51] sm:$0xff]
        %v2792 = vld [vmem:[#allocation2 + $0x61] sm:$0xff]
        %v2793 = vld [vmem:[#allocation2 + $0x71] sm:$0xff]
        %v2794 = vld [vmem:[#allocation2 + $0x2] sm:$0xff]
        %v2795 = vld [vmem:[#allocation2 + $0x12] sm:$0xff]
        %v2796 = vld [vmem:[#allocation2 + $0x22] sm:$0xff]
        %v2797 = vld [vmem:[#allocation2 + $0x32] sm:$0xff]
        %v2798 = vld [vmem:[#allocation2 + $0x42] sm:$0xff]
        %v2799 = vld [vmem:[#allocation2 + $0x52] sm:$0xff]
        %v2800 = vld [vmem:[#allocation2 + $0x62] sm:$0xff]
        %v2801 = vld [vmem:[#allocation2 + $0x72] sm:$0xff]
        %v2802 = vld [vmem:[%s302] sm:$0xff]
        %v2803 = vld [vmem:[%s302 + $0x10] sm:$0xff]
        %v2804 = vld [vmem:[%s302 + $0x20] sm:$0xff]
        %v2805 = vld [vmem:[%s302 + $0x30] sm:$0xff]
        %v2806 = vld [vmem:[%s302 + $0x40] sm:$0xff]
        %v2807 = vld [vmem:[%s302 + $0x50] sm:$0xff]
        %v2808 = vld [vmem:[%s302 + $0x60] sm:$0xff]
        %v2809 = vld [vmem:[%s302 + $0x70] sm:$0xff]
        %v2810 = vld [vmem:[%s302 + $0x1] sm:$0xff]
        %v2811 = vld [vmem:[%s302 + $0x11] sm:$0xff]
        %v2812 = vld [vmem:[%s302 + $0x21] sm:$0xff]
        %v2813 = vld [vmem:[%s302 + $0x31] sm:$0xff]
        %v2814 = vld [vmem:[%s302 + $0x41] sm:$0xff]
        %v2815 = vld [vmem:[%s302 + $0x51] sm:$0xff]
        %v2816 = vld [vmem:[%s302 + $0x61] sm:$0xff]
        %v2817 = vld [vmem:[%s302 + $0x71] sm:$0xff]
        %v2818 = vld [vmem:[%s302 + $0x2] sm:$0xff]
        %v2819 = vld [vmem:[%s302 + $0x12] sm:$0xff]
        %v2820 = vld [vmem:[%s302 + $0x22] sm:$0xff]
        %v2821 = vld [vmem:[%s302 + $0x32] sm:$0xff]
        %v2822 = vld [vmem:[%s302 + $0x42] sm:$0xff]
        %v2823 = vld [vmem:[%s302 + $0x52] sm:$0xff]
        %v2824 = vld [vmem:[%s302 + $0x62] sm:$0xff]
        %v2825 = vld [vmem:[%s302 + $0x72] sm:$0xff]
        %v2826 = vld [vmem:[%s359] sm:$0xff]
        %v2827 = vld [vmem:[%s359 + $0x10] sm:$0xff]
        %v2828 = vld [vmem:[%s359 + $0x20] sm:$0xff]
        %v2829 = vld [vmem:[%s359 + $0x30] sm:$0xff]
        %v2830 = vld [vmem:[%s359 + $0x40] sm:$0xff]
        %v2831 = vld [vmem:[%s359 + $0x50] sm:$0xff]
        %v2832 = vld [vmem:[%s359 + $0x60] sm:$0xff]
        %v2833 = vld [vmem:[%s359 + $0x70] sm:$0xff]
        %v2834 = vld [vmem:[%s359 + $0x1] sm:$0xff]
        %v2835 = vld [vmem:[%s359 + $0x11] sm:$0xff]
        %v2836 = vld [vmem:[%s359 + $0x21] sm:$0xff]
        %v2837 = vld [vmem:[%s359 + $0x31] sm:$0xff]
        %v2838 = vld [vmem:[%s359 + $0x41] sm:$0xff]
        %v2839 = vld [vmem:[%s359 + $0x51] sm:$0xff]
        %v2840 = vld [vmem:[%s359 + $0x61] sm:$0xff]
        %v2841 = vld [vmem:[%s359 + $0x71] sm:$0xff]
        %v2842 = vld [vmem:[%s359 + $0x2] sm:$0xff]
        %v2843 = vld [vmem:[%s359 + $0x12] sm:$0xff]
        %v2844 = vld [vmem:[%s359 + $0x22] sm:$0xff]
        %v2845 = vld [vmem:[%s359 + $0x32] sm:$0xff]
        %v2846 = vld [vmem:[%s359 + $0x42] sm:$0xff]
        %v2847 = vld [vmem:[%s359 + $0x52] sm:$0xff]
        %v2848 = vld [vmem:[%s359 + $0x62] sm:$0xff]
        %v2849 = vld [vmem:[%s359 + $0x72] sm:$0xff]
        %2858 = vrot.lane.b32.xlu0 %v2786, 16
        %v2859 = vpop.permute.xlu0 %2858
        %2860 = vrot.lane.b32.xlu0 %v2787, 16
        %v2861 = vpop.permute.xlu0 %2860
        %2862 = vrot.lane.b32.xlu0 %v2788, 16
        %v2863 = vpop.permute.xlu0 %2862
        %2864 = vrot.lane.b32.xlu0 %v2789, 16
        %v2865 = vpop.permute.xlu0 %2864
        %2866 = vrot.lane.b32.xlu0 %v2790, 16
        %v2867 = vpop.permute.xlu0 %2866
        %2868 = vrot.lane.b32.xlu0 %v2791, 16
        %v2869 = vpop.permute.xlu0 %2868
        %2870 = vrot.lane.b32.xlu0 %v2792, 16
        %v2871 = vpop.permute.xlu0 %2870
        %2872 = vrot.lane.b32.xlu0 %v2793, 16
        %v2873 = vpop.permute.xlu0 %2872
        %2890 = vrot.lane.b32.xlu0 %v2794, 32
        %v2891 = vpop.permute.xlu0 %2890
        %2892 = vrot.lane.b32.xlu0 %v2795, 32
        %v2893 = vpop.permute.xlu0 %2892
        %2894 = vrot.lane.b32.xlu0 %v2796, 32
        %v2895 = vpop.permute.xlu0 %2894
        %2896 = vrot.lane.b32.xlu0 %v2797, 32
        %v2897 = vpop.permute.xlu0 %2896
        %2898 = vrot.lane.b32.xlu0 %v2798, 32
        %v2899 = vpop.permute.xlu0 %2898
        %2900 = vrot.lane.b32.xlu0 %v2799, 32
        %v2901 = vpop.permute.xlu0 %2900
        %2902 = vrot.lane.b32.xlu0 %v2800, 32
        %v2903 = vpop.permute.xlu0 %2902
        %2904 = vrot.lane.b32.xlu0 %v2801, 32
        %v2905 = vpop.permute.xlu0 %2904
        %2922 = vrot.lane.b32.xlu0 %v2802, 48
        %v2923 = vpop.permute.xlu0 %2922
        %2924 = vrot.lane.b32.xlu0 %v2803, 48
        %v2925 = vpop.permute.xlu0 %2924
        %2926 = vrot.lane.b32.xlu0 %v2804, 48
        %v2927 = vpop.permute.xlu0 %2926
        %2928 = vrot.lane.b32.xlu0 %v2805, 48
        %v2929 = vpop.permute.xlu0 %2928
        %2930 = vrot.lane.b32.xlu0 %v2806, 48
        %v2931 = vpop.permute.xlu0 %2930
        %2932 = vrot.lane.b32.xlu0 %v2807, 48
        %v2933 = vpop.permute.xlu0 %2932
        %2934 = vrot.lane.b32.xlu0 %v2808, 48
        %v2935 = vpop.permute.xlu0 %2934
        %2936 = vrot.lane.b32.xlu0 %v2809, 48
        %v2937 = vpop.permute.xlu0 %2936
        %2954 = vrot.lane.b32.xlu0 %v2810, 64
        %v2955 = vpop.permute.xlu0 %2954
        %2956 = vrot.lane.b32.xlu0 %v2811, 64
        %v2957 = vpop.permute.xlu0 %2956
        %2958 = vrot.lane.b32.xlu0 %v2812, 64
        %v2959 = vpop.permute.xlu0 %2958
        %2960 = vrot.lane.b32.xlu0 %v2813, 64
        %v2961 = vpop.permute.xlu0 %2960
        %2962 = vrot.lane.b32.xlu0 %v2814, 64
        %v2963 = vpop.permute.xlu0 %2962
        %2964 = vrot.lane.b32.xlu0 %v2815, 64
        %v2965 = vpop.permute.xlu0 %2964
        %2966 = vrot.lane.b32.xlu0 %v2816, 64
        %v2967 = vpop.permute.xlu0 %2966
        %2968 = vrot.lane.b32.xlu0 %v2817, 64
        %v2969 = vpop.permute.xlu0 %2968
        %2986 = vrot.lane.b32.xlu0 %v2818, 80
        %v2987 = vpop.permute.xlu0 %2986
        %2988 = vrot.lane.b32.xlu0 %v2819, 80
        %v2989 = vpop.permute.xlu0 %2988
        %2990 = vrot.lane.b32.xlu0 %v2820, 80
        %v2991 = vpop.permute.xlu0 %2990
        %2992 = vrot.lane.b32.xlu0 %v2821, 80
        %v2993 = vpop.permute.xlu0 %2992
        %2994 = vrot.lane.b32.xlu0 %v2822, 80
        %v2995 = vpop.permute.xlu0 %2994
        %2996 = vrot.lane.b32.xlu0 %v2823, 80
        %v2997 = vpop.permute.xlu0 %2996
        %2998 = vrot.lane.b32.xlu0 %v2824, 80
        %v2999 = vpop.permute.xlu0 %2998
        %3000 = vrot.lane.b32.xlu0 %v2825, 80
        %v3001 = vpop.permute.xlu0 %3000
        %3018 = vrot.lane.b32.xlu0 %v2826, 96
        %v3019 = vpop.permute.xlu0 %3018
        %3020 = vrot.lane.b32.xlu0 %v2827, 96
        %v3021 = vpop.permute.xlu0 %3020
        %3022 = vrot.lane.b32.xlu0 %v2828, 96
        %v3023 = vpop.permute.xlu0 %3022
        %3024 = vrot.lane.b32.xlu0 %v2829, 96
        %v3025 = vpop.permute.xlu0 %3024
        %3026 = vrot.lane.b32.xlu0 %v2830, 96
        %v3027 = vpop.permute.xlu0 %3026
        %3028 = vrot.lane.b32.xlu0 %v2831, 96
        %v3029 = vpop.permute.xlu0 %3028
        %3030 = vrot.lane.b32.xlu0 %v2832, 96
        %v3031 = vpop.permute.xlu0 %3030
        %3032 = vrot.lane.b32.xlu0 %v2833, 96
        %v3033 = vpop.permute.xlu0 %3032
        %3050 = vrot.lane.b32.xlu0 %v2834, 112
        %v3051 = vpop.permute.xlu0 %3050
        %3052 = vrot.lane.b32.xlu0 %v2835, 112
        %v3053 = vpop.permute.xlu0 %3052
        %3054 = vrot.lane.b32.xlu0 %v2836, 112
        %v3055 = vpop.permute.xlu0 %3054
        %3056 = vrot.lane.b32.xlu0 %v2837, 112
        %v3057 = vpop.permute.xlu0 %3056
        %3058 = vrot.lane.b32.xlu0 %v2838, 112
        %v3059 = vpop.permute.xlu0 %3058
        %3060 = vrot.lane.b32.xlu0 %v2839, 112
        %v3061 = vpop.permute.xlu0 %3060
        %3062 = vrot.lane.b32.xlu0 %v2840, 112
        %v3063 = vpop.permute.xlu0 %3062
        %3064 = vrot.lane.b32.xlu0 %v2841, 112
        %v3065 = vpop.permute.xlu0 %3064
        %v3074 = vsel %vm250, %v2778, %v2859
        %v3075 = vsel %vm250, %v2779, %v2861
        %v3076 = vsel %vm250, %v2780, %v2863
        %v3077 = vsel %vm250, %v2781, %v2865
        %v3078 = vsel %vm250, %v2782, %v2867
        %v3079 = vsel %vm250, %v2783, %v2869
        %v3080 = vsel %vm250, %v2784, %v2871
        %v3081 = vsel %vm250, %v2785, %v2873
        %v3082 = vsel %vm272, %v3074, %v2891
        %v3083 = vsel %vm272, %v3075, %v2893
        %v3084 = vsel %vm272, %v3076, %v2895
        %v3085 = vsel %vm272, %v3077, %v2897
        %v3086 = vsel %vm272, %v3078, %v2899
        %v3087 = vsel %vm272, %v3079, %v2901
        %v3088 = vsel %vm272, %v3080, %v2903
        %v3089 = vsel %vm272, %v3081, %v2905
        %v3090 = vsel %vm624, %v3082, %v2923
        %v3091 = vsel %vm624, %v3083, %v2925
        %v3092 = vsel %vm624, %v3084, %v2927
        %v3093 = vsel %vm624, %v3085, %v2929
        %v3094 = vsel %vm624, %v3086, %v2931
        %v3095 = vsel %vm624, %v3087, %v2933
        %v3096 = vsel %vm624, %v3088, %v2935
        %v3097 = vsel %vm624, %v3089, %v2937
        %v3098 = vsel %vm633, %v3090, %v2955
        %v3099 = vsel %vm633, %v3091, %v2957
        %v3100 = vsel %vm633, %v3092, %v2959
        %v3101 = vsel %vm633, %v3093, %v2961
        %v3102 = vsel %vm633, %v3094, %v2963
        %v3103 = vsel %vm633, %v3095, %v2965
        %v3104 = vsel %vm633, %v3096, %v2967
        %v3105 = vsel %vm633, %v3097, %v2969
        %v3106 = vsel %vm642, %v3098, %v2987
        %v3107 = vsel %vm642, %v3099, %v2989
        %v3108 = vsel %vm642, %v3100, %v2991
        %v3109 = vsel %vm642, %v3101, %v2993
        %v3110 = vsel %vm642, %v3102, %v2995
        %v3111 = vsel %vm642, %v3103, %v2997
        %v3112 = vsel %vm642, %v3104, %v2999
        %v3113 = vsel %vm642, %v3105, %v3001
        %v3114 = vsel %vm651, %v3106, %v3019
        %v3115 = vsel %vm651, %v3107, %v3021
        %v3116 = vsel %vm651, %v3108, %v3023
        %v3117 = vsel %vm651, %v3109, %v3025
        %v3118 = vsel %vm651, %v3110, %v3027
        %v3119 = vsel %vm651, %v3111, %v3029
        %v3120 = vsel %vm651, %v3112, %v3031
        %v3121 = vsel %vm651, %v3113, %v3033
        %v3122 = vsel %vm660, %v3114, %v3051
        %v3123 = vsel %vm660, %v3115, %v3053
        %v3124 = vsel %vm660, %v3116, %v3055
        %v3125 = vsel %vm660, %v3117, %v3057
        %v3126 = vsel %vm660, %v3118, %v3059
        %v3127 = vsel %vm660, %v3119, %v3061
        %v3128 = vsel %vm660, %v3120, %v3063
        %v3129 = vsel %vm660, %v3121, %v3065
        %s3130 = scalar_lea.vmem %s1, 288
        %v3131 = vld [vmem:[%s3130] sm:$0xff]
        %v3132 = vld [vmem:[%s3130 + $0x8] sm:$0xff]
        %v3133 = vld [vmem:[%s3130 + $0x10] sm:$0xff]
        %v3134 = vld [vmem:[%s3130 + $0x18] sm:$0xff]
        %v3135 = vld [vmem:[%s3130 + $0x20] sm:$0xff]
        %v3136 = vld [vmem:[%s3130 + $0x28] sm:$0xff]
        %v3137 = vld [vmem:[%s3130 + $0x30] sm:$0xff]
        %v3138 = vld [vmem:[%s3130 + $0x38] sm:$0xff]
        %v3139 = vld [vmem:[%s3130 + $0x40] sm:$0xff]
        %v3140 = vld [vmem:[%s3130 + $0x48] sm:$0xff]
        %v3141 = vld [vmem:[%s3130 + $0x50] sm:$0xff]
        %v3142 = vld [vmem:[%s3130 + $0x58] sm:$0xff]
        %v3143 = vld [vmem:[%s3130 + $0x60] sm:$0xff]
        %v3144 = vld [vmem:[%s3130 + $0x68] sm:$0xff]
        %v3145 = vld [vmem:[%s3130 + $0x70] sm:$0xff]
        %v3146 = vld [vmem:[%s3130 + $0x78] sm:$0xff]
        %v3147 = vld [vmem:[%s3130 + $0x80] sm:$0xff]
        %v3148 = vld [vmem:[%s3130 + $0x88] sm:$0xff]
        %v3150 = vsel %vm250, %v2842, 0
        %v3153 = vsel %vm250, %v2843, 0
        %v3156 = vsel %vm250, %v2844, 0
        %v3159 = vsel %vm250, %v2845, 0
        %v3162 = vsel %vm250, %v2846, 0
        %v3165 = vsel %vm250, %v2847, 0
        %v3168 = vsel %vm250, %v2848, 0
        %v3171 = vsel %vm250, %v2849, 0
        %3173 = vmatprep.subr.mxu0 0.0
        %3174 = vmatpush1.msra.mxu0 %v3131
        %3175 = vmatprep.subr.mxu0 0.0
        %3176 = vmatpush1.msra.mxu0 %v3132
        %3177 = vmatprep.subr.mxu0 0.0
        %3178 = vmatpush1.msra.mxu0 %v3133
        %3179 = vmatprep.subr.mxu0 0.0
        %3180 = vmatpush1.msra.mxu0 %v3134
        %3181 = vmatprep.subr.mxu0 0.0
        %3182 = vmatpush1.msra.mxu0 %v3135
        %3183 = vmatprep.subr.mxu0 0.0
        %3184 = vmatpush1.msra.mxu0 %v3136
        %3185 = vmatprep.subr.mxu0 0.0
        %3186 = vmatpush1.msra.mxu0 %v3137
        %3187 = vmatprep.subr.mxu0 0.0
        %3188 = vmatpush1.msra.mxu0 %v3138
        %3189 = vmatprep.subr.mxu0 0.0
        %3190 = vmatpush1.msra.mxu0 %v3139
        %3191 = vmatprep.subr.mxu0 0.0
        %3192 = vmatpush1.msra.mxu0 %v3140
        %3193 = vmatprep.subr.mxu0 0.0
        %3194 = vmatpush1.msra.mxu0 %v3141
        %3195 = vmatprep.subr.mxu0 0.0
        %3196 = vmatpush1.msra.mxu0 %v3142
        %3197 = vmatprep.subr.mxu0 0.0
        %3198 = vmatpush1.msra.mxu0 %v3143
        %3199 = vmatprep.subr.mxu0 0.0
        %3200 = vmatpush1.msra.mxu0 %v3144
        %3201 = vmatprep.subr.mxu0 0.0
        %3202 = vmatpush1.msra.mxu0 %v3145
        %3203 = vmatprep.subr.mxu0 0.0
        %3204 = vmatpush1.msra.mxu0 %v3146
        %3205 = vmatprep.subr.mxu0 0.0
        %3206 = vmatpush1.msra.mxu0 %v3147
        %3207 = vmatprep.subr.mxu0 0.0
        %3208 = vmatpush1.msra.mxu0 %v3148
        %3209 = vmatprep.subr.mxu0 0.0
        %3210 = vmatpush1.msra.mxu0 0.0
        %3211 = vmatprep.subr.mxu0 0.0
        %3212 = vmatpush1.msra.mxu0 0.0
        %3213 = vmatprep.subr.mxu0 0.0
        %3214 = vmatpush1.msra.mxu0 0.0
        %3215 = vmatprep.subr.mxu0 0.0
        %3216 = vmatpush1.msra.mxu0 0.0
        %3217 = vmatprep.subr.mxu0 0.0
        %3218 = vmatpush1.msra.mxu0 0.0
        %3219 = vmatprep.subr.mxu0 0.0
        %3220 = vmatpush1.msra.mxu0 0.0
        %3221 = vmatprep.subr.mxu0 0.0
        %3222 = vmatpush1.msra.mxu0 0.0
        %3223 = vmatprep.subr.mxu0 0.0
        %3224 = vmatpush1.msra.mxu0 0.0
        %3225 = vmatprep.subr.mxu0 0.0
        %3226 = vmatpush1.msra.mxu0 0.0
        %3227 = vmatprep.subr.mxu0 0.0
        %3228 = vmatpush1.msra.mxu0 0.0
        %3229 = vmatprep.subr.mxu0 0.0
        %3230 = vmatpush1.msra.mxu0 0.0
        %3231 = vmatprep.subr.mxu0 0.0
        %3232 = vmatpush1.msra.mxu0 0.0
        %3233 = vmatprep.subr.mxu0 0.0
        %3234 = vmatpush1.msra.mxu0 0.0
        %3235 = vmatprep.subr.mxu0 0.0
        %3236 = vmatpush1.msra.mxu0 0.0
        %3237 = vmatprep.mubr.f32.mxu0 %v3150
        %3238 = vmatmul.mubr.f32.gmra.mrb[0].mxu0 %v3122
        %v3239 = vpop.f32.mrb[0].mxu0
        %v3240 = vadd.f32 0.0, %v3239
        %v3241 = vpop.f32.mrb[0].mxu0
        %3242 = vmatprep.mubr.f32.mxu0 %v3153
        %3243 = vmatmul.mubr.f32.gmra.mrb[0].mxu0 %v3123
        %v3244 = vpop.f32.mrb[0].mxu0
        %v3245 = vadd.f32 0.0, %v3244
        %v3246 = vpop.f32.mrb[0].mxu0
        %3247 = vmatprep.mubr.f32.mxu0 %v3156
        %3248 = vmatmul.mubr.f32.gmra.mrb[0].mxu0 %v3124
        %v3249 = vpop.f32.mrb[0].mxu0
        %v3250 = vadd.f32 0.0, %v3249
        %v3251 = vpop.f32.mrb[0].mxu0
        %3252 = vmatprep.mubr.f32.mxu0 %v3159
        %3253 = vmatmul.mubr.f32.gmra.mrb[0].mxu0 %v3125
        %v3254 = vpop.f32.mrb[0].mxu0
        %v3255 = vadd.f32 0.0, %v3254
        %v3256 = vpop.f32.mrb[0].mxu0
        %3257 = vmatprep.mubr.f32.mxu0 %v3162
        %3258 = vmatmul.mubr.f32.gmra.mrb[0].mxu0 %v3126
        %v3259 = vpop.f32.mrb[0].mxu0
        %v3260 = vadd.f32 0.0, %v3259
        %v3261 = vpop.f32.mrb[0].mxu0
        %3262 = vmatprep.mubr.f32.mxu0 %v3165
        %3263 = vmatmul.mubr.f32.gmra.mrb[0].mxu0 %v3127
        %v3264 = vpop.f32.mrb[0].mxu0
        %v3265 = vadd.f32 0.0, %v3264
        %v3266 = vpop.f32.mrb[0].mxu0
        %3267 = vmatprep.mubr.f32.mxu0 %v3168
        %3268 = vmatmul.mubr.f32.gmra.mrb[0].mxu0 %v3128
        %v3269 = vpop.f32.mrb[0].mxu0
        %v3270 = vadd.f32 0.0, %v3269
        %v3271 = vpop.f32.mrb[0].mxu0
        %3272 = vmatprep.mubr.f32.mxu0 %v3171
        %3273 = vmatmul.mubr.f32.gmra.mrb[0].mxu0 %v3129
        %v3274 = vpop.f32.mrb[0].mxu0
        %v3275 = vadd.f32 0.0, %v3274
        %v3276 = vpop.f32.mrb[0].mxu0
        %3277 = vdwg.mxu0
        %s3278 = scalar_lea.vmem %s2, 4
        %v3279 = vld [vmem:[%s3278] sm:$0x3]
        %v3280 = vlaneseq
        %v3281 = vshrl.u32 %v3280, 7
        %v3282 = vsub.s32 0, %v3281
        %v3283 = vrot.slane %v3279, %v3282
        %v3284 = vmul.f32 %v3240, %v3283
        %v3285 = vmul.f32 %v3245, %v3283
        %v3286 = vmul.f32 %v3250, %v3283
        %v3287 = vmul.f32 %v3255, %v3283
        %v3288 = vmul.f32 %v3260, %v3283
        %v3289 = vmul.f32 %v3265, %v3283
        %v3290 = vmul.f32 %v3270, %v3283
        %v3291 = vmul.f32 %v3275, %v3283
        %v3292 = vlaneseq
        %v3293 = vshrl.u32 %v3292, 7
        %v3294 = vsub.s32 1, %v3293
        %v3295 = vrot.slane %v3279, %v3294
        %v3296 = vadd.f32 %v3284, %v3295
        %v3297 = vadd.f32 %v3285, %v3295
        %v3298 = vadd.f32 %v3286, %v3295
        %v3299 = vadd.f32 %v3287, %v3295
        %v3300 = vadd.f32 %v3288, %v3295
        %v3301 = vadd.f32 %v3289, %v3295
        %v3302 = vadd.f32 %v3290, %v3295
        %v3303 = vadd.f32 %v3291, %v3295
        %v3304 = vmax.f32 %v3296, 0.0
        %v3305 = vmax.f32 %v3297, 0.0
        %v3306 = vmax.f32 %v3298, 0.0
        %v3307 = vmax.f32 %v3299, 0.0
        %v3308 = vmax.f32 %v3300, 0.0
        %v3309 = vmax.f32 %v3301, 0.0
        %v3310 = vmax.f32 %v3302, 0.0
        %v3311 = vmax.f32 %v3303, 0.0
        %3312 = vst.msk [vmem:[%s849 + $0x1] sm:$0xff] %vm272, %v3304
        %3313 = vst.msk [vmem:[%s849 + $0x11] sm:$0xff] %vm272, %v3305
        %3314 = vst.msk [vmem:[%s849 + $0x21] sm:$0xff] %vm272, %v3306
        %3315 = vst.msk [vmem:[%s849 + $0x31] sm:$0xff] %vm272, %v3307
        %3316 = vst.msk [vmem:[%s849 + $0x41] sm:$0xff] %vm272, %v3308
        %3317 = vst.msk [vmem:[%s849 + $0x51] sm:$0xff] %vm272, %v3309
        %3318 = vst.msk [vmem:[%s849 + $0x61] sm:$0xff] %vm272, %v3310
        %3319 = vst.msk [vmem:[%s849 + $0x71] sm:$0xff] %vm272, %v3311
        %v3320 = vld [vmem:[#allocation3] sm:$0xff]
        %v3321 = vld [vmem:[#allocation3 + $0x10] sm:$0xff]
        %v3322 = vld [vmem:[#allocation3 + $0x20] sm:$0xff]
        %v3323 = vld [vmem:[#allocation3 + $0x30] sm:$0xff]
        %v3324 = vld [vmem:[#allocation3 + $0x40] sm:$0xff]
        %v3325 = vld [vmem:[#allocation3 + $0x50] sm:$0xff]
        %v3326 = vld [vmem:[#allocation3 + $0x60] sm:$0xff]
        %v3327 = vld [vmem:[#allocation3 + $0x70] sm:$0xff]
        %v3328 = vld [vmem:[#allocation3 + $0x1] sm:$0xff]
        %v3329 = vld [vmem:[#allocation3 + $0x11] sm:$0xff]
        %v3330 = vld [vmem:[#allocation3 + $0x21] sm:$0xff]
        %v3331 = vld [vmem:[#allocation3 + $0x31] sm:$0xff]
        %v3332 = vld [vmem:[#allocation3 + $0x41] sm:$0xff]
        %v3333 = vld [vmem:[#allocation3 + $0x51] sm:$0xff]
        %v3334 = vld [vmem:[#allocation3 + $0x61] sm:$0xff]
        %v3335 = vld [vmem:[#allocation3 + $0x71] sm:$0xff]
        %v3336 = vld [vmem:[#allocation3 + $0x2] sm:$0xff]
        %v3337 = vld [vmem:[#allocation3 + $0x12] sm:$0xff]
        %v3338 = vld [vmem:[#allocation3 + $0x22] sm:$0xff]
        %v3339 = vld [vmem:[#allocation3 + $0x32] sm:$0xff]
        %v3340 = vld [vmem:[#allocation3 + $0x42] sm:$0xff]
        %v3341 = vld [vmem:[#allocation3 + $0x52] sm:$0xff]
        %v3342 = vld [vmem:[#allocation3 + $0x62] sm:$0xff]
        %v3343 = vld [vmem:[#allocation3 + $0x72] sm:$0xff]
        %v3344 = vld [vmem:[%s849] sm:$0xff]
        %v3345 = vld [vmem:[%s849 + $0x10] sm:$0xff]
        %v3346 = vld [vmem:[%s849 + $0x20] sm:$0xff]
        %v3347 = vld [vmem:[%s849 + $0x30] sm:$0xff]
        %v3348 = vld [vmem:[%s849 + $0x40] sm:$0xff]
        %v3349 = vld [vmem:[%s849 + $0x50] sm:$0xff]
        %v3350 = vld [vmem:[%s849 + $0x60] sm:$0xff]
        %v3351 = vld [vmem:[%s849 + $0x70] sm:$0xff]
        %v3352 = vld [vmem:[%s849 + $0x1] sm:$0xff]
        %v3353 = vld [vmem:[%s849 + $0x11] sm:$0xff]
        %v3354 = vld [vmem:[%s849 + $0x21] sm:$0xff]
        %v3355 = vld [vmem:[%s849 + $0x31] sm:$0xff]
        %v3356 = vld [vmem:[%s849 + $0x41] sm:$0xff]
        %v3357 = vld [vmem:[%s849 + $0x51] sm:$0xff]
        %v3358 = vld [vmem:[%s849 + $0x61] sm:$0xff]
        %v3359 = vld [vmem:[%s849 + $0x71] sm:$0xff]
        %v3360 = vld [vmem:[%s849 + $0x2] sm:$0xff]
        %v3361 = vld [vmem:[%s849 + $0x12] sm:$0xff]
        %v3362 = vld [vmem:[%s849 + $0x22] sm:$0xff]
        %v3363 = vld [vmem:[%s849 + $0x32] sm:$0xff]
        %v3364 = vld [vmem:[%s849 + $0x42] sm:$0xff]
        %v3365 = vld [vmem:[%s849 + $0x52] sm:$0xff]
        %v3366 = vld [vmem:[%s849 + $0x62] sm:$0xff]
        %v3367 = vld [vmem:[%s849 + $0x72] sm:$0xff]
        %v3368 = vld [vmem:[%s906] sm:$0xff]
        %v3369 = vld [vmem:[%s906 + $0x10] sm:$0xff]
        %v3370 = vld [vmem:[%s906 + $0x20] sm:$0xff]
        %v3371 = vld [vmem:[%s906 + $0x30] sm:$0xff]
        %v3372 = vld [vmem:[%s906 + $0x40] sm:$0xff]
        %v3373 = vld [vmem:[%s906 + $0x50] sm:$0xff]
        %v3374 = vld [vmem:[%s906 + $0x60] sm:$0xff]
        %v3375 = vld [vmem:[%s906 + $0x70] sm:$0xff]
        %v3376 = vld [vmem:[%s906 + $0x1] sm:$0xff]
        %v3377 = vld [vmem:[%s906 + $0x11] sm:$0xff]
        %v3378 = vld [vmem:[%s906 + $0x21] sm:$0xff]
        %v3379 = vld [vmem:[%s906 + $0x31] sm:$0xff]
        %v3380 = vld [vmem:[%s906 + $0x41] sm:$0xff]
        %v3381 = vld [vmem:[%s906 + $0x51] sm:$0xff]
        %v3382 = vld [vmem:[%s906 + $0x61] sm:$0xff]
        %v3383 = vld [vmem:[%s906 + $0x71] sm:$0xff]
        %v3384 = vld [vmem:[%s906 + $0x2] sm:$0xff]
        %v3385 = vld [vmem:[%s906 + $0x12] sm:$0xff]
        %v3386 = vld [vmem:[%s906 + $0x22] sm:$0xff]
        %v3387 = vld [vmem:[%s906 + $0x32] sm:$0xff]
        %v3388 = vld [vmem:[%s906 + $0x42] sm:$0xff]
        %v3389 = vld [vmem:[%s906 + $0x52] sm:$0xff]
        %v3390 = vld [vmem:[%s906 + $0x62] sm:$0xff]
        %v3391 = vld [vmem:[%s906 + $0x72] sm:$0xff]
        %3400 = vrot.lane.b32.xlu0 %v3328, 32
        %v3401 = vpop.permute.xlu0 %3400
        %3402 = vrot.lane.b32.xlu0 %v3329, 32
        %v3403 = vpop.permute.xlu0 %3402
        %3404 = vrot.lane.b32.xlu0 %v3330, 32
        %v3405 = vpop.permute.xlu0 %3404
        %3406 = vrot.lane.b32.xlu0 %v3331, 32
        %v3407 = vpop.permute.xlu0 %3406
        %3408 = vrot.lane.b32.xlu0 %v3332, 32
        %v3409 = vpop.permute.xlu0 %3408
        %3410 = vrot.lane.b32.xlu0 %v3333, 32
        %v3411 = vpop.permute.xlu0 %3410
        %3412 = vrot.lane.b32.xlu0 %v3334, 32
        %v3413 = vpop.permute.xlu0 %3412
        %3414 = vrot.lane.b32.xlu0 %v3335, 32
        %v3415 = vpop.permute.xlu0 %3414
        %3432 = vrot.lane.b32.xlu0 %v3336, 64
        %v3433 = vpop.permute.xlu0 %3432
        %3434 = vrot.lane.b32.xlu0 %v3337, 64
        %v3435 = vpop.permute.xlu0 %3434
        %3436 = vrot.lane.b32.xlu0 %v3338, 64
        %v3437 = vpop.permute.xlu0 %3436
        %3438 = vrot.lane.b32.xlu0 %v3339, 64
        %v3439 = vpop.permute.xlu0 %3438
        %3440 = vrot.lane.b32.xlu0 %v3340, 64
        %v3441 = vpop.permute.xlu0 %3440
        %3442 = vrot.lane.b32.xlu0 %v3341, 64
        %v3443 = vpop.permute.xlu0 %3442
        %3444 = vrot.lane.b32.xlu0 %v3342, 64
        %v3445 = vpop.permute.xlu0 %3444
        %3446 = vrot.lane.b32.xlu0 %v3343, 64
        %v3447 = vpop.permute.xlu0 %3446
        %3464 = vrot.lane.b32.xlu0 %v3344, 96
        %v3465 = vpop.permute.xlu0 %3464
        %3466 = vrot.lane.b32.xlu0 %v3345, 96
        %v3467 = vpop.permute.xlu0 %3466
        %3468 = vrot.lane.b32.xlu0 %v3346, 96
        %v3469 = vpop.permute.xlu0 %3468
        %3470 = vrot.lane.b32.xlu0 %v3347, 96
        %v3471 = vpop.permute.xlu0 %3470
        %3472 = vrot.lane.b32.xlu0 %v3348, 96
        %v3473 = vpop.permute.xlu0 %3472
        %3474 = vrot.lane.b32.xlu0 %v3349, 96
        %v3475 = vpop.permute.xlu0 %3474
        %3476 = vrot.lane.b32.xlu0 %v3350, 96
        %v3477 = vpop.permute.xlu0 %3476
        %3478 = vrot.lane.b32.xlu0 %v3351, 96
        %v3479 = vpop.permute.xlu0 %3478
        %3496 = vrot.lane.b32.xlu0 %v3360, 32
        %v3497 = vpop.permute.xlu0 %3496
        %3498 = vrot.lane.b32.xlu0 %v3361, 32
        %v3499 = vpop.permute.xlu0 %3498
        %3500 = vrot.lane.b32.xlu0 %v3362, 32
        %v3501 = vpop.permute.xlu0 %3500
        %3502 = vrot.lane.b32.xlu0 %v3363, 32
        %v3503 = vpop.permute.xlu0 %3502
        %3504 = vrot.lane.b32.xlu0 %v3364, 32
        %v3505 = vpop.permute.xlu0 %3504
        %3506 = vrot.lane.b32.xlu0 %v3365, 32
        %v3507 = vpop.permute.xlu0 %3506
        %3508 = vrot.lane.b32.xlu0 %v3366, 32
        %v3509 = vpop.permute.xlu0 %3508
        %3510 = vrot.lane.b32.xlu0 %v3367, 32
        %v3511 = vpop.permute.xlu0 %3510
        %3528 = vrot.lane.b32.xlu0 %v3368, 64
        %v3529 = vpop.permute.xlu0 %3528
        %3530 = vrot.lane.b32.xlu0 %v3369, 64
        %v3531 = vpop.permute.xlu0 %3530
        %3532 = vrot.lane.b32.xlu0 %v3370, 64
        %v3533 = vpop.permute.xlu0 %3532
        %3534 = vrot.lane.b32.xlu0 %v3371, 64
        %v3535 = vpop.permute.xlu0 %3534
        %3536 = vrot.lane.b32.xlu0 %v3372, 64
        %v3537 = vpop.permute.xlu0 %3536
        %3538 = vrot.lane.b32.xlu0 %v3373, 64
        %v3539 = vpop.permute.xlu0 %3538
        %3540 = vrot.lane.b32.xlu0 %v3374, 64
        %v3541 = vpop.permute.xlu0 %3540
        %3542 = vrot.lane.b32.xlu0 %v3375, 64
        %v3543 = vpop.permute.xlu0 %3542
        %3560 = vrot.lane.b32.xlu0 %v3376, 96
        %v3561 = vpop.permute.xlu0 %3560
        %3562 = vrot.lane.b32.xlu0 %v3377, 96
        %v3563 = vpop.permute.xlu0 %3562
        %3564 = vrot.lane.b32.xlu0 %v3378, 96
        %v3565 = vpop.permute.xlu0 %3564
        %3566 = vrot.lane.b32.xlu0 %v3379, 96
        %v3567 = vpop.permute.xlu0 %3566
        %3568 = vrot.lane.b32.xlu0 %v3380, 96
        %v3569 = vpop.permute.xlu0 %3568
        %3570 = vrot.lane.b32.xlu0 %v3381, 96
        %v3571 = vpop.permute.xlu0 %3570
        %3572 = vrot.lane.b32.xlu0 %v3382, 96
        %v3573 = vpop.permute.xlu0 %3572
        %3574 = vrot.lane.b32.xlu0 %v3383, 96
        %v3575 = vpop.permute.xlu0 %3574
        %v3584 = vsel %vm272, %v3320, %v3401
        %v3585 = vsel %vm272, %v3321, %v3403
        %v3586 = vsel %vm272, %v3322, %v3405
        %v3587 = vsel %vm272, %v3323, %v3407
        %v3588 = vsel %vm272, %v3324, %v3409
        %v3589 = vsel %vm272, %v3325, %v3411
        %v3590 = vsel %vm272, %v3326, %v3413
        %v3591 = vsel %vm272, %v3327, %v3415
        %v3592 = vsel %vm633, %v3584, %v3433
        %v3593 = vsel %vm633, %v3585, %v3435
        %v3594 = vsel %vm633, %v3586, %v3437
        %v3595 = vsel %vm633, %v3587, %v3439
        %v3596 = vsel %vm633, %v3588, %v3441
        %v3597 = vsel %vm633, %v3589, %v3443
        %v3598 = vsel %vm633, %v3590, %v3445
        %v3599 = vsel %vm633, %v3591, %v3447
        %v3600 = vsel %vm651, %v3592, %v3465
        %v3601 = vsel %vm651, %v3593, %v3467
        %v3602 = vsel %vm651, %v3594, %v3469
        %v3603 = vsel %vm651, %v3595, %v3471
        %v3604 = vsel %vm651, %v3596, %v3473
        %v3605 = vsel %vm651, %v3597, %v3475
        %v3606 = vsel %vm651, %v3598, %v3477
        %v3607 = vsel %vm651, %v3599, %v3479
        %v3608 = vsel %vm272, %v3352, %v3497
        %v3609 = vsel %vm272, %v3353, %v3499
        %v3610 = vsel %vm272, %v3354, %v3501
        %v3611 = vsel %vm272, %v3355, %v3503
        %v3612 = vsel %vm272, %v3356, %v3505
        %v3613 = vsel %vm272, %v3357, %v3507
        %v3614 = vsel %vm272, %v3358, %v3509
        %v3615 = vsel %vm272, %v3359, %v3511
        %v3616 = vsel %vm633, %v3608, %v3529
        %v3617 = vsel %vm633, %v3609, %v3531
        %v3618 = vsel %vm633, %v3610, %v3533
        %v3619 = vsel %vm633, %v3611, %v3535
        %v3620 = vsel %vm633, %v3612, %v3537
        %v3621 = vsel %vm633, %v3613, %v3539
        %v3622 = vsel %vm633, %v3614, %v3541
        %v3623 = vsel %vm633, %v3615, %v3543
        %v3624 = vsel %vm651, %v3616, %v3561
        %v3625 = vsel %vm651, %v3617, %v3563
        %v3626 = vsel %vm651, %v3618, %v3565
        %v3627 = vsel %vm651, %v3619, %v3567
        %v3628 = vsel %vm651, %v3620, %v3569
        %v3629 = vsel %vm651, %v3621, %v3571
        %v3630 = vsel %vm651, %v3622, %v3573
        %v3631 = vsel %vm651, %v3623, %v3575
        %s3632 = scalar_lea.vmem %s3, 576
        %v3633 = vld [vmem:[%s3632] sm:$0xff]
        %v3634 = vld [vmem:[%s3632 + $0x8] sm:$0xff]
        %v3635 = vld [vmem:[%s3632 + $0x10] sm:$0xff]
        %v3636 = vld [vmem:[%s3632 + $0x18] sm:$0xff]
        %v3637 = vld [vmem:[%s3632 + $0x20] sm:$0xff]
        %v3638 = vld [vmem:[%s3632 + $0x28] sm:$0xff]
        %v3639 = vld [vmem:[%s3632 + $0x30] sm:$0xff]
        %v3640 = vld [vmem:[%s3632 + $0x38] sm:$0xff]
        %v3641 = vld [vmem:[%s3632 + $0x40] sm:$0xff]
        %v3642 = vld [vmem:[%s3632 + $0x48] sm:$0xff]
        %v3643 = vld [vmem:[%s3632 + $0x50] sm:$0xff]
        %v3644 = vld [vmem:[%s3632 + $0x58] sm:$0xff]
        %v3645 = vld [vmem:[%s3632 + $0x60] sm:$0xff]
        %v3646 = vld [vmem:[%s3632 + $0x68] sm:$0xff]
        %v3647 = vld [vmem:[%s3632 + $0x70] sm:$0xff]
        %v3648 = vld [vmem:[%s3632 + $0x78] sm:$0xff]
        %v3649 = vld [vmem:[%s3632 + $0x80] sm:$0xff]
        %v3650 = vld [vmem:[%s3632 + $0x88] sm:$0xff]
        %v3651 = vld [vmem:[%s3632 + $0x90] sm:$0xff]
        %v3652 = vld [vmem:[%s3632 + $0x98] sm:$0xff]
        %v3653 = vld [vmem:[%s3632 + $0xa0] sm:$0xff]
        %v3654 = vld [vmem:[%s3632 + $0xa8] sm:$0xff]
        %v3655 = vld [vmem:[%s3632 + $0xb0] sm:$0xff]
        %v3656 = vld [vmem:[%s3632 + $0xb8] sm:$0xff]
        %v3657 = vld [vmem:[%s3632 + $0xc0] sm:$0xff]
        %v3658 = vld [vmem:[%s3632 + $0xc8] sm:$0xff]
        %v3659 = vld [vmem:[%s3632 + $0xd0] sm:$0xff]
        %v3660 = vld [vmem:[%s3632 + $0xd8] sm:$0xff]
        %v3661 = vld [vmem:[%s3632 + $0xe0] sm:$0xff]
        %v3662 = vld [vmem:[%s3632 + $0xe8] sm:$0xff]
        %v3663 = vld [vmem:[%s3632 + $0xf0] sm:$0xff]
        %v3664 = vld [vmem:[%s3632 + $0xf8] sm:$0xff]
        %v3665 = vld [vmem:[%s3632 + $0x100] sm:$0xff]
        %v3666 = vld [vmem:[%s3632 + $0x108] sm:$0xff]
        %v3667 = vld [vmem:[%s3632 + $0x110] sm:$0xff]
        %v3668 = vld [vmem:[%s3632 + $0x118] sm:$0xff]
        %v3670 = vsel %vm272, %v3384, 0
        %v3673 = vsel %vm272, %v3385, 0
        %v3676 = vsel %vm272, %v3386, 0
        %v3679 = vsel %vm272, %v3387, 0
        %v3682 = vsel %vm272, %v3388, 0
        %v3685 = vsel %vm272, %v3389, 0
        %v3688 = vsel %vm272, %v3390, 0
        %v3691 = vsel %vm272, %v3391, 0
        %3693 = vmatprep.subr.mxu0 0.0
        %3694 = vmatpush1.msra.mxu0 %v3633
        %3695 = vmatprep.subr.mxu0 0.0
        %3696 = vmatpush1.msra.mxu0 %v3634
        %3697 = vmatprep.subr.mxu0 0.0
        %3698 = vmatpush1.msra.mxu0 %v3635
        %3699 = vmatprep.subr.mxu0 0.0
        %3700 = vmatpush1.msra.mxu0 %v3636
        %3701 = vmatprep.subr.mxu0 0.0
        %3702 = vmatpush1.msra.mxu0 %v3637
        %3703 = vmatprep.subr.mxu0 0.0
        %3704 = vmatpush1.msra.mxu0 %v3638
        %3705 = vmatprep.subr.mxu0 0.0
        %3706 = vmatpush1.msra.mxu0 %v3639
        %3707 = vmatprep.subr.mxu0 0.0
        %3708 = vmatpush1.msra.mxu0 %v3640
        %3709 = vmatprep.subr.mxu0 0.0
        %3710 = vmatpush1.msra.mxu0 %v3641
        %3711 = vmatprep.subr.mxu0 0.0
        %3712 = vmatpush1.msra.mxu0 %v3642
        %3713 = vmatprep.subr.mxu0 0.0
        %3714 = vmatpush1.msra.mxu0 %v3643
        %3715 = vmatprep.subr.mxu0 0.0
        %3716 = vmatpush1.msra.mxu0 %v3644
        %3717 = vmatprep.subr.mxu0 0.0
        %3718 = vmatpush1.msra.mxu0 %v3645
        %3719 = vmatprep.subr.mxu0 0.0
        %3720 = vmatpush1.msra.mxu0 %v3646
        %3721 = vmatprep.subr.mxu0 0.0
        %3722 = vmatpush1.msra.mxu0 %v3647
        %3723 = vmatprep.subr.mxu0 0.0
        %3724 = vmatpush1.msra.mxu0 %v3648
        %3725 = vmatprep.subr.mxu0 0.0
        %3726 = vmatpush1.msra.mxu0 %v3649
        %3727 = vmatprep.subr.mxu0 0.0
        %3728 = vmatpush1.msra.mxu0 %v3650
        %3729 = vmatprep.subr.mxu0 0.0
        %3730 = vmatpush1.msra.mxu0 %v3651
        %3731 = vmatprep.subr.mxu0 0.0
        %3732 = vmatpush1.msra.mxu0 %v3652
        %3733 = vmatprep.subr.mxu0 0.0
        %3734 = vmatpush1.msra.mxu0 %v3653
        %3735 = vmatprep.subr.mxu0 0.0
        %3736 = vmatpush1.msra.mxu0 %v3654
        %3737 = vmatprep.subr.mxu0 0.0
        %3738 = vmatpush1.msra.mxu0 %v3655
        %3739 = vmatprep.subr.mxu0 0.0
        %3740 = vmatpush1.msra.mxu0 %v3656
        %3741 = vmatprep.subr.mxu0 0.0
        %3742 = vmatpush1.msra.mxu0 %v3657
        %3743 = vmatprep.subr.mxu0 0.0
        %3744 = vmatpush1.msra.mxu0 %v3658
        %3745 = vmatprep.subr.mxu0 0.0
        %3746 = vmatpush1.msra.mxu0 %v3659
        %3747 = vmatprep.subr.mxu0 0.0
        %3748 = vmatpush1.msra.mxu0 %v3660
        %3749 = vmatprep.subr.mxu0 0.0
        %3750 = vmatpush1.msra.mxu0 %v3661
        %3751 = vmatprep.subr.mxu0 0.0
        %3752 = vmatpush1.msra.mxu0 %v3662
        %3753 = vmatprep.subr.mxu0 0.0
        %3754 = vmatpush1.msra.mxu0 %v3663
        %3755 = vmatprep.subr.mxu0 0.0
        %3756 = vmatpush1.msra.mxu0 %v3664
        %3757 = vmatprep.mubr.f32.mxu0 %v3624
        %3758 = vmatmul.mubr.f32.gmra.mrb[0].mxu0 %v3600
        %v3759 = vpop.f32.mrb[0].mxu0
        %v3760 = vadd.f32 0.0, %v3759
        %v3761 = vpop.f32.mrb[0].mxu0
        %3762 = vmatprep.mubr.f32.mxu0 %v3625
        %3763 = vmatmul.mubr.f32.gmra.mrb[0].mxu0 %v3601
        %v3764 = vpop.f32.mrb[0].mxu0
        %v3765 = vadd.f32 0.0, %v3764
        %v3766 = vpop.f32.mrb[0].mxu0
        %3767 = vmatprep.mubr.f32.mxu0 %v3626
        %3768 = vmatmul.mubr.f32.gmra.mrb[0].mxu0 %v3602
        %v3769 = vpop.f32.mrb[0].mxu0
        %v3770 = vadd.f32 0.0, %v3769
        %v3771 = vpop.f32.mrb[0].mxu0
        %3772 = vmatprep.mubr.f32.mxu0 %v3627
        %3773 = vmatmul.mubr.f32.gmra.mrb[0].mxu0 %v3603
        %v3774 = vpop.f32.mrb[0].mxu0
        %v3775 = vadd.f32 0.0, %v3774
        %v3776 = vpop.f32.mrb[0].mxu0
        %3777 = vmatprep.mubr.f32.mxu0 %v3628
        %3778 = vmatmul.mubr.f32.gmra.mrb[0].mxu0 %v3604
        %v3779 = vpop.f32.mrb[0].mxu0
        %v3780 = vadd.f32 0.0, %v3779
        %v3781 = vpop.f32.mrb[0].mxu0
        %3782 = vmatprep.mubr.f32.mxu0 %v3629
        %3783 = vmatmul.mubr.f32.gmra.mrb[0].mxu0 %v3605
        %v3784 = vpop.f32.mrb[0].mxu0
        %v3785 = vadd.f32 0.0, %v3784
        %v3786 = vpop.f32.mrb[0].mxu0
        %3787 = vmatprep.mubr.f32.mxu0 %v3630
        %3788 = vmatmul.mubr.f32.gmra.mrb[0].mxu0 %v3606
        %v3789 = vpop.f32.mrb[0].mxu0
        %v3790 = vadd.f32 0.0, %v3789
        %v3791 = vpop.f32.mrb[0].mxu0
        %3792 = vmatprep.mubr.f32.mxu0 %v3631
        %3793 = vmatmul.mubr.f32.gmra.mrb[0].mxu0 %v3607
        %v3794 = vpop.f32.mrb[0].mxu0
        %v3795 = vadd.f32 0.0, %v3794
        %v3796 = vpop.f32.mrb[0].mxu0
        %3797 = vdwg.mxu0
        %3798 = vmatprep.subr.mxu0 0.0
        %3799 = vmatpush1.msra.mxu0 %v3665
        %3800 = vmatprep.subr.mxu0 0.0
        %3801 = vmatpush1.msra.mxu0 %v3666
        %3802 = vmatprep.subr.mxu0 0.0
        %3803 = vmatpush1.msra.mxu0 %v3667
        %3804 = vmatprep.subr.mxu0 0.0
        %3805 = vmatpush1.msra.mxu0 %v3668
        %3806 = vmatprep.subr.mxu0 0.0
        %3807 = vmatpush1.msra.mxu0 0.0
        %3808 = vmatprep.subr.mxu0 0.0
        %3809 = vmatpush1.msra.mxu0 0.0
        %3810 = vmatprep.subr.mxu0 0.0
        %3811 = vmatpush1.msra.mxu0 0.0
        %3812 = vmatprep.subr.mxu0 0.0
        %3813 = vmatpush1.msra.mxu0 0.0
        %3814 = vmatprep.subr.mxu0 0.0
        %3815 = vmatpush1.msra.mxu0 0.0
        %3816 = vmatprep.subr.mxu0 0.0
        %3817 = vmatpush1.msra.mxu0 0.0
        %3818 = vmatprep.subr.mxu0 0.0
        %3819 = vmatpush1.msra.mxu0 0.0
        %3820 = vmatprep.subr.mxu0 0.0
        %3821 = vmatpush1.msra.mxu0 0.0
        %3822 = vmatprep.subr.mxu0 0.0
        %3823 = vmatpush1.msra.mxu0 0.0
        %3824 = vmatprep.subr.mxu0 0.0
        %3825 = vmatpush1.msra.mxu0 0.0
        %3826 = vmatprep.subr.mxu0 0.0
        %3827 = vmatpush1.msra.mxu0 0.0
        %3828 = vmatprep.subr.mxu0 0.0
        %3829 = vmatpush1.msra.mxu0 0.0
        %3830 = vmatprep.subr.mxu0 0.0
        %3831 = vmatpush1.msra.mxu0 0.0
        %3832 = vmatprep.subr.mxu0 0.0
        %3833 = vmatpush1.msra.mxu0 0.0
        %3834 = vmatprep.subr.mxu0 0.0
        %3835 = vmatpush1.msra.mxu0 0.0
        %3836 = vmatprep.subr.mxu0 0.0
        %3837 = vmatpush1.msra.mxu0 0.0
        %3838 = vmatprep.subr.mxu0 0.0
        %3839 = vmatpush1.msra.mxu0 0.0
        %3840 = vmatprep.subr.mxu0 0.0
        %3841 = vmatpush1.msra.mxu0 0.0
        %3842 = vmatprep.subr.mxu0 0.0
        %3843 = vmatpush1.msra.mxu0 0.0
        %3844 = vmatprep.subr.mxu0 0.0
        %3845 = vmatpush1.msra.mxu0 0.0
        %3846 = vmatprep.subr.mxu0 0.0
        %3847 = vmatpush1.msra.mxu0 0.0
        %3848 = vmatprep.subr.mxu0 0.0
        %3849 = vmatpush1.msra.mxu0 0.0
        %3850 = vmatprep.subr.mxu0 0.0
        %3851 = vmatpush1.msra.mxu0 0.0
        %3852 = vmatprep.subr.mxu0 0.0
        %3853 = vmatpush1.msra.mxu0 0.0
        %3854 = vmatprep.subr.mxu0 0.0
        %3855 = vmatpush1.msra.mxu0 0.0
        %3856 = vmatprep.subr.mxu0 0.0
        %3857 = vmatpush1.msra.mxu0 0.0
        %3858 = vmatprep.subr.mxu0 0.0
        %3859 = vmatpush1.msra.mxu0 0.0
        %3860 = vmatprep.subr.mxu0 0.0
        %3861 = vmatpush1.msra.mxu0 0.0
        %3862 = vmatprep.mubr.f32.mxu0 0.0
        %3863 = vmatmul.mubr.f32.gmra.mrb[0].mxu0 %v3670
        %v3864 = vpop.f32.mrb[0].mxu0
        %v3865 = vadd.f32 %v3760, %v3864
        %v3866 = vpop.f32.mrb[0].mxu0
        %3867 = vmatprep.mubr.f32.mxu0 0.0
        %3868 = vmatmul.mubr.f32.gmra.mrb[0].mxu0 %v3673
        %v3869 = vpop.f32.mrb[0].mxu0
        %v3870 = vadd.f32 %v3765, %v3869
        %v3871 = vpop.f32.mrb[0].mxu0
        %3872 = vmatprep.mubr.f32.mxu0 0.0
        %3873 = vmatmul.mubr.f32.gmra.mrb[0].mxu0 %v3676
        %v3874 = vpop.f32.mrb[0].mxu0
        %v3875 = vadd.f32 %v3770, %v3874
        %v3876 = vpop.f32.mrb[0].mxu0
        %3877 = vmatprep.mubr.f32.mxu0 0.0
        %3878 = vmatmul.mubr.f32.gmra.mrb[0].mxu0 %v3679
        %v3879 = vpop.f32.mrb[0].mxu0
        %v3880 = vadd.f32 %v3775, %v3879
        %v3881 = vpop.f32.mrb[0].mxu0
        %3882 = vmatprep.mubr.f32.mxu0 0.0
        %3883 = vmatmul.mubr.f32.gmra.mrb[0].mxu0 %v3682
        %v3884 = vpop.f32.mrb[0].mxu0
        %v3885 = vadd.f32 %v3780, %v3884
        %v3886 = vpop.f32.mrb[0].mxu0
        %3887 = vmatprep.mubr.f32.mxu0 0.0
        %3888 = vmatmul.mubr.f32.gmra.mrb[0].mxu0 %v3685
        %v3889 = vpop.f32.mrb[0].mxu0
        %v3890 = vadd.f32 %v3785, %v3889
        %v3891 = vpop.f32.mrb[0].mxu0
        %3892 = vmatprep.mubr.f32.mxu0 0.0
        %3893 = vmatmul.mubr.f32.gmra.mrb[0].mxu0 %v3688
        %v3894 = vpop.f32.mrb[0].mxu0
        %v3895 = vadd.f32 %v3790, %v3894
        %v3896 = vpop.f32.mrb[0].mxu0
        %3897 = vmatprep.mubr.f32.mxu0 0.0
        %3898 = vmatmul.mubr.f32.gmra.mrb[0].mxu0 %v3691
        %v3899 = vpop.f32.mrb[0].mxu0
        %v3900 = vadd.f32 %v3795, %v3899
        %v3901 = vpop.f32.mrb[0].mxu0
        %3902 = vdwg.mxu0
        %s3903 = scalar_lea.vmem %s4, 4
        %v3904 = vld [vmem:[%s3903] sm:$0x3]
        %v3905 = vlaneseq
        %v3906 = vshrl.u32 %v3905, 7
        %v3907 = vsub.s32 0, %v3906
        %v3908 = vrot.slane %v3904, %v3907
        %v3909 = vmul.f32 %v3865, %v3908
        %v3910 = vmul.f32 %v3870, %v3908
        %v3911 = vmul.f32 %v3875, %v3908
        %v3912 = vmul.f32 %v3880, %v3908
        %v3913 = vmul.f32 %v3885, %v3908
        %v3914 = vmul.f32 %v3890, %v3908
        %v3915 = vmul.f32 %v3895, %v3908
        %v3916 = vmul.f32 %v3900, %v3908
        %v3917 = vlaneseq
        %v3918 = vshrl.u32 %v3917, 7
        %v3919 = vsub.s32 1, %v3918
        %v3920 = vrot.slane %v3904, %v3919
        %v3921 = vadd.f32 %v3909, %v3920
        %v3922 = vadd.f32 %v3910, %v3920
        %v3923 = vadd.f32 %v3911, %v3920
        %v3924 = vadd.f32 %v3912, %v3920
        %v3925 = vadd.f32 %v3913, %v3920
        %v3926 = vadd.f32 %v3914, %v3920
        %v3927 = vadd.f32 %v3915, %v3920
        %v3928 = vadd.f32 %v3916, %v3920
        %v3929 = vmax.f32 %v3921, 0.0
        %v3930 = vmax.f32 %v3922, 0.0
        %v3931 = vmax.f32 %v3923, 0.0
        %v3932 = vmax.f32 %v3924, 0.0
        %v3933 = vmax.f32 %v3925, 0.0
        %v3934 = vmax.f32 %v3926, 0.0
        %v3935 = vmax.f32 %v3927, 0.0
        %v3936 = vmax.f32 %v3928, 0.0
        %3945 = vrot.lane.b32.xlu0 %v3929, 64
        %v3946 = vpop.permute.xlu0 %3945
        %3947 = vrot.lane.b32.xlu0 %v3930, 64
        %v3948 = vpop.permute.xlu0 %3947
        %3949 = vrot.lane.b32.xlu0 %v3931, 64
        %v3950 = vpop.permute.xlu0 %3949
        %3951 = vrot.lane.b32.xlu0 %v3932, 64
        %v3952 = vpop.permute.xlu0 %3951
        %3953 = vrot.lane.b32.xlu0 %v3933, 64
        %v3954 = vpop.permute.xlu0 %3953
        %3955 = vrot.lane.b32.xlu0 %v3934, 64
        %v3956 = vpop.permute.xlu0 %3955
        %3957 = vrot.lane.b32.xlu0 %v3935, 64
        %v3958 = vpop.permute.xlu0 %3957
        %3959 = vrot.lane.b32.xlu0 %v3936, 64
        %v3960 = vpop.permute.xlu0 %3959
        %vm3969 = vcmask 785920
        %3970 = vst.msk [vmem:[#allocation4] sm:$0xff] %vm3969, %v3946
        %3971 = vst.msk [vmem:[#allocation4 + $0x8] sm:$0xff] %vm3969, %v3948
        %3972 = vst.msk [vmem:[#allocation4 + $0x10] sm:$0xff] %vm3969, %v3950
        %3973 = vst.msk [vmem:[#allocation4 + $0x18] sm:$0xff] %vm3969, %v3952
        %3974 = vst.msk [vmem:[#allocation4 + $0x20] sm:$0xff] %vm3969, %v3954
        %3975 = vst.msk [vmem:[#allocation4 + $0x28] sm:$0xff] %vm3969, %v3956
        %3976 = vst.msk [vmem:[#allocation4 + $0x30] sm:$0xff] %vm3969, %v3958
        %3977 = vst.msk [vmem:[#allocation4 + $0x38] sm:$0xff] %vm3969, %v3960
        %v3978 = vld [vmem:[%s249] sm:$0xff]
        %v3979 = vld [vmem:[%s249 + $0x8] sm:$0xff]
        %v3980 = vld [vmem:[%s249 + $0x10] sm:$0xff]
        %v3981 = vld [vmem:[%s249 + $0x18] sm:$0xff]
        %v3982 = vld [vmem:[%s249 + $0x20] sm:$0xff]
        %v3983 = vld [vmem:[%s249 + $0x28] sm:$0xff]
        %v3984 = vld [vmem:[%s249 + $0x30] sm:$0xff]
        %v3985 = vld [vmem:[%s249 + $0x38] sm:$0xff]
        %3994 = vrot.lane.b32.xlu0 %v3978, 80
        %v3995 = vpop.permute.xlu0 %3994
        %3996 = vrot.lane.b32.xlu0 %v3979, 80
        %v3997 = vpop.permute.xlu0 %3996
        %3998 = vrot.lane.b32.xlu0 %v3980, 80
        %v3999 = vpop.permute.xlu0 %3998
        %4000 = vrot.lane.b32.xlu0 %v3981, 80
        %v4001 = vpop.permute.xlu0 %4000
        %4002 = vrot.lane.b32.xlu0 %v3982, 80
        %v4003 = vpop.permute.xlu0 %4002
        %4004 = vrot.lane.b32.xlu0 %v3983, 80
        %v4005 = vpop.permute.xlu0 %4004
        %4006 = vrot.lane.b32.xlu0 %v3984, 80
        %v4007 = vpop.permute.xlu0 %4006
        %4008 = vrot.lane.b32.xlu0 %v3985, 80
        %v4009 = vpop.permute.xlu0 %4008
        %4018 = vst.msk [vmem:[%s302 + $0x1] sm:$0xff] %vm250, %v3995
        %4019 = vst.msk [vmem:[%s302 + $0x11] sm:$0xff] %vm250, %v3997
        %4020 = vst.msk [vmem:[%s302 + $0x21] sm:$0xff] %vm250, %v3999
        %4021 = vst.msk [vmem:[%s302 + $0x31] sm:$0xff] %vm250, %v4001
        %4022 = vst.msk [vmem:[%s302 + $0x41] sm:$0xff] %vm250, %v4003
        %4023 = vst.msk [vmem:[%s302 + $0x51] sm:$0xff] %vm250, %v4005
        %4024 = vst.msk [vmem:[%s302 + $0x61] sm:$0xff] %vm250, %v4007
        %4025 = vst.msk [vmem:[%s302 + $0x71] sm:$0xff] %vm250, %v4009
        %v4026 = vld [vmem:[#allocation2] sm:$0xff]
        %v4027 = vld [vmem:[#allocation2 + $0x10] sm:$0xff]
        %v4028 = vld [vmem:[#allocation2 + $0x20] sm:$0xff]
        %v4029 = vld [vmem:[#allocation2 + $0x30] sm:$0xff]
        %v4030 = vld [vmem:[#allocation2 + $0x40] sm:$0xff]
        %v4031 = vld [vmem:[#allocation2 + $0x50] sm:$0xff]
        %v4032 = vld [vmem:[#allocation2 + $0x60] sm:$0xff]
        %v4033 = vld [vmem:[#allocation2 + $0x70] sm:$0xff]
        %v4034 = vld [vmem:[#allocation2 + $0x1] sm:$0xff]
        %v4035 = vld [vmem:[#allocation2 + $0x11] sm:$0xff]
        %v4036 = vld [vmem:[#allocation2 + $0x21] sm:$0xff]
        %v4037 = vld [vmem:[#allocation2 + $0x31] sm:$0xff]
        %v4038 = vld [vmem:[#allocation2 + $0x41] sm:$0xff]
        %v4039 = vld [vmem:[#allocation2 + $0x51] sm:$0xff]
        %v4040 = vld [vmem:[#allocation2 + $0x61] sm:$0xff]
        %v4041 = vld [vmem:[#allocation2 + $0x71] sm:$0xff]
        %v4042 = vld [vmem:[#allocation2 + $0x2] sm:$0xff]
        %v4043 = vld [vmem:[#allocation2 + $0x12] sm:$0xff]
        %v4044 = vld [vmem:[#allocation2 + $0x22] sm:$0xff]
        %v4045 = vld [vmem:[#allocation2 + $0x32] sm:$0xff]
        %v4046 = vld [vmem:[#allocation2 + $0x42] sm:$0xff]
        %v4047 = vld [vmem:[#allocation2 + $0x52] sm:$0xff]
        %v4048 = vld [vmem:[#allocation2 + $0x62] sm:$0xff]
        %v4049 = vld [vmem:[#allocation2 + $0x72] sm:$0xff]
        %v4050 = vld [vmem:[%s302] sm:$0xff]
        %v4051 = vld [vmem:[%s302 + $0x10] sm:$0xff]
        %v4052 = vld [vmem:[%s302 + $0x20] sm:$0xff]
        %v4053 = vld [vmem:[%s302 + $0x30] sm:$0xff]
        %v4054 = vld [vmem:[%s302 + $0x40] sm:$0xff]
        %v4055 = vld [vmem:[%s302 + $0x50] sm:$0xff]
        %v4056 = vld [vmem:[%s302 + $0x60] sm:$0xff]
        %v4057 = vld [vmem:[%s302 + $0x70] sm:$0xff]
        %v4058 = vld [vmem:[%s302 + $0x1] sm:$0xff]
        %v4059 = vld [vmem:[%s302 + $0x11] sm:$0xff]
        %v4060 = vld [vmem:[%s302 + $0x21] sm:$0xff]
        %v4061 = vld [vmem:[%s302 + $0x31] sm:$0xff]
        %v4062 = vld [vmem:[%s302 + $0x41] sm:$0xff]
        %v4063 = vld [vmem:[%s302 + $0x51] sm:$0xff]
        %v4064 = vld [vmem:[%s302 + $0x61] sm:$0xff]
        %v4065 = vld [vmem:[%s302 + $0x71] sm:$0xff]
        %v4066 = vld [vmem:[%s302 + $0x2] sm:$0xff]
        %v4067 = vld [vmem:[%s302 + $0x12] sm:$0xff]
        %v4068 = vld [vmem:[%s302 + $0x22] sm:$0xff]
        %v4069 = vld [vmem:[%s302 + $0x32] sm:$0xff]
        %v4070 = vld [vmem:[%s302 + $0x42] sm:$0xff]
        %v4071 = vld [vmem:[%s302 + $0x52] sm:$0xff]
        %v4072 = vld [vmem:[%s302 + $0x62] sm:$0xff]
        %v4073 = vld [vmem:[%s302 + $0x72] sm:$0xff]
        %v4074 = vld [vmem:[%s359] sm:$0xff]
        %v4075 = vld [vmem:[%s359 + $0x10] sm:$0xff]
        %v4076 = vld [vmem:[%s359 + $0x20] sm:$0xff]
        %v4077 = vld [vmem:[%s359 + $0x30] sm:$0xff]
        %v4078 = vld [vmem:[%s359 + $0x40] sm:$0xff]
        %v4079 = vld [vmem:[%s359 + $0x50] sm:$0xff]
        %v4080 = vld [vmem:[%s359 + $0x60] sm:$0xff]
        %v4081 = vld [vmem:[%s359 + $0x70] sm:$0xff]
        %v4082 = vld [vmem:[%s359 + $0x1] sm:$0xff]
        %v4083 = vld [vmem:[%s359 + $0x11] sm:$0xff]
        %v4084 = vld [vmem:[%s359 + $0x21] sm:$0xff]
        %v4085 = vld [vmem:[%s359 + $0x31] sm:$0xff]
        %v4086 = vld [vmem:[%s359 + $0x41] sm:$0xff]
        %v4087 = vld [vmem:[%s359 + $0x51] sm:$0xff]
        %v4088 = vld [vmem:[%s359 + $0x61] sm:$0xff]
        %v4089 = vld [vmem:[%s359 + $0x71] sm:$0xff]
        %v4090 = vld [vmem:[%s359 + $0x2] sm:$0xff]
        %v4091 = vld [vmem:[%s359 + $0x12] sm:$0xff]
        %v4092 = vld [vmem:[%s359 + $0x22] sm:$0xff]
        %v4093 = vld [vmem:[%s359 + $0x32] sm:$0xff]
        %v4094 = vld [vmem:[%s359 + $0x42] sm:$0xff]
        %v4095 = vld [vmem:[%s359 + $0x52] sm:$0xff]
        %v4096 = vld [vmem:[%s359 + $0x62] sm:$0xff]
        %v4097 = vld [vmem:[%s359 + $0x72] sm:$0xff]
        %4106 = vrot.lane.b32.xlu0 %v4034, 16
        %v4107 = vpop.permute.xlu0 %4106
        %4108 = vrot.lane.b32.xlu0 %v4035, 16
        %v4109 = vpop.permute.xlu0 %4108
        %4110 = vrot.lane.b32.xlu0 %v4036, 16
        %v4111 = vpop.permute.xlu0 %4110
        %4112 = vrot.lane.b32.xlu0 %v4037, 16
        %v4113 = vpop.permute.xlu0 %4112
        %4114 = vrot.lane.b32.xlu0 %v4038, 16
        %v4115 = vpop.permute.xlu0 %4114
        %4116 = vrot.lane.b32.xlu0 %v4039, 16
        %v4117 = vpop.permute.xlu0 %4116
        %4118 = vrot.lane.b32.xlu0 %v4040, 16
        %v4119 = vpop.permute.xlu0 %4118
        %4120 = vrot.lane.b32.xlu0 %v4041, 16
        %v4121 = vpop.permute.xlu0 %4120
        %4138 = vrot.lane.b32.xlu0 %v4042, 32
        %v4139 = vpop.permute.xlu0 %4138
        %4140 = vrot.lane.b32.xlu0 %v4043, 32
        %v4141 = vpop.permute.xlu0 %4140
        %4142 = vrot.lane.b32.xlu0 %v4044, 32
        %v4143 = vpop.permute.xlu0 %4142
        %4144 = vrot.lane.b32.xlu0 %v4045, 32
        %v4145 = vpop.permute.xlu0 %4144
        %4146 = vrot.lane.b32.xlu0 %v4046, 32
        %v4147 = vpop.permute.xlu0 %4146
        %4148 = vrot.lane.b32.xlu0 %v4047, 32
        %v4149 = vpop.permute.xlu0 %4148
        %4150 = vrot.lane.b32.xlu0 %v4048, 32
        %v4151 = vpop.permute.xlu0 %4150
        %4152 = vrot.lane.b32.xlu0 %v4049, 32
        %v4153 = vpop.permute.xlu0 %4152
        %4170 = vrot.lane.b32.xlu0 %v4050, 48
        %v4171 = vpop.permute.xlu0 %4170
        %4172 = vrot.lane.b32.xlu0 %v4051, 48
        %v4173 = vpop.permute.xlu0 %4172
        %4174 = vrot.lane.b32.xlu0 %v4052, 48
        %v4175 = vpop.permute.xlu0 %4174
        %4176 = vrot.lane.b32.xlu0 %v4053, 48
        %v4177 = vpop.permute.xlu0 %4176
        %4178 = vrot.lane.b32.xlu0 %v4054, 48
        %v4179 = vpop.permute.xlu0 %4178
        %4180 = vrot.lane.b32.xlu0 %v4055, 48
        %v4181 = vpop.permute.xlu0 %4180
        %4182 = vrot.lane.b32.xlu0 %v4056, 48
        %v4183 = vpop.permute.xlu0 %4182
        %4184 = vrot.lane.b32.xlu0 %v4057, 48
        %v4185 = vpop.permute.xlu0 %4184
        %4202 = vrot.lane.b32.xlu0 %v4058, 64
        %v4203 = vpop.permute.xlu0 %4202
        %4204 = vrot.lane.b32.xlu0 %v4059, 64
        %v4205 = vpop.permute.xlu0 %4204
        %4206 = vrot.lane.b32.xlu0 %v4060, 64
        %v4207 = vpop.permute.xlu0 %4206
        %4208 = vrot.lane.b32.xlu0 %v4061, 64
        %v4209 = vpop.permute.xlu0 %4208
        %4210 = vrot.lane.b32.xlu0 %v4062, 64
        %v4211 = vpop.permute.xlu0 %4210
        %4212 = vrot.lane.b32.xlu0 %v4063, 64
        %v4213 = vpop.permute.xlu0 %4212
        %4214 = vrot.lane.b32.xlu0 %v4064, 64
        %v4215 = vpop.permute.xlu0 %4214
        %4216 = vrot.lane.b32.xlu0 %v4065, 64
        %v4217 = vpop.permute.xlu0 %4216
        %4234 = vrot.lane.b32.xlu0 %v4066, 80
        %v4235 = vpop.permute.xlu0 %4234
        %4236 = vrot.lane.b32.xlu0 %v4067, 80
        %v4237 = vpop.permute.xlu0 %4236
        %4238 = vrot.lane.b32.xlu0 %v4068, 80
        %v4239 = vpop.permute.xlu0 %4238
        %4240 = vrot.lane.b32.xlu0 %v4069, 80
        %v4241 = vpop.permute.xlu0 %4240
        %4242 = vrot.lane.b32.xlu0 %v4070, 80
        %v4243 = vpop.permute.xlu0 %4242
        %4244 = vrot.lane.b32.xlu0 %v4071, 80
        %v4245 = vpop.permute.xlu0 %4244
        %4246 = vrot.lane.b32.xlu0 %v4072, 80
        %v4247 = vpop.permute.xlu0 %4246
        %4248 = vrot.lane.b32.xlu0 %v4073, 80
        %v4249 = vpop.permute.xlu0 %4248
        %4266 = vrot.lane.b32.xlu0 %v4074, 96
        %v4267 = vpop.permute.xlu0 %4266
        %4268 = vrot.lane.b32.xlu0 %v4075, 96
        %v4269 = vpop.permute.xlu0 %4268
        %4270 = vrot.lane.b32.xlu0 %v4076, 96
        %v4271 = vpop.permute.xlu0 %4270
        %4272 = vrot.lane.b32.xlu0 %v4077, 96
        %v4273 = vpop.permute.xlu0 %4272
        %4274 = vrot.lane.b32.xlu0 %v4078, 96
        %v4275 = vpop.permute.xlu0 %4274
        %4276 = vrot.lane.b32.xlu0 %v4079, 96
        %v4277 = vpop.permute.xlu0 %4276
        %4278 = vrot.lane.b32.xlu0 %v4080, 96
        %v4279 = vpop.permute.xlu0 %4278
        %4280 = vrot.lane.b32.xlu0 %v4081, 96
        %v4281 = vpop.permute.xlu0 %4280
        %4298 = vrot.lane.b32.xlu0 %v4082, 112
        %v4299 = vpop.permute.xlu0 %4298
        %4300 = vrot.lane.b32.xlu0 %v4083, 112
        %v4301 = vpop.permute.xlu0 %4300
        %4302 = vrot.lane.b32.xlu0 %v4084, 112
        %v4303 = vpop.permute.xlu0 %4302
        %4304 = vrot.lane.b32.xlu0 %v4085, 112
        %v4305 = vpop.permute.xlu0 %4304
        %4306 = vrot.lane.b32.xlu0 %v4086, 112
        %v4307 = vpop.permute.xlu0 %4306
        %4308 = vrot.lane.b32.xlu0 %v4087, 112
        %v4309 = vpop.permute.xlu0 %4308
        %4310 = vrot.lane.b32.xlu0 %v4088, 112
        %v4311 = vpop.permute.xlu0 %4310
        %4312 = vrot.lane.b32.xlu0 %v4089, 112
        %v4313 = vpop.permute.xlu0 %4312
        %v4322 = vsel %vm250, %v4026, %v4107
        %v4323 = vsel %vm250, %v4027, %v4109
        %v4324 = vsel %vm250, %v4028, %v4111
        %v4325 = vsel %vm250, %v4029, %v4113
        %v4326 = vsel %vm250, %v4030, %v4115
        %v4327 = vsel %vm250, %v4031, %v4117
        %v4328 = vsel %vm250, %v4032, %v4119
        %v4329 = vsel %vm250, %v4033, %v4121
        %v4330 = vsel %vm272, %v4322, %v4139
        %v4331 = vsel %vm272, %v4323, %v4141
        %v4332 = vsel %vm272, %v4324, %v4143
        %v4333 = vsel %vm272, %v4325, %v4145
        %v4334 = vsel %vm272, %v4326, %v4147
        %v4335 = vsel %vm272, %v4327, %v4149
        %v4336 = vsel %vm272, %v4328, %v4151
        %v4337 = vsel %vm272, %v4329, %v4153
        %v4338 = vsel %vm624, %v4330, %v4171
        %v4339 = vsel %vm624, %v4331, %v4173
        %v4340 = vsel %vm624, %v4332, %v4175
        %v4341 = vsel %vm624, %v4333, %v4177
        %v4342 = vsel %vm624, %v4334, %v4179
        %v4343 = vsel %vm624, %v4335, %v4181
        %v4344 = vsel %vm624, %v4336, %v4183
        %v4345 = vsel %vm624, %v4337, %v4185
        %v4346 = vsel %vm633, %v4338, %v4203
        %v4347 = vsel %vm633, %v4339, %v4205
        %v4348 = vsel %vm633, %v4340, %v4207
        %v4349 = vsel %vm633, %v4341, %v4209
        %v4350 = vsel %vm633, %v4342, %v4211
        %v4351 = vsel %vm633, %v4343, %v4213
        %v4352 = vsel %vm633, %v4344, %v4215
        %v4353 = vsel %vm633, %v4345, %v4217
        %v4354 = vsel %vm642, %v4346, %v4235
        %v4355 = vsel %vm642, %v4347, %v4237
        %v4356 = vsel %vm642, %v4348, %v4239
        %v4357 = vsel %vm642, %v4349, %v4241
        %v4358 = vsel %vm642, %v4350, %v4243
        %v4359 = vsel %vm642, %v4351, %v4245
        %v4360 = vsel %vm642, %v4352, %v4247
        %v4361 = vsel %vm642, %v4353, %v4249
        %v4362 = vsel %vm651, %v4354, %v4267
        %v4363 = vsel %vm651, %v4355, %v4269
        %v4364 = vsel %vm651, %v4356, %v4271
        %v4365 = vsel %vm651, %v4357, %v4273
        %v4366 = vsel %vm651, %v4358, %v4275
        %v4367 = vsel %vm651, %v4359, %v4277
        %v4368 = vsel %vm651, %v4360, %v4279
        %v4369 = vsel %vm651, %v4361, %v4281
        %v4370 = vsel %vm660, %v4362, %v4299
        %v4371 = vsel %vm660, %v4363, %v4301
        %v4372 = vsel %vm660, %v4364, %v4303
        %v4373 = vsel %vm660, %v4365, %v4305
        %v4374 = vsel %vm660, %v4366, %v4307
        %v4375 = vsel %vm660, %v4367, %v4309
        %v4376 = vsel %vm660, %v4368, %v4311
        %v4377 = vsel %vm660, %v4369, %v4313
        %s4378 = scalar_lea.vmem %s1, 432
        %v4379 = vld [vmem:[%s4378] sm:$0xff]
        %v4380 = vld [vmem:[%s4378 + $0x8] sm:$0xff]
        %v4381 = vld [vmem:[%s4378 + $0x10] sm:$0xff]
        %v4382 = vld [vmem:[%s4378 + $0x18] sm:$0xff]
        %v4383 = vld [vmem:[%s4378 + $0x20] sm:$0xff]
        %v4384 = vld [vmem:[%s4378 + $0x28] sm:$0xff]
        %v4385 = vld [vmem:[%s4378 + $0x30] sm:$0xff]
        %v4386 = vld [vmem:[%s4378 + $0x38] sm:$0xff]
        %v4387 = vld [vmem:[%s4378 + $0x40] sm:$0xff]
        %v4388 = vld [vmem:[%s4378 + $0x48] sm:$0xff]
        %v4389 = vld [vmem:[%s4378 + $0x50] sm:$0xff]
        %v4390 = vld [vmem:[%s4378 + $0x58] sm:$0xff]
        %v4391 = vld [vmem:[%s4378 + $0x60] sm:$0xff]
        %v4392 = vld [vmem:[%s4378 + $0x68] sm:$0xff]
        %v4393 = vld [vmem:[%s4378 + $0x70] sm:$0xff]
        %v4394 = vld [vmem:[%s4378 + $0x78] sm:$0xff]
        %v4395 = vld [vmem:[%s4378 + $0x80] sm:$0xff]
        %v4396 = vld [vmem:[%s4378 + $0x88] sm:$0xff]
        %v4398 = vsel %vm250, %v4090, 0
        %v4401 = vsel %vm250, %v4091, 0
        %v4404 = vsel %vm250, %v4092, 0
        %v4407 = vsel %vm250, %v4093, 0
        %v4410 = vsel %vm250, %v4094, 0
        %v4413 = vsel %vm250, %v4095, 0
        %v4416 = vsel %vm250, %v4096, 0
        %v4419 = vsel %vm250, %v4097, 0
        %4421 = vmatprep.subr.mxu0 0.0
        %4422 = vmatpush1.msra.mxu0 %v4379
        %4423 = vmatprep.subr.mxu0 0.0
        %4424 = vmatpush1.msra.mxu0 %v4380
        %4425 = vmatprep.subr.mxu0 0.0
        %4426 = vmatpush1.msra.mxu0 %v4381
        %4427 = vmatprep.subr.mxu0 0.0
        %4428 = vmatpush1.msra.mxu0 %v4382
        %4429 = vmatprep.subr.mxu0 0.0
        %4430 = vmatpush1.msra.mxu0 %v4383
        %4431 = vmatprep.subr.mxu0 0.0
        %4432 = vmatpush1.msra.mxu0 %v4384
        %4433 = vmatprep.subr.mxu0 0.0
        %4434 = vmatpush1.msra.mxu0 %v4385
        %4435 = vmatprep.subr.mxu0 0.0
        %4436 = vmatpush1.msra.mxu0 %v4386
        %4437 = vmatprep.subr.mxu0 0.0
        %4438 = vmatpush1.msra.mxu0 %v4387
        %4439 = vmatprep.subr.mxu0 0.0
        %4440 = vmatpush1.msra.mxu0 %v4388
        %4441 = vmatprep.subr.mxu0 0.0
        %4442 = vmatpush1.msra.mxu0 %v4389
        %4443 = vmatprep.subr.mxu0 0.0
        %4444 = vmatpush1.msra.mxu0 %v4390
        %4445 = vmatprep.subr.mxu0 0.0
        %4446 = vmatpush1.msra.mxu0 %v4391
        %4447 = vmatprep.subr.mxu0 0.0
        %4448 = vmatpush1.msra.mxu0 %v4392
        %4449 = vmatprep.subr.mxu0 0.0
        %4450 = vmatpush1.msra.mxu0 %v4393
        %4451 = vmatprep.subr.mxu0 0.0
        %4452 = vmatpush1.msra.mxu0 %v4394
        %4453 = vmatprep.subr.mxu0 0.0
        %4454 = vmatpush1.msra.mxu0 %v4395
        %4455 = vmatprep.subr.mxu0 0.0
        %4456 = vmatpush1.msra.mxu0 %v4396
        %4457 = vmatprep.subr.mxu0 0.0
        %4458 = vmatpush1.msra.mxu0 0.0
        %4459 = vmatprep.subr.mxu0 0.0
        %4460 = vmatpush1.msra.mxu0 0.0
        %4461 = vmatprep.subr.mxu0 0.0
        %4462 = vmatpush1.msra.mxu0 0.0
        %4463 = vmatprep.subr.mxu0 0.0
        %4464 = vmatpush1.msra.mxu0 0.0
        %4465 = vmatprep.subr.mxu0 0.0
        %4466 = vmatpush1.msra.mxu0 0.0
        %4467 = vmatprep.subr.mxu0 0.0
        %4468 = vmatpush1.msra.mxu0 0.0
        %4469 = vmatprep.subr.mxu0 0.0
        %4470 = vmatpush1.msra.mxu0 0.0
        %4471 = vmatprep.subr.mxu0 0.0
        %4472 = vmatpush1.msra.mxu0 0.0
        %4473 = vmatprep.subr.mxu0 0.0
        %4474 = vmatpush1.msra.mxu0 0.0
        %4475 = vmatprep.subr.mxu0 0.0
        %4476 = vmatpush1.msra.mxu0 0.0
        %4477 = vmatprep.subr.mxu0 0.0
        %4478 = vmatpush1.msra.mxu0 0.0
        %4479 = vmatprep.subr.mxu0 0.0
        %4480 = vmatpush1.msra.mxu0 0.0
        %4481 = vmatprep.subr.mxu0 0.0
        %4482 = vmatpush1.msra.mxu0 0.0
        %4483 = vmatprep.subr.mxu0 0.0
        %4484 = vmatpush1.msra.mxu0 0.0
        %4485 = vmatprep.mubr.f32.mxu0 %v4398
        %4486 = vmatmul.mubr.f32.gmra.mrb[0].mxu0 %v4370
        %v4487 = vpop.f32.mrb[0].mxu0
        %v4488 = vadd.f32 0.0, %v4487
        %v4489 = vpop.f32.mrb[0].mxu0
        %4490 = vmatprep.mubr.f32.mxu0 %v4401
        %4491 = vmatmul.mubr.f32.gmra.mrb[0].mxu0 %v4371
        %v4492 = vpop.f32.mrb[0].mxu0
        %v4493 = vadd.f32 0.0, %v4492
        %v4494 = vpop.f32.mrb[0].mxu0
        %4495 = vmatprep.mubr.f32.mxu0 %v4404
        %4496 = vmatmul.mubr.f32.gmra.mrb[0].mxu0 %v4372
        %v4497 = vpop.f32.mrb[0].mxu0
        %v4498 = vadd.f32 0.0, %v4497
        %v4499 = vpop.f32.mrb[0].mxu0
        %4500 = vmatprep.mubr.f32.mxu0 %v4407
        %4501 = vmatmul.mubr.f32.gmra.mrb[0].mxu0 %v4373
        %v4502 = vpop.f32.mrb[0].mxu0
        %v4503 = vadd.f32 0.0, %v4502
        %v4504 = vpop.f32.mrb[0].mxu0
        %4505 = vmatprep.mubr.f32.mxu0 %v4410
        %4506 = vmatmul.mubr.f32.gmra.mrb[0].mxu0 %v4374
        %v4507 = vpop.f32.mrb[0].mxu0
        %v4508 = vadd.f32 0.0, %v4507
        %v4509 = vpop.f32.mrb[0].mxu0
        %4510 = vmatprep.mubr.f32.mxu0 %v4413
        %4511 = vmatmul.mubr.f32.gmra.mrb[0].mxu0 %v4375
        %v4512 = vpop.f32.mrb[0].mxu0
        %v4513 = vadd.f32 0.0, %v4512
        %v4514 = vpop.f32.mrb[0].mxu0
        %4515 = vmatprep.mubr.f32.mxu0 %v4416
        %4516 = vmatmul.mubr.f32.gmra.mrb[0].mxu0 %v4376
        %v4517 = vpop.f32.mrb[0].mxu0
        %v4518 = vadd.f32 0.0, %v4517
        %v4519 = vpop.f32.mrb[0].mxu0
        %4520 = vmatprep.mubr.f32.mxu0 %v4419
        %4521 = vmatmul.mubr.f32.gmra.mrb[0].mxu0 %v4377
        %v4522 = vpop.f32.mrb[0].mxu0
        %v4523 = vadd.f32 0.0, %v4522
        %v4524 = vpop.f32.mrb[0].mxu0
        %4525 = vdwg.mxu0
        %s4526 = scalar_lea.vmem %s2, 6
        %v4527 = vld [vmem:[%s4526] sm:$0x3]
        %v4528 = vlaneseq
        %v4529 = vshrl.u32 %v4528, 7
        %v4530 = vsub.s32 0, %v4529
        %v4531 = vrot.slane %v4527, %v4530
        %v4532 = vmul.f32 %v4488, %v4531
        %v4533 = vmul.f32 %v4493, %v4531
        %v4534 = vmul.f32 %v4498, %v4531
        %v4535 = vmul.f32 %v4503, %v4531
        %v4536 = vmul.f32 %v4508, %v4531
        %v4537 = vmul.f32 %v4513, %v4531
        %v4538 = vmul.f32 %v4518, %v4531
        %v4539 = vmul.f32 %v4523, %v4531
        %v4540 = vlaneseq
        %v4541 = vshrl.u32 %v4540, 7
        %v4542 = vsub.s32 1, %v4541
        %v4543 = vrot.slane %v4527, %v4542
        %v4544 = vadd.f32 %v4532, %v4543
        %v4545 = vadd.f32 %v4533, %v4543
        %v4546 = vadd.f32 %v4534, %v4543
        %v4547 = vadd.f32 %v4535, %v4543
        %v4548 = vadd.f32 %v4536, %v4543
        %v4549 = vadd.f32 %v4537, %v4543
        %v4550 = vadd.f32 %v4538, %v4543
        %v4551 = vadd.f32 %v4539, %v4543
        %v4552 = vmax.f32 %v4544, 0.0
        %v4553 = vmax.f32 %v4545, 0.0
        %v4554 = vmax.f32 %v4546, 0.0
        %v4555 = vmax.f32 %v4547, 0.0
        %v4556 = vmax.f32 %v4548, 0.0
        %v4557 = vmax.f32 %v4549, 0.0
        %v4558 = vmax.f32 %v4550, 0.0
        %v4559 = vmax.f32 %v4551, 0.0
        %4560 = vst.msk [vmem:[%s849 + $0x1] sm:$0xff] %vm272, %v4552
        %4561 = vst.msk [vmem:[%s849 + $0x11] sm:$0xff] %vm272, %v4553
        %4562 = vst.msk [vmem:[%s849 + $0x21] sm:$0xff] %vm272, %v4554
        %4563 = vst.msk [vmem:[%s849 + $0x31] sm:$0xff] %vm272, %v4555
        %4564 = vst.msk [vmem:[%s849 + $0x41] sm:$0xff] %vm272, %v4556
        %4565 = vst.msk [vmem:[%s849 + $0x51] sm:$0xff] %vm272, %v4557
        %4566 = vst.msk [vmem:[%s849 + $0x61] sm:$0xff] %vm272, %v4558
        %4567 = vst.msk [vmem:[%s849 + $0x71] sm:$0xff] %vm272, %v4559
        %v4568 = vld [vmem:[#allocation3] sm:$0xff]
        %v4569 = vld [vmem:[#allocation3 + $0x10] sm:$0xff]
        %v4570 = vld [vmem:[#allocation3 + $0x20] sm:$0xff]
        %v4571 = vld [vmem:[#allocation3 + $0x30] sm:$0xff]
        %v4572 = vld [vmem:[#allocation3 + $0x40] sm:$0xff]
        %v4573 = vld [vmem:[#allocation3 + $0x50] sm:$0xff]
        %v4574 = vld [vmem:[#allocation3 + $0x60] sm:$0xff]
        %v4575 = vld [vmem:[#allocation3 + $0x70] sm:$0xff]
        %v4576 = vld [vmem:[#allocation3 + $0x1] sm:$0xff]
        %v4577 = vld [vmem:[#allocation3 + $0x11] sm:$0xff]
        %v4578 = vld [vmem:[#allocation3 + $0x21] sm:$0xff]
        %v4579 = vld [vmem:[#allocation3 + $0x31] sm:$0xff]
        %v4580 = vld [vmem:[#allocation3 + $0x41] sm:$0xff]
        %v4581 = vld [vmem:[#allocation3 + $0x51] sm:$0xff]
        %v4582 = vld [vmem:[#allocation3 + $0x61] sm:$0xff]
        %v4583 = vld [vmem:[#allocation3 + $0x71] sm:$0xff]
        %v4584 = vld [vmem:[#allocation3 + $0x2] sm:$0xff]
        %v4585 = vld [vmem:[#allocation3 + $0x12] sm:$0xff]
        %v4586 = vld [vmem:[#allocation3 + $0x22] sm:$0xff]
        %v4587 = vld [vmem:[#allocation3 + $0x32] sm:$0xff]
        %v4588 = vld [vmem:[#allocation3 + $0x42] sm:$0xff]
        %v4589 = vld [vmem:[#allocation3 + $0x52] sm:$0xff]
        %v4590 = vld [vmem:[#allocation3 + $0x62] sm:$0xff]
        %v4591 = vld [vmem:[#allocation3 + $0x72] sm:$0xff]
        %v4592 = vld [vmem:[%s849] sm:$0xff]
        %v4593 = vld [vmem:[%s849 + $0x10] sm:$0xff]
        %v4594 = vld [vmem:[%s849 + $0x20] sm:$0xff]
        %v4595 = vld [vmem:[%s849 + $0x30] sm:$0xff]
        %v4596 = vld [vmem:[%s849 + $0x40] sm:$0xff]
        %v4597 = vld [vmem:[%s849 + $0x50] sm:$0xff]
        %v4598 = vld [vmem:[%s849 + $0x60] sm:$0xff]
        %v4599 = vld [vmem:[%s849 + $0x70] sm:$0xff]
        %v4600 = vld [vmem:[%s849 + $0x1] sm:$0xff]
        %v4601 = vld [vmem:[%s849 + $0x11] sm:$0xff]
        %v4602 = vld [vmem:[%s849 + $0x21] sm:$0xff]
        %v4603 = vld [vmem:[%s849 + $0x31] sm:$0xff]
        %v4604 = vld [vmem:[%s849 + $0x41] sm:$0xff]
        %v4605 = vld [vmem:[%s849 + $0x51] sm:$0xff]
        %v4606 = vld [vmem:[%s849 + $0x61] sm:$0xff]
        %v4607 = vld [vmem:[%s849 + $0x71] sm:$0xff]
        %v4608 = vld [vmem:[%s849 + $0x2] sm:$0xff]
        %v4609 = vld [vmem:[%s849 + $0x12] sm:$0xff]
        %v4610 = vld [vmem:[%s849 + $0x22] sm:$0xff]
        %v4611 = vld [vmem:[%s849 + $0x32] sm:$0xff]
        %v4612 = vld [vmem:[%s849 + $0x42] sm:$0xff]
        %v4613 = vld [vmem:[%s849 + $0x52] sm:$0xff]
        %v4614 = vld [vmem:[%s849 + $0x62] sm:$0xff]
        %v4615 = vld [vmem:[%s849 + $0x72] sm:$0xff]
        %v4616 = vld [vmem:[%s906] sm:$0xff]
        %v4617 = vld [vmem:[%s906 + $0x10] sm:$0xff]
        %v4618 = vld [vmem:[%s906 + $0x20] sm:$0xff]
        %v4619 = vld [vmem:[%s906 + $0x30] sm:$0xff]
        %v4620 = vld [vmem:[%s906 + $0x40] sm:$0xff]
        %v4621 = vld [vmem:[%s906 + $0x50] sm:$0xff]
        %v4622 = vld [vmem:[%s906 + $0x60] sm:$0xff]
        %v4623 = vld [vmem:[%s906 + $0x70] sm:$0xff]
        %v4624 = vld [vmem:[%s906 + $0x1] sm:$0xff]
        %v4625 = vld [vmem:[%s906 + $0x11] sm:$0xff]
        %v4626 = vld [vmem:[%s906 + $0x21] sm:$0xff]
        %v4627 = vld [vmem:[%s906 + $0x31] sm:$0xff]
        %v4628 = vld [vmem:[%s906 + $0x41] sm:$0xff]
        %v4629 = vld [vmem:[%s906 + $0x51] sm:$0xff]
        %v4630 = vld [vmem:[%s906 + $0x61] sm:$0xff]
        %v4631 = vld [vmem:[%s906 + $0x71] sm:$0xff]
        %v4632 = vld [vmem:[%s906 + $0x2] sm:$0xff]
        %v4633 = vld [vmem:[%s906 + $0x12] sm:$0xff]
        %v4634 = vld [vmem:[%s906 + $0x22] sm:$0xff]
        %v4635 = vld [vmem:[%s906 + $0x32] sm:$0xff]
        %v4636 = vld [vmem:[%s906 + $0x42] sm:$0xff]
        %v4637 = vld [vmem:[%s906 + $0x52] sm:$0xff]
        %v4638 = vld [vmem:[%s906 + $0x62] sm:$0xff]
        %v4639 = vld [vmem:[%s906 + $0x72] sm:$0xff]
        %4648 = vrot.lane.b32.xlu0 %v4576, 32
        %v4649 = vpop.permute.xlu0 %4648
        %4650 = vrot.lane.b32.xlu0 %v4577, 32
        %v4651 = vpop.permute.xlu0 %4650
        %4652 = vrot.lane.b32.xlu0 %v4578, 32
        %v4653 = vpop.permute.xlu0 %4652
        %4654 = vrot.lane.b32.xlu0 %v4579, 32
        %v4655 = vpop.permute.xlu0 %4654
        %4656 = vrot.lane.b32.xlu0 %v4580, 32
        %v4657 = vpop.permute.xlu0 %4656
        %4658 = vrot.lane.b32.xlu0 %v4581, 32
        %v4659 = vpop.permute.xlu0 %4658
        %4660 = vrot.lane.b32.xlu0 %v4582, 32
        %v4661 = vpop.permute.xlu0 %4660
        %4662 = vrot.lane.b32.xlu0 %v4583, 32
        %v4663 = vpop.permute.xlu0 %4662
        %4680 = vrot.lane.b32.xlu0 %v4584, 64
        %v4681 = vpop.permute.xlu0 %4680
        %4682 = vrot.lane.b32.xlu0 %v4585, 64
        %v4683 = vpop.permute.xlu0 %4682
        %4684 = vrot.lane.b32.xlu0 %v4586, 64
        %v4685 = vpop.permute.xlu0 %4684
        %4686 = vrot.lane.b32.xlu0 %v4587, 64
        %v4687 = vpop.permute.xlu0 %4686
        %4688 = vrot.lane.b32.xlu0 %v4588, 64
        %v4689 = vpop.permute.xlu0 %4688
        %4690 = vrot.lane.b32.xlu0 %v4589, 64
        %v4691 = vpop.permute.xlu0 %4690
        %4692 = vrot.lane.b32.xlu0 %v4590, 64
        %v4693 = vpop.permute.xlu0 %4692
        %4694 = vrot.lane.b32.xlu0 %v4591, 64
        %v4695 = vpop.permute.xlu0 %4694
        %4712 = vrot.lane.b32.xlu0 %v4592, 96
        %v4713 = vpop.permute.xlu0 %4712
        %4714 = vrot.lane.b32.xlu0 %v4593, 96
        %v4715 = vpop.permute.xlu0 %4714
        %4716 = vrot.lane.b32.xlu0 %v4594, 96
        %v4717 = vpop.permute.xlu0 %4716
        %4718 = vrot.lane.b32.xlu0 %v4595, 96
        %v4719 = vpop.permute.xlu0 %4718
        %4720 = vrot.lane.b32.xlu0 %v4596, 96
        %v4721 = vpop.permute.xlu0 %4720
        %4722 = vrot.lane.b32.xlu0 %v4597, 96
        %v4723 = vpop.permute.xlu0 %4722
        %4724 = vrot.lane.b32.xlu0 %v4598, 96
        %v4725 = vpop.permute.xlu0 %4724
        %4726 = vrot.lane.b32.xlu0 %v4599, 96
        %v4727 = vpop.permute.xlu0 %4726
        %4744 = vrot.lane.b32.xlu0 %v4608, 32
        %v4745 = vpop.permute.xlu0 %4744
        %4746 = vrot.lane.b32.xlu0 %v4609, 32
        %v4747 = vpop.permute.xlu0 %4746
        %4748 = vrot.lane.b32.xlu0 %v4610, 32
        %v4749 = vpop.permute.xlu0 %4748
        %4750 = vrot.lane.b32.xlu0 %v4611, 32
        %v4751 = vpop.permute.xlu0 %4750
        %4752 = vrot.lane.b32.xlu0 %v4612, 32
        %v4753 = vpop.permute.xlu0 %4752
        %4754 = vrot.lane.b32.xlu0 %v4613, 32
        %v4755 = vpop.permute.xlu0 %4754
        %4756 = vrot.lane.b32.xlu0 %v4614, 32
        %v4757 = vpop.permute.xlu0 %4756
        %4758 = vrot.lane.b32.xlu0 %v4615, 32
        %v4759 = vpop.permute.xlu0 %4758
        %4776 = vrot.lane.b32.xlu0 %v4616, 64
        %v4777 = vpop.permute.xlu0 %4776
        %4778 = vrot.lane.b32.xlu0 %v4617, 64
        %v4779 = vpop.permute.xlu0 %4778
        %4780 = vrot.lane.b32.xlu0 %v4618, 64
        %v4781 = vpop.permute.xlu0 %4780
        %4782 = vrot.lane.b32.xlu0 %v4619, 64
        %v4783 = vpop.permute.xlu0 %4782
        %4784 = vrot.lane.b32.xlu0 %v4620, 64
        %v4785 = vpop.permute.xlu0 %4784
        %4786 = vrot.lane.b32.xlu0 %v4621, 64
        %v4787 = vpop.permute.xlu0 %4786
        %4788 = vrot.lane.b32.xlu0 %v4622, 64
        %v4789 = vpop.permute.xlu0 %4788
        %4790 = vrot.lane.b32.xlu0 %v4623, 64
        %v4791 = vpop.permute.xlu0 %4790
        %4808 = vrot.lane.b32.xlu0 %v4624, 96
        %v4809 = vpop.permute.xlu0 %4808
        %4810 = vrot.lane.b32.xlu0 %v4625, 96
        %v4811 = vpop.permute.xlu0 %4810
        %4812 = vrot.lane.b32.xlu0 %v4626, 96
        %v4813 = vpop.permute.xlu0 %4812
        %4814 = vrot.lane.b32.xlu0 %v4627, 96
        %v4815 = vpop.permute.xlu0 %4814
        %4816 = vrot.lane.b32.xlu0 %v4628, 96
        %v4817 = vpop.permute.xlu0 %4816
        %4818 = vrot.lane.b32.xlu0 %v4629, 96
        %v4819 = vpop.permute.xlu0 %4818
        %4820 = vrot.lane.b32.xlu0 %v4630, 96
        %v4821 = vpop.permute.xlu0 %4820
        %4822 = vrot.lane.b32.xlu0 %v4631, 96
        %v4823 = vpop.permute.xlu0 %4822
        %v4832 = vsel %vm272, %v4568, %v4649
        %v4833 = vsel %vm272, %v4569, %v4651
        %v4834 = vsel %vm272, %v4570, %v4653
        %v4835 = vsel %vm272, %v4571, %v4655
        %v4836 = vsel %vm272, %v4572, %v4657
        %v4837 = vsel %vm272, %v4573, %v4659
        %v4838 = vsel %vm272, %v4574, %v4661
        %v4839 = vsel %vm272, %v4575, %v4663
        %v4840 = vsel %vm633, %v4832, %v4681
        %v4841 = vsel %vm633, %v4833, %v4683
        %v4842 = vsel %vm633, %v4834, %v4685
        %v4843 = vsel %vm633, %v4835, %v4687
        %v4844 = vsel %vm633, %v4836, %v4689
        %v4845 = vsel %vm633, %v4837, %v4691
        %v4846 = vsel %vm633, %v4838, %v4693
        %v4847 = vsel %vm633, %v4839, %v4695
        %v4848 = vsel %vm651, %v4840, %v4713
        %v4849 = vsel %vm651, %v4841, %v4715
        %v4850 = vsel %vm651, %v4842, %v4717
        %v4851 = vsel %vm651, %v4843, %v4719
        %v4852 = vsel %vm651, %v4844, %v4721
        %v4853 = vsel %vm651, %v4845, %v4723
        %v4854 = vsel %vm651, %v4846, %v4725
        %v4855 = vsel %vm651, %v4847, %v4727
        %v4856 = vsel %vm272, %v4600, %v4745
        %v4857 = vsel %vm272, %v4601, %v4747
        %v4858 = vsel %vm272, %v4602, %v4749
        %v4859 = vsel %vm272, %v4603, %v4751
        %v4860 = vsel %vm272, %v4604, %v4753
        %v4861 = vsel %vm272, %v4605, %v4755
        %v4862 = vsel %vm272, %v4606, %v4757
        %v4863 = vsel %vm272, %v4607, %v4759
        %v4864 = vsel %vm633, %v4856, %v4777
        %v4865 = vsel %vm633, %v4857, %v4779
        %v4866 = vsel %vm633, %v4858, %v4781
        %v4867 = vsel %vm633, %v4859, %v4783
        %v4868 = vsel %vm633, %v4860, %v4785
        %v4869 = vsel %vm633, %v4861, %v4787
        %v4870 = vsel %vm633, %v4862, %v4789
        %v4871 = vsel %vm633, %v4863, %v4791
        %v4872 = vsel %vm651, %v4864, %v4809
        %v4873 = vsel %vm651, %v4865, %v4811
        %v4874 = vsel %vm651, %v4866, %v4813
        %v4875 = vsel %vm651, %v4867, %v4815
        %v4876 = vsel %vm651, %v4868, %v4817
        %v4877 = vsel %vm651, %v4869, %v4819
        %v4878 = vsel %vm651, %v4870, %v4821
        %v4879 = vsel %vm651, %v4871, %v4823
        %s4880 = scalar_lea.vmem %s3, 864
        %v4881 = vld [vmem:[%s4880] sm:$0xff]
        %v4882 = vld [vmem:[%s4880 + $0x8] sm:$0xff]
        %v4883 = vld [vmem:[%s4880 + $0x10] sm:$0xff]
        %v4884 = vld [vmem:[%s4880 + $0x18] sm:$0xff]
        %v4885 = vld [vmem:[%s4880 + $0x20] sm:$0xff]
        %v4886 = vld [vmem:[%s4880 + $0x28] sm:$0xff]
        %v4887 = vld [vmem:[%s4880 + $0x30] sm:$0xff]
        %v4888 = vld [vmem:[%s4880 + $0x38] sm:$0xff]
        %v4889 = vld [vmem:[%s4880 + $0x40] sm:$0xff]
        %v4890 = vld [vmem:[%s4880 + $0x48] sm:$0xff]
        %v4891 = vld [vmem:[%s4880 + $0x50] sm:$0xff]
        %v4892 = vld [vmem:[%s4880 + $0x58] sm:$0xff]
        %v4893 = vld [vmem:[%s4880 + $0x60] sm:$0xff]
        %v4894 = vld [vmem:[%s4880 + $0x68] sm:$0xff]
        %v4895 = vld [vmem:[%s4880 + $0x70] sm:$0xff]
        %v4896 = vld [vmem:[%s4880 + $0x78] sm:$0xff]
        %v4897 = vld [vmem:[%s4880 + $0x80] sm:$0xff]
        %v4898 = vld [vmem:[%s4880 + $0x88] sm:$0xff]
        %v4899 = vld [vmem:[%s4880 + $0x90] sm:$0xff]
        %v4900 = vld [vmem:[%s4880 + $0x98] sm:$0xff]
        %v4901 = vld [vmem:[%s4880 + $0xa0] sm:$0xff]
        %v4902 = vld [vmem:[%s4880 + $0xa8] sm:$0xff]
        %v4903 = vld [vmem:[%s4880 + $0xb0] sm:$0xff]
        %v4904 = vld [vmem:[%s4880 + $0xb8] sm:$0xff]
        %v4905 = vld [vmem:[%s4880 + $0xc0] sm:$0xff]
        %v4906 = vld [vmem:[%s4880 + $0xc8] sm:$0xff]
        %v4907 = vld [vmem:[%s4880 + $0xd0] sm:$0xff]
        %v4908 = vld [vmem:[%s4880 + $0xd8] sm:$0xff]
        %v4909 = vld [vmem:[%s4880 + $0xe0] sm:$0xff]
        %v4910 = vld [vmem:[%s4880 + $0xe8] sm:$0xff]
        %v4911 = vld [vmem:[%s4880 + $0xf0] sm:$0xff]
        %v4912 = vld [vmem:[%s4880 + $0xf8] sm:$0xff]
        %v4913 = vld [vmem:[%s4880 + $0x100] sm:$0xff]
        %v4914 = vld [vmem:[%s4880 + $0x108] sm:$0xff]
        %v4915 = vld [vmem:[%s4880 + $0x110] sm:$0xff]
        %v4916 = vld [vmem:[%s4880 + $0x118] sm:$0xff]
        %v4918 = vsel %vm272, %v4632, 0
        %v4921 = vsel %vm272, %v4633, 0
        %v4924 = vsel %vm272, %v4634, 0
        %v4927 = vsel %vm272, %v4635, 0
        %v4930 = vsel %vm272, %v4636, 0
        %v4933 = vsel %vm272, %v4637, 0
        %v4936 = vsel %vm272, %v4638, 0
        %v4939 = vsel %vm272, %v4639, 0
        %4941 = vmatprep.subr.mxu0 0.0
        %4942 = vmatpush1.msra.mxu0 %v4881
        %4943 = vmatprep.subr.mxu0 0.0
        %4944 = vmatpush1.msra.mxu0 %v4882
        %4945 = vmatprep.subr.mxu0 0.0
        %4946 = vmatpush1.msra.mxu0 %v4883
        %4947 = vmatprep.subr.mxu0 0.0
        %4948 = vmatpush1.msra.mxu0 %v4884
        %4949 = vmatprep.subr.mxu0 0.0
        %4950 = vmatpush1.msra.mxu0 %v4885
        %4951 = vmatprep.subr.mxu0 0.0
        %4952 = vmatpush1.msra.mxu0 %v4886
        %4953 = vmatprep.subr.mxu0 0.0
        %4954 = vmatpush1.msra.mxu0 %v4887
        %4955 = vmatprep.subr.mxu0 0.0
        %4956 = vmatpush1.msra.mxu0 %v4888
        %4957 = vmatprep.subr.mxu0 0.0
        %4958 = vmatpush1.msra.mxu0 %v4889
        %4959 = vmatprep.subr.mxu0 0.0
        %4960 = vmatpush1.msra.mxu0 %v4890
        %4961 = vmatprep.subr.mxu0 0.0
        %4962 = vmatpush1.msra.mxu0 %v4891
        %4963 = vmatprep.subr.mxu0 0.0
        %4964 = vmatpush1.msra.mxu0 %v4892
        %4965 = vmatprep.subr.mxu0 0.0
        %4966 = vmatpush1.msra.mxu0 %v4893
        %4967 = vmatprep.subr.mxu0 0.0
        %4968 = vmatpush1.msra.mxu0 %v4894
        %4969 = vmatprep.subr.mxu0 0.0
        %4970 = vmatpush1.msra.mxu0 %v4895
        %4971 = vmatprep.subr.mxu0 0.0
        %4972 = vmatpush1.msra.mxu0 %v4896
        %4973 = vmatprep.subr.mxu0 0.0
        %4974 = vmatpush1.msra.mxu0 %v4897
        %4975 = vmatprep.subr.mxu0 0.0
        %4976 = vmatpush1.msra.mxu0 %v4898
        %4977 = vmatprep.subr.mxu0 0.0
        %4978 = vmatpush1.msra.mxu0 %v4899
        %4979 = vmatprep.subr.mxu0 0.0
        %4980 = vmatpush1.msra.mxu0 %v4900
        %4981 = vmatprep.subr.mxu0 0.0
        %4982 = vmatpush1.msra.mxu0 %v4901
        %4983 = vmatprep.subr.mxu0 0.0
        %4984 = vmatpush1.msra.mxu0 %v4902
        %4985 = vmatprep.subr.mxu0 0.0
        %4986 = vmatpush1.msra.mxu0 %v4903
        %4987 = vmatprep.subr.mxu0 0.0
        %4988 = vmatpush1.msra.mxu0 %v4904
        %4989 = vmatprep.subr.mxu0 0.0
        %4990 = vmatpush1.msra.mxu0 %v4905
        %4991 = vmatprep.subr.mxu0 0.0
        %4992 = vmatpush1.msra.mxu0 %v4906
        %4993 = vmatprep.subr.mxu0 0.0
        %4994 = vmatpush1.msra.mxu0 %v4907
        %4995 = vmatprep.subr.mxu0 0.0
        %4996 = vmatpush1.msra.mxu0 %v4908
        %4997 = vmatprep.subr.mxu0 0.0
        %4998 = vmatpush1.msra.mxu0 %v4909
        %4999 = vmatprep.subr.mxu0 0.0
        %5000 = vmatpush1.msra.mxu0 %v4910
        %5001 = vmatprep.subr.mxu0 0.0
        %5002 = vmatpush1.msra.mxu0 %v4911
        %5003 = vmatprep.subr.mxu0 0.0
        %5004 = vmatpush1.msra.mxu0 %v4912
        %5005 = vmatprep.mubr.f32.mxu0 %v4872
        %5006 = vmatmul.mubr.f32.gmra.mrb[0].mxu0 %v4848
        %v5007 = vpop.f32.mrb[0].mxu0
        %v5008 = vadd.f32 0.0, %v5007
        %v5009 = vpop.f32.mrb[0].mxu0
        %5010 = vmatprep.mubr.f32.mxu0 %v4873
        %5011 = vmatmul.mubr.f32.gmra.mrb[0].mxu0 %v4849
        %v5012 = vpop.f32.mrb[0].mxu0
        %v5013 = vadd.f32 0.0, %v5012
        %v5014 = vpop.f32.mrb[0].mxu0
        %5015 = vmatprep.mubr.f32.mxu0 %v4874
        %5016 = vmatmul.mubr.f32.gmra.mrb[0].mxu0 %v4850
        %v5017 = vpop.f32.mrb[0].mxu0
        %v5018 = vadd.f32 0.0, %v5017
        %v5019 = vpop.f32.mrb[0].mxu0
        %5020 = vmatprep.mubr.f32.mxu0 %v4875
        %5021 = vmatmul.mubr.f32.gmra.mrb[0].mxu0 %v4851
        %v5022 = vpop.f32.mrb[0].mxu0
        %v5023 = vadd.f32 0.0, %v5022
        %v5024 = vpop.f32.mrb[0].mxu0
        %5025 = vmatprep.mubr.f32.mxu0 %v4876
        %5026 = vmatmul.mubr.f32.gmra.mrb[0].mxu0 %v4852
        %v5027 = vpop.f32.mrb[0].mxu0
        %v5028 = vadd.f32 0.0, %v5027
        %v5029 = vpop.f32.mrb[0].mxu0
        %5030 = vmatprep.mubr.f32.mxu0 %v4877
        %5031 = vmatmul.mubr.f32.gmra.mrb[0].mxu0 %v4853
        %v5032 = vpop.f32.mrb[0].mxu0
        %v5033 = vadd.f32 0.0, %v5032
        %v5034 = vpop.f32.mrb[0].mxu0
        %5035 = vmatprep.mubr.f32.mxu0 %v4878
        %5036 = vmatmul.mubr.f32.gmra.mrb[0].mxu0 %v4854
        %v5037 = vpop.f32.mrb[0].mxu0
        %v5038 = vadd.f32 0.0, %v5037
        %v5039 = vpop.f32.mrb[0].mxu0
        %5040 = vmatprep.mubr.f32.mxu0 %v4879
        %5041 = vmatmul.mubr.f32.gmra.mrb[0].mxu0 %v4855
        %v5042 = vpop.f32.mrb[0].mxu0
        %v5043 = vadd.f32 0.0, %v5042
        %v5044 = vpop.f32.mrb[0].mxu0
        %5045 = vdwg.mxu0
        %5046 = vmatprep.subr.mxu0 0.0
        %5047 = vmatpush1.msra.mxu0 %v4913
        %5048 = vmatprep.subr.mxu0 0.0
        %5049 = vmatpush1.msra.mxu0 %v4914
        %5050 = vmatprep.subr.mxu0 0.0
        %5051 = vmatpush1.msra.mxu0 %v4915
        %5052 = vmatprep.subr.mxu0 0.0
        %5053 = vmatpush1.msra.mxu0 %v4916
        %5054 = vmatprep.subr.mxu0 0.0
        %5055 = vmatpush1.msra.mxu0 0.0
        %5056 = vmatprep.subr.mxu0 0.0
        %5057 = vmatpush1.msra.mxu0 0.0
        %5058 = vmatprep.subr.mxu0 0.0
        %5059 = vmatpush1.msra.mxu0 0.0
        %5060 = vmatprep.subr.mxu0 0.0
        %5061 = vmatpush1.msra.mxu0 0.0
        %5062 = vmatprep.subr.mxu0 0.0
        %5063 = vmatpush1.msra.mxu0 0.0
        %5064 = vmatprep.subr.mxu0 0.0
        %5065 = vmatpush1.msra.mxu0 0.0
        %5066 = vmatprep.subr.mxu0 0.0
        %5067 = vmatpush1.msra.mxu0 0.0
        %5068 = vmatprep.subr.mxu0 0.0
        %5069 = vmatpush1.msra.mxu0 0.0
        %5070 = vmatprep.subr.mxu0 0.0
        %5071 = vmatpush1.msra.mxu0 0.0
        %5072 = vmatprep.subr.mxu0 0.0
        %5073 = vmatpush1.msra.mxu0 0.0
        %5074 = vmatprep.subr.mxu0 0.0
        %5075 = vmatpush1.msra.mxu0 0.0
        %5076 = vmatprep.subr.mxu0 0.0
        %5077 = vmatpush1.msra.mxu0 0.0
        %5078 = vmatprep.subr.mxu0 0.0
        %5079 = vmatpush1.msra.mxu0 0.0
        %5080 = vmatprep.subr.mxu0 0.0
        %5081 = vmatpush1.msra.mxu0 0.0
        %5082 = vmatprep.subr.mxu0 0.0
        %5083 = vmatpush1.msra.mxu0 0.0
        %5084 = vmatprep.subr.mxu0 0.0
        %5085 = vmatpush1.msra.mxu0 0.0
        %5086 = vmatprep.subr.mxu0 0.0
        %5087 = vmatpush1.msra.mxu0 0.0
        %5088 = vmatprep.subr.mxu0 0.0
        %5089 = vmatpush1.msra.mxu0 0.0
        %5090 = vmatprep.subr.mxu0 0.0
        %5091 = vmatpush1.msra.mxu0 0.0
        %5092 = vmatprep.subr.mxu0 0.0
        %5093 = vmatpush1.msra.mxu0 0.0
        %5094 = vmatprep.subr.mxu0 0.0
        %5095 = vmatpush1.msra.mxu0 0.0
        %5096 = vmatprep.subr.mxu0 0.0
        %5097 = vmatpush1.msra.mxu0 0.0
        %5098 = vmatprep.subr.mxu0 0.0
        %5099 = vmatpush1.msra.mxu0 0.0
        %5100 = vmatprep.subr.mxu0 0.0
        %5101 = vmatpush1.msra.mxu0 0.0
        %5102 = vmatprep.subr.mxu0 0.0
        %5103 = vmatpush1.msra.mxu0 0.0
        %5104 = vmatprep.subr.mxu0 0.0
        %5105 = vmatpush1.msra.mxu0 0.0
        %5106 = vmatprep.subr.mxu0 0.0
        %5107 = vmatpush1.msra.mxu0 0.0
        %5108 = vmatprep.subr.mxu0 0.0
        %5109 = vmatpush1.msra.mxu0 0.0
        %5110 = vmatprep.mubr.f32.mxu0 0.0
        %5111 = vmatmul.mubr.f32.gmra.mrb[0].mxu0 %v4918
        %v5112 = vpop.f32.mrb[0].mxu0
        %v5113 = vadd.f32 %v5008, %v5112
        %v5114 = vpop.f32.mrb[0].mxu0
        %5115 = vmatprep.mubr.f32.mxu0 0.0
        %5116 = vmatmul.mubr.f32.gmra.mrb[0].mxu0 %v4921
        %v5117 = vpop.f32.mrb[0].mxu0
        %v5118 = vadd.f32 %v5013, %v5117
        %v5119 = vpop.f32.mrb[0].mxu0
        %5120 = vmatprep.mubr.f32.mxu0 0.0
        %5121 = vmatmul.mubr.f32.gmra.mrb[0].mxu0 %v4924
        %v5122 = vpop.f32.mrb[0].mxu0
        %v5123 = vadd.f32 %v5018, %v5122
        %v5124 = vpop.f32.mrb[0].mxu0
        %5125 = vmatprep.mubr.f32.mxu0 0.0
        %5126 = vmatmul.mubr.f32.gmra.mrb[0].mxu0 %v4927
        %v5127 = vpop.f32.mrb[0].mxu0
        %v5128 = vadd.f32 %v5023, %v5127
        %v5129 = vpop.f32.mrb[0].mxu0
        %5130 = vmatprep.mubr.f32.mxu0 0.0
        %5131 = vmatmul.mubr.f32.gmra.mrb[0].mxu0 %v4930
        %v5132 = vpop.f32.mrb[0].mxu0
        %v5133 = vadd.f32 %v5028, %v5132
        %v5134 = vpop.f32.mrb[0].mxu0
        %5135 = vmatprep.mubr.f32.mxu0 0.0
        %5136 = vmatmul.mubr.f32.gmra.mrb[0].mxu0 %v4933
        %v5137 = vpop.f32.mrb[0].mxu0
        %v5138 = vadd.f32 %v5033, %v5137
        %v5139 = vpop.f32.mrb[0].mxu0
        %5140 = vmatprep.mubr.f32.mxu0 0.0
        %5141 = vmatmul.mubr.f32.gmra.mrb[0].mxu0 %v4936
        %v5142 = vpop.f32.mrb[0].mxu0
        %v5143 = vadd.f32 %v5038, %v5142
        %v5144 = vpop.f32.mrb[0].mxu0
        %5145 = vmatprep.mubr.f32.mxu0 0.0
        %5146 = vmatmul.mubr.f32.gmra.mrb[0].mxu0 %v4939
        %v5147 = vpop.f32.mrb[0].mxu0
        %v5148 = vadd.f32 %v5043, %v5147
        %v5149 = vpop.f32.mrb[0].mxu0
        %5150 = vdwg.mxu0
        %s5151 = scalar_lea.vmem %s4, 6
        %v5152 = vld [vmem:[%s5151] sm:$0x3]
        %v5153 = vlaneseq
        %v5154 = vshrl.u32 %v5153, 7
        %v5155 = vsub.s32 0, %v5154
        %v5156 = vrot.slane %v5152, %v5155
        %v5157 = vmul.f32 %v5113, %v5156
        %v5158 = vmul.f32 %v5118, %v5156
        %v5159 = vmul.f32 %v5123, %v5156
        %v5160 = vmul.f32 %v5128, %v5156
        %v5161 = vmul.f32 %v5133, %v5156
        %v5162 = vmul.f32 %v5138, %v5156
        %v5163 = vmul.f32 %v5143, %v5156
        %v5164 = vmul.f32 %v5148, %v5156
        %v5165 = vlaneseq
        %v5166 = vshrl.u32 %v5165, 7
        %v5167 = vsub.s32 1, %v5166
        %v5168 = vrot.slane %v5152, %v5167
        %v5169 = vadd.f32 %v5157, %v5168
        %v5170 = vadd.f32 %v5158, %v5168
        %v5171 = vadd.f32 %v5159, %v5168
        %v5172 = vadd.f32 %v5160, %v5168
        %v5173 = vadd.f32 %v5161, %v5168
        %v5174 = vadd.f32 %v5162, %v5168
        %v5175 = vadd.f32 %v5163, %v5168
        %v5176 = vadd.f32 %v5164, %v5168
        %v5177 = vmax.f32 %v5169, 0.0
        %v5178 = vmax.f32 %v5170, 0.0
        %v5179 = vmax.f32 %v5171, 0.0
        %v5180 = vmax.f32 %v5172, 0.0
        %v5181 = vmax.f32 %v5173, 0.0
        %v5182 = vmax.f32 %v5174, 0.0
        %v5183 = vmax.f32 %v5175, 0.0
        %v5184 = vmax.f32 %v5176, 0.0
        %5193 = vrot.lane.b32.xlu0 %v5177, 96
        %v5194 = vpop.permute.xlu0 %5193
        %5195 = vrot.lane.b32.xlu0 %v5178, 96
        %v5196 = vpop.permute.xlu0 %5195
        %5197 = vrot.lane.b32.xlu0 %v5179, 96
        %v5198 = vpop.permute.xlu0 %5197
        %5199 = vrot.lane.b32.xlu0 %v5180, 96
        %v5200 = vpop.permute.xlu0 %5199
        %5201 = vrot.lane.b32.xlu0 %v5181, 96
        %v5202 = vpop.permute.xlu0 %5201
        %5203 = vrot.lane.b32.xlu0 %v5182, 96
        %v5204 = vpop.permute.xlu0 %5203
        %5205 = vrot.lane.b32.xlu0 %v5183, 96
        %v5206 = vpop.permute.xlu0 %5205
        %5207 = vrot.lane.b32.xlu0 %v5184, 96
        %v5208 = vpop.permute.xlu0 %5207
        %vm5217 = vcmask 1048320
        %5218 = vst.msk [vmem:[#allocation4] sm:$0xff] %vm5217, %v5194
        %5219 = vst.msk [vmem:[#allocation4 + $0x8] sm:$0xff] %vm5217, %v5196
        %5220 = vst.msk [vmem:[#allocation4 + $0x10] sm:$0xff] %vm5217, %v5198
        %5221 = vst.msk [vmem:[#allocation4 + $0x18] sm:$0xff] %vm5217, %v5200
        %5222 = vst.msk [vmem:[#allocation4 + $0x20] sm:$0xff] %vm5217, %v5202
        %5223 = vst.msk [vmem:[#allocation4 + $0x28] sm:$0xff] %vm5217, %v5204
        %5224 = vst.msk [vmem:[#allocation4 + $0x30] sm:$0xff] %vm5217, %v5206
        %5225 = vst.msk [vmem:[#allocation4 + $0x38] sm:$0xff] %vm5217, %v5208
        %v5226 = vld [vmem:[%s5] sm:$0xff]
        %v5227 = vld [vmem:[%s5 + $0x8] sm:$0xff]
        %v5228 = vld [vmem:[%s5 + $0x10] sm:$0xff]
        %v5229 = vld [vmem:[%s5 + $0x18] sm:$0xff]
        %v5230 = vld [vmem:[%s5 + $0x20] sm:$0xff]
        %v5231 = vld [vmem:[%s5 + $0x28] sm:$0xff]
        %v5232 = vld [vmem:[%s5 + $0x30] sm:$0xff]
        %v5233 = vld [vmem:[%s5 + $0x38] sm:$0xff]
        %v5234 = vld [vmem:[%s5 + $0x40] sm:$0xff]
        %v5235 = vld [vmem:[%s5 + $0x48] sm:$0xff]
        %v5236 = vld [vmem:[%s5 + $0x50] sm:$0xff]
        %v5237 = vld [vmem:[%s5 + $0x58] sm:$0xff]
        %v5238 = vld [vmem:[%s5 + $0x60] sm:$0xff]
        %v5239 = vld [vmem:[%s5 + $0x68] sm:$0xff]
        %v5240 = vld [vmem:[%s5 + $0x70] sm:$0xff]
        %v5241 = vld [vmem:[%s5 + $0x78] sm:$0xff]
        %v5242 = vld [vmem:[%s5 + $0x80] sm:$0xff]
        %v5243 = vld [vmem:[%s5 + $0x88] sm:$0xff]
        %v5244 = vld [vmem:[%s5 + $0x90] sm:$0xff]
        %v5245 = vld [vmem:[%s5 + $0x98] sm:$0xff]
        %v5246 = vld [vmem:[%s5 + $0xa0] sm:$0xff]
        %v5247 = vld [vmem:[%s5 + $0xa8] sm:$0xff]
        %v5248 = vld [vmem:[%s5 + $0xb0] sm:$0xff]
        %v5249 = vld [vmem:[%s5 + $0xb8] sm:$0xff]
        %v5250 = vld [vmem:[%s5 + $0xc0] sm:$0xff]
        %v5251 = vld [vmem:[%s5 + $0xc8] sm:$0xff]
        %v5252 = vld [vmem:[%s5 + $0xd0] sm:$0xff]
        %v5253 = vld [vmem:[%s5 + $0xd8] sm:$0xff]
        %v5254 = vld [vmem:[%s5 + $0xe0] sm:$0xff]
        %v5255 = vld [vmem:[%s5 + $0xe8] sm:$0xff]
        %v5256 = vld [vmem:[%s5 + $0xf0] sm:$0xff]
        %v5257 = vld [vmem:[%s5 + $0xf8] sm:$0xff]
        %v5258 = vld [vmem:[%s5 + $0x100] sm:$0xff]
        %v5259 = vld [vmem:[%s5 + $0x108] sm:$0xff]
        %v5260 = vld [vmem:[%s5 + $0x110] sm:$0xff]
        %v5261 = vld [vmem:[%s5 + $0x118] sm:$0xff]
        %v5262 = vld [vmem:[%s5 + $0x120] sm:$0xff]
        %v5263 = vld [vmem:[%s5 + $0x128] sm:$0xff]
        %v5264 = vld [vmem:[%s5 + $0x130] sm:$0xff]
        %v5265 = vld [vmem:[%s5 + $0x138] sm:$0xff]
        %v5266 = vld [vmem:[%s5 + $0x140] sm:$0xff]
        %v5267 = vld [vmem:[%s5 + $0x148] sm:$0xff]
        %v5268 = vld [vmem:[%s5 + $0x150] sm:$0xff]
        %v5269 = vld [vmem:[%s5 + $0x158] sm:$0xff]
        %v5270 = vld [vmem:[%s5 + $0x160] sm:$0xff]
        %v5271 = vld [vmem:[%s5 + $0x168] sm:$0xff]
        %v5272 = vld [vmem:[%s5 + $0x170] sm:$0xff]
        %v5273 = vld [vmem:[%s5 + $0x178] sm:$0xff]
        %v5274 = vld [vmem:[%s5 + $0x180] sm:$0xff]
        %v5275 = vld [vmem:[%s5 + $0x188] sm:$0xff]
        %v5276 = vld [vmem:[%s5 + $0x190] sm:$0xff]
        %v5277 = vld [vmem:[%s5 + $0x198] sm:$0xff]
        %v5278 = vld [vmem:[%s5 + $0x1a0] sm:$0xff]
        %v5279 = vld [vmem:[%s5 + $0x1a8] sm:$0xff]
        %v5280 = vld [vmem:[%s5 + $0x1b0] sm:$0xff]
        %v5281 = vld [vmem:[%s5 + $0x1b8] sm:$0xff]
        %v5282 = vld [vmem:[%s5 + $0x1c0] sm:$0xff]
        %v5283 = vld [vmem:[%s5 + $0x1c8] sm:$0xff]
        %v5284 = vld [vmem:[%s5 + $0x1d0] sm:$0xff]
        %v5285 = vld [vmem:[%s5 + $0x1d8] sm:$0xff]
        %v5286 = vld [vmem:[%s5 + $0x1e0] sm:$0xff]
        %v5287 = vld [vmem:[%s5 + $0x1e8] sm:$0xff]
        %v5288 = vld [vmem:[%s5 + $0x1f0] sm:$0xff]
        %v5289 = vld [vmem:[%s5 + $0x1f8] sm:$0xff]
        %v5290 = vld [vmem:[%s5 + $0x200] sm:$0xff]
        %v5291 = vld [vmem:[%s5 + $0x208] sm:$0xff]
        %v5292 = vld [vmem:[%s5 + $0x210] sm:$0xff]
        %v5293 = vld [vmem:[%s5 + $0x218] sm:$0xff]
        %v5294 = vld [vmem:[%s5 + $0x220] sm:$0xff]
        %v5295 = vld [vmem:[%s5 + $0x228] sm:$0xff]
        %v5296 = vld [vmem:[%s5 + $0x230] sm:$0xff]
        %v5297 = vld [vmem:[%s5 + $0x238] sm:$0xff]
        %v5298 = vld [vmem:[%s5 + $0x240] sm:$0xff]
        %v5299 = vld [vmem:[%s5 + $0x248] sm:$0xff]
        %v5300 = vld [vmem:[%s5 + $0x250] sm:$0xff]
        %v5301 = vld [vmem:[%s5 + $0x258] sm:$0xff]
        %v5302 = vld [vmem:[%s5 + $0x260] sm:$0xff]
        %v5303 = vld [vmem:[%s5 + $0x268] sm:$0xff]
        %v5304 = vld [vmem:[%s5 + $0x270] sm:$0xff]
        %v5305 = vld [vmem:[%s5 + $0x278] sm:$0xff]
        %v5306 = vld [vmem:[%s5 + $0x280] sm:$0xff]
        %v5307 = vld [vmem:[%s5 + $0x288] sm:$0xff]
        %v5308 = vld [vmem:[%s5 + $0x290] sm:$0xff]
        %v5309 = vld [vmem:[%s5 + $0x298] sm:$0xff]
        %v5310 = vld [vmem:[%s5 + $0x2a0] sm:$0xff]
        %v5311 = vld [vmem:[%s5 + $0x2a8] sm:$0xff]
        %v5312 = vld [vmem:[%s5 + $0x2b0] sm:$0xff]
        %v5313 = vld [vmem:[%s5 + $0x2b8] sm:$0xff]
        %v5314 = vld [vmem:[%s5 + $0x2c0] sm:$0xff]
        %v5315 = vld [vmem:[%s5 + $0x2c8] sm:$0xff]
        %v5316 = vld [vmem:[%s5 + $0x2d0] sm:$0xff]
        %v5317 = vld [vmem:[%s5 + $0x2d8] sm:$0xff]
        %v5318 = vld [vmem:[%s5 + $0x2e0] sm:$0xff]
        %v5319 = vld [vmem:[%s5 + $0x2e8] sm:$0xff]
        %v5320 = vld [vmem:[%s5 + $0x2f0] sm:$0xff]
        %v5321 = vld [vmem:[%s5 + $0x2f8] sm:$0xff]
        %v5322 = vld [vmem:[%s5 + $0x300] sm:$0xff]
        %v5323 = vld [vmem:[%s5 + $0x308] sm:$0xff]
        %v5324 = vld [vmem:[%s5 + $0x310] sm:$0xff]
        %v5325 = vld [vmem:[%s5 + $0x318] sm:$0xff]
        %v5326 = vld [vmem:[%s5 + $0x320] sm:$0xff]
        %v5327 = vld [vmem:[%s5 + $0x328] sm:$0xff]
        %v5328 = vld [vmem:[%s5 + $0x330] sm:$0xff]
        %v5329 = vld [vmem:[%s5 + $0x338] sm:$0xff]
        %v5330 = vld [vmem:[%s5 + $0x340] sm:$0xff]
        %v5331 = vld [vmem:[%s5 + $0x348] sm:$0xff]
        %v5332 = vld [vmem:[%s5 + $0x350] sm:$0xff]
        %v5333 = vld [vmem:[%s5 + $0x358] sm:$0xff]
        %v5334 = vld [vmem:[%s5 + $0x360] sm:$0xff]
        %v5335 = vld [vmem:[%s5 + $0x368] sm:$0xff]
        %v5336 = vld [vmem:[%s5 + $0x370] sm:$0xff]
        %v5337 = vld [vmem:[%s5 + $0x378] sm:$0xff]
        %v5338 = vld [vmem:[%s5 + $0x380] sm:$0xff]
        %v5339 = vld [vmem:[%s5 + $0x388] sm:$0xff]
        %v5340 = vld [vmem:[%s5 + $0x390] sm:$0xff]
        %v5341 = vld [vmem:[%s5 + $0x398] sm:$0xff]
        %v5342 = vld [vmem:[%s5 + $0x3a0] sm:$0xff]
        %v5343 = vld [vmem:[%s5 + $0x3a8] sm:$0xff]
        %v5344 = vld [vmem:[%s5 + $0x3b0] sm:$0xff]
        %v5345 = vld [vmem:[%s5 + $0x3b8] sm:$0xff]
        %v5346 = vld [vmem:[%s5 + $0x3c0] sm:$0xff]
        %v5347 = vld [vmem:[%s5 + $0x3c8] sm:$0xff]
        %v5348 = vld [vmem:[%s5 + $0x3d0] sm:$0xff]
        %v5349 = vld [vmem:[%s5 + $0x3d8] sm:$0xff]
        %v5350 = vld [vmem:[%s5 + $0x3e0] sm:$0xff]
        %v5351 = vld [vmem:[%s5 + $0x3e8] sm:$0xff]
        %v5352 = vld [vmem:[%s5 + $0x3f0] sm:$0xff]
        %v5353 = vld [vmem:[%s5 + $0x3f8] sm:$0xff]
        %v5354 = vld [vmem:[#allocation4] sm:$0xff]
        %v5355 = vld [vmem:[#allocation4 + $0x8] sm:$0xff]
        %v5356 = vld [vmem:[#allocation4 + $0x10] sm:$0xff]
        %v5357 = vld [vmem:[#allocation4 + $0x18] sm:$0xff]
        %v5358 = vld [vmem:[#allocation4 + $0x20] sm:$0xff]
        %v5359 = vld [vmem:[#allocation4 + $0x28] sm:$0xff]
        %v5360 = vld [vmem:[#allocation4 + $0x30] sm:$0xff]
        %v5361 = vld [vmem:[#allocation4 + $0x38] sm:$0xff]
        %v5363 = vsel %vm633, %v5226, 0
        %v5366 = vsel %vm633, %v5227, 0
        %v5369 = vsel %vm633, %v5228, 0
        %v5372 = vsel %vm633, %v5229, 0
        %v5375 = vsel %vm633, %v5230, 0
        %v5378 = vsel %vm633, %v5231, 0
        %v5381 = vsel %vm633, %v5232, 0
        %v5384 = vsel %vm633, %v5233, 0
        %v5387 = vsel %vm633, %v5234, 0
        %v5390 = vsel %vm633, %v5235, 0
        %v5393 = vsel %vm633, %v5236, 0
        %v5396 = vsel %vm633, %v5237, 0
        %v5399 = vsel %vm633, %v5238, 0
        %v5402 = vsel %vm633, %v5239, 0
        %v5405 = vsel %vm633, %v5240, 0
        %v5408 = vsel %vm633, %v5241, 0
        %v5411 = vsel %vm633, %v5242, 0
        %v5414 = vsel %vm633, %v5243, 0
        %v5417 = vsel %vm633, %v5244, 0
        %v5420 = vsel %vm633, %v5245, 0
        %v5423 = vsel %vm633, %v5246, 0
        %v5426 = vsel %vm633, %v5247, 0
        %v5429 = vsel %vm633, %v5248, 0
        %v5432 = vsel %vm633, %v5249, 0
        %v5435 = vsel %vm633, %v5250, 0
        %v5438 = vsel %vm633, %v5251, 0
        %v5441 = vsel %vm633, %v5252, 0
        %v5444 = vsel %vm633, %v5253, 0
        %v5447 = vsel %vm633, %v5254, 0
        %v5450 = vsel %vm633, %v5255, 0
        %v5453 = vsel %vm633, %v5256, 0
        %v5456 = vsel %vm633, %v5257, 0
        %v5459 = vsel %vm633, %v5258, 0
        %v5462 = vsel %vm633, %v5259, 0
        %v5465 = vsel %vm633, %v5260, 0
        %v5468 = vsel %vm633, %v5261, 0
        %v5471 = vsel %vm633, %v5262, 0
        %v5474 = vsel %vm633, %v5263, 0
        %v5477 = vsel %vm633, %v5264, 0
        %v5480 = vsel %vm633, %v5265, 0
        %v5483 = vsel %vm633, %v5266, 0
        %v5486 = vsel %vm633, %v5267, 0
        %v5489 = vsel %vm633, %v5268, 0
        %v5492 = vsel %vm633, %v5269, 0
        %v5495 = vsel %vm633, %v5270, 0
        %v5498 = vsel %vm633, %v5271, 0
        %v5501 = vsel %vm633, %v5272, 0
        %v5504 = vsel %vm633, %v5273, 0
        %v5507 = vsel %vm633, %v5274, 0
        %v5510 = vsel %vm633, %v5275, 0
        %v5513 = vsel %vm633, %v5276, 0
        %v5516 = vsel %vm633, %v5277, 0
        %v5519 = vsel %vm633, %v5278, 0
        %v5522 = vsel %vm633, %v5279, 0
        %v5525 = vsel %vm633, %v5280, 0
        %v5528 = vsel %vm633, %v5281, 0
        %v5531 = vsel %vm633, %v5282, 0
        %v5534 = vsel %vm633, %v5283, 0
        %v5537 = vsel %vm633, %v5284, 0
        %v5540 = vsel %vm633, %v5285, 0
        %v5543 = vsel %vm633, %v5286, 0
        %v5546 = vsel %vm633, %v5287, 0
        %v5549 = vsel %vm633, %v5288, 0
        %v5552 = vsel %vm633, %v5289, 0
        %v5555 = vsel %vm633, %v5290, 0
        %v5558 = vsel %vm633, %v5291, 0
        %v5561 = vsel %vm633, %v5292, 0
        %v5564 = vsel %vm633, %v5293, 0
        %v5567 = vsel %vm633, %v5294, 0
        %v5570 = vsel %vm633, %v5295, 0
        %v5573 = vsel %vm633, %v5296, 0
        %v5576 = vsel %vm633, %v5297, 0
        %v5579 = vsel %vm633, %v5298, 0
        %v5582 = vsel %vm633, %v5299, 0
        %v5585 = vsel %vm633, %v5300, 0
        %v5588 = vsel %vm633, %v5301, 0
        %v5591 = vsel %vm633, %v5302, 0
        %v5594 = vsel %vm633, %v5303, 0
        %v5597 = vsel %vm633, %v5304, 0
        %v5600 = vsel %vm633, %v5305, 0
        %v5603 = vsel %vm633, %v5306, 0
        %v5606 = vsel %vm633, %v5307, 0
        %v5609 = vsel %vm633, %v5308, 0
        %v5612 = vsel %vm633, %v5309, 0
        %v5615 = vsel %vm633, %v5310, 0
        %v5618 = vsel %vm633, %v5311, 0
        %v5621 = vsel %vm633, %v5312, 0
        %v5624 = vsel %vm633, %v5313, 0
        %v5627 = vsel %vm633, %v5314, 0
        %v5630 = vsel %vm633, %v5315, 0
        %v5633 = vsel %vm633, %v5316, 0
        %v5636 = vsel %vm633, %v5317, 0
        %v5639 = vsel %vm633, %v5318, 0
        %v5642 = vsel %vm633, %v5319, 0
        %v5645 = vsel %vm633, %v5320, 0
        %v5648 = vsel %vm633, %v5321, 0
        %v5651 = vsel %vm633, %v5322, 0
        %v5654 = vsel %vm633, %v5323, 0
        %v5657 = vsel %vm633, %v5324, 0
        %v5660 = vsel %vm633, %v5325, 0
        %v5663 = vsel %vm633, %v5326, 0
        %v5666 = vsel %vm633, %v5327, 0
        %v5669 = vsel %vm633, %v5328, 0
        %v5672 = vsel %vm633, %v5329, 0
        %v5675 = vsel %vm633, %v5330, 0
        %v5678 = vsel %vm633, %v5331, 0
        %v5681 = vsel %vm633, %v5332, 0
        %v5684 = vsel %vm633, %v5333, 0
        %v5687 = vsel %vm633, %v5334, 0
        %v5690 = vsel %vm633, %v5335, 0
        %v5693 = vsel %vm633, %v5336, 0
        %v5696 = vsel %vm633, %v5337, 0
        %v5699 = vsel %vm633, %v5338, 0
        %v5702 = vsel %vm633, %v5339, 0
        %v5705 = vsel %vm633, %v5340, 0
        %v5708 = vsel %vm633, %v5341, 0
        %v5711 = vsel %vm633, %v5342, 0
        %v5714 = vsel %vm633, %v5343, 0
        %v5717 = vsel %vm633, %v5344, 0
        %v5720 = vsel %vm633, %v5345, 0
        %v5723 = vsel %vm633, %v5346, 0
        %v5726 = vsel %vm633, %v5347, 0
        %v5729 = vsel %vm633, %v5348, 0
        %v5732 = vsel %vm633, %v5349, 0
        %v5735 = vsel %vm633, %v5350, 0
        %v5738 = vsel %vm633, %v5351, 0
        %v5741 = vsel %vm633, %v5352, 0
        %v5744 = vsel %vm633, %v5353, 0
        %5746 = vmatprep.subr.mxu0 0.0
        %5747 = vmatpush1.msra.mxu0 %v5354
        %5748 = vmatprep.subr.mxu0 0.0
        %5749 = vmatpush1.msra.mxu0 %v5355
        %5750 = vmatprep.subr.mxu0 0.0
        %5751 = vmatpush1.msra.mxu0 %v5356
        %5752 = vmatprep.subr.mxu0 0.0
        %5753 = vmatpush1.msra.mxu0 %v5357
        %5754 = vmatprep.subr.mxu0 0.0
        %5755 = vmatpush1.msra.mxu0 %v5358
        %5756 = vmatprep.subr.mxu0 0.0
        %5757 = vmatpush1.msra.mxu0 %v5359
        %5758 = vmatprep.subr.mxu0 0.0
        %5759 = vmatpush1.msra.mxu0 %v5360
        %5760 = vmatprep.subr.mxu0 0.0
        %5761 = vmatpush1.msra.mxu0 %v5361
        %5762 = vmatprep.subr.mxu0 0.0
        %5763 = vmatpush1.msra.mxu0 0.0
        %5764 = vmatprep.subr.mxu0 0.0
        %5765 = vmatpush1.msra.mxu0 0.0
        %5766 = vmatprep.subr.mxu0 0.0
        %5767 = vmatpush1.msra.mxu0 0.0
        %5768 = vmatprep.subr.mxu0 0.0
        %5769 = vmatpush1.msra.mxu0 0.0
        %5770 = vmatprep.subr.mxu0 0.0
        %5771 = vmatpush1.msra.mxu0 0.0
        %5772 = vmatprep.subr.mxu0 0.0
        %5773 = vmatpush1.msra.mxu0 0.0
        %5774 = vmatprep.subr.mxu0 0.0
        %5775 = vmatpush1.msra.mxu0 0.0
        %5776 = vmatprep.subr.mxu0 0.0
        %5777 = vmatpush1.msra.mxu0 0.0
        %5778 = vmatprep.subr.mxu0 0.0
        %5779 = vmatpush1.msra.mxu0 0.0
        %5780 = vmatprep.subr.mxu0 0.0
        %5781 = vmatpush1.msra.mxu0 0.0
        %5782 = vmatprep.subr.mxu0 0.0
        %5783 = vmatpush1.msra.mxu0 0.0
        %5784 = vmatprep.subr.mxu0 0.0
        %5785 = vmatpush1.msra.mxu0 0.0
        %5786 = vmatprep.subr.mxu0 0.0
        %5787 = vmatpush1.msra.mxu0 0.0
        %5788 = vmatprep.subr.mxu0 0.0
        %5789 = vmatpush1.msra.mxu0 0.0
        %5790 = vmatprep.subr.mxu0 0.0
        %5791 = vmatpush1.msra.mxu0 0.0
        %5792 = vmatprep.subr.mxu0 0.0
        %5793 = vmatpush1.msra.mxu0 0.0
        %5794 = vmatprep.subr.mxu0 0.0
        %5795 = vmatpush1.msra.mxu0 0.0
        %5796 = vmatprep.subr.mxu0 0.0
        %5797 = vmatpush1.msra.mxu0 0.0
        %5798 = vmatprep.subr.mxu0 0.0
        %5799 = vmatpush1.msra.mxu0 0.0
        %5800 = vmatprep.subr.mxu0 0.0
        %5801 = vmatpush1.msra.mxu0 0.0
        %5802 = vmatprep.subr.mxu0 0.0
        %5803 = vmatpush1.msra.mxu0 0.0
        %5804 = vmatprep.subr.mxu0 0.0
        %5805 = vmatpush1.msra.mxu0 0.0
        %5806 = vmatprep.subr.mxu0 0.0
        %5807 = vmatpush1.msra.mxu0 0.0
        %5808 = vmatprep.subr.mxu0 0.0
        %5809 = vmatpush1.msra.mxu0 0.0
        %5810 = vmatprep.mubr.f32.mxu0 0.0
        %5811 = vmatmul.mubr.f32.gmra.mrb[0].mxu0 %v5363
        %v5812 = vpop.f32.mrb[0].mxu0
        %v5813 = vadd.f32 0.0, %v5812
        %v5814 = vpop.f32.mrb[0].mxu0
        %5815 = vmatprep.mubr.f32.mxu0 0.0
        %5816 = vmatmul.mubr.f32.gmra.mrb[0].mxu0 %v5366
        %v5817 = vpop.f32.mrb[0].mxu0
        %v5818 = vadd.f32 0.0, %v5817
        %v5819 = vpop.f32.mrb[0].mxu0
        %5820 = vmatprep.mubr.f32.mxu0 0.0
        %5821 = vmatmul.mubr.f32.gmra.mrb[0].mxu0 %v5369
        %v5822 = vpop.f32.mrb[0].mxu0
        %v5823 = vadd.f32 0.0, %v5822
        %v5824 = vpop.f32.mrb[0].mxu0
        %5825 = vmatprep.mubr.f32.mxu0 0.0
        %5826 = vmatmul.mubr.f32.gmra.mrb[0].mxu0 %v5372
        %v5827 = vpop.f32.mrb[0].mxu0
        %v5828 = vadd.f32 0.0, %v5827
        %v5829 = vpop.f32.mrb[0].mxu0
        %5830 = vmatprep.mubr.f32.mxu0 0.0
        %5831 = vmatmul.mubr.f32.gmra.mrb[0].mxu0 %v5375
        %v5832 = vpop.f32.mrb[0].mxu0
        %v5833 = vadd.f32 0.0, %v5832
        %v5834 = vpop.f32.mrb[0].mxu0
        %5835 = vmatprep.mubr.f32.mxu0 0.0
        %5836 = vmatmul.mubr.f32.gmra.mrb[0].mxu0 %v5378
        %v5837 = vpop.f32.mrb[0].mxu0
        %v5838 = vadd.f32 0.0, %v5837
        %v5839 = vpop.f32.mrb[0].mxu0
        %5840 = vmatprep.mubr.f32.mxu0 0.0
        %5841 = vmatmul.mubr.f32.gmra.mrb[0].mxu0 %v5381
        %v5842 = vpop.f32.mrb[0].mxu0
        %v5843 = vadd.f32 0.0, %v5842
        %v5844 = vpop.f32.mrb[0].mxu0
        %5845 = vmatprep.mubr.f32.mxu0 0.0
        %5846 = vmatmul.mubr.f32.gmra.mrb[0].mxu0 %v5384
        %v5847 = vpop.f32.mrb[0].mxu0
        %v5848 = vadd.f32 0.0, %v5847
        %v5849 = vpop.f32.mrb[0].mxu0
        %5850 = vmatprep.mubr.f32.mxu0 0.0
        %5851 = vmatmul.mubr.f32.gmra.mrb[0].mxu0 %v5387
        %v5852 = vpop.f32.mrb[0].mxu0
        %v5853 = vadd.f32 0.0, %v5852
        %v5854 = vpop.f32.mrb[0].mxu0
        %5855 = vmatprep.mubr.f32.mxu0 0.0
        %5856 = vmatmul.mubr.f32.gmra.mrb[0].mxu0 %v5390
        %v5857 = vpop.f32.mrb[0].mxu0
        %v5858 = vadd.f32 0.0, %v5857
        %v5859 = vpop.f32.mrb[0].mxu0
        %5860 = vmatprep.mubr.f32.mxu0 0.0
        %5861 = vmatmul.mubr.f32.gmra.mrb[0].mxu0 %v5393
        %v5862 = vpop.f32.mrb[0].mxu0
        %v5863 = vadd.f32 0.0, %v5862
        %v5864 = vpop.f32.mrb[0].mxu0
        %5865 = vmatprep.mubr.f32.mxu0 0.0
        %5866 = vmatmul.mubr.f32.gmra.mrb[0].mxu0 %v5396
        %v5867 = vpop.f32.mrb[0].mxu0
        %v5868 = vadd.f32 0.0, %v5867
        %v5869 = vpop.f32.mrb[0].mxu0
        %5870 = vmatprep.mubr.f32.mxu0 0.0
        %5871 = vmatmul.mubr.f32.gmra.mrb[0].mxu0 %v5399
        %v5872 = vpop.f32.mrb[0].mxu0
        %v5873 = vadd.f32 0.0, %v5872
        %v5874 = vpop.f32.mrb[0].mxu0
        %5875 = vmatprep.mubr.f32.mxu0 0.0
        %5876 = vmatmul.mubr.f32.gmra.mrb[0].mxu0 %v5402
        %v5877 = vpop.f32.mrb[0].mxu0
        %v5878 = vadd.f32 0.0, %v5877
        %v5879 = vpop.f32.mrb[0].mxu0
        %5880 = vmatprep.mubr.f32.mxu0 0.0
        %5881 = vmatmul.mubr.f32.gmra.mrb[0].mxu0 %v5405
        %v5882 = vpop.f32.mrb[0].mxu0
        %v5883 = vadd.f32 0.0, %v5882
        %v5884 = vpop.f32.mrb[0].mxu0
        %5885 = vmatprep.mubr.f32.mxu0 0.0
        %5886 = vmatmul.mubr.f32.gmra.mrb[0].mxu0 %v5408
        %v5887 = vpop.f32.mrb[0].mxu0
        %v5888 = vadd.f32 0.0, %v5887
        %v5889 = vpop.f32.mrb[0].mxu0
        %5890 = vmatprep.mubr.f32.mxu0 0.0
        %5891 = vmatmul.mubr.f32.gmra.mrb[0].mxu0 %v5411
        %v5892 = vpop.f32.mrb[0].mxu0
        %v5893 = vadd.f32 0.0, %v5892
        %v5894 = vpop.f32.mrb[0].mxu0
        %5895 = vmatprep.mubr.f32.mxu0 0.0
        %5896 = vmatmul.mubr.f32.gmra.mrb[0].mxu0 %v5414
        %v5897 = vpop.f32.mrb[0].mxu0
        %v5898 = vadd.f32 0.0, %v5897
        %v5899 = vpop.f32.mrb[0].mxu0
        %5900 = vmatprep.mubr.f32.mxu0 0.0
        %5901 = vmatmul.mubr.f32.gmra.mrb[0].mxu0 %v5417
        %v5902 = vpop.f32.mrb[0].mxu0
        %v5903 = vadd.f32 0.0, %v5902
        %v5904 = vpop.f32.mrb[0].mxu0
        %5905 = vmatprep.mubr.f32.mxu0 0.0
        %5906 = vmatmul.mubr.f32.gmra.mrb[0].mxu0 %v5420
        %v5907 = vpop.f32.mrb[0].mxu0
        %v5908 = vadd.f32 0.0, %v5907
        %v5909 = vpop.f32.mrb[0].mxu0
        %5910 = vmatprep.mubr.f32.mxu0 0.0
        %5911 = vmatmul.mubr.f32.gmra.mrb[0].mxu0 %v5423
        %v5912 = vpop.f32.mrb[0].mxu0
        %v5913 = vadd.f32 0.0, %v5912
        %v5914 = vpop.f32.mrb[0].mxu0
        %5915 = vmatprep.mubr.f32.mxu0 0.0
        %5916 = vmatmul.mubr.f32.gmra.mrb[0].mxu0 %v5426
        %v5917 = vpop.f32.mrb[0].mxu0
        %v5918 = vadd.f32 0.0, %v5917
        %v5919 = vpop.f32.mrb[0].mxu0
        %5920 = vmatprep.mubr.f32.mxu0 0.0
        %5921 = vmatmul.mubr.f32.gmra.mrb[0].mxu0 %v5429
        %v5922 = vpop.f32.mrb[0].mxu0
        %v5923 = vadd.f32 0.0, %v5922
        %v5924 = vpop.f32.mrb[0].mxu0
        %5925 = vmatprep.mubr.f32.mxu0 0.0
        %5926 = vmatmul.mubr.f32.gmra.mrb[0].mxu0 %v5432
        %v5927 = vpop.f32.mrb[0].mxu0
        %v5928 = vadd.f32 0.0, %v5927
        %v5929 = vpop.f32.mrb[0].mxu0
        %5930 = vmatprep.mubr.f32.mxu0 0.0
        %5931 = vmatmul.mubr.f32.gmra.mrb[0].mxu0 %v5435
        %v5932 = vpop.f32.mrb[0].mxu0
        %v5933 = vadd.f32 0.0, %v5932
        %v5934 = vpop.f32.mrb[0].mxu0
        %5935 = vmatprep.mubr.f32.mxu0 0.0
        %5936 = vmatmul.mubr.f32.gmra.mrb[0].mxu0 %v5438
        %v5937 = vpop.f32.mrb[0].mxu0
        %v5938 = vadd.f32 0.0, %v5937
        %v5939 = vpop.f32.mrb[0].mxu0
        %5940 = vmatprep.mubr.f32.mxu0 0.0
        %5941 = vmatmul.mubr.f32.gmra.mrb[0].mxu0 %v5441
        %v5942 = vpop.f32.mrb[0].mxu0
        %v5943 = vadd.f32 0.0, %v5942
        %v5944 = vpop.f32.mrb[0].mxu0
        %5945 = vmatprep.mubr.f32.mxu0 0.0
        %5946 = vmatmul.mubr.f32.gmra.mrb[0].mxu0 %v5444
        %v5947 = vpop.f32.mrb[0].mxu0
        %v5948 = vadd.f32 0.0, %v5947
        %v5949 = vpop.f32.mrb[0].mxu0
        %5950 = vmatprep.mubr.f32.mxu0 0.0
        %5951 = vmatmul.mubr.f32.gmra.mrb[0].mxu0 %v5447
        %v5952 = vpop.f32.mrb[0].mxu0
        %v5953 = vadd.f32 0.0, %v5952
        %v5954 = vpop.f32.mrb[0].mxu0
        %5955 = vmatprep.mubr.f32.mxu0 0.0
        %5956 = vmatmul.mubr.f32.gmra.mrb[0].mxu0 %v5450
        %v5957 = vpop.f32.mrb[0].mxu0
        %v5958 = vadd.f32 0.0, %v5957
        %v5959 = vpop.f32.mrb[0].mxu0
        %5960 = vmatprep.mubr.f32.mxu0 0.0
        %5961 = vmatmul.mubr.f32.gmra.mrb[0].mxu0 %v5453
        %v5962 = vpop.f32.mrb[0].mxu0
        %v5963 = vadd.f32 0.0, %v5962
        %v5964 = vpop.f32.mrb[0].mxu0
        %5965 = vmatprep.mubr.f32.mxu0 0.0
        %5966 = vmatmul.mubr.f32.gmra.mrb[0].mxu0 %v5456
        %v5967 = vpop.f32.mrb[0].mxu0
        %v5968 = vadd.f32 0.0, %v5967
        %v5969 = vpop.f32.mrb[0].mxu0
        %5970 = vmatprep.mubr.f32.mxu0 0.0
        %5971 = vmatmul.mubr.f32.gmra.mrb[0].mxu0 %v5459
        %v5972 = vpop.f32.mrb[0].mxu0
        %v5973 = vadd.f32 0.0, %v5972
        %v5974 = vpop.f32.mrb[0].mxu0
        %5975 = vmatprep.mubr.f32.mxu0 0.0
        %5976 = vmatmul.mubr.f32.gmra.mrb[0].mxu0 %v5462
        %v5977 = vpop.f32.mrb[0].mxu0
        %v5978 = vadd.f32 0.0, %v5977
        %v5979 = vpop.f32.mrb[0].mxu0
        %5980 = vmatprep.mubr.f32.mxu0 0.0
        %5981 = vmatmul.mubr.f32.gmra.mrb[0].mxu0 %v5465
        %v5982 = vpop.f32.mrb[0].mxu0
        %v5983 = vadd.f32 0.0, %v5982
        %v5984 = vpop.f32.mrb[0].mxu0
        %5985 = vmatprep.mubr.f32.mxu0 0.0
        %5986 = vmatmul.mubr.f32.gmra.mrb[0].mxu0 %v5468
        %v5987 = vpop.f32.mrb[0].mxu0
        %v5988 = vadd.f32 0.0, %v5987
        %v5989 = vpop.f32.mrb[0].mxu0
        %5990 = vmatprep.mubr.f32.mxu0 0.0
        %5991 = vmatmul.mubr.f32.gmra.mrb[0].mxu0 %v5471
        %v5992 = vpop.f32.mrb[0].mxu0
        %v5993 = vadd.f32 0.0, %v5992
        %v5994 = vpop.f32.mrb[0].mxu0
        %5995 = vmatprep.mubr.f32.mxu0 0.0
        %5996 = vmatmul.mubr.f32.gmra.mrb[0].mxu0 %v5474
        %v5997 = vpop.f32.mrb[0].mxu0
        %v5998 = vadd.f32 0.0, %v5997
        %v5999 = vpop.f32.mrb[0].mxu0
        %6000 = vmatprep.mubr.f32.mxu0 0.0
        %6001 = vmatmul.mubr.f32.gmra.mrb[0].mxu0 %v5477
        %v6002 = vpop.f32.mrb[0].mxu0
        %v6003 = vadd.f32 0.0, %v6002
        %v6004 = vpop.f32.mrb[0].mxu0
        %6005 = vmatprep.mubr.f32.mxu0 0.0
        %6006 = vmatmul.mubr.f32.gmra.mrb[0].mxu0 %v5480
        %v6007 = vpop.f32.mrb[0].mxu0
        %v6008 = vadd.f32 0.0, %v6007
        %v6009 = vpop.f32.mrb[0].mxu0
        %6010 = vmatprep.mubr.f32.mxu0 0.0
        %6011 = vmatmul.mubr.f32.gmra.mrb[0].mxu0 %v5483
        %v6012 = vpop.f32.mrb[0].mxu0
        %v6013 = vadd.f32 0.0, %v6012
        %v6014 = vpop.f32.mrb[0].mxu0
        %6015 = vmatprep.mubr.f32.mxu0 0.0
        %6016 = vmatmul.mubr.f32.gmra.mrb[0].mxu0 %v5486
        %v6017 = vpop.f32.mrb[0].mxu0
        %v6018 = vadd.f32 0.0, %v6017
        %v6019 = vpop.f32.mrb[0].mxu0
        %6020 = vmatprep.mubr.f32.mxu0 0.0
        %6021 = vmatmul.mubr.f32.gmra.mrb[0].mxu0 %v5489
        %v6022 = vpop.f32.mrb[0].mxu0
        %v6023 = vadd.f32 0.0, %v6022
        %v6024 = vpop.f32.mrb[0].mxu0
        %6025 = vmatprep.mubr.f32.mxu0 0.0
        %6026 = vmatmul.mubr.f32.gmra.mrb[0].mxu0 %v5492
        %v6027 = vpop.f32.mrb[0].mxu0
        %v6028 = vadd.f32 0.0, %v6027
        %v6029 = vpop.f32.mrb[0].mxu0
        %6030 = vmatprep.mubr.f32.mxu0 0.0
        %6031 = vmatmul.mubr.f32.gmra.mrb[0].mxu0 %v5495
        %v6032 = vpop.f32.mrb[0].mxu0
        %v6033 = vadd.f32 0.0, %v6032
        %v6034 = vpop.f32.mrb[0].mxu0
        %6035 = vmatprep.mubr.f32.mxu0 0.0
        %6036 = vmatmul.mubr.f32.gmra.mrb[0].mxu0 %v5498
        %v6037 = vpop.f32.mrb[0].mxu0
        %v6038 = vadd.f32 0.0, %v6037
        %v6039 = vpop.f32.mrb[0].mxu0
        %6040 = vmatprep.mubr.f32.mxu0 0.0
        %6041 = vmatmul.mubr.f32.gmra.mrb[0].mxu0 %v5501
        %v6042 = vpop.f32.mrb[0].mxu0
        %v6043 = vadd.f32 0.0, %v6042
        %v6044 = vpop.f32.mrb[0].mxu0
        %6045 = vmatprep.mubr.f32.mxu0 0.0
        %6046 = vmatmul.mubr.f32.gmra.mrb[0].mxu0 %v5504
        %v6047 = vpop.f32.mrb[0].mxu0
        %v6048 = vadd.f32 0.0, %v6047
        %v6049 = vpop.f32.mrb[0].mxu0
        %6050 = vmatprep.mubr.f32.mxu0 0.0
        %6051 = vmatmul.mubr.f32.gmra.mrb[0].mxu0 %v5507
        %v6052 = vpop.f32.mrb[0].mxu0
        %v6053 = vadd.f32 0.0, %v6052
        %v6054 = vpop.f32.mrb[0].mxu0
        %6055 = vmatprep.mubr.f32.mxu0 0.0
        %6056 = vmatmul.mubr.f32.gmra.mrb[0].mxu0 %v5510
        %v6057 = vpop.f32.mrb[0].mxu0
        %v6058 = vadd.f32 0.0, %v6057
        %v6059 = vpop.f32.mrb[0].mxu0
        %6060 = vmatprep.mubr.f32.mxu0 0.0
        %6061 = vmatmul.mubr.f32.gmra.mrb[0].mxu0 %v5513
        %v6062 = vpop.f32.mrb[0].mxu0
        %v6063 = vadd.f32 0.0, %v6062
        %v6064 = vpop.f32.mrb[0].mxu0
        %6065 = vmatprep.mubr.f32.mxu0 0.0
        %6066 = vmatmul.mubr.f32.gmra.mrb[0].mxu0 %v5516
        %v6067 = vpop.f32.mrb[0].mxu0
        %v6068 = vadd.f32 0.0, %v6067
        %v6069 = vpop.f32.mrb[0].mxu0
        %6070 = vmatprep.mubr.f32.mxu0 0.0
        %6071 = vmatmul.mubr.f32.gmra.mrb[0].mxu0 %v5519
        %v6072 = vpop.f32.mrb[0].mxu0
        %v6073 = vadd.f32 0.0, %v6072
        %v6074 = vpop.f32.mrb[0].mxu0
        %6075 = vmatprep.mubr.f32.mxu0 0.0
        %6076 = vmatmul.mubr.f32.gmra.mrb[0].mxu0 %v5522
        %v6077 = vpop.f32.mrb[0].mxu0
        %v6078 = vadd.f32 0.0, %v6077
        %v6079 = vpop.f32.mrb[0].mxu0
        %6080 = vmatprep.mubr.f32.mxu0 0.0
        %6081 = vmatmul.mubr.f32.gmra.mrb[0].mxu0 %v5525
        %v6082 = vpop.f32.mrb[0].mxu0
        %v6083 = vadd.f32 0.0, %v6082
        %v6084 = vpop.f32.mrb[0].mxu0
        %6085 = vmatprep.mubr.f32.mxu0 0.0
        %6086 = vmatmul.mubr.f32.gmra.mrb[0].mxu0 %v5528
        %v6087 = vpop.f32.mrb[0].mxu0
        %v6088 = vadd.f32 0.0, %v6087
        %v6089 = vpop.f32.mrb[0].mxu0
        %6090 = vmatprep.mubr.f32.mxu0 0.0
        %6091 = vmatmul.mubr.f32.gmra.mrb[0].mxu0 %v5531
        %v6092 = vpop.f32.mrb[0].mxu0
        %v6093 = vadd.f32 0.0, %v6092
        %v6094 = vpop.f32.mrb[0].mxu0
        %6095 = vmatprep.mubr.f32.mxu0 0.0
        %6096 = vmatmul.mubr.f32.gmra.mrb[0].mxu0 %v5534
        %v6097 = vpop.f32.mrb[0].mxu0
        %v6098 = vadd.f32 0.0, %v6097
        %v6099 = vpop.f32.mrb[0].mxu0
        %6100 = vmatprep.mubr.f32.mxu0 0.0
        %6101 = vmatmul.mubr.f32.gmra.mrb[0].mxu0 %v5537
        %v6102 = vpop.f32.mrb[0].mxu0
        %v6103 = vadd.f32 0.0, %v6102
        %v6104 = vpop.f32.mrb[0].mxu0
        %6105 = vmatprep.mubr.f32.mxu0 0.0
        %6106 = vmatmul.mubr.f32.gmra.mrb[0].mxu0 %v5540
        %v6107 = vpop.f32.mrb[0].mxu0
        %v6108 = vadd.f32 0.0, %v6107
        %v6109 = vpop.f32.mrb[0].mxu0
        %6110 = vmatprep.mubr.f32.mxu0 0.0
        %6111 = vmatmul.mubr.f32.gmra.mrb[0].mxu0 %v5543
        %v6112 = vpop.f32.mrb[0].mxu0
        %v6113 = vadd.f32 0.0, %v6112
        %v6114 = vpop.f32.mrb[0].mxu0
        %6115 = vmatprep.mubr.f32.mxu0 0.0
        %6116 = vmatmul.mubr.f32.gmra.mrb[0].mxu0 %v5546
        %v6117 = vpop.f32.mrb[0].mxu0
        %v6118 = vadd.f32 0.0, %v6117
        %v6119 = vpop.f32.mrb[0].mxu0
        %6120 = vmatprep.mubr.f32.mxu0 0.0
        %6121 = vmatmul.mubr.f32.gmra.mrb[0].mxu0 %v5549
        %v6122 = vpop.f32.mrb[0].mxu0
        %v6123 = vadd.f32 0.0, %v6122
        %v6124 = vpop.f32.mrb[0].mxu0
        %6125 = vmatprep.mubr.f32.mxu0 0.0
        %6126 = vmatmul.mubr.f32.gmra.mrb[0].mxu0 %v5552
        %v6127 = vpop.f32.mrb[0].mxu0
        %v6128 = vadd.f32 0.0, %v6127
        %v6129 = vpop.f32.mrb[0].mxu0
        %6130 = vmatprep.mubr.f32.mxu0 0.0
        %6131 = vmatmul.mubr.f32.gmra.mrb[0].mxu0 %v5555
        %v6132 = vpop.f32.mrb[0].mxu0
        %v6133 = vadd.f32 0.0, %v6132
        %v6134 = vpop.f32.mrb[0].mxu0
        %6135 = vmatprep.mubr.f32.mxu0 0.0
        %6136 = vmatmul.mubr.f32.gmra.mrb[0].mxu0 %v5558
        %v6137 = vpop.f32.mrb[0].mxu0
        %v6138 = vadd.f32 0.0, %v6137
        %v6139 = vpop.f32.mrb[0].mxu0
        %6140 = vmatprep.mubr.f32.mxu0 0.0
        %6141 = vmatmul.mubr.f32.gmra.mrb[0].mxu0 %v5561
        %v6142 = vpop.f32.mrb[0].mxu0
        %v6143 = vadd.f32 0.0, %v6142
        %v6144 = vpop.f32.mrb[0].mxu0
        %6145 = vmatprep.mubr.f32.mxu0 0.0
        %6146 = vmatmul.mubr.f32.gmra.mrb[0].mxu0 %v5564
        %v6147 = vpop.f32.mrb[0].mxu0
        %v6148 = vadd.f32 0.0, %v6147
        %v6149 = vpop.f32.mrb[0].mxu0
        %6150 = vmatprep.mubr.f32.mxu0 0.0
        %6151 = vmatmul.mubr.f32.gmra.mrb[0].mxu0 %v5567
        %v6152 = vpop.f32.mrb[0].mxu0
        %v6153 = vadd.f32 0.0, %v6152
        %v6154 = vpop.f32.mrb[0].mxu0
        %6155 = vmatprep.mubr.f32.mxu0 0.0
        %6156 = vmatmul.mubr.f32.gmra.mrb[0].mxu0 %v5570
        %v6157 = vpop.f32.mrb[0].mxu0
        %v6158 = vadd.f32 0.0, %v6157
        %v6159 = vpop.f32.mrb[0].mxu0
        %6160 = vmatprep.mubr.f32.mxu0 0.0
        %6161 = vmatmul.mubr.f32.gmra.mrb[0].mxu0 %v5573
        %v6162 = vpop.f32.mrb[0].mxu0
        %v6163 = vadd.f32 0.0, %v6162
        %v6164 = vpop.f32.mrb[0].mxu0
        %6165 = vmatprep.mubr.f32.mxu0 0.0
        %6166 = vmatmul.mubr.f32.gmra.mrb[0].mxu0 %v5576
        %v6167 = vpop.f32.mrb[0].mxu0
        %v6168 = vadd.f32 0.0, %v6167
        %v6169 = vpop.f32.mrb[0].mxu0
        %6170 = vmatprep.mubr.f32.mxu0 0.0
        %6171 = vmatmul.mubr.f32.gmra.mrb[0].mxu0 %v5579
        %v6172 = vpop.f32.mrb[0].mxu0
        %v6173 = vadd.f32 0.0, %v6172
        %v6174 = vpop.f32.mrb[0].mxu0
        %6175 = vmatprep.mubr.f32.mxu0 0.0
        %6176 = vmatmul.mubr.f32.gmra.mrb[0].mxu0 %v5582
        %v6177 = vpop.f32.mrb[0].mxu0
        %v6178 = vadd.f32 0.0, %v6177
        %v6179 = vpop.f32.mrb[0].mxu0
        %6180 = vmatprep.mubr.f32.mxu0 0.0
        %6181 = vmatmul.mubr.f32.gmra.mrb[0].mxu0 %v5585
        %v6182 = vpop.f32.mrb[0].mxu0
        %v6183 = vadd.f32 0.0, %v6182
        %v6184 = vpop.f32.mrb[0].mxu0
        %6185 = vmatprep.mubr.f32.mxu0 0.0
        %6186 = vmatmul.mubr.f32.gmra.mrb[0].mxu0 %v5588
        %v6187 = vpop.f32.mrb[0].mxu0
        %v6188 = vadd.f32 0.0, %v6187
        %v6189 = vpop.f32.mrb[0].mxu0
        %6190 = vmatprep.mubr.f32.mxu0 0.0
        %6191 = vmatmul.mubr.f32.gmra.mrb[0].mxu0 %v5591
        %v6192 = vpop.f32.mrb[0].mxu0
        %v6193 = vadd.f32 0.0, %v6192
        %v6194 = vpop.f32.mrb[0].mxu0
        %6195 = vmatprep.mubr.f32.mxu0 0.0
        %6196 = vmatmul.mubr.f32.gmra.mrb[0].mxu0 %v5594
        %v6197 = vpop.f32.mrb[0].mxu0
        %v6198 = vadd.f32 0.0, %v6197
        %v6199 = vpop.f32.mrb[0].mxu0
        %6200 = vmatprep.mubr.f32.mxu0 0.0
        %6201 = vmatmul.mubr.f32.gmra.mrb[0].mxu0 %v5597
        %v6202 = vpop.f32.mrb[0].mxu0
        %v6203 = vadd.f32 0.0, %v6202
        %v6204 = vpop.f32.mrb[0].mxu0
        %6205 = vmatprep.mubr.f32.mxu0 0.0
        %6206 = vmatmul.mubr.f32.gmra.mrb[0].mxu0 %v5600
        %v6207 = vpop.f32.mrb[0].mxu0
        %v6208 = vadd.f32 0.0, %v6207
        %v6209 = vpop.f32.mrb[0].mxu0
        %6210 = vmatprep.mubr.f32.mxu0 0.0
        %6211 = vmatmul.mubr.f32.gmra.mrb[0].mxu0 %v5603
        %v6212 = vpop.f32.mrb[0].mxu0
        %v6213 = vadd.f32 0.0, %v6212
        %v6214 = vpop.f32.mrb[0].mxu0
        %6215 = vmatprep.mubr.f32.mxu0 0.0
        %6216 = vmatmul.mubr.f32.gmra.mrb[0].mxu0 %v5606
        %v6217 = vpop.f32.mrb[0].mxu0
        %v6218 = vadd.f32 0.0, %v6217
        %v6219 = vpop.f32.mrb[0].mxu0
        %6220 = vmatprep.mubr.f32.mxu0 0.0
        %6221 = vmatmul.mubr.f32.gmra.mrb[0].mxu0 %v5609
        %v6222 = vpop.f32.mrb[0].mxu0
        %v6223 = vadd.f32 0.0, %v6222
        %v6224 = vpop.f32.mrb[0].mxu0
        %6225 = vmatprep.mubr.f32.mxu0 0.0
        %6226 = vmatmul.mubr.f32.gmra.mrb[0].mxu0 %v5612
        %v6227 = vpop.f32.mrb[0].mxu0
        %v6228 = vadd.f32 0.0, %v6227
        %v6229 = vpop.f32.mrb[0].mxu0
        %6230 = vmatprep.mubr.f32.mxu0 0.0
        %6231 = vmatmul.mubr.f32.gmra.mrb[0].mxu0 %v5615
        %v6232 = vpop.f32.mrb[0].mxu0
        %v6233 = vadd.f32 0.0, %v6232
        %v6234 = vpop.f32.mrb[0].mxu0
        %6235 = vmatprep.mubr.f32.mxu0 0.0
        %6236 = vmatmul.mubr.f32.gmra.mrb[0].mxu0 %v5618
        %v6237 = vpop.f32.mrb[0].mxu0
        %v6238 = vadd.f32 0.0, %v6237
        %v6239 = vpop.f32.mrb[0].mxu0
        %6240 = vmatprep.mubr.f32.mxu0 0.0
        %6241 = vmatmul.mubr.f32.gmra.mrb[0].mxu0 %v5621
        %v6242 = vpop.f32.mrb[0].mxu0
        %v6243 = vadd.f32 0.0, %v6242
        %v6244 = vpop.f32.mrb[0].mxu0
        %6245 = vmatprep.mubr.f32.mxu0 0.0
        %6246 = vmatmul.mubr.f32.gmra.mrb[0].mxu0 %v5624
        %v6247 = vpop.f32.mrb[0].mxu0
        %v6248 = vadd.f32 0.0, %v6247
        %v6249 = vpop.f32.mrb[0].mxu0
        %6250 = vmatprep.mubr.f32.mxu0 0.0
        %6251 = vmatmul.mubr.f32.gmra.mrb[0].mxu0 %v5627
        %v6252 = vpop.f32.mrb[0].mxu0
        %v6253 = vadd.f32 0.0, %v6252
        %v6254 = vpop.f32.mrb[0].mxu0
        %6255 = vmatprep.mubr.f32.mxu0 0.0
        %6256 = vmatmul.mubr.f32.gmra.mrb[0].mxu0 %v5630
        %v6257 = vpop.f32.mrb[0].mxu0
        %v6258 = vadd.f32 0.0, %v6257
        %v6259 = vpop.f32.mrb[0].mxu0
        %6260 = vmatprep.mubr.f32.mxu0 0.0
        %6261 = vmatmul.mubr.f32.gmra.mrb[0].mxu0 %v5633
        %v6262 = vpop.f32.mrb[0].mxu0
        %v6263 = vadd.f32 0.0, %v6262
        %v6264 = vpop.f32.mrb[0].mxu0
        %6265 = vmatprep.mubr.f32.mxu0 0.0
        %6266 = vmatmul.mubr.f32.gmra.mrb[0].mxu0 %v5636
        %v6267 = vpop.f32.mrb[0].mxu0
        %v6268 = vadd.f32 0.0, %v6267
        %v6269 = vpop.f32.mrb[0].mxu0
        %6270 = vmatprep.mubr.f32.mxu0 0.0
        %6271 = vmatmul.mubr.f32.gmra.mrb[0].mxu0 %v5639
        %v6272 = vpop.f32.mrb[0].mxu0
        %v6273 = vadd.f32 0.0, %v6272
        %v6274 = vpop.f32.mrb[0].mxu0
        %6275 = vmatprep.mubr.f32.mxu0 0.0
        %6276 = vmatmul.mubr.f32.gmra.mrb[0].mxu0 %v5642
        %v6277 = vpop.f32.mrb[0].mxu0
        %v6278 = vadd.f32 0.0, %v6277
        %v6279 = vpop.f32.mrb[0].mxu0
        %6280 = vmatprep.mubr.f32.mxu0 0.0
        %6281 = vmatmul.mubr.f32.gmra.mrb[0].mxu0 %v5645
        %v6282 = vpop.f32.mrb[0].mxu0
        %v6283 = vadd.f32 0.0, %v6282
        %v6284 = vpop.f32.mrb[0].mxu0
        %6285 = vmatprep.mubr.f32.mxu0 0.0
        %6286 = vmatmul.mubr.f32.gmra.mrb[0].mxu0 %v5648
        %v6287 = vpop.f32.mrb[0].mxu0
        %v6288 = vadd.f32 0.0, %v6287
        %v6289 = vpop.f32.mrb[0].mxu0
        %6290 = vmatprep.mubr.f32.mxu0 0.0
        %6291 = vmatmul.mubr.f32.gmra.mrb[0].mxu0 %v5651
        %v6292 = vpop.f32.mrb[0].mxu0
        %v6293 = vadd.f32 0.0, %v6292
        %v6294 = vpop.f32.mrb[0].mxu0
        %6295 = vmatprep.mubr.f32.mxu0 0.0
        %6296 = vmatmul.mubr.f32.gmra.mrb[0].mxu0 %v5654
        %v6297 = vpop.f32.mrb[0].mxu0
        %v6298 = vadd.f32 0.0, %v6297
        %v6299 = vpop.f32.mrb[0].mxu0
        %6300 = vmatprep.mubr.f32.mxu0 0.0
        %6301 = vmatmul.mubr.f32.gmra.mrb[0].mxu0 %v5657
        %v6302 = vpop.f32.mrb[0].mxu0
        %v6303 = vadd.f32 0.0, %v6302
        %v6304 = vpop.f32.mrb[0].mxu0
        %6305 = vmatprep.mubr.f32.mxu0 0.0
        %6306 = vmatmul.mubr.f32.gmra.mrb[0].mxu0 %v5660
        %v6307 = vpop.f32.mrb[0].mxu0
        %v6308 = vadd.f32 0.0, %v6307
        %v6309 = vpop.f32.mrb[0].mxu0
        %6310 = vmatprep.mubr.f32.mxu0 0.0
        %6311 = vmatmul.mubr.f32.gmra.mrb[0].mxu0 %v5663
        %v6312 = vpop.f32.mrb[0].mxu0
        %v6313 = vadd.f32 0.0, %v6312
        %v6314 = vpop.f32.mrb[0].mxu0
        %6315 = vmatprep.mubr.f32.mxu0 0.0
        %6316 = vmatmul.mubr.f32.gmra.mrb[0].mxu0 %v5666
        %v6317 = vpop.f32.mrb[0].mxu0
        %v6318 = vadd.f32 0.0, %v6317
        %v6319 = vpop.f32.mrb[0].mxu0
        %6320 = vmatprep.mubr.f32.mxu0 0.0
        %6321 = vmatmul.mubr.f32.gmra.mrb[0].mxu0 %v5669
        %v6322 = vpop.f32.mrb[0].mxu0
        %v6323 = vadd.f32 0.0, %v6322
        %v6324 = vpop.f32.mrb[0].mxu0
        %6325 = vmatprep.mubr.f32.mxu0 0.0
        %6326 = vmatmul.mubr.f32.gmra.mrb[0].mxu0 %v5672
        %v6327 = vpop.f32.mrb[0].mxu0
        %v6328 = vadd.f32 0.0, %v6327
        %v6329 = vpop.f32.mrb[0].mxu0
        %6330 = vmatprep.mubr.f32.mxu0 0.0
        %6331 = vmatmul.mubr.f32.gmra.mrb[0].mxu0 %v5675
        %v6332 = vpop.f32.mrb[0].mxu0
        %v6333 = vadd.f32 0.0, %v6332
        %v6334 = vpop.f32.mrb[0].mxu0
        %6335 = vmatprep.mubr.f32.mxu0 0.0
        %6336 = vmatmul.mubr.f32.gmra.mrb[0].mxu0 %v5678
        %v6337 = vpop.f32.mrb[0].mxu0
        %v6338 = vadd.f32 0.0, %v6337
        %v6339 = vpop.f32.mrb[0].mxu0
        %6340 = vmatprep.mubr.f32.mxu0 0.0
        %6341 = vmatmul.mubr.f32.gmra.mrb[0].mxu0 %v5681
        %v6342 = vpop.f32.mrb[0].mxu0
        %v6343 = vadd.f32 0.0, %v6342
        %v6344 = vpop.f32.mrb[0].mxu0
        %6345 = vmatprep.mubr.f32.mxu0 0.0
        %6346 = vmatmul.mubr.f32.gmra.mrb[0].mxu0 %v5684
        %v6347 = vpop.f32.mrb[0].mxu0
        %v6348 = vadd.f32 0.0, %v6347
        %v6349 = vpop.f32.mrb[0].mxu0
        %6350 = vmatprep.mubr.f32.mxu0 0.0
        %6351 = vmatmul.mubr.f32.gmra.mrb[0].mxu0 %v5687
        %v6352 = vpop.f32.mrb[0].mxu0
        %v6353 = vadd.f32 0.0, %v6352
        %v6354 = vpop.f32.mrb[0].mxu0
        %6355 = vmatprep.mubr.f32.mxu0 0.0
        %6356 = vmatmul.mubr.f32.gmra.mrb[0].mxu0 %v5690
        %v6357 = vpop.f32.mrb[0].mxu0
        %v6358 = vadd.f32 0.0, %v6357
        %v6359 = vpop.f32.mrb[0].mxu0
        %6360 = vmatprep.mubr.f32.mxu0 0.0
        %6361 = vmatmul.mubr.f32.gmra.mrb[0].mxu0 %v5693
        %v6362 = vpop.f32.mrb[0].mxu0
        %v6363 = vadd.f32 0.0, %v6362
        %v6364 = vpop.f32.mrb[0].mxu0
        %6365 = vmatprep.mubr.f32.mxu0 0.0
        %6366 = vmatmul.mubr.f32.gmra.mrb[0].mxu0 %v5696
        %v6367 = vpop.f32.mrb[0].mxu0
        %v6368 = vadd.f32 0.0, %v6367
        %v6369 = vpop.f32.mrb[0].mxu0
        %6370 = vmatprep.mubr.f32.mxu0 0.0
        %6371 = vmatmul.mubr.f32.gmra.mrb[0].mxu0 %v5699
        %v6372 = vpop.f32.mrb[0].mxu0
        %v6373 = vadd.f32 0.0, %v6372
        %v6374 = vpop.f32.mrb[0].mxu0
        %6375 = vmatprep.mubr.f32.mxu0 0.0
        %6376 = vmatmul.mubr.f32.gmra.mrb[0].mxu0 %v5702
        %v6377 = vpop.f32.mrb[0].mxu0
        %v6378 = vadd.f32 0.0, %v6377
        %v6379 = vpop.f32.mrb[0].mxu0
        %6380 = vmatprep.mubr.f32.mxu0 0.0
        %6381 = vmatmul.mubr.f32.gmra.mrb[0].mxu0 %v5705
        %v6382 = vpop.f32.mrb[0].mxu0
        %v6383 = vadd.f32 0.0, %v6382
        %v6384 = vpop.f32.mrb[0].mxu0
        %6385 = vmatprep.mubr.f32.mxu0 0.0
        %6386 = vmatmul.mubr.f32.gmra.mrb[0].mxu0 %v5708
        %v6387 = vpop.f32.mrb[0].mxu0
        %v6388 = vadd.f32 0.0, %v6387
        %v6389 = vpop.f32.mrb[0].mxu0
        %6390 = vmatprep.mubr.f32.mxu0 0.0
        %6391 = vmatmul.mubr.f32.gmra.mrb[0].mxu0 %v5711
        %v6392 = vpop.f32.mrb[0].mxu0
        %v6393 = vadd.f32 0.0, %v6392
        %v6394 = vpop.f32.mrb[0].mxu0
        %6395 = vmatprep.mubr.f32.mxu0 0.0
        %6396 = vmatmul.mubr.f32.gmra.mrb[0].mxu0 %v5714
        %v6397 = vpop.f32.mrb[0].mxu0
        %v6398 = vadd.f32 0.0, %v6397
        %v6399 = vpop.f32.mrb[0].mxu0
        %6400 = vmatprep.mubr.f32.mxu0 0.0
        %6401 = vmatmul.mubr.f32.gmra.mrb[0].mxu0 %v5717
        %v6402 = vpop.f32.mrb[0].mxu0
        %v6403 = vadd.f32 0.0, %v6402
        %v6404 = vpop.f32.mrb[0].mxu0
        %6405 = vmatprep.mubr.f32.mxu0 0.0
        %6406 = vmatmul.mubr.f32.gmra.mrb[0].mxu0 %v5720
        %v6407 = vpop.f32.mrb[0].mxu0
        %v6408 = vadd.f32 0.0, %v6407
        %v6409 = vpop.f32.mrb[0].mxu0
        %6410 = vmatprep.mubr.f32.mxu0 0.0
        %6411 = vmatmul.mubr.f32.gmra.mrb[0].mxu0 %v5723
        %v6412 = vpop.f32.mrb[0].mxu0
        %v6413 = vadd.f32 0.0, %v6412
        %v6414 = vpop.f32.mrb[0].mxu0
        %6415 = vmatprep.mubr.f32.mxu0 0.0
        %6416 = vmatmul.mubr.f32.gmra.mrb[0].mxu0 %v5726
        %v6417 = vpop.f32.mrb[0].mxu0
        %v6418 = vadd.f32 0.0, %v6417
        %v6419 = vpop.f32.mrb[0].mxu0
        %6420 = vmatprep.mubr.f32.mxu0 0.0
        %6421 = vmatmul.mubr.f32.gmra.mrb[0].mxu0 %v5729
        %v6422 = vpop.f32.mrb[0].mxu0
        %v6423 = vadd.f32 0.0, %v6422
        %v6424 = vpop.f32.mrb[0].mxu0
        %6425 = vmatprep.mubr.f32.mxu0 0.0
        %6426 = vmatmul.mubr.f32.gmra.mrb[0].mxu0 %v5732
        %v6427 = vpop.f32.mrb[0].mxu0
        %v6428 = vadd.f32 0.0, %v6427
        %v6429 = vpop.f32.mrb[0].mxu0
        %6430 = vmatprep.mubr.f32.mxu0 0.0
        %6431 = vmatmul.mubr.f32.gmra.mrb[0].mxu0 %v5735
        %v6432 = vpop.f32.mrb[0].mxu0
        %v6433 = vadd.f32 0.0, %v6432
        %v6434 = vpop.f32.mrb[0].mxu0
        %6435 = vmatprep.mubr.f32.mxu0 0.0
        %6436 = vmatmul.mubr.f32.gmra.mrb[0].mxu0 %v5738
        %v6437 = vpop.f32.mrb[0].mxu0
        %v6438 = vadd.f32 0.0, %v6437
        %v6439 = vpop.f32.mrb[0].mxu0
        %6440 = vmatprep.mubr.f32.mxu0 0.0
        %6441 = vmatmul.mubr.f32.gmra.mrb[0].mxu0 %v5741
        %v6442 = vpop.f32.mrb[0].mxu0
        %v6443 = vadd.f32 0.0, %v6442
        %v6444 = vpop.f32.mrb[0].mxu0
        %6445 = vmatprep.mubr.f32.mxu0 0.0
        %6446 = vmatmul.mubr.f32.gmra.mrb[0].mxu0 %v5744
        %v6447 = vpop.f32.mrb[0].mxu0
        %v6448 = vadd.f32 0.0, %v6447
        %v6449 = vpop.f32.mrb[0].mxu0
        %6450 = vdwg.mxu0
        %6451 = vst [vmem:[%s244] sm:$0xff] %v5813
        %6452 = vst [vmem:[%s244 + $0x8] sm:$0xff] %v5818
        %6453 = vst [vmem:[%s244 + $0x10] sm:$0xff] %v5823
        %6454 = vst [vmem:[%s244 + $0x18] sm:$0xff] %v5828
        %6455 = vst [vmem:[%s244 + $0x20] sm:$0xff] %v5833
        %6456 = vst [vmem:[%s244 + $0x28] sm:$0xff] %v5838
        %6457 = vst [vmem:[%s244 + $0x30] sm:$0xff] %v5843
        %6458 = vst [vmem:[%s244 + $0x38] sm:$0xff] %v5848
        %6459 = vst [vmem:[%s244 + $0x40] sm:$0xff] %v5853
        %6460 = vst [vmem:[%s244 + $0x48] sm:$0xff] %v5858
        %6461 = vst [vmem:[%s244 + $0x50] sm:$0xff] %v5863
        %6462 = vst [vmem:[%s244 + $0x58] sm:$0xff] %v5868
        %6463 = vst [vmem:[%s244 + $0x60] sm:$0xff] %v5873
        %6464 = vst [vmem:[%s244 + $0x68] sm:$0xff] %v5878
        %6465 = vst [vmem:[%s244 + $0x70] sm:$0xff] %v5883
        %6466 = vst [vmem:[%s244 + $0x78] sm:$0xff] %v5888
        %6467 = vst [vmem:[%s244 + $0x80] sm:$0xff] %v5893
        %6468 = vst [vmem:[%s244 + $0x88] sm:$0xff] %v5898
        %6469 = vst [vmem:[%s244 + $0x90] sm:$0xff] %v5903
        %6470 = vst [vmem:[%s244 + $0x98] sm:$0xff] %v5908
        %6471 = vst [vmem:[%s244 + $0xa0] sm:$0xff] %v5913
        %6472 = vst [vmem:[%s244 + $0xa8] sm:$0xff] %v5918
        %6473 = vst [vmem:[%s244 + $0xb0] sm:$0xff] %v5923
        %6474 = vst [vmem:[%s244 + $0xb8] sm:$0xff] %v5928
        %6475 = vst [vmem:[%s244 + $0xc0] sm:$0xff] %v5933
        %6476 = vst [vmem:[%s244 + $0xc8] sm:$0xff] %v5938
        %6477 = vst [vmem:[%s244 + $0xd0] sm:$0xff] %v5943
        %6478 = vst [vmem:[%s244 + $0xd8] sm:$0xff] %v5948
        %6479 = vst [vmem:[%s244 + $0xe0] sm:$0xff] %v5953
        %6480 = vst [vmem:[%s244 + $0xe8] sm:$0xff] %v5958
        %6481 = vst [vmem:[%s244 + $0xf0] sm:$0xff] %v5963
        %6482 = vst [vmem:[%s244 + $0xf8] sm:$0xff] %v5968
        %6483 = vst [vmem:[%s244 + $0x100] sm:$0xff] %v5973
        %6484 = vst [vmem:[%s244 + $0x108] sm:$0xff] %v5978
        %6485 = vst [vmem:[%s244 + $0x110] sm:$0xff] %v5983
        %6486 = vst [vmem:[%s244 + $0x118] sm:$0xff] %v5988
        %6487 = vst [vmem:[%s244 + $0x120] sm:$0xff] %v5993
        %6488 = vst [vmem:[%s244 + $0x128] sm:$0xff] %v5998
        %6489 = vst [vmem:[%s244 + $0x130] sm:$0xff] %v6003
        %6490 = vst [vmem:[%s244 + $0x138] sm:$0xff] %v6008
        %6491 = vst [vmem:[%s244 + $0x140] sm:$0xff] %v6013
        %6492 = vst [vmem:[%s244 + $0x148] sm:$0xff] %v6018
        %6493 = vst [vmem:[%s244 + $0x150] sm:$0xff] %v6023
        %6494 = vst [vmem:[%s244 + $0x158] sm:$0xff] %v6028
        %6495 = vst [vmem:[%s244 + $0x160] sm:$0xff] %v6033
        %6496 = vst [vmem:[%s244 + $0x168] sm:$0xff] %v6038
        %6497 = vst [vmem:[%s244 + $0x170] sm:$0xff] %v6043
        %6498 = vst [vmem:[%s244 + $0x178] sm:$0xff] %v6048
        %6499 = vst [vmem:[%s244 + $0x180] sm:$0xff] %v6053
        %6500 = vst [vmem:[%s244 + $0x188] sm:$0xff] %v6058
        %6501 = vst [vmem:[%s244 + $0x190] sm:$0xff] %v6063
        %6502 = vst [vmem:[%s244 + $0x198] sm:$0xff] %v6068
        %6503 = vst [vmem:[%s244 + $0x1a0] sm:$0xff] %v6073
        %6504 = vst [vmem:[%s244 + $0x1a8] sm:$0xff] %v6078
        %6505 = vst [vmem:[%s244 + $0x1b0] sm:$0xff] %v6083
        %6506 = vst [vmem:[%s244 + $0x1b8] sm:$0xff] %v6088
        %6507 = vst [vmem:[%s244 + $0x1c0] sm:$0xff] %v6093
        %6508 = vst [vmem:[%s244 + $0x1c8] sm:$0xff] %v6098
        %6509 = vst [vmem:[%s244 + $0x1d0] sm:$0xff] %v6103
        %6510 = vst [vmem:[%s244 + $0x1d8] sm:$0xff] %v6108
        %6511 = vst [vmem:[%s244 + $0x1e0] sm:$0xff] %v6113
        %6512 = vst [vmem:[%s244 + $0x1e8] sm:$0xff] %v6118
        %6513 = vst [vmem:[%s244 + $0x1f0] sm:$0xff] %v6123
        %6514 = vst [vmem:[%s244 + $0x1f8] sm:$0xff] %v6128
        %6515 = vst [vmem:[%s244 + $0x200] sm:$0xff] %v6133
        %6516 = vst [vmem:[%s244 + $0x208] sm:$0xff] %v6138
        %6517 = vst [vmem:[%s244 + $0x210] sm:$0xff] %v6143
        %6518 = vst [vmem:[%s244 + $0x218] sm:$0xff] %v6148
        %6519 = vst [vmem:[%s244 + $0x220] sm:$0xff] %v6153
        %6520 = vst [vmem:[%s244 + $0x228] sm:$0xff] %v6158
        %6521 = vst [vmem:[%s244 + $0x230] sm:$0xff] %v6163
        %6522 = vst [vmem:[%s244 + $0x238] sm:$0xff] %v6168
        %6523 = vst [vmem:[%s244 + $0x240] sm:$0xff] %v6173
        %6524 = vst [vmem:[%s244 + $0x248] sm:$0xff] %v6178
        %6525 = vst [vmem:[%s244 + $0x250] sm:$0xff] %v6183
        %6526 = vst [vmem:[%s244 + $0x258] sm:$0xff] %v6188
        %6527 = vst [vmem:[%s244 + $0x260] sm:$0xff] %v6193
        %6528 = vst [vmem:[%s244 + $0x268] sm:$0xff] %v6198
        %6529 = vst [vmem:[%s244 + $0x270] sm:$0xff] %v6203
        %6530 = vst [vmem:[%s244 + $0x278] sm:$0xff] %v6208
        %6531 = vst [vmem:[%s244 + $0x280] sm:$0xff] %v6213
        %6532 = vst [vmem:[%s244 + $0x288] sm:$0xff] %v6218
        %6533 = vst [vmem:[%s244 + $0x290] sm:$0xff] %v6223
        %6534 = vst [vmem:[%s244 + $0x298] sm:$0xff] %v6228
        %6535 = vst [vmem:[%s244 + $0x2a0] sm:$0xff] %v6233
        %6536 = vst [vmem:[%s244 + $0x2a8] sm:$0xff] %v6238
        %6537 = vst [vmem:[%s244 + $0x2b0] sm:$0xff] %v6243
        %6538 = vst [vmem:[%s244 + $0x2b8] sm:$0xff] %v6248
        %6539 = vst [vmem:[%s244 + $0x2c0] sm:$0xff] %v6253
        %6540 = vst [vmem:[%s244 + $0x2c8] sm:$0xff] %v6258
        %6541 = vst [vmem:[%s244 + $0x2d0] sm:$0xff] %v6263
        %6542 = vst [vmem:[%s244 + $0x2d8] sm:$0xff] %v6268
        %6543 = vst [vmem:[%s244 + $0x2e0] sm:$0xff] %v6273
        %6544 = vst [vmem:[%s244 + $0x2e8] sm:$0xff] %v6278
        %6545 = vst [vmem:[%s244 + $0x2f0] sm:$0xff] %v6283
        %6546 = vst [vmem:[%s244 + $0x2f8] sm:$0xff] %v6288
        %6547 = vst [vmem:[%s244 + $0x300] sm:$0xff] %v6293
        %6548 = vst [vmem:[%s244 + $0x308] sm:$0xff] %v6298
        %6549 = vst [vmem:[%s244 + $0x310] sm:$0xff] %v6303
        %6550 = vst [vmem:[%s244 + $0x318] sm:$0xff] %v6308
        %6551 = vst [vmem:[%s244 + $0x320] sm:$0xff] %v6313
        %6552 = vst [vmem:[%s244 + $0x328] sm:$0xff] %v6318
        %6553 = vst [vmem:[%s244 + $0x330] sm:$0xff] %v6323
        %6554 = vst [vmem:[%s244 + $0x338] sm:$0xff] %v6328
        %6555 = vst [vmem:[%s244 + $0x340] sm:$0xff] %v6333
        %6556 = vst [vmem:[%s244 + $0x348] sm:$0xff] %v6338
        %6557 = vst [vmem:[%s244 + $0x350] sm:$0xff] %v6343
        %6558 = vst [vmem:[%s244 + $0x358] sm:$0xff] %v6348
        %6559 = vst [vmem:[%s244 + $0x360] sm:$0xff] %v6353
        %6560 = vst [vmem:[%s244 + $0x368] sm:$0xff] %v6358
        %6561 = vst [vmem:[%s244 + $0x370] sm:$0xff] %v6363
        %6562 = vst [vmem:[%s244 + $0x378] sm:$0xff] %v6368
        %6563 = vst [vmem:[%s244 + $0x380] sm:$0xff] %v6373
        %6564 = vst [vmem:[%s244 + $0x388] sm:$0xff] %v6378
        %6565 = vst [vmem:[%s244 + $0x390] sm:$0xff] %v6383
        %6566 = vst [vmem:[%s244 + $0x398] sm:$0xff] %v6388
        %6567 = vst [vmem:[%s244 + $0x3a0] sm:$0xff] %v6393
        %6568 = vst [vmem:[%s244 + $0x3a8] sm:$0xff] %v6398
        %6569 = vst [vmem:[%s244 + $0x3b0] sm:$0xff] %v6403
        %6570 = vst [vmem:[%s244 + $0x3b8] sm:$0xff] %v6408
        %6571 = vst [vmem:[%s244 + $0x3c0] sm:$0xff] %v6413
        %6572 = vst [vmem:[%s244 + $0x3c8] sm:$0xff] %v6418
        %6573 = vst [vmem:[%s244 + $0x3d0] sm:$0xff] %v6423
        %6574 = vst [vmem:[%s244 + $0x3d8] sm:$0xff] %v6428
        %6575 = vst [vmem:[%s244 + $0x3e0] sm:$0xff] %v6433
        %6576 = vst [vmem:[%s244 + $0x3e8] sm:$0xff] %v6438
        %6577 = vst [vmem:[%s244 + $0x3f0] sm:$0xff] %v6443
        %6578 = vst [vmem:[%s244 + $0x3f8] sm:$0xff] %v6448
        %s6579 = sand.u32 %s159, 1
        %s6580 = scalar_lea.sflag [#allocation6], %s6579
        %s6581 = sand.u32 %s159, 1
        %s6582 = smul.addr %s6581, 1024
        %s6583 = scalar_lea.vmem [#allocation5], %s6582
        // Predicated region
        $region45: #{tpu_custom_call.1} parent=43 // pred_check
          %p6584 = pneg %p169
        $region46: #{tpu_custom_call.1} parent=43 // pred_check_branch
          %6586 = sbr.rel (%p6584) target = $region48
        $region47: #{tpu_custom_call.1} parent=43 // pred_region
          %s6588 = ssub.s32 16384, 16384
          %6589 = vsyncadd %s6580, %s6588
          %s6590 = smul.addr %s20, 128
          %s6591 = smul.addr %s6590, 128
          %s6592 = scalar_lea.hbm %s6, %s6591
          %s6593 = sshll.u32 %s6583, 4
          %s6594 = int_to_ptr.vmem [resolvable:$true] %s6593
          %6599 = dma.vmem_to_hbm [thread:$0]  %s6594, 16384, %s6592, %s6580, 128, 128, 8
        $region48: #{tpu_custom_call.1} parent=43 // pred_fallthru
          _
      $region44: #{tpu_custom_call.1} parent=5 // pred_fallthru
        _
      %p6600 = scmp.le.s32.totalorder 2, %s15
      // Predicated region
      $region49: #{tpu_custom_call.1} parent=5 // pred_check
        %p6601 = pneg %p6600
      $region50: #{tpu_custom_call.1} parent=5 // pred_check_branch
        %6603 = sbr.rel (%p6601) target = $region52
      $region51: #{tpu_custom_call.1} parent=5 // pred_region
        %s6604 = ssub.s32 %s15, 2
        // Predicated region
        $region53: #{tpu_custom_call.1} parent=51 // pred_check
          %p6605 = pneg %p175
        $region54: #{tpu_custom_call.1} parent=51 // pred_check_branch
          %6607 = sbr.rel (%p6605) target = $region56
        $region55: #{tpu_custom_call.1} parent=51 // pred_region
          %s6608 = sand.u32 %s160, 1
          %s6609 = scalar_lea.sflag [#allocation6], %s6608
          %s6610 = sand.u32 %s160, 1
          %s6611 = smul.addr %s6610, 1024
          %s6612 = scalar_lea.vmem [#allocation5], %s6611
          %6613 = dma.done %s6609, 16384
        $region56: #{tpu_custom_call.1} parent=51 // pred_fallthru
          _
      $region52: #{tpu_custom_call.1} parent=5 // pred_fallthru
        _
    $region6: #{tpu_custom_call.1} parent=1 // loop_footer
      %s19 = sadd.s32 1, %s15
    $region7: #{tpu_custom_call.1} parent=1 // loop_footer_branch
      %14 = sbr.rel target = $region3
    $region8: #{tpu_custom_call.1} parent=1 // loop_exit
      _
    %6614 = vsyncpa [#allocation6], 1
    %s6615 = scalar_lea.sflag [#allocation6], 1
    %6616 = vsyncpa %s6615, 1

</llo_original>
